<compile_context>
chip_gen: v7x
topology: tpu7x:2x2x1
jax: 0.10.0
libtpu: 0.0.40
codegen_flags: <defaults>
</compile_context>

<pallas_src>
import functools

import jax
import jax.numpy as jnp
import numpy as np
from jax import lax
from jax.experimental import pallas as pl
from jax.experimental.pallas import tpu as pltpu

EPS = 1e-5
NEG_SLOPE = 0.2


def _round_up(x, m):
    return (x + m - 1) // m * m


def _pick_tm(m):
    # Tiny M: single full-dimension block (no alignment constraint needed).
    if m <= 32:
        return m
    # Mid-size M: ~2 tiles so both TensorCores get work (16-aligned for bf16).
    if m <= 1024:
        return _round_up(-(-m // 2), 16)
    # Large M: big tiles to amortize per-grid-step overhead.
    return 512


# --------------------------------------------------------------------------
# Pallas kernel: (M, K) x (K, Np) GEMM, bf16 operands, f32 scratch accumulate,
# fused per-output-channel scale/shift + LeakyReLU epilogue on the last K step.
# --------------------------------------------------------------------------
def _gemm_bn_lrelu_kernel(a_ref, b_ref, scale_ref, shift_ref, o_ref, acc_ref,
                          *, apply_act):
    k = pl.program_id(1)
    nk = pl.num_programs(1)

    @pl.when(k == 0)
    def _():
        acc_ref[...] = jnp.zeros_like(acc_ref)

    # Keep this K-step's partial sum in registers; only spill to the scratch
    # accumulator when there are more K steps to come.
    acc = acc_ref[...] + jnp.dot(a_ref[...], b_ref[...],
                                 preferred_element_type=jnp.float32)

    @pl.when(k < nk - 1)
    def _():
        acc_ref[...] = acc

    @pl.when(k == nk - 1)
    def _():
        y = acc * scale_ref[...] + shift_ref[...]      # f32 epilogue (v5e-safe)
        if apply_act:
            y = jnp.where(y >= 0, y, NEG_SLOPE * y)
        o_ref[...] = y.astype(o_ref.dtype)


def pallas_gemm_bn_lrelu(a, b, scale, shift, *, apply_act, out_dtype):
    """a: (M, K) bf16 patches; b: (K, Np) bf16 weights (Np a 128-multiple,
    columns beyond the true Cout are zero); scale/shift: (1, Np) f32."""
    M, K = a.shape
    K2, Np = b.shape
    assert K == K2
    assert K % 128 == 0, "K must be 128-aligned (pad input channels)"
    assert Np % 128 == 0 and Np <= 512

    tm = _pick_tm(M)
    tk = min(2048, K)
    assert K % tk == 0, "K tile must divide K exactly (no implicit K padding)"

    kernel = functools.partial(_gemm_bn_lrelu_kernel, apply_act=apply_act)
    return pl.pallas_call(
        kernel,
        out_shape=jax.ShapeDtypeStruct((M, Np), out_dtype),
        grid_spec=pltpu.PrefetchScalarGridSpec(
            num_scalar_prefetch=0,
            grid=(pl.cdiv(M, tm), K // tk),
            in_specs=[
                pl.BlockSpec((tm, tk), lambda i, k: (i, k)),   # A stream
                pl.BlockSpec((tk, Np), lambda i, k: (k, 0)),   # B panel
                pl.BlockSpec(memory_space=pltpu.MemorySpace.VMEM),  # scale
                pl.BlockSpec(memory_space=pltpu.MemorySpace.VMEM),  # shift
            ],
            out_specs=pl.BlockSpec((tm, Np), lambda i, k: (i, 0)),
            scratch_shapes=[pltpu.VMEM((tm, Np), jnp.float32)],
        ),
        compiler_params=pltpu.CompilerParams(
            dimension_semantics=("parallel", "arbitrary"),
            vmem_limit_bytes=48 * 1024 * 1024),
    )(a, b, scale, shift)


# --------------------------------------------------------------------------
# Glue: im2col patch extraction (plain JAX slices, bf16).
# --------------------------------------------------------------------------
def im2col(x, ksize, stride, pad):
    # x: (N, H, W, C)  ->  (N*OH*OW, k*k*C), ordered (kh, kw, c) on last axis.
    n, h, w, c = x.shape
    xp = jnp.pad(x, ((0, 0), (pad, pad), (pad, pad), (0, 0)))
    oh = (h + 2 * pad - ksize) // stride + 1
    ow = (w + 2 * pad - ksize) // stride + 1
    cols = []
    for i in range(ksize):
        for j in range(ksize):
            cols.append(xp[:, i:i + stride * oh:stride,
                           j:j + stride * ow:stride, :])
    patches = jnp.stack(cols, axis=3)                  # (N, OH, OW, k*k, C)
    return patches.reshape(n * oh * ow, ksize * ksize * c), oh, ow


def conv_layer(x, layer, cout, ksize, stride, pad, apply_act,
               out_dtype=jnp.bfloat16):
    # x: (N, H, W, Cin) NHWC (bf16)
    n = x.shape[0]
    a, oh, ow = im2col(x, ksize, stride, pad)
    y = pallas_gemm_bn_lrelu(a, layer["w"], layer["scale"], layer["shift"],
                             apply_act=apply_act, out_dtype=out_dtype)
    if y.shape[1] != cout:
        y = y[:, :cout]
    return y.reshape(n, oh, ow, cout)


# --------------------------------------------------------------------------
# Parameter construction (torch-like (Cout, Cin, KH, KW)) and one-time prep.
# --------------------------------------------------------------------------
def make_params(key):
    def conv_w(key, cout, cin, k=4):
        return jax.random.normal(key, (cout, cin, k, k), jnp.float32) * 0.05

    keys = jax.random.split(key, 11)
    return {
        "w_d1": conv_w(keys[0], 64, 6),
        "w_d2": conv_w(keys[1], 128, 64),
        "w_d3": conv_w(keys[2], 256, 128),
        "w_conv": conv_w(keys[3], 512, 256),
        "w_last": conv_w(keys[4], 1, 512),
        "g_d2": 1.0 + 0.1 * jax.random.normal(keys[5], (128,), jnp.float32),
        "b_d2": 0.1 * jax.random.normal(keys[6], (128,), jnp.float32),
        "g_d3": 1.0 + 0.1 * jax.random.normal(keys[7], (256,), jnp.float32),
        "b_d3": 0.1 * jax.random.normal(keys[8], (256,), jnp.float32),
        "g_bn1": 1.0 + 0.1 * jax.random.normal(keys[9], (512,), jnp.float32),
        "b_bn1": 0.1 * jax.random.normal(keys[10], (512,), jnp.float32),
    }


def prepare_params(p):
    """Fold eval-mode BN, flatten/pad/bf16-cast weights once (outside jit)."""
    def layer(w_oihw, cout, gamma=None, beta=None):
        np_ = _round_up(cout, 128)
        # (Cout, Cin, KH, KW) -> (KH*KW*Cin, Cout), matching im2col ordering.
        w = jnp.transpose(w_oihw, (2, 3, 1, 0)).reshape(-1, cout)
        w = jnp.pad(w, ((0, 0), (0, np_ - cout))).astype(jnp.bfloat16)
        if gamma is None:
            scale = jnp.ones((cout,), jnp.float32)
            shift = jnp.zeros((cout,), jnp.float32)
        else:
            scale = gamma / jnp.sqrt(1.0 + EPS)   # running_mean=0, running_var=1
            shift = beta
        scale = jnp.pad(scale, (0, np_ - cout)).reshape(1, -1)
        shift = jnp.pad(shift, (0, np_ - cout)).reshape(1, -1)
        return {"w": w, "scale": scale, "shift": shift}

    # First conv: pad Cin 6 -> 8 so K = 4*4*8 = 128 (128-aligned MXU feed).
    w1 = jnp.pad(p["w_d1"], ((0, 0), (0, 2), (0, 0), (0, 0)))
    return {
        "d1": layer(w1, 64),
        "d2": layer(p["w_d2"], 128, p["g_d2"], p["b_d2"]),
        "d3": layer(p["w_d3"], 256, p["g_d3"], p["b_d3"]),
        "conv": layer(p["w_conv"], 512, p["g_bn1"], p["b_bn1"]),
        "last": layer(p["w_last"], 1),
    }


# --------------------------------------------------------------------------
# Full discriminator forward (NCHW in / NCHW out).
# --------------------------------------------------------------------------
def discriminator_forward(prep, inp, tgt):
    x = jnp.concatenate([inp, tgt], axis=1)           # (N, 6, H, W)
    x = jnp.transpose(x, (0, 2, 3, 1))                # NHWC, C=6
    x = jnp.pad(x, ((0, 0), (0, 0), (0, 0), (0, 2)))  # C 6 -> 8
    x = x.astype(jnp.bfloat16)

    x = conv_layer(x, prep["d1"], 64, 4, 2, 1, True)
    x = conv_layer(x, prep["d2"], 128, 4, 2, 1, True)
    x = conv_layer(x, prep["d3"], 256, 4, 2, 1, True)
    x = conv_layer(x, prep["conv"], 512, 4, 1, 1, True)
    x = conv_layer(x, prep["last"], 1, 4, 1, 1, False, out_dtype=jnp.float32)

    return jnp.transpose(x, (0, 3, 1, 2))             # NCHW


# --------------------------------------------------------------------------
# Pure-JAX reference (lax conv) for verification.
# --------------------------------------------------------------------------
def _ref_conv(x, w, stride, pad):
    return lax.conv_general_dilated(
        x, w, window_strides=(stride, stride),
        padding=[(pad, pad), (pad, pad)],
        dimension_numbers=("NCHW", "OIHW", "NCHW"))


def reference_forward(params, inp, tgt):
    def bn(x, g, b):
        return x * (g / jnp.sqrt(1.0 + EPS))[None, :, None, None] \
            + b[None, :, None, None]

    def lrelu(x):
        return jnp.where(x >= 0, x, NEG_SLOPE * x)

    x = jnp.concatenate([inp, tgt], axis=1)
    x = lrelu(_ref_conv(x, params["w_d1"], 2, 1))
    x = lrelu(bn(_ref_conv(x, params["w_d2"], 2, 1), params["g_d2"], params["b_d2"]))
    x = lrelu(bn(_ref_conv(x, params["w_d3"], 2, 1), params["g_d3"], params["b_d3"]))
    x = lrelu(bn(_ref_conv(x, params["w_conv"], 1, 1), params["g_bn1"], params["b_bn1"]))
    x = _ref_conv(x, params["w_last"], 1, 1)
    return x


if __name__ == "__main__":
    key = jax.random.PRNGKey(0)
    k_p, k_a, k_b = jax.random.split(key, 3)
    params = make_params(k_p)
    prep = prepare_params(params)   # one-time weight flatten / pad / bf16 cast

    # Small shapes: batch=2, 3-channel input & target, 32x32 spatial
    # (32 keeps every conv's output spatial size >= 1).
    inp = jax.random.normal(k_a, (2, 3, 32, 32), jnp.float32)
    tgt = jax.random.normal(k_b, (2, 3, 32, 32), jnp.float32)

    fwd = jax.jit(discriminator_forward)
    out = jax.block_until_ready(fwd(prep, inp, tgt))
    ref = jax.block_until_ready(reference_forward(params, inp, tgt))

    assert out.shape == (2, 1, 2, 2), out.shape
    np.testing.assert_allclose(np.asarray(out), np.asarray(ref),
                               rtol=5e-2, atol=5e-2)
    print("KERNEL_OK")
</pallas_src>

<mosaic_0001>
module attributes {stable_mosaic.version = 11 : i64} {
  func.func @_gemm_bn_lrelu_kernel(%arg0: i32, %arg1: i32, %arg2: memref<256x128xbf16, #tpu.memory_space<vmem>>, %arg3: memref<128x128xbf16, #tpu.memory_space<vmem>>, %arg4: memref<1x128xf32, #tpu.memory_space<vmem>>, %arg5: memref<1x128xf32, #tpu.memory_space<vmem>>, %arg6: memref<256x128xbf16, #tpu.memory_space<vmem>>, %arg7: memref<256x128xf32, #tpu.memory_space<vmem>>) attributes {dimension_semantics = [#tpu.dimension_semantics<parallel>, #tpu.dimension_semantics<arbitrary>], iteration_bounds = array<i64: 2, 1>, scalar_prefetch = 0 : i64, scratch_operands = 1 : i64, tpu.core_type = #tpu.core_type<tc>, window_params = [{transform_indices = @transform_0, window_bounds = array<i64: 256, 128>}, {transform_indices = @transform_1, window_bounds = array<i64: 128, 128>}, {pipeline_mode = #tpu.pipeline_mode<synchronous>, transform_indices = @transform_2, window_bounds = array<i64: 1, 128>}, {pipeline_mode = #tpu.pipeline_mode<synchronous>, transform_indices = @transform_3, window_bounds = array<i64: 1, 128>}, {transform_indices = @transform_4, window_bounds = array<i64: 256, 128>}]} {
    %c0_i32 = arith.constant 0 : i32
    %0 = arith.cmpi eq, %arg1, %c0_i32 : i32
    %1 = arith.extui %0 : i1 to i32
    %c0_i32_0 = arith.constant 0 : i32
    %2 = arith.cmpi ne, %1, %c0_i32_0 : i32
    scf.if %2 {
      %cst_10 = arith.constant 0.000000e+00 : f32
      %14 = vector.broadcast %cst_10 : f32 to vector<256x128xf32>
      %c0_11 = arith.constant 0 : index
      %c0_12 = arith.constant 0 : index
      %15 = vector.load %arg7[%c0_11, %c0_12] : memref<256x128xf32, #tpu.memory_space<vmem>>, vector<256x128xf32>
      tpu.vector_store %arg7[%c0_11, %c0_12], %14 {strides = array<i32>} : memref<256x128xf32, #tpu.memory_space<vmem>>, vector<256x128xf32>,
    } else {
    }
    %c0 = arith.constant 0 : index
    %c0_1 = arith.constant 0 : index
    %3 = vector.load %arg7[%c0, %c0_1] : memref<256x128xf32, #tpu.memory_space<vmem>>, vector<256x128xf32>
    %c0_2 = arith.constant 0 : index
    %c0_3 = arith.constant 0 : index
    %4 = vector.load %arg2[%c0_2, %c0_3] : memref<256x128xbf16, #tpu.memory_space<vmem>>, vector<256x128xbf16>
    %c0_4 = arith.constant 0 : index
    %c0_5 = arith.constant 0 : index
    %5 = vector.load %arg3[%c0_4, %c0_5] : memref<128x128xbf16, #tpu.memory_space<vmem>>, vector<128x128xbf16>
    %cst = arith.constant dense<0.000000e+00> : vector<256x128xf32>
    %6 = tpu.matmul %4, %5, %cst {dimension_numbers = #tpu.dot_dimension_numbers<[1], [0], [0], [1], [0, 0, 1, 1], [], []>} : vector<256x128xbf16>, vector<128x128xbf16>, vector<256x128xf32> -> vector<256x128xf32>
    %7 = arith.addf %3, %6 : vector<256x128xf32>
    %c0_i32_6 = arith.constant 0 : i32
    %8 = arith.cmpi slt, %arg1, %c0_i32_6 : i32
    %9 = arith.extui %8 : i1 to i32
    %c0_i32_7 = arith.constant 0 : i32
    %10 = arith.cmpi ne, %9, %c0_i32_7 : i32
    scf.if %10 {
      %c0_10 = arith.constant 0 : index
      %c0_11 = arith.constant 0 : index
      %14 = vector.load %arg7[%c0_10, %c0_11] : memref<256x128xf32, #tpu.memory_space<vmem>>, vector<256x128xf32>
      tpu.vector_store %arg7[%c0_10, %c0_11], %7 {strides = array<i32>} : memref<256x128xf32, #tpu.memory_space<vmem>>, vector<256x128xf32>,
    } else {
    }
    %c0_i32_8 = arith.constant 0 : i32
    %11 = arith.cmpi eq, %arg1, %c0_i32_8 : i32
    %12 = arith.extui %11 : i1 to i32
    %c0_i32_9 = arith.constant 0 : i32
    %13 = arith.cmpi ne, %12, %c0_i32_9 : i32
    scf.if %13 {
      %c0_10 = arith.constant 0 : index
      %c0_11 = arith.constant 0 : index
      %14 = vector.load %arg4[%c0_10, %c0_11] : memref<1x128xf32, #tpu.memory_space<vmem>>, vector<1x128xf32>
      %15 = vector.broadcast %14 : vector<1x128xf32> to vector<256x128xf32>
      %16 = arith.mulf %7, %15 : vector<256x128xf32>
      %c0_12 = arith.constant 0 : index
      %c0_13 = arith.constant 0 : index
      %17 = vector.load %arg5[%c0_12, %c0_13] : memref<1x128xf32, #tpu.memory_space<vmem>>, vector<1x128xf32>
      %18 = vector.broadcast %17 : vector<1x128xf32> to vector<256x128xf32>
      %19 = arith.addf %16, %18 : vector<256x128xf32>
      %cst_14 = arith.constant 0.000000e+00 : f32
      %20 = vector.broadcast %cst_14 : f32 to vector<256x128xf32>
      %21 = arith.cmpf oge, %19, %20 : vector<256x128xf32>
      %cst_15 = arith.constant 2.000000e-01 : f32
      %22 = vector.broadcast %cst_15 : f32 to vector<256x128xf32>
      %23 = arith.mulf %22, %19 : vector<256x128xf32>
      %24 = arith.select %21, %19, %23 : vector<256x128xi1>, vector<256x128xf32>
      %25 = arith.truncf %24 : vector<256x128xf32> to vector<256x128xbf16>
      %c0_16 = arith.constant 0 : index
      %c0_17 = arith.constant 0 : index
      %26 = vector.load %arg6[%c0_16, %c0_17] : memref<256x128xbf16, #tpu.memory_space<vmem>>, vector<256x128xbf16>
      tpu.vector_store %arg6[%c0_16, %c0_17], %25 {strides = array<i32>} : memref<256x128xbf16, #tpu.memory_space<vmem>>, vector<256x128xbf16>,
    } else {
    }
    return
  }
  func.func @transform_0(%arg0: i32, %arg1: i32) -> (i32, i32) {
    %c0_i32 = arith.constant 0 : i32
    return %arg0, %arg1 : i32, i32
  }
  func.func @transform_1(%arg0: i32, %arg1: i32) -> (i32, i32) {
    %c0_i32 = arith.constant 0 : i32
    %c0_i32_0 = arith.constant 0 : i32
    return %arg1, %c0_i32 : i32, i32
  }
  func.func @transform_2(%arg0: i32, %arg1: i32) -> (i32, i32) {
    %c0_i32 = arith.constant 0 : i32
    %c0_i32_0 = arith.constant 0 : i32
    %c0_i32_1 = arith.constant 0 : i32
    return %c0_i32, %c0_i32_0 : i32, i32
  }
  func.func @transform_3(%arg0: i32, %arg1: i32) -> (i32, i32) {
    %c0_i32 = arith.constant 0 : i32
    %c0_i32_0 = arith.constant 0 : i32
    %c0_i32_1 = arith.constant 0 : i32
    return %c0_i32, %c0_i32_0 : i32, i32
  }
  func.func @transform_4(%arg0: i32, %arg1: i32) -> (i32, i32) {
    %c0_i32 = arith.constant 0 : i32
    %c0_i32_0 = arith.constant 0 : i32
    return %arg0, %c0_i32 : i32, i32
  }
}

module attributes {stable_mosaic.version = 11 : i64} {
  func.func @_gemm_bn_lrelu_kernel(%arg0: i32, %arg1: i32, %arg2: memref<64x1024xbf16, #tpu.memory_space<vmem>>, %arg3: memref<1024x128xbf16, #tpu.memory_space<vmem>>, %arg4: memref<1x128xf32, #tpu.memory_space<vmem>>, %arg5: memref<1x128xf32, #tpu.memory_space<vmem>>, %arg6: memref<64x128xbf16, #tpu.memory_space<vmem>>, %arg7: memref<64x128xf32, #tpu.memory_space<vmem>>) attributes {dimension_semantics = [#tpu.dimension_semantics<parallel>, #tpu.dimension_semantics<arbitrary>], iteration_bounds = array<i64: 2, 1>, scalar_prefetch = 0 : i64, scratch_operands = 1 : i64, tpu.core_type = #tpu.core_type<tc>, window_params = [{transform_indices = @transform_0, window_bounds = array<i64: 64, 1024>}, {transform_indices = @transform_1, window_bounds = array<i64: 1024, 128>}, {pipeline_mode = #tpu.pipeline_mode<synchronous>, transform_indices = @transform_2, window_bounds = array<i64: 1, 128>}, {pipeline_mode = #tpu.pipeline_mode<synchronous>, transform_indices = @transform_3, window_bounds = array<i64: 1, 128>}, {transform_indices = @transform_4, window_bounds = array<i64: 64, 128>}]} {
    %c0_i32 = arith.constant 0 : i32
    %0 = arith.cmpi eq, %arg1, %c0_i32 : i32
    %1 = arith.extui %0 : i1 to i32
    %c0_i32_0 = arith.constant 0 : i32
    %2 = arith.cmpi ne, %1, %c0_i32_0 : i32
    scf.if %2 {
      %cst_10 = arith.constant 0.000000e+00 : f32
      %14 = vector.broadcast %cst_10 : f32 to vector<64x128xf32>
      %c0_11 = arith.constant 0 : index
      %c0_12 = arith.constant 0 : index
      %15 = vector.load %arg7[%c0_11, %c0_12] : memref<64x128xf32, #tpu.memory_space<vmem>>, vector<64x128xf32>
      tpu.vector_store %arg7[%c0_11, %c0_12], %14 {strides = array<i32>} : memref<64x128xf32, #tpu.memory_space<vmem>>, vector<64x128xf32>,
    } else {
    }
    %c0 = arith.constant 0 : index
    %c0_1 = arith.constant 0 : index
    %3 = vector.load %arg7[%c0, %c0_1] : memref<64x128xf32, #tpu.memory_space<vmem>>, vector<64x128xf32>
    %c0_2 = arith.constant 0 : index
    %c0_3 = arith.constant 0 : index
    %4 = vector.load %arg2[%c0_2, %c0_3] : memref<64x1024xbf16, #tpu.memory_space<vmem>>, vector<64x1024xbf16>
    %c0_4 = arith.constant 0 : index
    %c0_5 = arith.constant 0 : index
    %5 = vector.load %arg3[%c0_4, %c0_5] : memref<1024x128xbf16, #tpu.memory_space<vmem>>, vector<1024x128xbf16>
    %cst = arith.constant dense<0.000000e+00> : vector<64x128xf32>
    %6 = tpu.matmul %4, %5, %cst {dimension_numbers = #tpu.dot_dimension_numbers<[1], [0], [0], [1], [0, 0, 1, 1], [], []>} : vector<64x1024xbf16>, vector<1024x128xbf16>, vector<64x128xf32> -> vector<64x128xf32>
    %7 = arith.addf %3, %6 : vector<64x128xf32>
    %c0_i32_6 = arith.constant 0 : i32
    %8 = arith.cmpi slt, %arg1, %c0_i32_6 : i32
    %9 = arith.extui %8 : i1 to i32
    %c0_i32_7 = arith.constant 0 : i32
    %10 = arith.cmpi ne, %9, %c0_i32_7 : i32
    scf.if %10 {
      %c0_10 = arith.constant 0 : index
      %c0_11 = arith.constant 0 : index
      %14 = vector.load %arg7[%c0_10, %c0_11] : memref<64x128xf32, #tpu.memory_space<vmem>>, vector<64x128xf32>
      tpu.vector_store %arg7[%c0_10, %c0_11], %7 {strides = array<i32>} : memref<64x128xf32, #tpu.memory_space<vmem>>, vector<64x128xf32>,
    } else {
    }
    %c0_i32_8 = arith.constant 0 : i32
    %11 = arith.cmpi eq, %arg1, %c0_i32_8 : i32
    %12 = arith.extui %11 : i1 to i32
    %c0_i32_9 = arith.constant 0 : i32
    %13 = arith.cmpi ne, %12, %c0_i32_9 : i32
    scf.if %13 {
      %c0_10 = arith.constant 0 : index
      %c0_11 = arith.constant 0 : index
      %14 = vector.load %arg4[%c0_10, %c0_11] : memref<1x128xf32, #tpu.memory_space<vmem>>, vector<1x128xf32>
      %15 = vector.broadcast %14 : vector<1x128xf32> to vector<64x128xf32>
      %16 = arith.mulf %7, %15 : vector<64x128xf32>
      %c0_12 = arith.constant 0 : index
      %c0_13 = arith.constant 0 : index
      %17 = vector.load %arg5[%c0_12, %c0_13] : memref<1x128xf32, #tpu.memory_space<vmem>>, vector<1x128xf32>
      %18 = vector.broadcast %17 : vector<1x128xf32> to vector<64x128xf32>
      %19 = arith.addf %16, %18 : vector<64x128xf32>
      %cst_14 = arith.constant 0.000000e+00 : f32
      %20 = vector.broadcast %cst_14 : f32 to vector<64x128xf32>
      %21 = arith.cmpf oge, %19, %20 : vector<64x128xf32>
      %cst_15 = arith.constant 2.000000e-01 : f32
      %22 = vector.broadcast %cst_15 : f32 to vector<64x128xf32>
      %23 = arith.mulf %22, %19 : vector<64x128xf32>
      %24 = arith.select %21, %19, %23 : vector<64x128xi1>, vector<64x128xf32>
      %25 = arith.truncf %24 : vector<64x128xf32> to vector<64x128xbf16>
      %c0_16 = arith.constant 0 : index
      %c0_17 = arith.constant 0 : index
      %26 = vector.load %arg6[%c0_16, %c0_17] : memref<64x128xbf16, #tpu.memory_space<vmem>>, vector<64x128xbf16>
      tpu.vector_store %arg6[%c0_16, %c0_17], %25 {strides = array<i32>} : memref<64x128xbf16, #tpu.memory_space<vmem>>, vector<64x128xbf16>,
    } else {
    }
    return
  }
  func.func @transform_0(%arg0: i32, %arg1: i32) -> (i32, i32) {
    %c0_i32 = arith.constant 0 : i32
    return %arg0, %arg1 : i32, i32
  }
  func.func @transform_1(%arg0: i32, %arg1: i32) -> (i32, i32) {
    %c0_i32 = arith.constant 0 : i32
    %c0_i32_0 = arith.constant 0 : i32
    return %arg1, %c0_i32 : i32, i32
  }
  func.func @transform_2(%arg0: i32, %arg1: i32) -> (i32, i32) {
    %c0_i32 = arith.constant 0 : i32
    %c0_i32_0 = arith.constant 0 : i32
    %c0_i32_1 = arith.constant 0 : i32
    return %c0_i32, %c0_i32_0 : i32, i32
  }
  func.func @transform_3(%arg0: i32, %arg1: i32) -> (i32, i32) {
    %c0_i32 = arith.constant 0 : i32
    %c0_i32_0 = arith.constant 0 : i32
    %c0_i32_1 = arith.constant 0 : i32
    return %c0_i32, %c0_i32_0 : i32, i32
  }
  func.func @transform_4(%arg0: i32, %arg1: i32) -> (i32, i32) {
    %c0_i32 = arith.constant 0 : i32
    %c0_i32_0 = arith.constant 0 : i32
    return %arg0, %c0_i32 : i32, i32
  }
}

module attributes {stable_mosaic.version = 11 : i64} {
  func.func @_gemm_bn_lrelu_kernel(%arg0: i32, %arg1: i32, %arg2: memref<32x2048xbf16, #tpu.memory_space<vmem>>, %arg3: memref<2048x256xbf16, #tpu.memory_space<vmem>>, %arg4: memref<1x256xf32, #tpu.memory_space<vmem>>, %arg5: memref<1x256xf32, #tpu.memory_space<vmem>>, %arg6: memref<32x256xbf16, #tpu.memory_space<vmem>>, %arg7: memref<32x256xf32, #tpu.memory_space<vmem>>) attributes {dimension_semantics = [#tpu.dimension_semantics<parallel>, #tpu.dimension_semantics<arbitrary>], iteration_bounds = array<i64: 1, 1>, scalar_prefetch = 0 : i64, scratch_operands = 1 : i64, tpu.core_type = #tpu.core_type<tc>, window_params = [{transform_indices = @transform_0, window_bounds = array<i64: 32, 2048>}, {transform_indices = @transform_1, window_bounds = array<i64: 2048, 256>}, {pipeline_mode = #tpu.pipeline_mode<synchronous>, transform_indices = @transform_2, window_bounds = array<i64: 1, 256>}, {pipeline_mode = #tpu.pipeline_mode<synchronous>, transform_indices = @transform_3, window_bounds = array<i64: 1, 256>}, {transform_indices = @transform_4, window_bounds = array<i64: 32, 256>}]} {
    %c0_i32 = arith.constant 0 : i32
    %0 = arith.cmpi eq, %arg1, %c0_i32 : i32
    %1 = arith.extui %0 : i1 to i32
    %c0_i32_0 = arith.constant 0 : i32
    %2 = arith.cmpi ne, %1, %c0_i32_0 : i32
    scf.if %2 {
      %cst_10 = arith.constant 0.000000e+00 : f32
      %14 = vector.broadcast %cst_10 : f32 to vector<32x256xf32>
      %c0_11 = arith.constant 0 : index
      %c0_12 = arith.constant 0 : index
      %15 = vector.load %arg7[%c0_11, %c0_12] : memref<32x256xf32, #tpu.memory_space<vmem>>, vector<32x256xf32>
      tpu.vector_store %arg7[%c0_11, %c0_12], %14 {strides = array<i32>} : memref<32x256xf32, #tpu.memory_space<vmem>>, vector<32x256xf32>,
    } else {
    }
    %c0 = arith.constant 0 : index
    %c0_1 = arith.constant 0 : index
    %3 = vector.load %arg7[%c0, %c0_1] : memref<32x256xf32, #tpu.memory_space<vmem>>, vector<32x256xf32>
    %c0_2 = arith.constant 0 : index
    %c0_3 = arith.constant 0 : index
    %4 = vector.load %arg2[%c0_2, %c0_3] : memref<32x2048xbf16, #tpu.memory_space<vmem>>, vector<32x2048xbf16>
    %c0_4 = arith.constant 0 : index
    %c0_5 = arith.constant 0 : index
    %5 = vector.load %arg3[%c0_4, %c0_5] : memref<2048x256xbf16, #tpu.memory_space<vmem>>, vector<2048x256xbf16>
    %cst = arith.constant dense<0.000000e+00> : vector<32x256xf32>
    %6 = tpu.matmul %4, %5, %cst {dimension_numbers = #tpu.dot_dimension_numbers<[1], [0], [0], [1], [0, 0, 1, 1], [], []>} : vector<32x2048xbf16>, vector<2048x256xbf16>, vector<32x256xf32> -> vector<32x256xf32>
    %7 = arith.addf %3, %6 : vector<32x256xf32>
    %c0_i32_6 = arith.constant 0 : i32
    %8 = arith.cmpi slt, %arg1, %c0_i32_6 : i32
    %9 = arith.extui %8 : i1 to i32
    %c0_i32_7 = arith.constant 0 : i32
    %10 = arith.cmpi ne, %9, %c0_i32_7 : i32
    scf.if %10 {
      %c0_10 = arith.constant 0 : index
      %c0_11 = arith.constant 0 : index
      %14 = vector.load %arg7[%c0_10, %c0_11] : memref<32x256xf32, #tpu.memory_space<vmem>>, vector<32x256xf32>
      tpu.vector_store %arg7[%c0_10, %c0_11], %7 {strides = array<i32>} : memref<32x256xf32, #tpu.memory_space<vmem>>, vector<32x256xf32>,
    } else {
    }
    %c0_i32_8 = arith.constant 0 : i32
    %11 = arith.cmpi eq, %arg1, %c0_i32_8 : i32
    %12 = arith.extui %11 : i1 to i32
    %c0_i32_9 = arith.constant 0 : i32
    %13 = arith.cmpi ne, %12, %c0_i32_9 : i32
    scf.if %13 {
      %c0_10 = arith.constant 0 : index
      %c0_11 = arith.constant 0 : index
      %14 = vector.load %arg4[%c0_10, %c0_11] : memref<1x256xf32, #tpu.memory_space<vmem>>, vector<1x256xf32>
      %15 = vector.broadcast %14 : vector<1x256xf32> to vector<32x256xf32>
      %16 = arith.mulf %7, %15 : vector<32x256xf32>
      %c0_12 = arith.constant 0 : index
      %c0_13 = arith.constant 0 : index
      %17 = vector.load %arg5[%c0_12, %c0_13] : memref<1x256xf32, #tpu.memory_space<vmem>>, vector<1x256xf32>
      %18 = vector.broadcast %17 : vector<1x256xf32> to vector<32x256xf32>
      %19 = arith.addf %16, %18 : vector<32x256xf32>
      %cst_14 = arith.constant 0.000000e+00 : f32
      %20 = vector.broadcast %cst_14 : f32 to vector<32x256xf32>
      %21 = arith.cmpf oge, %19, %20 : vector<32x256xf32>
      %cst_15 = arith.constant 2.000000e-01 : f32
      %22 = vector.broadcast %cst_15 : f32 to vector<32x256xf32>
      %23 = arith.mulf %22, %19 : vector<32x256xf32>
      %24 = arith.select %21, %19, %23 : vector<32x256xi1>, vector<32x256xf32>
      %25 = arith.truncf %24 : vector<32x256xf32> to vector<32x256xbf16>
      %c0_16 = arith.constant 0 : index
      %c0_17 = arith.constant 0 : index
      %26 = vector.load %arg6[%c0_16, %c0_17] : memref<32x256xbf16, #tpu.memory_space<vmem>>, vector<32x256xbf16>
      tpu.vector_store %arg6[%c0_16, %c0_17], %25 {strides = array<i32>} : memref<32x256xbf16, #tpu.memory_space<vmem>>, vector<32x256xbf16>,
    } else {
    }
    return
  }
  func.func @transform_0(%arg0: i32, %arg1: i32) -> (i32, i32) {
    %c0_i32 = arith.constant 0 : i32
    return %arg0, %arg1 : i32, i32
  }
  func.func @transform_1(%arg0: i32, %arg1: i32) -> (i32, i32) {
    %c0_i32 = arith.constant 0 : i32
    %c0_i32_0 = arith.constant 0 : i32
    return %arg1, %c0_i32 : i32, i32
  }
  func.func @transform_2(%arg0: i32, %arg1: i32) -> (i32, i32) {
    %c0_i32 = arith.constant 0 : i32
    %c0_i32_0 = arith.constant 0 : i32
    %c0_i32_1 = arith.constant 0 : i32
    return %c0_i32, %c0_i32_0 : i32, i32
  }
  func.func @transform_3(%arg0: i32, %arg1: i32) -> (i32, i32) {
    %c0_i32 = arith.constant 0 : i32
    %c0_i32_0 = arith.constant 0 : i32
    %c0_i32_1 = arith.constant 0 : i32
    return %c0_i32, %c0_i32_0 : i32, i32
  }
  func.func @transform_4(%arg0: i32, %arg1: i32) -> (i32, i32) {
    %c0_i32 = arith.constant 0 : i32
    %c0_i32_0 = arith.constant 0 : i32
    return %arg0, %c0_i32 : i32, i32
  }
}

module attributes {stable_mosaic.version = 11 : i64} {
  func.func @_gemm_bn_lrelu_kernel(%arg0: i32, %arg1: i32, %arg2: memref<18x2048xbf16, #tpu.memory_space<vmem>>, %arg3: memref<2048x512xbf16, #tpu.memory_space<vmem>>, %arg4: memref<1x512xf32, #tpu.memory_space<vmem>>, %arg5: memref<1x512xf32, #tpu.memory_space<vmem>>, %arg6: memref<18x512xbf16, #tpu.memory_space<vmem>>, %arg7: memref<18x512xf32, #tpu.memory_space<vmem>>) attributes {dimension_semantics = [#tpu.dimension_semantics<parallel>, #tpu.dimension_semantics<arbitrary>], iteration_bounds = array<i64: 1, 2>, scalar_prefetch = 0 : i64, scratch_operands = 1 : i64, tpu.core_type = #tpu.core_type<tc>, window_params = [{transform_indices = @transform_0, window_bounds = array<i64: 18, 2048>}, {transform_indices = @transform_1, window_bounds = array<i64: 2048, 512>}, {pipeline_mode = #tpu.pipeline_mode<synchronous>, transform_indices = @transform_2, window_bounds = array<i64: 1, 512>}, {pipeline_mode = #tpu.pipeline_mode<synchronous>, transform_indices = @transform_3, window_bounds = array<i64: 1, 512>}, {transform_indices = @transform_4, window_bounds = array<i64: 18, 512>}]} {
    %c0_i32 = arith.constant 0 : i32
    %0 = arith.cmpi eq, %arg1, %c0_i32 : i32
    %1 = arith.extui %0 : i1 to i32
    %c0_i32_0 = arith.constant 0 : i32
    %2 = arith.cmpi ne, %1, %c0_i32_0 : i32
    scf.if %2 {
      %cst_9 = arith.constant 0.000000e+00 : f32
      %14 = vector.broadcast %cst_9 : f32 to vector<18x512xf32>
      %c0_10 = arith.constant 0 : index
      %c0_11 = arith.constant 0 : index
      %15 = vector.load %arg7[%c0_10, %c0_11] : memref<18x512xf32, #tpu.memory_space<vmem>>, vector<18x512xf32>
      tpu.vector_store %arg7[%c0_10, %c0_11], %14 {strides = array<i32>} : memref<18x512xf32, #tpu.memory_space<vmem>>, vector<18x512xf32>,
    } else {
    }
    %c0 = arith.constant 0 : index
    %c0_1 = arith.constant 0 : index
    %3 = vector.load %arg7[%c0, %c0_1] : memref<18x512xf32, #tpu.memory_space<vmem>>, vector<18x512xf32>
    %c0_2 = arith.constant 0 : index
    %c0_3 = arith.constant 0 : index
    %4 = vector.load %arg2[%c0_2, %c0_3] : memref<18x2048xbf16, #tpu.memory_space<vmem>>, vector<18x2048xbf16>
    %c0_4 = arith.constant 0 : index
    %c0_5 = arith.constant 0 : index
    %5 = vector.load %arg3[%c0_4, %c0_5] : memref<2048x512xbf16, #tpu.memory_space<vmem>>, vector<2048x512xbf16>
    %cst = arith.constant dense<0.000000e+00> : vector<18x512xf32>
    %6 = tpu.matmul %4, %5, %cst {dimension_numbers = #tpu.dot_dimension_numbers<[1], [0], [0], [1], [0, 0, 1, 1], [], []>} : vector<18x2048xbf16>, vector<2048x512xbf16>, vector<18x512xf32> -> vector<18x512xf32>
    %7 = arith.addf %3, %6 : vector<18x512xf32>
    %c1_i32 = arith.constant 1 : i32
    %8 = arith.cmpi slt, %arg1, %c1_i32 : i32
    %9 = arith.extui %8 : i1 to i32
    %c0_i32_6 = arith.constant 0 : i32
    %10 = arith.cmpi ne, %9, %c0_i32_6 : i32
    scf.if %10 {
      %c0_9 = arith.constant 0 : index
      %c0_10 = arith.constant 0 : index
      %14 = vector.load %arg7[%c0_9, %c0_10] : memref<18x512xf32, #tpu.memory_space<vmem>>, vector<18x512xf32>
      tpu.vector_store %arg7[%c0_9, %c0_10], %7 {strides = array<i32>} : memref<18x512xf32, #tpu.memory_space<vmem>>, vector<18x512xf32>,
    } else {
    }
    %c1_i32_7 = arith.constant 1 : i32
    %11 = arith.cmpi eq, %arg1, %c1_i32_7 : i32
    %12 = arith.extui %11 : i1 to i32
    %c0_i32_8 = arith.constant 0 : i32
    %13 = arith.cmpi ne, %12, %c0_i32_8 : i32
    scf.if %13 {
      %c0_9 = arith.constant 0 : index
      %c0_10 = arith.constant 0 : index
      %14 = vector.load %arg4[%c0_9, %c0_10] : memref<1x512xf32, #tpu.memory_space<vmem>>, vector<1x512xf32>
      %15 = vector.broadcast %14 : vector<1x512xf32> to vector<18x512xf32>
      %16 = arith.mulf %7, %15 : vector<18x512xf32>
      %c0_11 = arith.constant 0 : index
      %c0_12 = arith.constant 0 : index
      %17 = vector.load %arg5[%c0_11, %c0_12] : memref<1x512xf32, #tpu.memory_space<vmem>>, vector<1x512xf32>
      %18 = vector.broadcast %17 : vector<1x512xf32> to vector<18x512xf32>
      %19 = arith.addf %16, %18 : vector<18x512xf32>
      %cst_13 = arith.constant 0.000000e+00 : f32
      %20 = vector.broadcast %cst_13 : f32 to vector<18x512xf32>
      %21 = arith.cmpf oge, %19, %20 : vector<18x512xf32>
      %cst_14 = arith.constant 2.000000e-01 : f32
      %22 = vector.broadcast %cst_14 : f32 to vector<18x512xf32>
      %23 = arith.mulf %22, %19 : vector<18x512xf32>
      %24 = arith.select %21, %19, %23 : vector<18x512xi1>, vector<18x512xf32>
      %25 = arith.truncf %24 : vector<18x512xf32> to vector<18x512xbf16>
      %c0_15 = arith.constant 0 : index
      %c0_16 = arith.constant 0 : index
      %26 = vector.load %arg6[%c0_15, %c0_16] : memref<18x512xbf16, #tpu.memory_space<vmem>>, vector<18x512xbf16>
      tpu.vector_store %arg6[%c0_15, %c0_16], %25 {strides = array<i32>} : memref<18x512xbf16, #tpu.memory_space<vmem>>, vector<18x512xbf16>,
    } else {
    }
    return
  }
  func.func @transform_0(%arg0: i32, %arg1: i32) -> (i32, i32) {
    %c0_i32 = arith.constant 0 : i32
    return %arg0, %arg1 : i32, i32
  }
  func.func @transform_1(%arg0: i32, %arg1: i32) -> (i32, i32) {
    %c0_i32 = arith.constant 0 : i32
    %c0_i32_0 = arith.constant 0 : i32
    return %arg1, %c0_i32 : i32, i32
  }
  func.func @transform_2(%arg0: i32, %arg1: i32) -> (i32, i32) {
    %c0_i32 = arith.constant 0 : i32
    %c0_i32_0 = arith.constant 0 : i32
    %c0_i32_1 = arith.constant 0 : i32
    return %c0_i32, %c0_i32_0 : i32, i32
  }
  func.func @transform_3(%arg0: i32, %arg1: i32) -> (i32, i32) {
    %c0_i32 = arith.constant 0 : i32
    %c0_i32_0 = arith.constant 0 : i32
    %c0_i32_1 = arith.constant 0 : i32
    return %c0_i32, %c0_i32_0 : i32, i32
  }
  func.func @transform_4(%arg0: i32, %arg1: i32) -> (i32, i32) {
    %c0_i32 = arith.constant 0 : i32
    %c0_i32_0 = arith.constant 0 : i32
    return %arg0, %c0_i32 : i32, i32
  }
}

module attributes {stable_mosaic.version = 11 : i64} {
  func.func @_gemm_bn_lrelu_kernel(%arg0: i32, %arg1: i32, %arg2: memref<8x2048xbf16, #tpu.memory_space<vmem>>, %arg3: memref<2048x128xbf16, #tpu.memory_space<vmem>>, %arg4: memref<1x128xf32, #tpu.memory_space<vmem>>, %arg5: memref<1x128xf32, #tpu.memory_space<vmem>>, %arg6: memref<8x128xf32, #tpu.memory_space<vmem>>, %arg7: memref<8x128xf32, #tpu.memory_space<vmem>>) attributes {dimension_semantics = [#tpu.dimension_semantics<parallel>, #tpu.dimension_semantics<arbitrary>], iteration_bounds = array<i64: 1, 4>, scalar_prefetch = 0 : i64, scratch_operands = 1 : i64, tpu.core_type = #tpu.core_type<tc>, window_params = [{transform_indices = @transform_0, window_bounds = array<i64: 8, 2048>}, {transform_indices = @transform_1, window_bounds = array<i64: 2048, 128>}, {pipeline_mode = #tpu.pipeline_mode<synchronous>, transform_indices = @transform_2, window_bounds = array<i64: 1, 128>}, {pipeline_mode = #tpu.pipeline_mode<synchronous>, transform_indices = @transform_3, window_bounds = array<i64: 1, 128>}, {transform_indices = @transform_4, window_bounds = array<i64: 8, 128>}]} {
    %c0_i32 = arith.constant 0 : i32
    %0 = arith.cmpi eq, %arg1, %c0_i32 : i32
    %1 = arith.extui %0 : i1 to i32
    %c0_i32_0 = arith.constant 0 : i32
    %2 = arith.cmpi ne, %1, %c0_i32_0 : i32
    scf.if %2 {
      %cst_9 = arith.constant 0.000000e+00 : f32
      %14 = vector.broadcast %cst_9 : f32 to vector<8x128xf32>
      %c0_10 = arith.constant 0 : index
      %c0_11 = arith.constant 0 : index
      %15 = vector.load %arg7[%c0_10, %c0_11] : memref<8x128xf32, #tpu.memory_space<vmem>>, vector<8x128xf32>
      tpu.vector_store %arg7[%c0_10, %c0_11], %14 {strides = array<i32>} : memref<8x128xf32, #tpu.memory_space<vmem>>, vector<8x128xf32>,
    } else {
    }
    %c0 = arith.constant 0 : index
    %c0_1 = arith.constant 0 : index
    %3 = vector.load %arg7[%c0, %c0_1] : memref<8x128xf32, #tpu.memory_space<vmem>>, vector<8x128xf32>
    %c0_2 = arith.constant 0 : index
    %c0_3 = arith.constant 0 : index
    %4 = vector.load %arg2[%c0_2, %c0_3] : memref<8x2048xbf16, #tpu.memory_space<vmem>>, vector<8x2048xbf16>
    %c0_4 = arith.constant 0 : index
    %c0_5 = arith.constant 0 : index
    %5 = vector.load %arg3[%c0_4, %c0_5] : memref<2048x128xbf16, #tpu.memory_space<vmem>>, vector<2048x128xbf16>
    %cst = arith.constant dense<0.000000e+00> : vector<8x128xf32>
    %6 = tpu.matmul %4, %5, %cst {dimension_numbers = #tpu.dot_dimension_numbers<[1], [0], [0], [1], [0, 0, 1, 1], [], []>} : vector<8x2048xbf16>, vector<2048x128xbf16>, vector<8x128xf32> -> vector<8x128xf32>
    %7 = arith.addf %3, %6 : vector<8x128xf32>
    %c3_i32 = arith.constant 3 : i32
    %8 = arith.cmpi slt, %arg1, %c3_i32 : i32
    %9 = arith.extui %8 : i1 to i32
    %c0_i32_6 = arith.constant 0 : i32
    %10 = arith.cmpi ne, %9, %c0_i32_6 : i32
    scf.if %10 {
      %c0_9 = arith.constant 0 : index
      %c0_10 = arith.constant 0 : index
      %14 = vector.load %arg7[%c0_9, %c0_10] : memref<8x128xf32, #tpu.memory_space<vmem>>, vector<8x128xf32>
      tpu.vector_store %arg7[%c0_9, %c0_10], %7 {strides = array<i32>} : memref<8x128xf32, #tpu.memory_space<vmem>>, vector<8x128xf32>,
    } else {
    }
    %c3_i32_7 = arith.constant 3 : i32
    %11 = arith.cmpi eq, %arg1, %c3_i32_7 : i32
    %12 = arith.extui %11 : i1 to i32
    %c0_i32_8 = arith.constant 0 : i32
    %13 = arith.cmpi ne, %12, %c0_i32_8 : i32
    scf.if %13 {
      %c0_9 = arith.constant 0 : index
      %c0_10 = arith.constant 0 : index
      %14 = vector.load %arg4[%c0_9, %c0_10] : memref<1x128xf32, #tpu.memory_space<vmem>>, vector<1x128xf32>
      %15 = vector.broadcast %14 : vector<1x128xf32> to vector<8x128xf32>
      %16 = arith.mulf %7, %15 : vector<8x128xf32>
      %c0_11 = arith.constant 0 : index
      %c0_12 = arith.constant 0 : index
      %17 = vector.load %arg5[%c0_11, %c0_12] : memref<1x128xf32, #tpu.memory_space<vmem>>, vector<1x128xf32>
      %18 = vector.broadcast %17 : vector<1x128xf32> to vector<8x128xf32>
      %19 = arith.addf %16, %18 : vector<8x128xf32>
      %c0_13 = arith.constant 0 : index
      %c0_14 = arith.constant 0 : index
      %20 = vector.load %arg6[%c0_13, %c0_14] : memref<8x128xf32, #tpu.memory_space<vmem>>, vector<8x128xf32>
      tpu.vector_store %arg6[%c0_13, %c0_14], %19 {strides = array<i32>} : memref<8x128xf32, #tpu.memory_space<vmem>>, vector<8x128xf32>,
    } else {
    }
    return
  }
  func.func @transform_0(%arg0: i32, %arg1: i32) -> (i32, i32) {
    %c0_i32 = arith.constant 0 : i32
    return %arg0, %arg1 : i32, i32
  }
  func.func @transform_1(%arg0: i32, %arg1: i32) -> (i32, i32) {
    %c0_i32 = arith.constant 0 : i32
    %c0_i32_0 = arith.constant 0 : i32
    return %arg1, %c0_i32 : i32, i32
  }
  func.func @transform_2(%arg0: i32, %arg1: i32) -> (i32, i32) {
    %c0_i32 = arith.constant 0 : i32
    %c0_i32_0 = arith.constant 0 : i32
    %c0_i32_1 = arith.constant 0 : i32
    return %c0_i32, %c0_i32_0 : i32, i32
  }
  func.func @transform_3(%arg0: i32, %arg1: i32) -> (i32, i32) {
    %c0_i32 = arith.constant 0 : i32
    %c0_i32_0 = arith.constant 0 : i32
    %c0_i32_1 = arith.constant 0 : i32
    return %c0_i32, %c0_i32_0 : i32, i32
  }
  func.func @transform_4(%arg0: i32, %arg1: i32) -> (i32, i32) {
    %c0_i32 = arith.constant 0 : i32
    %c0_i32_0 = arith.constant 0 : i32
    return %arg0, %c0_i32 : i32, i32
  }
}

</mosaic_0001>

<llo_original>
// kernel: discriminator_forward.5
$region0: #{discriminator_forward.5}
  #allocation0 [shape = 'u32[]', space=smem, size = 0x4, offset = 0x4, fixed_abs, tag = 'smem constant byte address 0x4 - core index']
  #allocation1 [shape = 'u32[144,128]{1,0:T(1,128)}', space=vmem, size = 0x12000, scoped, tag = 'internal scratch']
  #allocation2 [shape = 'f32[256,128]{1,0:T(8,128)}', space=vmem, size = 0x20000, scoped, tag = 'scratch operand']
  %s0 = inlined_call_operand.vmem [shape: bf16[512,128], index: 0, kind: input, shape index: {}]
  %s1 = inlined_call_operand.vmem [shape: bf16[128,128], index: 1, kind: input, shape index: {}]
  %s2 = inlined_call_operand.vmem [shape: f32[1,128], index: 2, kind: input, shape index: {}]
  %s3 = inlined_call_operand.vmem [shape: f32[1,128], index: 3, kind: input, shape index: {}]
  %s4 = inlined_call_operand.vmem [shape: bf16[512,128], index: 4, kind: output, shape index: {}]
  %s5 = sld [smem:[#allocation0]]
  $region61: #{discriminator_forward.5} parent=0
    _
  %s7 = ssub.s32 1, %s5
  %s8 = scalar_select 0, %s7, %s5
  loop: start=0, step=1, limit=4
  $region2: #{discriminator_forward.5} parent=0 // loop_pre_header
    _
  $region3: #{discriminator_forward.5} parent=0 // loop_header
    %s10 = sphi 0, %s14
    %p11 = scmp.ge.s32.totalorder %s10, 4
    %s17 = sphi 0, %s29
    %s18 = sphi 0, %s25
    %s19 = sphi 0, %s17
    %s20 = sphi 0, %s18
    %s21 = sphi 0, %s19
    %s22 = sphi 0, %s20
    %s34 = sphi 0, %s36
    %s37 = sphi 0, %s34
    %s38 = sphi 0, %s37
    %s54 = sphi 0, %s38
    %s60 = sphi 0, %s62
    %s63 = sphi 0, %s60
    %s64 = sphi 0, %s63
    %s80 = sphi 0, %s64
    %s84 = sphi 0, %s84
    %s86 = sphi 0, %s84
    %s87 = sphi 0, %s86
    %s101 = sphi 0, %s87
    %s105 = sphi 0, %s105
    %s107 = sphi 0, %s105
    %s108 = sphi 0, %s107
    %s122 = sphi 0, %s108
    %s128 = sphi 0, %s130
    %s131 = sphi 0, %s128
    %s132 = sphi 0, %s131
    %s148 = sphi 0, %s132
  $region4: #{discriminator_forward.5} parent=0 // loop_header_branch
    %13 = sbr.rel (%p11) target = $region8
  $region5: #{discriminator_forward.5} parent=0 // loop_body
    %s15 = ssub.s32 %s10, 1
    %s16 = ssub.s32 %s10, 2
    %s23 = sadd.s32 1, %s18
    %p24 = scmp.ge.s32.totalorder %s23, 1
    %s25 = scalar_select %p24, 0, %s23
    %s26 = sadd.s32 1, %s17
    %s27 = scalar_select %p24, %s26, %s17
    %p28 = scmp.ge.s32.totalorder %s27, 2
    %s29 = scalar_select %p28, 0, %s27
    %s30 = ssub.s32 %s17, %s29
    %s31 = ssub.s32 %s18, %s25
    %s32 = sor.u32 %s30, %s31
    %p33 = scmp.eq.s32.totalorder %s32, 0
    %s35 = sadd.s32 %s34, 1
    %s36 = scalar_select %p33, %s34, %s35
    %p39 = pneg %p33
    %p40 = scmp.eq.s32.totalorder %s10, 1
    %p41 = por %p39, %p40
    %p42 = scmp.ne.s32.totalorder %s34, %s37
    %p43 = scmp.eq.s32.totalorder %s10, 0
    %p44 = por %p42, %p43
    %p45 = scmp.ne.s32.totalorder %s34, %s37
    %p46 = scmp.eq.s32.totalorder %s15, 1
    %p47 = por %p45, %p46
    %p48 = scmp.ne.s32.totalorder %s37, %s38
    %p49 = scmp.eq.s32.totalorder %s15, 0
    %p50 = por %p48, %p49
    %p51 = scmp.ne.s32.totalorder %s37, %s38
    %p52 = scmp.eq.s32.totalorder %s16, 1
    %p53 = por %p51, %p52
    %p55 = scmp.ne.s32.totalorder %s38, %s54
    %p56 = scmp.eq.s32.totalorder %s16, 0
    %p57 = por %p55, %p56
    %s58 = ssub.s32 %s18, %s25
    %p59 = scmp.eq.s32.totalorder %s58, 0
    %s61 = sadd.s32 %s60, 1
    %s62 = scalar_select %p59, %s60, %s61
    %p65 = pneg %p59
    %p66 = scmp.eq.s32.totalorder %s10, 1
    %p67 = por %p65, %p66
    %p68 = scmp.ne.s32.totalorder %s60, %s63
    %p69 = scmp.eq.s32.totalorder %s10, 0
    %p70 = por %p68, %p69
    %p71 = scmp.ne.s32.totalorder %s60, %s63
    %p72 = scmp.eq.s32.totalorder %s15, 1
    %p73 = por %p71, %p72
    %p74 = scmp.ne.s32.totalorder %s63, %s64
    %p75 = scmp.eq.s32.totalorder %s15, 0
    %p76 = por %p74, %p75
    %p77 = scmp.ne.s32.totalorder %s63, %s64
    %p78 = scmp.eq.s32.totalorder %s16, 1
    %p79 = por %p77, %p78
    %p81 = scmp.ne.s32.totalorder %s64, %s80
    %p82 = scmp.eq.s32.totalorder %s16, 0
    %p83 = por %p81, %p82
    %s85 = sadd.s32 %s84, 1
    %p88 = scmp.eq.s32.totalorder %s10, 1
    %p89 = scmp.ne.s32.totalorder %s84, %s86
    %p90 = scmp.eq.s32.totalorder %s10, 0
    %p91 = por %p89, %p90
    %p92 = scmp.ne.s32.totalorder %s84, %s86
    %p93 = scmp.eq.s32.totalorder %s15, 1
    %p94 = por %p92, %p93
    %p95 = scmp.ne.s32.totalorder %s86, %s87
    %p96 = scmp.eq.s32.totalorder %s15, 0
    %p97 = por %p95, %p96
    %p98 = scmp.ne.s32.totalorder %s86, %s87
    %p99 = scmp.eq.s32.totalorder %s16, 1
    %p100 = por %p98, %p99
    %p102 = scmp.ne.s32.totalorder %s87, %s101
    %p103 = scmp.eq.s32.totalorder %s16, 0
    %p104 = por %p102, %p103
    %s106 = sadd.s32 %s105, 1
    %p109 = scmp.eq.s32.totalorder %s10, 1
    %p110 = scmp.ne.s32.totalorder %s105, %s107
    %p111 = scmp.eq.s32.totalorder %s10, 0
    %p112 = por %p110, %p111
    %p113 = scmp.ne.s32.totalorder %s105, %s107
    %p114 = scmp.eq.s32.totalorder %s15, 1
    %p115 = por %p113, %p114
    %p116 = scmp.ne.s32.totalorder %s107, %s108
    %p117 = scmp.eq.s32.totalorder %s15, 0
    %p118 = por %p116, %p117
    %p119 = scmp.ne.s32.totalorder %s107, %s108
    %p120 = scmp.eq.s32.totalorder %s16, 1
    %p121 = por %p119, %p120
    %p123 = scmp.ne.s32.totalorder %s108, %s122
    %p124 = scmp.eq.s32.totalorder %s16, 0
    %p125 = por %p123, %p124
    %s126 = ssub.s32 %s17, %s29
    %p127 = scmp.eq.s32.totalorder %s126, 0
    %s129 = sadd.s32 %s128, 1
    %s130 = scalar_select %p127, %s128, %s129
    %p133 = pneg %p127
    %p134 = scmp.eq.s32.totalorder %s10, 1
    %p135 = por %p133, %p134
    %p136 = scmp.ne.s32.totalorder %s128, %s131
    %p137 = scmp.eq.s32.totalorder %s10, 0
    %p138 = por %p136, %p137
    %p139 = scmp.ne.s32.totalorder %s128, %s131
    %p140 = scmp.eq.s32.totalorder %s15, 1
    %p141 = por %p139, %p140
    %p142 = scmp.ne.s32.totalorder %s131, %s132
    %p143 = scmp.eq.s32.totalorder %s15, 0
    %p144 = por %p142, %p143
    %p145 = scmp.ne.s32.totalorder %s131, %s132
    %p146 = scmp.eq.s32.totalorder %s16, 1
    %p147 = por %p145, %p146
    %p149 = scmp.ne.s32.totalorder %s132, %s148
    %p150 = scmp.eq.s32.totalorder %s16, 0
    %p151 = por %p149, %p150
    %p152 = scmp.le.s32.totalorder 1, %s10
    %p153 = scmp.lt.s32.totalorder %s10, 3
    %p154 = pnand %p152, %p153
    %p155 = pneg %p154
    // Predicated region
    $region9: #{discriminator_forward.5} parent=5 // pred_check
      _
    $region10: #{discriminator_forward.5} parent=5 // pred_check_branch
      %157 = sbr.rel (%p154) target = $region12
    $region11: #{discriminator_forward.5} parent=5 // pred_region
      %s158 = ssub.s32 %s10, 1
      // Predicated region
      $region13: #{discriminator_forward.5} parent=11 // pred_check
        %p159 = pneg %p76
      $region14: #{discriminator_forward.5} parent=11 // pred_check_branch
        %161 = sbr.rel (%p159) target = $region16
      $region15: #{discriminator_forward.5} parent=11 // pred_region
        %s162 = smul.u32 16, %s20
        %p163 = scmp.lt.s32.totalorder %s162, 15
        %s164 = scalar_select %p163, %s162, 15
        %s165 = smul.addr %s164, 4
        %s166 = scalar_lea.vmem %s1, %s165
        %s167 = smul.u32 16, %s20
      $region16: #{discriminator_forward.5} parent=11 // pred_fallthru
        _
      // Predicated region
      $region17: #{discriminator_forward.5} parent=11 // pred_check
        %p168 = pneg %p97
      $region18: #{discriminator_forward.5} parent=11 // pred_check_branch
        %170 = sbr.rel (%p168) target = $region20
      $region19: #{discriminator_forward.5} parent=11 // pred_region
        _
      $region20: #{discriminator_forward.5} parent=11 // pred_fallthru
        _
      // Predicated region
      $region21: #{discriminator_forward.5} parent=11 // pred_check
        %p171 = pneg %p118
      $region22: #{discriminator_forward.5} parent=11 // pred_check_branch
        %173 = sbr.rel (%p171) target = $region24
      $region23: #{discriminator_forward.5} parent=11 // pred_region
        _
      $region24: #{discriminator_forward.5} parent=11 // pred_fallthru
        _
    $region12: #{discriminator_forward.5} parent=5 // pred_fallthru
      _
    %p174 = scmp.lt.s32.totalorder %s10, 2
    // Predicated region
    $region25: #{discriminator_forward.5} parent=5 // pred_check
      %p175 = pneg %p174
    $region26: #{discriminator_forward.5} parent=5 // pred_check_branch
      %177 = sbr.rel (%p175) target = $region28
    $region27: #{discriminator_forward.5} parent=5 // pred_region
      // Predicated region
      $region29: #{discriminator_forward.5} parent=27 // pred_check
        %p178 = pneg %p44
      $region30: #{discriminator_forward.5} parent=27 // pred_check_branch
        %180 = sbr.rel (%p178) target = $region32
      $region31: #{discriminator_forward.5} parent=27 // pred_region
        %s181 = smul.u32 32, %s17
        %p182 = scmp.lt.s32.totalorder %s181, 63
        %s183 = scalar_select %p182, %s181, 63
        %p184 = scmp.lt.s32.totalorder %s18, 0
        %s185 = scalar_select %p184, %s18, 0
        %s186 = sadd.s32 %s185, %s183
        %s187 = smul.addr %s186, 4
        %s188 = scalar_lea.vmem %s0, %s187
        %s189 = smul.u32 32, %s17
      $region32: #{discriminator_forward.5} parent=27 // pred_fallthru
        _
    $region28: #{discriminator_forward.5} parent=5 // pred_fallthru
      _
    %p190 = scmp.le.s32.totalorder 1, %s10
    %p191 = scmp.lt.s32.totalorder %s10, 3
    %p192 = pnand %p190, %p191
    %p193 = pneg %p192
    // Predicated region
    $region33: #{discriminator_forward.5} parent=5 // pred_check
      _
    $region34: #{discriminator_forward.5} parent=5 // pred_check_branch
      %195 = sbr.rel (%p192) target = $region36
    $region35: #{discriminator_forward.5} parent=5 // pred_region
      %s196 = ssub.s32 %s10, 1
      %s197 = smul.u32 32, %s19
      %p198 = scmp.lt.s32.totalorder %s197, 63
      %s199 = scalar_select %p198, %s197, 63
      %p200 = scmp.lt.s32.totalorder %s20, 0
      %s201 = scalar_select %p200, %s20, 0
      %s202 = sadd.s32 %s201, %s199
      %s203 = smul.addr %s202, 4
      %s204 = scalar_lea.vmem %s0, %s203
      %p205 = pneg %p50
      %p206 = pneg %p47
      %s207 = smul.u32 16, %s20
      %p208 = scmp.lt.s32.totalorder %s207, 15
      %s209 = scalar_select %p208, %s207, 15
      %s210 = smul.addr %s209, 4
      %s211 = scalar_lea.vmem %s1, %s210
      %p212 = pneg %p76
      %p213 = pneg %p73
      %p214 = pneg %p97
      %p215 = pneg %p94
      %p216 = pneg %p118
      %p217 = pneg %p115
      %p218 = pneg %p144
      %p219 = pneg %p141
      %s220 = smul.u32 32, %s19
      %p221 = scmp.lt.s32.totalorder %s220, 63
      %s222 = scalar_select %p221, %s220, 63
      %s223 = smul.addr %s222, 4
      %s224 = scalar_lea.vmem %s4, %s223
      %s225 = smul.u32 32, %s19
      %p226 = scmp.lt.s32.totalorder %s225, 63
      %s227 = scalar_select %p226, %s225, 63
      %p228 = scmp.lt.s32.totalorder %s20, 0
      %s229 = scalar_select %p228, %s20, 0
      %s230 = sadd.s32 %s229, %s227
      %s231 = smul.addr %s230, 4
      %s232 = scalar_lea.vmem %s0, %s231
      %s233 = smul.u32 32, %s19
      %s234 = smul.u32 16, %s20
      %p235 = scmp.lt.s32.totalorder %s234, 15
      %s236 = scalar_select %p235, %s234, 15
      %s237 = smul.addr %s236, 4
      %s238 = scalar_lea.vmem %s1, %s237
      %s239 = smul.u32 16, %s20
      %s240 = smul.u32 32, %s19
      %p241 = scmp.lt.s32.totalorder %s240, 63
      %s242 = scalar_select %p241, %s240, 63
      %s243 = smul.addr %s242, 4
      %s244 = scalar_lea.vmem %s4, %s243
      %s245 = smul.u32 32, %s19
      %p247 = scmp.eq.s32.totalorder %s20, 0
      // Predicated region
      $region37: #{discriminator_forward.5} parent=35 // pred_check
        %p248 = pneg %p247
      $region38: #{discriminator_forward.5} parent=35 // pred_check_branch
        %250 = sbr.rel (%p248) target = $region40
      $region39: #{discriminator_forward.5} parent=35 // pred_region
        %251 = vst [vmem:[#allocation2] sm:$0xff] 0.0
        %252 = vst [vmem:[#allocation2 + $0x8] sm:$0xff] 0.0
        %253 = vst [vmem:[#allocation2 + $0x10] sm:$0xff] 0.0
        %254 = vst [vmem:[#allocation2 + $0x18] sm:$0xff] 0.0
        %255 = vst [vmem:[#allocation2 + $0x20] sm:$0xff] 0.0
        %256 = vst [vmem:[#allocation2 + $0x28] sm:$0xff] 0.0
        %257 = vst [vmem:[#allocation2 + $0x30] sm:$0xff] 0.0
        %258 = vst [vmem:[#allocation2 + $0x38] sm:$0xff] 0.0
        %259 = vst [vmem:[#allocation2 + $0x40] sm:$0xff] 0.0
        %260 = vst [vmem:[#allocation2 + $0x48] sm:$0xff] 0.0
        %261 = vst [vmem:[#allocation2 + $0x50] sm:$0xff] 0.0
        %262 = vst [vmem:[#allocation2 + $0x58] sm:$0xff] 0.0
        %263 = vst [vmem:[#allocation2 + $0x60] sm:$0xff] 0.0
        %264 = vst [vmem:[#allocation2 + $0x68] sm:$0xff] 0.0
        %265 = vst [vmem:[#allocation2 + $0x70] sm:$0xff] 0.0
        %266 = vst [vmem:[#allocation2 + $0x78] sm:$0xff] 0.0
        %267 = vst [vmem:[#allocation2 + $0x80] sm:$0xff] 0.0
        %268 = vst [vmem:[#allocation2 + $0x88] sm:$0xff] 0.0
        %269 = vst [vmem:[#allocation2 + $0x90] sm:$0xff] 0.0
        %270 = vst [vmem:[#allocation2 + $0x98] sm:$0xff] 0.0
        %271 = vst [vmem:[#allocation2 + $0xa0] sm:$0xff] 0.0
        %272 = vst [vmem:[#allocation2 + $0xa8] sm:$0xff] 0.0
        %273 = vst [vmem:[#allocation2 + $0xb0] sm:$0xff] 0.0
        %274 = vst [vmem:[#allocation2 + $0xb8] sm:$0xff] 0.0
        %275 = vst [vmem:[#allocation2 + $0xc0] sm:$0xff] 0.0
        %276 = vst [vmem:[#allocation2 + $0xc8] sm:$0xff] 0.0
        %277 = vst [vmem:[#allocation2 + $0xd0] sm:$0xff] 0.0
        %278 = vst [vmem:[#allocation2 + $0xd8] sm:$0xff] 0.0
        %279 = vst [vmem:[#allocation2 + $0xe0] sm:$0xff] 0.0
        %280 = vst [vmem:[#allocation2 + $0xe8] sm:$0xff] 0.0
        %281 = vst [vmem:[#allocation2 + $0xf0] sm:$0xff] 0.0
        %282 = vst [vmem:[#allocation2 + $0xf8] sm:$0xff] 0.0
      $region40: #{discriminator_forward.5} parent=35 // pred_fallthru
        _
      %v283 = vld [vmem:[#allocation2] sm:$0xff]
      %v284 = vld [vmem:[#allocation2 + $0x8] sm:$0xff]
      %v285 = vld [vmem:[#allocation2 + $0x10] sm:$0xff]
      %v286 = vld [vmem:[#allocation2 + $0x18] sm:$0xff]
      %v287 = vld [vmem:[#allocation2 + $0x20] sm:$0xff]
      %v288 = vld [vmem:[#allocation2 + $0x28] sm:$0xff]
      %v289 = vld [vmem:[#allocation2 + $0x30] sm:$0xff]
      %v290 = vld [vmem:[#allocation2 + $0x38] sm:$0xff]
      %v291 = vld [vmem:[#allocation2 + $0x40] sm:$0xff]
      %v292 = vld [vmem:[#allocation2 + $0x48] sm:$0xff]
      %v293 = vld [vmem:[#allocation2 + $0x50] sm:$0xff]
      %v294 = vld [vmem:[#allocation2 + $0x58] sm:$0xff]
      %v295 = vld [vmem:[#allocation2 + $0x60] sm:$0xff]
      %v296 = vld [vmem:[#allocation2 + $0x68] sm:$0xff]
      %v297 = vld [vmem:[#allocation2 + $0x70] sm:$0xff]
      %v298 = vld [vmem:[#allocation2 + $0x78] sm:$0xff]
      %v299 = vld [vmem:[#allocation2 + $0x80] sm:$0xff]
      %v300 = vld [vmem:[#allocation2 + $0x88] sm:$0xff]
      %v301 = vld [vmem:[#allocation2 + $0x90] sm:$0xff]
      %v302 = vld [vmem:[#allocation2 + $0x98] sm:$0xff]
      %v303 = vld [vmem:[#allocation2 + $0xa0] sm:$0xff]
      %v304 = vld [vmem:[#allocation2 + $0xa8] sm:$0xff]
      %v305 = vld [vmem:[#allocation2 + $0xb0] sm:$0xff]
      %v306 = vld [vmem:[#allocation2 + $0xb8] sm:$0xff]
      %v307 = vld [vmem:[#allocation2 + $0xc0] sm:$0xff]
      %v308 = vld [vmem:[#allocation2 + $0xc8] sm:$0xff]
      %v309 = vld [vmem:[#allocation2 + $0xd0] sm:$0xff]
      %v310 = vld [vmem:[#allocation2 + $0xd8] sm:$0xff]
      %v311 = vld [vmem:[#allocation2 + $0xe0] sm:$0xff]
      %v312 = vld [vmem:[#allocation2 + $0xe8] sm:$0xff]
      %v313 = vld [vmem:[#allocation2 + $0xf0] sm:$0xff]
      %v314 = vld [vmem:[#allocation2 + $0xf8] sm:$0xff]
      %v315 = vld [vmem:[%s232] sm:$0xf]
      %v316 = vld [vmem:[%s232 + $0x4] sm:$0xf]
      %v317 = vld [vmem:[%s232 + $0x8] sm:$0xf]
      %v318 = vld [vmem:[%s232 + $0xc] sm:$0xf]
      %v319 = vld [vmem:[%s232 + $0x10] sm:$0xf]
      %v320 = vld [vmem:[%s232 + $0x14] sm:$0xf]
      %v321 = vld [vmem:[%s232 + $0x18] sm:$0xf]
      %v322 = vld [vmem:[%s232 + $0x1c] sm:$0xf]
      %v323 = vld [vmem:[%s232 + $0x20] sm:$0xf]
      %v324 = vld [vmem:[%s232 + $0x24] sm:$0xf]
      %v325 = vld [vmem:[%s232 + $0x28] sm:$0xf]
      %v326 = vld [vmem:[%s232 + $0x2c] sm:$0xf]
      %v327 = vld [vmem:[%s232 + $0x30] sm:$0xf]
      %v328 = vld [vmem:[%s232 + $0x34] sm:$0xf]
      %v329 = vld [vmem:[%s232 + $0x38] sm:$0xf]
      %v330 = vld [vmem:[%s232 + $0x3c] sm:$0xf]
      %v331 = vld [vmem:[%s232 + $0x40] sm:$0xf]
      %v332 = vld [vmem:[%s232 + $0x44] sm:$0xf]
      %v333 = vld [vmem:[%s232 + $0x48] sm:$0xf]
      %v334 = vld [vmem:[%s232 + $0x4c] sm:$0xf]
      %v335 = vld [vmem:[%s232 + $0x50] sm:$0xf]
      %v336 = vld [vmem:[%s232 + $0x54] sm:$0xf]
      %v337 = vld [vmem:[%s232 + $0x58] sm:$0xf]
      %v338 = vld [vmem:[%s232 + $0x5c] sm:$0xf]
      %v339 = vld [vmem:[%s232 + $0x60] sm:$0xf]
      %v340 = vld [vmem:[%s232 + $0x64] sm:$0xf]
      %v341 = vld [vmem:[%s232 + $0x68] sm:$0xf]
      %v342 = vld [vmem:[%s232 + $0x6c] sm:$0xf]
      %v343 = vld [vmem:[%s232 + $0x70] sm:$0xf]
      %v344 = vld [vmem:[%s232 + $0x74] sm:$0xf]
      %v345 = vld [vmem:[%s232 + $0x78] sm:$0xf]
      %v346 = vld [vmem:[%s232 + $0x7c] sm:$0xf]
      %v347 = vld [vmem:[%s238] sm:$0xf]
      %v348 = vld [vmem:[%s238 + $0x4] sm:$0xf]
      %v349 = vld [vmem:[%s238 + $0x8] sm:$0xf]
      %v350 = vld [vmem:[%s238 + $0xc] sm:$0xf]
      %v351 = vld [vmem:[%s238 + $0x10] sm:$0xf]
      %v352 = vld [vmem:[%s238 + $0x14] sm:$0xf]
      %v353 = vld [vmem:[%s238 + $0x18] sm:$0xf]
      %v354 = vld [vmem:[%s238 + $0x1c] sm:$0xf]
      %v355 = vld [vmem:[%s238 + $0x20] sm:$0xf]
      %v356 = vld [vmem:[%s238 + $0x24] sm:$0xf]
      %v357 = vld [vmem:[%s238 + $0x28] sm:$0xf]
      %v358 = vld [vmem:[%s238 + $0x2c] sm:$0xf]
      %v359 = vld [vmem:[%s238 + $0x30] sm:$0xf]
      %v360 = vld [vmem:[%s238 + $0x34] sm:$0xf]
      %v361 = vld [vmem:[%s238 + $0x38] sm:$0xf]
      %v362 = vld [vmem:[%s238 + $0x3c] sm:$0xf]
      %v395 = vunpack.c.l.b16 %v315
      %v396 = vunpack.c.l.b16 %v316
      %v397 = vunpack.c.l.b16 %v317
      %v398 = vunpack.c.l.b16 %v318
      %v399 = vunpack.c.l.b16 %v319
      %v400 = vunpack.c.l.b16 %v320
      %v401 = vunpack.c.l.b16 %v321
      %v402 = vunpack.c.l.b16 %v322
      %v403 = vunpack.c.l.b16 %v323
      %v404 = vunpack.c.l.b16 %v324
      %v405 = vunpack.c.l.b16 %v325
      %v406 = vunpack.c.l.b16 %v326
      %v407 = vunpack.c.l.b16 %v327
      %v408 = vunpack.c.l.b16 %v328
      %v409 = vunpack.c.l.b16 %v329
      %v410 = vunpack.c.l.b16 %v330
      %v411 = vunpack.c.l.b16 %v331
      %v412 = vunpack.c.l.b16 %v332
      %v413 = vunpack.c.l.b16 %v333
      %v414 = vunpack.c.l.b16 %v334
      %v415 = vunpack.c.l.b16 %v335
      %v416 = vunpack.c.l.b16 %v336
      %v417 = vunpack.c.l.b16 %v337
      %v418 = vunpack.c.l.b16 %v338
      %v419 = vunpack.c.l.b16 %v339
      %v420 = vunpack.c.l.b16 %v340
      %v421 = vunpack.c.l.b16 %v341
      %v422 = vunpack.c.l.b16 %v342
      %v423 = vunpack.c.l.b16 %v343
      %v424 = vunpack.c.l.b16 %v344
      %v425 = vunpack.c.l.b16 %v345
      %v426 = vunpack.c.l.b16 %v346
      %v427 = vpack.c.b16 %v396, %v395
      %v428 = vpack.c.b16 %v398, %v397
      %v429 = vpack.c.b16 %v400, %v399
      %v430 = vpack.c.b16 %v402, %v401
      %v431 = vpack.c.b16 %v404, %v403
      %v432 = vpack.c.b16 %v406, %v405
      %v433 = vpack.c.b16 %v408, %v407
      %v434 = vpack.c.b16 %v410, %v409
      %v435 = vpack.c.b16 %v412, %v411
      %v436 = vpack.c.b16 %v414, %v413
      %v437 = vpack.c.b16 %v416, %v415
      %v438 = vpack.c.b16 %v418, %v417
      %v439 = vpack.c.b16 %v420, %v419
      %v440 = vpack.c.b16 %v422, %v421
      %v441 = vpack.c.b16 %v424, %v423
      %v442 = vpack.c.b16 %v426, %v425
      %v475 = vunpack.c.l.b16 %v347
      %v476 = vunpack.c.l.b16 %v348
      %v477 = vunpack.c.l.b16 %v349
      %v478 = vunpack.c.l.b16 %v350
      %v479 = vunpack.c.l.b16 %v351
      %v480 = vunpack.c.l.b16 %v352
      %v481 = vunpack.c.l.b16 %v353
      %v482 = vunpack.c.l.b16 %v354
      %v483 = vunpack.c.l.b16 %v355
      %v484 = vunpack.c.l.b16 %v356
      %v485 = vunpack.c.l.b16 %v357
      %v486 = vunpack.c.l.b16 %v358
      %v487 = vunpack.c.l.b16 %v359
      %v488 = vunpack.c.l.b16 %v360
      %v489 = vunpack.c.l.b16 %v361
      %v490 = vunpack.c.l.b16 %v362
      %v491 = vpack.c.b16 %v476, %v475
      %v492 = vpack.c.b16 %v478, %v477
      %v493 = vpack.c.b16 %v480, %v479
      %v494 = vpack.c.b16 %v482, %v481
      %v495 = vpack.c.b16 %v484, %v483
      %v496 = vpack.c.b16 %v486, %v485
      %v497 = vpack.c.b16 %v488, %v487
      %v498 = vpack.c.b16 %v490, %v489
      %507 = vmatprep.subr.bf16.mxu0 0
      %508 = vmatpush1.bf16.msra.mxu0 %v491
      %509 = vmatprep.subr.bf16.mxu0 0
      %510 = vmatpush1.bf16.msra.mxu0 %v492
      %511 = vmatprep.subr.bf16.mxu0 0
      %512 = vmatpush1.bf16.msra.mxu0 %v493
      %513 = vmatprep.subr.bf16.mxu0 0
      %514 = vmatpush1.bf16.msra.mxu0 %v494
      %515 = vmatprep.subr.bf16.mxu0 0
      %516 = vmatpush1.bf16.msra.mxu0 %v495
      %517 = vmatprep.subr.bf16.mxu0 0
      %518 = vmatpush1.bf16.msra.mxu0 %v496
      %519 = vmatprep.subr.bf16.mxu0 0
      %520 = vmatpush1.bf16.msra.mxu0 %v497
      %521 = vmatprep.subr.bf16.mxu0 0
      %522 = vmatpush1.bf16.msra.mxu0 %v498
      %523 = vmatprep.subr.bf16.mxu0 0
      %524 = vmatpush1.bf16.msra.mxu0 0
      %525 = vmatprep.subr.bf16.mxu0 0
      %526 = vmatpush1.bf16.msra.mxu0 0
      %527 = vmatprep.subr.bf16.mxu0 0
      %528 = vmatpush1.bf16.msra.mxu0 0
      %529 = vmatprep.subr.bf16.mxu0 0
      %530 = vmatpush1.bf16.msra.mxu0 0
      %531 = vmatprep.subr.bf16.mxu0 0
      %532 = vmatpush1.bf16.msra.mxu0 0
      %533 = vmatprep.subr.bf16.mxu0 0
      %534 = vmatpush1.bf16.msra.mxu0 0
      %535 = vmatprep.subr.bf16.mxu0 0
      %536 = vmatpush1.bf16.msra.mxu0 0
      %537 = vmatprep.subr.bf16.mxu0 0
      %538 = vmatpush1.bf16.msra.mxu0 0
      %539 = vmatprep.mubr.bf16.mxu0 0
      %540 = vmatmul.mubr.bf16.gmra.mrb[0].mxu0 %v427
      %v541 = vpop.f32.mrb[0].mxu0
      %v542 = vadd.f32 0.0, %v541
      %v543 = vpop.f32.mrb[0].mxu0
      %v544 = vpop.f32.mrb[0].mxu0
      %v545 = vadd.f32 0.0, %v544
      %v546 = vpop.f32.mrb[0].mxu0
      %547 = vmatprep.mubr.bf16.mxu0 0
      %548 = vmatmul.mubr.bf16.gmra.mrb[0].mxu0 %v428
      %v549 = vpop.f32.mrb[0].mxu0
      %v550 = vadd.f32 0.0, %v549
      %v551 = vpop.f32.mrb[0].mxu0
      %v552 = vpop.f32.mrb[0].mxu0
      %v553 = vadd.f32 0.0, %v552
      %v554 = vpop.f32.mrb[0].mxu0
      %555 = vmatprep.mubr.bf16.mxu0 0
      %556 = vmatmul.mubr.bf16.gmra.mrb[0].mxu0 %v429
      %v557 = vpop.f32.mrb[0].mxu0
      %v558 = vadd.f32 0.0, %v557
      %v559 = vpop.f32.mrb[0].mxu0
      %v560 = vpop.f32.mrb[0].mxu0
      %v561 = vadd.f32 0.0, %v560
      %v562 = vpop.f32.mrb[0].mxu0
      %563 = vmatprep.mubr.bf16.mxu0 0
      %564 = vmatmul.mubr.bf16.gmra.mrb[0].mxu0 %v430
      %v565 = vpop.f32.mrb[0].mxu0
      %v566 = vadd.f32 0.0, %v565
      %v567 = vpop.f32.mrb[0].mxu0
      %v568 = vpop.f32.mrb[0].mxu0
      %v569 = vadd.f32 0.0, %v568
      %v570 = vpop.f32.mrb[0].mxu0
      %571 = vmatprep.mubr.bf16.mxu0 0
      %572 = vmatmul.mubr.bf16.gmra.mrb[0].mxu0 %v431
      %v573 = vpop.f32.mrb[0].mxu0
      %v574 = vadd.f32 0.0, %v573
      %v575 = vpop.f32.mrb[0].mxu0
      %v576 = vpop.f32.mrb[0].mxu0
      %v577 = vadd.f32 0.0, %v576
      %v578 = vpop.f32.mrb[0].mxu0
      %579 = vmatprep.mubr.bf16.mxu0 0
      %580 = vmatmul.mubr.bf16.gmra.mrb[0].mxu0 %v432
      %v581 = vpop.f32.mrb[0].mxu0
      %v582 = vadd.f32 0.0, %v581
      %v583 = vpop.f32.mrb[0].mxu0
      %v584 = vpop.f32.mrb[0].mxu0
      %v585 = vadd.f32 0.0, %v584
      %v586 = vpop.f32.mrb[0].mxu0
      %587 = vmatprep.mubr.bf16.mxu0 0
      %588 = vmatmul.mubr.bf16.gmra.mrb[0].mxu0 %v433
      %v589 = vpop.f32.mrb[0].mxu0
      %v590 = vadd.f32 0.0, %v589
      %v591 = vpop.f32.mrb[0].mxu0
      %v592 = vpop.f32.mrb[0].mxu0
      %v593 = vadd.f32 0.0, %v592
      %v594 = vpop.f32.mrb[0].mxu0
      %595 = vmatprep.mubr.bf16.mxu0 0
      %596 = vmatmul.mubr.bf16.gmra.mrb[0].mxu0 %v434
      %v597 = vpop.f32.mrb[0].mxu0
      %v598 = vadd.f32 0.0, %v597
      %v599 = vpop.f32.mrb[0].mxu0
      %v600 = vpop.f32.mrb[0].mxu0
      %v601 = vadd.f32 0.0, %v600
      %v602 = vpop.f32.mrb[0].mxu0
      %603 = vmatprep.mubr.bf16.mxu0 0
      %604 = vmatmul.mubr.bf16.gmra.mrb[0].mxu0 %v435
      %v605 = vpop.f32.mrb[0].mxu0
      %v606 = vadd.f32 0.0, %v605
      %v607 = vpop.f32.mrb[0].mxu0
      %v608 = vpop.f32.mrb[0].mxu0
      %v609 = vadd.f32 0.0, %v608
      %v610 = vpop.f32.mrb[0].mxu0
      %611 = vmatprep.mubr.bf16.mxu0 0
      %612 = vmatmul.mubr.bf16.gmra.mrb[0].mxu0 %v436
      %v613 = vpop.f32.mrb[0].mxu0
      %v614 = vadd.f32 0.0, %v613
      %v615 = vpop.f32.mrb[0].mxu0
      %v616 = vpop.f32.mrb[0].mxu0
      %v617 = vadd.f32 0.0, %v616
      %v618 = vpop.f32.mrb[0].mxu0
      %619 = vmatprep.mubr.bf16.mxu0 0
      %620 = vmatmul.mubr.bf16.gmra.mrb[0].mxu0 %v437
      %v621 = vpop.f32.mrb[0].mxu0
      %v622 = vadd.f32 0.0, %v621
      %v623 = vpop.f32.mrb[0].mxu0
      %v624 = vpop.f32.mrb[0].mxu0
      %v625 = vadd.f32 0.0, %v624
      %v626 = vpop.f32.mrb[0].mxu0
      %627 = vmatprep.mubr.bf16.mxu0 0
      %628 = vmatmul.mubr.bf16.gmra.mrb[0].mxu0 %v438
      %v629 = vpop.f32.mrb[0].mxu0
      %v630 = vadd.f32 0.0, %v629
      %v631 = vpop.f32.mrb[0].mxu0
      %v632 = vpop.f32.mrb[0].mxu0
      %v633 = vadd.f32 0.0, %v632
      %v634 = vpop.f32.mrb[0].mxu0
      %635 = vmatprep.mubr.bf16.mxu0 0
      %636 = vmatmul.mubr.bf16.gmra.mrb[0].mxu0 %v439
      %v637 = vpop.f32.mrb[0].mxu0
      %v638 = vadd.f32 0.0, %v637
      %v639 = vpop.f32.mrb[0].mxu0
      %v640 = vpop.f32.mrb[0].mxu0
      %v641 = vadd.f32 0.0, %v640
      %v642 = vpop.f32.mrb[0].mxu0
      %643 = vmatprep.mubr.bf16.mxu0 0
      %644 = vmatmul.mubr.bf16.gmra.mrb[0].mxu0 %v440
      %v645 = vpop.f32.mrb[0].mxu0
      %v646 = vadd.f32 0.0, %v645
      %v647 = vpop.f32.mrb[0].mxu0
      %v648 = vpop.f32.mrb[0].mxu0
      %v649 = vadd.f32 0.0, %v648
      %v650 = vpop.f32.mrb[0].mxu0
      %651 = vmatprep.mubr.bf16.mxu0 0
      %652 = vmatmul.mubr.bf16.gmra.mrb[0].mxu0 %v441
      %v653 = vpop.f32.mrb[0].mxu0
      %v654 = vadd.f32 0.0, %v653
      %v655 = vpop.f32.mrb[0].mxu0
      %v656 = vpop.f32.mrb[0].mxu0
      %v657 = vadd.f32 0.0, %v656
      %v658 = vpop.f32.mrb[0].mxu0
      %659 = vmatprep.mubr.bf16.mxu0 0
      %660 = vmatmul.mubr.bf16.gmra.mrb[0].mxu0 %v442
      %v661 = vpop.f32.mrb[0].mxu0
      %v662 = vadd.f32 0.0, %v661
      %v663 = vpop.f32.mrb[0].mxu0
      %v664 = vpop.f32.mrb[0].mxu0
      %v665 = vadd.f32 0.0, %v664
      %v666 = vpop.f32.mrb[0].mxu0
      %667 = vdwg.mxu0
      %v668 = vadd.f32 %v283, %v542
      %v669 = vadd.f32 %v284, %v545
      %v670 = vadd.f32 %v285, %v550
      %v671 = vadd.f32 %v286, %v553
      %v672 = vadd.f32 %v287, %v558
      %v673 = vadd.f32 %v288, %v561
      %v674 = vadd.f32 %v289, %v566
      %v675 = vadd.f32 %v290, %v569
      %v676 = vadd.f32 %v291, %v574
      %v677 = vadd.f32 %v292, %v577
      %v678 = vadd.f32 %v293, %v582
      %v679 = vadd.f32 %v294, %v585
      %v680 = vadd.f32 %v295, %v590
      %v681 = vadd.f32 %v296, %v593
      %v682 = vadd.f32 %v297, %v598
      %v683 = vadd.f32 %v298, %v601
      %v684 = vadd.f32 %v299, %v606
      %v685 = vadd.f32 %v300, %v609
      %v686 = vadd.f32 %v301, %v614
      %v687 = vadd.f32 %v302, %v617
      %v688 = vadd.f32 %v303, %v622
      %v689 = vadd.f32 %v304, %v625
      %v690 = vadd.f32 %v305, %v630
      %v691 = vadd.f32 %v306, %v633
      %v692 = vadd.f32 %v307, %v638
      %v693 = vadd.f32 %v308, %v641
      %v694 = vadd.f32 %v309, %v646
      %v695 = vadd.f32 %v310, %v649
      %v696 = vadd.f32 %v311, %v654
      %v697 = vadd.f32 %v312, %v657
      %v698 = vadd.f32 %v313, %v662
      %v699 = vadd.f32 %v314, %v665
      %p700 = scmp.lt.s32.totalorder %s20, 0
      // Predicated region
      $region41: #{discriminator_forward.5} parent=35 // pred_check
        %p701 = pneg %p700
      $region42: #{discriminator_forward.5} parent=35 // pred_check_branch
        %703 = sbr.rel (%p701) target = $region44
      $region43: #{discriminator_forward.5} parent=35 // pred_region
        %704 = vst [vmem:[#allocation2] sm:$0xff] %v668
        %705 = vst [vmem:[#allocation2 + $0x8] sm:$0xff] %v669
        %706 = vst [vmem:[#allocation2 + $0x10] sm:$0xff] %v670
        %707 = vst [vmem:[#allocation2 + $0x18] sm:$0xff] %v671
        %708 = vst [vmem:[#allocation2 + $0x20] sm:$0xff] %v672
        %709 = vst [vmem:[#allocation2 + $0x28] sm:$0xff] %v673
        %710 = vst [vmem:[#allocation2 + $0x30] sm:$0xff] %v674
        %711 = vst [vmem:[#allocation2 + $0x38] sm:$0xff] %v675
        %712 = vst [vmem:[#allocation2 + $0x40] sm:$0xff] %v676
        %713 = vst [vmem:[#allocation2 + $0x48] sm:$0xff] %v677
        %714 = vst [vmem:[#allocation2 + $0x50] sm:$0xff] %v678
        %715 = vst [vmem:[#allocation2 + $0x58] sm:$0xff] %v679
        %716 = vst [vmem:[#allocation2 + $0x60] sm:$0xff] %v680
        %717 = vst [vmem:[#allocation2 + $0x68] sm:$0xff] %v681
        %718 = vst [vmem:[#allocation2 + $0x70] sm:$0xff] %v682
        %719 = vst [vmem:[#allocation2 + $0x78] sm:$0xff] %v683
        %720 = vst [vmem:[#allocation2 + $0x80] sm:$0xff] %v684
        %721 = vst [vmem:[#allocation2 + $0x88] sm:$0xff] %v685
        %722 = vst [vmem:[#allocation2 + $0x90] sm:$0xff] %v686
        %723 = vst [vmem:[#allocation2 + $0x98] sm:$0xff] %v687
        %724 = vst [vmem:[#allocation2 + $0xa0] sm:$0xff] %v688
        %725 = vst [vmem:[#allocation2 + $0xa8] sm:$0xff] %v689
        %726 = vst [vmem:[#allocation2 + $0xb0] sm:$0xff] %v690
        %727 = vst [vmem:[#allocation2 + $0xb8] sm:$0xff] %v691
        %728 = vst [vmem:[#allocation2 + $0xc0] sm:$0xff] %v692
        %729 = vst [vmem:[#allocation2 + $0xc8] sm:$0xff] %v693
        %730 = vst [vmem:[#allocation2 + $0xd0] sm:$0xff] %v694
        %731 = vst [vmem:[#allocation2 + $0xd8] sm:$0xff] %v695
        %732 = vst [vmem:[#allocation2 + $0xe0] sm:$0xff] %v696
        %733 = vst [vmem:[#allocation2 + $0xe8] sm:$0xff] %v697
        %734 = vst [vmem:[#allocation2 + $0xf0] sm:$0xff] %v698
        %735 = vst [vmem:[#allocation2 + $0xf8] sm:$0xff] %v699
      $region44: #{discriminator_forward.5} parent=35 // pred_fallthru
        _
      // Predicated region
      $region45: #{discriminator_forward.5} parent=35 // pred_check
        %p736 = pneg %p247
      $region46: #{discriminator_forward.5} parent=35 // pred_check_branch
        %738 = sbr.rel (%p736) target = $region48
      $region47: #{discriminator_forward.5} parent=35 // pred_region
        %v739 = vld [vmem:[%s2] sm:$0x1]
        %v741 = vlaneseq
        %v742 = vshrl.u32 %v741, 7
        %v743 = vsub.s32 0, %v742
        %v744 = vrot.slane %v739, %v743
        %v746 = vmul.f32 %v668, %v744
        %v747 = vmul.f32 %v669, %v744
        %v748 = vmul.f32 %v670, %v744
        %v749 = vmul.f32 %v671, %v744
        %v750 = vmul.f32 %v672, %v744
        %v751 = vmul.f32 %v673, %v744
        %v752 = vmul.f32 %v674, %v744
        %v753 = vmul.f32 %v675, %v744
        %v754 = vmul.f32 %v676, %v744
        %v755 = vmul.f32 %v677, %v744
        %v756 = vmul.f32 %v678, %v744
        %v757 = vmul.f32 %v679, %v744
        %v758 = vmul.f32 %v680, %v744
        %v759 = vmul.f32 %v681, %v744
        %v760 = vmul.f32 %v682, %v744
        %v761 = vmul.f32 %v683, %v744
        %v762 = vmul.f32 %v684, %v744
        %v763 = vmul.f32 %v685, %v744
        %v764 = vmul.f32 %v686, %v744
        %v765 = vmul.f32 %v687, %v744
        %v766 = vmul.f32 %v688, %v744
        %v767 = vmul.f32 %v689, %v744
        %v768 = vmul.f32 %v690, %v744
        %v769 = vmul.f32 %v691, %v744
        %v770 = vmul.f32 %v692, %v744
        %v771 = vmul.f32 %v693, %v744
        %v772 = vmul.f32 %v694, %v744
        %v773 = vmul.f32 %v695, %v744
        %v774 = vmul.f32 %v696, %v744
        %v775 = vmul.f32 %v697, %v744
        %v776 = vmul.f32 %v698, %v744
        %v777 = vmul.f32 %v699, %v744
        %v778 = vld [vmem:[%s3] sm:$0x1]
        %v780 = vlaneseq
        %v781 = vshrl.u32 %v780, 7
        %v782 = vsub.s32 0, %v781
        %v783 = vrot.slane %v778, %v782
        %v785 = vadd.f32 %v746, %v783
        %v786 = vadd.f32 %v747, %v783
        %v787 = vadd.f32 %v748, %v783
        %v788 = vadd.f32 %v749, %v783
        %v789 = vadd.f32 %v750, %v783
        %v790 = vadd.f32 %v751, %v783
        %v791 = vadd.f32 %v752, %v783
        %v792 = vadd.f32 %v753, %v783
        %v793 = vadd.f32 %v754, %v783
        %v794 = vadd.f32 %v755, %v783
        %v795 = vadd.f32 %v756, %v783
        %v796 = vadd.f32 %v757, %v783
        %v797 = vadd.f32 %v758, %v783
        %v798 = vadd.f32 %v759, %v783
        %v799 = vadd.f32 %v760, %v783
        %v800 = vadd.f32 %v761, %v783
        %v801 = vadd.f32 %v762, %v783
        %v802 = vadd.f32 %v763, %v783
        %v803 = vadd.f32 %v764, %v783
        %v804 = vadd.f32 %v765, %v783
        %v805 = vadd.f32 %v766, %v783
        %v806 = vadd.f32 %v767, %v783
        %v807 = vadd.f32 %v768, %v783
        %v808 = vadd.f32 %v769, %v783
        %v809 = vadd.f32 %v770, %v783
        %v810 = vadd.f32 %v771, %v783
        %v811 = vadd.f32 %v772, %v783
        %v812 = vadd.f32 %v773, %v783
        %v813 = vadd.f32 %v774, %v783
        %v814 = vadd.f32 %v775, %v783
        %v815 = vadd.f32 %v776, %v783
        %v816 = vadd.f32 %v777, %v783
        %vm817 = vcmp.ge.f32.partialorder %v785, 0.0
        %vm818 = vcmp.ge.f32.partialorder %v786, 0.0
        %vm819 = vcmp.ge.f32.partialorder %v787, 0.0
        %vm820 = vcmp.ge.f32.partialorder %v788, 0.0
        %vm821 = vcmp.ge.f32.partialorder %v789, 0.0
        %vm822 = vcmp.ge.f32.partialorder %v790, 0.0
        %vm823 = vcmp.ge.f32.partialorder %v791, 0.0
        %vm824 = vcmp.ge.f32.partialorder %v792, 0.0
        %vm825 = vcmp.ge.f32.partialorder %v793, 0.0
        %vm826 = vcmp.ge.f32.partialorder %v794, 0.0
        %vm827 = vcmp.ge.f32.partialorder %v795, 0.0
        %vm828 = vcmp.ge.f32.partialorder %v796, 0.0
        %vm829 = vcmp.ge.f32.partialorder %v797, 0.0
        %vm830 = vcmp.ge.f32.partialorder %v798, 0.0
        %vm831 = vcmp.ge.f32.partialorder %v799, 0.0
        %vm832 = vcmp.ge.f32.partialorder %v800, 0.0
        %vm833 = vcmp.ge.f32.partialorder %v801, 0.0
        %vm834 = vcmp.ge.f32.partialorder %v802, 0.0
        %vm835 = vcmp.ge.f32.partialorder %v803, 0.0
        %vm836 = vcmp.ge.f32.partialorder %v804, 0.0
        %vm837 = vcmp.ge.f32.partialorder %v805, 0.0
        %vm838 = vcmp.ge.f32.partialorder %v806, 0.0
        %vm839 = vcmp.ge.f32.partialorder %v807, 0.0
        %vm840 = vcmp.ge.f32.partialorder %v808, 0.0
        %vm841 = vcmp.ge.f32.partialorder %v809, 0.0
        %vm842 = vcmp.ge.f32.partialorder %v810, 0.0
        %vm843 = vcmp.ge.f32.partialorder %v811, 0.0
        %vm844 = vcmp.ge.f32.partialorder %v812, 0.0
        %vm845 = vcmp.ge.f32.partialorder %v813, 0.0
        %vm846 = vcmp.ge.f32.partialorder %v814, 0.0
        %vm847 = vcmp.ge.f32.partialorder %v815, 0.0
        %vm848 = vcmp.ge.f32.partialorder %v816, 0.0
        %v849 = vmul.f32 %v785, 0.2
        %v850 = vmul.f32 %v786, 0.2
        %v851 = vmul.f32 %v787, 0.2
        %v852 = vmul.f32 %v788, 0.2
        %v853 = vmul.f32 %v789, 0.2
        %v854 = vmul.f32 %v790, 0.2
        %v855 = vmul.f32 %v791, 0.2
        %v856 = vmul.f32 %v792, 0.2
        %v857 = vmul.f32 %v793, 0.2
        %v858 = vmul.f32 %v794, 0.2
        %v859 = vmul.f32 %v795, 0.2
        %v860 = vmul.f32 %v796, 0.2
        %v861 = vmul.f32 %v797, 0.2
        %v862 = vmul.f32 %v798, 0.2
        %v863 = vmul.f32 %v799, 0.2
        %v864 = vmul.f32 %v800, 0.2
        %v865 = vmul.f32 %v801, 0.2
        %v866 = vmul.f32 %v802, 0.2
        %v867 = vmul.f32 %v803, 0.2
        %v868 = vmul.f32 %v804, 0.2
        %v869 = vmul.f32 %v805, 0.2
        %v870 = vmul.f32 %v806, 0.2
        %v871 = vmul.f32 %v807, 0.2
        %v872 = vmul.f32 %v808, 0.2
        %v873 = vmul.f32 %v809, 0.2
        %v874 = vmul.f32 %v810, 0.2
        %v875 = vmul.f32 %v811, 0.2
        %v876 = vmul.f32 %v812, 0.2
        %v877 = vmul.f32 %v813, 0.2
        %v878 = vmul.f32 %v814, 0.2
        %v879 = vmul.f32 %v815, 0.2
        %v880 = vmul.f32 %v816, 0.2
        %v881 = vsel %vm817, %v785, %v849
        %v882 = vsel %vm818, %v786, %v850
        %v883 = vsel %vm819, %v787, %v851
        %v884 = vsel %vm820, %v788, %v852
        %v885 = vsel %vm821, %v789, %v853
        %v886 = vsel %vm822, %v790, %v854
        %v887 = vsel %vm823, %v791, %v855
        %v888 = vsel %vm824, %v792, %v856
        %v889 = vsel %vm825, %v793, %v857
        %v890 = vsel %vm826, %v794, %v858
        %v891 = vsel %vm827, %v795, %v859
        %v892 = vsel %vm828, %v796, %v860
        %v893 = vsel %vm829, %v797, %v861
        %v894 = vsel %vm830, %v798, %v862
        %v895 = vsel %vm831, %v799, %v863
        %v896 = vsel %vm832, %v800, %v864
        %v897 = vsel %vm833, %v801, %v865
        %v898 = vsel %vm834, %v802, %v866
        %v899 = vsel %vm835, %v803, %v867
        %v900 = vsel %vm836, %v804, %v868
        %v901 = vsel %vm837, %v805, %v869
        %v902 = vsel %vm838, %v806, %v870
        %v903 = vsel %vm839, %v807, %v871
        %v904 = vsel %vm840, %v808, %v872
        %v905 = vsel %vm841, %v809, %v873
        %v906 = vsel %vm842, %v810, %v874
        %v907 = vsel %vm843, %v811, %v875
        %v908 = vsel %vm844, %v812, %v876
        %v909 = vsel %vm845, %v813, %v877
        %v910 = vsel %vm846, %v814, %v878
        %v911 = vsel %vm847, %v815, %v879
        %v912 = vsel %vm848, %v816, %v880
        %v913 = vpack.c.bf16 %v882, %v881
        %v914 = vpack.c.bf16 %v884, %v883
        %v915 = vpack.c.bf16 %v886, %v885
        %v916 = vpack.c.bf16 %v888, %v887
        %v917 = vpack.c.bf16 %v890, %v889
        %v918 = vpack.c.bf16 %v892, %v891
        %v919 = vpack.c.bf16 %v894, %v893
        %v920 = vpack.c.bf16 %v896, %v895
        %v921 = vpack.c.bf16 %v898, %v897
        %v922 = vpack.c.bf16 %v900, %v899
        %v923 = vpack.c.bf16 %v902, %v901
        %v924 = vpack.c.bf16 %v904, %v903
        %v925 = vpack.c.bf16 %v906, %v905
        %v926 = vpack.c.bf16 %v908, %v907
        %v927 = vpack.c.bf16 %v910, %v909
        %v928 = vpack.c.bf16 %v912, %v911
        %v945 = vunpack.c.l.b16 %v913
        %v946 = vunpack.c.h.b16 %v913
        %v947 = vunpack.c.l.b16 %v914
        %v948 = vunpack.c.h.b16 %v914
        %v949 = vunpack.c.l.b16 %v915
        %v950 = vunpack.c.h.b16 %v915
        %v951 = vunpack.c.l.b16 %v916
        %v952 = vunpack.c.h.b16 %v916
        %v953 = vunpack.c.l.b16 %v917
        %v954 = vunpack.c.h.b16 %v917
        %v955 = vunpack.c.l.b16 %v918
        %v956 = vunpack.c.h.b16 %v918
        %v957 = vunpack.c.l.b16 %v919
        %v958 = vunpack.c.h.b16 %v919
        %v959 = vunpack.c.l.b16 %v920
        %v960 = vunpack.c.h.b16 %v920
        %v961 = vunpack.c.l.b16 %v921
        %v962 = vunpack.c.h.b16 %v921
        %v963 = vunpack.c.l.b16 %v922
        %v964 = vunpack.c.h.b16 %v922
        %v965 = vunpack.c.l.b16 %v923
        %v966 = vunpack.c.h.b16 %v923
        %v967 = vunpack.c.l.b16 %v924
        %v968 = vunpack.c.h.b16 %v924
        %v969 = vunpack.c.l.b16 %v925
        %v970 = vunpack.c.h.b16 %v925
        %v971 = vunpack.c.l.b16 %v926
        %v972 = vunpack.c.h.b16 %v926
        %v973 = vunpack.c.l.b16 %v927
        %v974 = vunpack.c.h.b16 %v927
        %v975 = vunpack.c.l.b16 %v928
        %v976 = vunpack.c.h.b16 %v928
        %v977 = vpack.c.b16 %v945, %v945
        %v978 = vpack.c.b16 %v946, %v946
        %v979 = vpack.c.b16 %v947, %v947
        %v980 = vpack.c.b16 %v948, %v948
        %v981 = vpack.c.b16 %v949, %v949
        %v982 = vpack.c.b16 %v950, %v950
        %v983 = vpack.c.b16 %v951, %v951
        %v984 = vpack.c.b16 %v952, %v952
        %v985 = vpack.c.b16 %v953, %v953
        %v986 = vpack.c.b16 %v954, %v954
        %v987 = vpack.c.b16 %v955, %v955
        %v988 = vpack.c.b16 %v956, %v956
        %v989 = vpack.c.b16 %v957, %v957
        %v990 = vpack.c.b16 %v958, %v958
        %v991 = vpack.c.b16 %v959, %v959
        %v992 = vpack.c.b16 %v960, %v960
        %v993 = vpack.c.b16 %v961, %v961
        %v994 = vpack.c.b16 %v962, %v962
        %v995 = vpack.c.b16 %v963, %v963
        %v996 = vpack.c.b16 %v964, %v964
        %v997 = vpack.c.b16 %v965, %v965
        %v998 = vpack.c.b16 %v966, %v966
        %v999 = vpack.c.b16 %v967, %v967
        %v1000 = vpack.c.b16 %v968, %v968
        %v1001 = vpack.c.b16 %v969, %v969
        %v1002 = vpack.c.b16 %v970, %v970
        %v1003 = vpack.c.b16 %v971, %v971
        %v1004 = vpack.c.b16 %v972, %v972
        %v1005 = vpack.c.b16 %v973, %v973
        %v1006 = vpack.c.b16 %v974, %v974
        %v1007 = vpack.c.b16 %v975, %v975
        %v1008 = vpack.c.b16 %v976, %v976
        %1041 = vst [vmem:[%s244] sm:$0xf] %v977
        %1042 = vst [vmem:[%s244 + $0x4] sm:$0xf] %v978
        %1043 = vst [vmem:[%s244 + $0x8] sm:$0xf] %v979
        %1044 = vst [vmem:[%s244 + $0xc] sm:$0xf] %v980
        %1045 = vst [vmem:[%s244 + $0x10] sm:$0xf] %v981
        %1046 = vst [vmem:[%s244 + $0x14] sm:$0xf] %v982
        %1047 = vst [vmem:[%s244 + $0x18] sm:$0xf] %v983
        %1048 = vst [vmem:[%s244 + $0x1c] sm:$0xf] %v984
        %1049 = vst [vmem:[%s244 + $0x20] sm:$0xf] %v985
        %1050 = vst [vmem:[%s244 + $0x24] sm:$0xf] %v986
        %1051 = vst [vmem:[%s244 + $0x28] sm:$0xf] %v987
        %1052 = vst [vmem:[%s244 + $0x2c] sm:$0xf] %v988
        %1053 = vst [vmem:[%s244 + $0x30] sm:$0xf] %v989
        %1054 = vst [vmem:[%s244 + $0x34] sm:$0xf] %v990
        %1055 = vst [vmem:[%s244 + $0x38] sm:$0xf] %v991
        %1056 = vst [vmem:[%s244 + $0x3c] sm:$0xf] %v992
        %1057 = vst [vmem:[%s244 + $0x40] sm:$0xf] %v993
        %1058 = vst [vmem:[%s244 + $0x44] sm:$0xf] %v994
        %1059 = vst [vmem:[%s244 + $0x48] sm:$0xf] %v995
        %1060 = vst [vmem:[%s244 + $0x4c] sm:$0xf] %v996
        %1061 = vst [vmem:[%s244 + $0x50] sm:$0xf] %v997
        %1062 = vst [vmem:[%s244 + $0x54] sm:$0xf] %v998
        %1063 = vst [vmem:[%s244 + $0x58] sm:$0xf] %v999
        %1064 = vst [vmem:[%s244 + $0x5c] sm:$0xf] %v1000
        %1065 = vst [vmem:[%s244 + $0x60] sm:$0xf] %v1001
        %1066 = vst [vmem:[%s244 + $0x64] sm:$0xf] %v1002
        %1067 = vst [vmem:[%s244 + $0x68] sm:$0xf] %v1003
        %1068 = vst [vmem:[%s244 + $0x6c] sm:$0xf] %v1004
        %1069 = vst [vmem:[%s244 + $0x70] sm:$0xf] %v1005
        %1070 = vst [vmem:[%s244 + $0x74] sm:$0xf] %v1006
        %1071 = vst [vmem:[%s244 + $0x78] sm:$0xf] %v1007
        %1072 = vst [vmem:[%s244 + $0x7c] sm:$0xf] %v1008
      $region48: #{discriminator_forward.5} parent=35 // pred_fallthru
        _
      %s1073 = smul.u32 32, %s19
      %p1074 = scmp.lt.s32.totalorder %s1073, 63
      %s1075 = scalar_select %p1074, %s1073, 63
      %s1076 = smul.addr %s1075, 4
      %s1077 = scalar_lea.vmem %s4, %s1076
      // Predicated region
      $region49: #{discriminator_forward.5} parent=35 // pred_check
        %p1078 = pneg %p141
      $region50: #{discriminator_forward.5} parent=35 // pred_check_branch
        %1080 = sbr.rel (%p1078) target = $region52
      $region51: #{discriminator_forward.5} parent=35 // pred_region
        %s1081 = smul.u32 32, %s19
      $region52: #{discriminator_forward.5} parent=35 // pred_fallthru
        _
    $region36: #{discriminator_forward.5} parent=5 // pred_fallthru
      _
    %p1082 = scmp.le.s32.totalorder 2, %s10
    // Predicated region
    $region53: #{discriminator_forward.5} parent=5 // pred_check
      %p1083 = pneg %p1082
    $region54: #{discriminator_forward.5} parent=5 // pred_check_branch
      %1085 = sbr.rel (%p1083) target = $region56
    $region55: #{discriminator_forward.5} parent=5 // pred_region
      %s1086 = ssub.s32 %s10, 2
      // Predicated region
      $region57: #{discriminator_forward.5} parent=55 // pred_check
        %p1087 = pneg %p147
      $region58: #{discriminator_forward.5} parent=55 // pred_check_branch
        %1089 = sbr.rel (%p1087) target = $region60
      $region59: #{discriminator_forward.5} parent=55 // pred_region
        %s1090 = smul.u32 32, %s21
        %p1091 = scmp.lt.s32.totalorder %s1090, 63
        %s1092 = scalar_select %p1091, %s1090, 63
        %s1093 = smul.addr %s1092, 4
        %s1094 = scalar_lea.vmem %s4, %s1093
      $region60: #{discriminator_forward.5} parent=55 // pred_fallthru
        _
    $region56: #{discriminator_forward.5} parent=5 // pred_fallthru
      _
  $region6: #{discriminator_forward.5} parent=0 // loop_footer
    %s14 = sadd.s32 1, %s10
  $region7: #{discriminator_forward.5} parent=0 // loop_footer_branch
    %9 = sbr.rel target = $region3
  $region8: #{discriminator_forward.5} parent=0 // loop_exit
    _

// kernel: discriminator_forward.6
$region0: #{discriminator_forward.6}
  #allocation0 [shape = 'u32[]', space=smem, size = 0x4, offset = 0x4, fixed_abs, tag = 'smem constant byte address 0x4 - core index']
  #allocation1 [shape = 'u32[144,128]{1,0:T(1,128)}', space=vmem, size = 0x12000, scoped, tag = 'internal scratch']
  #allocation2 [shape = 'f32[64,128]{1,0:T(8,128)}', space=vmem, size = 0x8000, scoped, tag = 'scratch operand']
  %s0 = inlined_call_operand.vmem [shape: bf16[128,1024], index: 0, kind: input, shape index: {}]
  %s1 = inlined_call_operand.vmem [shape: bf16[1024,128], index: 1, kind: input, shape index: {}]
  %s2 = inlined_call_operand.vmem [shape: f32[1,128], index: 2, kind: input, shape index: {}]
  %s3 = inlined_call_operand.vmem [shape: f32[1,128], index: 3, kind: input, shape index: {}]
  %s4 = inlined_call_operand.vmem [shape: bf16[128,128], index: 4, kind: output, shape index: {}]
  %s5 = sld [smem:[#allocation0]]
  $region61: #{discriminator_forward.6} parent=0
    _
  %s7 = ssub.s32 1, %s5
  %s8 = scalar_select 0, %s7, %s5
  loop: start=0, step=1, limit=4
  $region2: #{discriminator_forward.6} parent=0 // loop_pre_header
    _
  $region3: #{discriminator_forward.6} parent=0 // loop_header
    %s10 = sphi 0, %s14
    %p11 = scmp.ge.s32.totalorder %s10, 4
    %s17 = sphi 0, %s29
    %s18 = sphi 0, %s25
    %s19 = sphi 0, %s17
    %s20 = sphi 0, %s18
    %s21 = sphi 0, %s19
    %s22 = sphi 0, %s20
    %s34 = sphi 0, %s36
    %s37 = sphi 0, %s34
    %s38 = sphi 0, %s37
    %s54 = sphi 0, %s38
    %s60 = sphi 0, %s62
    %s63 = sphi 0, %s60
    %s64 = sphi 0, %s63
    %s80 = sphi 0, %s64
    %s84 = sphi 0, %s84
    %s86 = sphi 0, %s84
    %s87 = sphi 0, %s86
    %s101 = sphi 0, %s87
    %s105 = sphi 0, %s105
    %s107 = sphi 0, %s105
    %s108 = sphi 0, %s107
    %s122 = sphi 0, %s108
    %s128 = sphi 0, %s130
    %s131 = sphi 0, %s128
    %s132 = sphi 0, %s131
    %s148 = sphi 0, %s132
  $region4: #{discriminator_forward.6} parent=0 // loop_header_branch
    %13 = sbr.rel (%p11) target = $region8
  $region5: #{discriminator_forward.6} parent=0 // loop_body
    %s15 = ssub.s32 %s10, 1
    %s16 = ssub.s32 %s10, 2
    %s23 = sadd.s32 1, %s18
    %p24 = scmp.ge.s32.totalorder %s23, 1
    %s25 = scalar_select %p24, 0, %s23
    %s26 = sadd.s32 1, %s17
    %s27 = scalar_select %p24, %s26, %s17
    %p28 = scmp.ge.s32.totalorder %s27, 2
    %s29 = scalar_select %p28, 0, %s27
    %s30 = ssub.s32 %s17, %s29
    %s31 = ssub.s32 %s18, %s25
    %s32 = sor.u32 %s30, %s31
    %p33 = scmp.eq.s32.totalorder %s32, 0
    %s35 = sadd.s32 %s34, 1
    %s36 = scalar_select %p33, %s34, %s35
    %p39 = pneg %p33
    %p40 = scmp.eq.s32.totalorder %s10, 1
    %p41 = por %p39, %p40
    %p42 = scmp.ne.s32.totalorder %s34, %s37
    %p43 = scmp.eq.s32.totalorder %s10, 0
    %p44 = por %p42, %p43
    %p45 = scmp.ne.s32.totalorder %s34, %s37
    %p46 = scmp.eq.s32.totalorder %s15, 1
    %p47 = por %p45, %p46
    %p48 = scmp.ne.s32.totalorder %s37, %s38
    %p49 = scmp.eq.s32.totalorder %s15, 0
    %p50 = por %p48, %p49
    %p51 = scmp.ne.s32.totalorder %s37, %s38
    %p52 = scmp.eq.s32.totalorder %s16, 1
    %p53 = por %p51, %p52
    %p55 = scmp.ne.s32.totalorder %s38, %s54
    %p56 = scmp.eq.s32.totalorder %s16, 0
    %p57 = por %p55, %p56
    %s58 = ssub.s32 %s18, %s25
    %p59 = scmp.eq.s32.totalorder %s58, 0
    %s61 = sadd.s32 %s60, 1
    %s62 = scalar_select %p59, %s60, %s61
    %p65 = pneg %p59
    %p66 = scmp.eq.s32.totalorder %s10, 1
    %p67 = por %p65, %p66
    %p68 = scmp.ne.s32.totalorder %s60, %s63
    %p69 = scmp.eq.s32.totalorder %s10, 0
    %p70 = por %p68, %p69
    %p71 = scmp.ne.s32.totalorder %s60, %s63
    %p72 = scmp.eq.s32.totalorder %s15, 1
    %p73 = por %p71, %p72
    %p74 = scmp.ne.s32.totalorder %s63, %s64
    %p75 = scmp.eq.s32.totalorder %s15, 0
    %p76 = por %p74, %p75
    %p77 = scmp.ne.s32.totalorder %s63, %s64
    %p78 = scmp.eq.s32.totalorder %s16, 1
    %p79 = por %p77, %p78
    %p81 = scmp.ne.s32.totalorder %s64, %s80
    %p82 = scmp.eq.s32.totalorder %s16, 0
    %p83 = por %p81, %p82
    %s85 = sadd.s32 %s84, 1
    %p88 = scmp.eq.s32.totalorder %s10, 1
    %p89 = scmp.ne.s32.totalorder %s84, %s86
    %p90 = scmp.eq.s32.totalorder %s10, 0
    %p91 = por %p89, %p90
    %p92 = scmp.ne.s32.totalorder %s84, %s86
    %p93 = scmp.eq.s32.totalorder %s15, 1
    %p94 = por %p92, %p93
    %p95 = scmp.ne.s32.totalorder %s86, %s87
    %p96 = scmp.eq.s32.totalorder %s15, 0
    %p97 = por %p95, %p96
    %p98 = scmp.ne.s32.totalorder %s86, %s87
    %p99 = scmp.eq.s32.totalorder %s16, 1
    %p100 = por %p98, %p99
    %p102 = scmp.ne.s32.totalorder %s87, %s101
    %p103 = scmp.eq.s32.totalorder %s16, 0
    %p104 = por %p102, %p103
    %s106 = sadd.s32 %s105, 1
    %p109 = scmp.eq.s32.totalorder %s10, 1
    %p110 = scmp.ne.s32.totalorder %s105, %s107
    %p111 = scmp.eq.s32.totalorder %s10, 0
    %p112 = por %p110, %p111
    %p113 = scmp.ne.s32.totalorder %s105, %s107
    %p114 = scmp.eq.s32.totalorder %s15, 1
    %p115 = por %p113, %p114
    %p116 = scmp.ne.s32.totalorder %s107, %s108
    %p117 = scmp.eq.s32.totalorder %s15, 0
    %p118 = por %p116, %p117
    %p119 = scmp.ne.s32.totalorder %s107, %s108
    %p120 = scmp.eq.s32.totalorder %s16, 1
    %p121 = por %p119, %p120
    %p123 = scmp.ne.s32.totalorder %s108, %s122
    %p124 = scmp.eq.s32.totalorder %s16, 0
    %p125 = por %p123, %p124
    %s126 = ssub.s32 %s17, %s29
    %p127 = scmp.eq.s32.totalorder %s126, 0
    %s129 = sadd.s32 %s128, 1
    %s130 = scalar_select %p127, %s128, %s129
    %p133 = pneg %p127
    %p134 = scmp.eq.s32.totalorder %s10, 1
    %p135 = por %p133, %p134
    %p136 = scmp.ne.s32.totalorder %s128, %s131
    %p137 = scmp.eq.s32.totalorder %s10, 0
    %p138 = por %p136, %p137
    %p139 = scmp.ne.s32.totalorder %s128, %s131
    %p140 = scmp.eq.s32.totalorder %s15, 1
    %p141 = por %p139, %p140
    %p142 = scmp.ne.s32.totalorder %s131, %s132
    %p143 = scmp.eq.s32.totalorder %s15, 0
    %p144 = por %p142, %p143
    %p145 = scmp.ne.s32.totalorder %s131, %s132
    %p146 = scmp.eq.s32.totalorder %s16, 1
    %p147 = por %p145, %p146
    %p149 = scmp.ne.s32.totalorder %s132, %s148
    %p150 = scmp.eq.s32.totalorder %s16, 0
    %p151 = por %p149, %p150
    %p152 = scmp.le.s32.totalorder 1, %s10
    %p153 = scmp.lt.s32.totalorder %s10, 3
    %p154 = pnand %p152, %p153
    %p155 = pneg %p154
    // Predicated region
    $region9: #{discriminator_forward.6} parent=5 // pred_check
      _
    $region10: #{discriminator_forward.6} parent=5 // pred_check_branch
      %157 = sbr.rel (%p154) target = $region12
    $region11: #{discriminator_forward.6} parent=5 // pred_region
      %s158 = ssub.s32 %s10, 1
      // Predicated region
      $region13: #{discriminator_forward.6} parent=11 // pred_check
        %p159 = pneg %p76
      $region14: #{discriminator_forward.6} parent=11 // pred_check_branch
        %161 = sbr.rel (%p159) target = $region16
      $region15: #{discriminator_forward.6} parent=11 // pred_region
        %s162 = smul.u32 128, %s20
        %p163 = scmp.lt.s32.totalorder %s162, 127
        %s164 = scalar_select %p163, %s162, 127
        %s165 = smul.addr %s164, 4
        %s166 = scalar_lea.vmem %s1, %s165
        %s167 = smul.u32 128, %s20
      $region16: #{discriminator_forward.6} parent=11 // pred_fallthru
        _
      // Predicated region
      $region17: #{discriminator_forward.6} parent=11 // pred_check
        %p168 = pneg %p97
      $region18: #{discriminator_forward.6} parent=11 // pred_check_branch
        %170 = sbr.rel (%p168) target = $region20
      $region19: #{discriminator_forward.6} parent=11 // pred_region
        _
      $region20: #{discriminator_forward.6} parent=11 // pred_fallthru
        _
      // Predicated region
      $region21: #{discriminator_forward.6} parent=11 // pred_check
        %p171 = pneg %p118
      $region22: #{discriminator_forward.6} parent=11 // pred_check_branch
        %173 = sbr.rel (%p171) target = $region24
      $region23: #{discriminator_forward.6} parent=11 // pred_region
        _
      $region24: #{discriminator_forward.6} parent=11 // pred_fallthru
        _
    $region12: #{discriminator_forward.6} parent=5 // pred_fallthru
      _
    %p174 = scmp.lt.s32.totalorder %s10, 2
    // Predicated region
    $region25: #{discriminator_forward.6} parent=5 // pred_check
      %p175 = pneg %p174
    $region26: #{discriminator_forward.6} parent=5 // pred_check_branch
      %177 = sbr.rel (%p175) target = $region28
    $region27: #{discriminator_forward.6} parent=5 // pred_region
      // Predicated region
      $region29: #{discriminator_forward.6} parent=27 // pred_check
        %p178 = pneg %p44
      $region30: #{discriminator_forward.6} parent=27 // pred_check_branch
        %180 = sbr.rel (%p178) target = $region32
      $region31: #{discriminator_forward.6} parent=27 // pred_region
        %s181 = smul.u32 8, %s17
        %s182 = smul.u32 8, %s18
        %p183 = scmp.lt.s32.totalorder %s181, 15
        %s184 = scalar_select %p183, %s181, 15
        %p185 = scmp.lt.s32.totalorder %s182, 7
        %s186 = scalar_select %p185, %s182, 7
        %s187 = smul.addr %s184, 8
        %s188 = sadd.s32 %s186, %s187
        %s189 = smul.addr %s188, 4
        %s190 = scalar_lea.vmem %s0, %s189
        %s191 = smul.u32 8, %s17
        %s192 = smul.u32 8, %s18
      $region32: #{discriminator_forward.6} parent=27 // pred_fallthru
        _
    $region28: #{discriminator_forward.6} parent=5 // pred_fallthru
      _
    %p193 = scmp.le.s32.totalorder 1, %s10
    %p194 = scmp.lt.s32.totalorder %s10, 3
    %p195 = pnand %p193, %p194
    %p196 = pneg %p195
    // Predicated region
    $region33: #{discriminator_forward.6} parent=5 // pred_check
      _
    $region34: #{discriminator_forward.6} parent=5 // pred_check_branch
      %198 = sbr.rel (%p195) target = $region36
    $region35: #{discriminator_forward.6} parent=5 // pred_region
      %s199 = ssub.s32 %s10, 1
      %s200 = smul.u32 8, %s19
      %s201 = smul.u32 8, %s20
      %p202 = scmp.lt.s32.totalorder %s200, 15
      %s203 = scalar_select %p202, %s200, 15
      %p204 = scmp.lt.s32.totalorder %s201, 7
      %s205 = scalar_select %p204, %s201, 7
      %s206 = smul.addr %s203, 8
      %s207 = sadd.s32 %s205, %s206
      %s208 = smul.addr %s207, 4
      %s209 = scalar_lea.vmem %s0, %s208
      %p210 = pneg %p50
      %p211 = pneg %p47
      %s212 = smul.u32 128, %s20
      %p213 = scmp.lt.s32.totalorder %s212, 127
      %s214 = scalar_select %p213, %s212, 127
      %s215 = smul.addr %s214, 4
      %s216 = scalar_lea.vmem %s1, %s215
      %p217 = pneg %p76
      %p218 = pneg %p73
      %p219 = pneg %p97
      %p220 = pneg %p94
      %p221 = pneg %p118
      %p222 = pneg %p115
      %p223 = pneg %p144
      %p224 = pneg %p141
      %s225 = smul.u32 8, %s19
      %p226 = scmp.lt.s32.totalorder %s225, 15
      %s227 = scalar_select %p226, %s225, 15
      %s228 = smul.addr %s227, 4
      %s229 = scalar_lea.vmem %s4, %s228
      %s230 = smul.u32 8, %s19
      %s231 = smul.u32 8, %s20
      %p232 = scmp.lt.s32.totalorder %s230, 15
      %s233 = scalar_select %p232, %s230, 15
      %p234 = scmp.lt.s32.totalorder %s231, 7
      %s235 = scalar_select %p234, %s231, 7
      %s236 = smul.addr %s233, 8
      %s237 = sadd.s32 %s235, %s236
      %s238 = smul.addr %s237, 4
      %s239 = scalar_lea.vmem %s0, %s238
      %s240 = smul.u32 8, %s19
      %s241 = smul.u32 8, %s20
      %s242 = smul.u32 128, %s20
      %p243 = scmp.lt.s32.totalorder %s242, 127
      %s244 = scalar_select %p243, %s242, 127
      %s245 = smul.addr %s244, 4
      %s246 = scalar_lea.vmem %s1, %s245
      %s247 = smul.u32 128, %s20
      %s248 = smul.u32 8, %s19
      %p249 = scmp.lt.s32.totalorder %s248, 15
      %s250 = scalar_select %p249, %s248, 15
      %s251 = smul.addr %s250, 4
      %s252 = scalar_lea.vmem %s4, %s251
      %s253 = smul.u32 8, %s19
      %p255 = scmp.eq.s32.totalorder %s20, 0
      // Predicated region
      $region37: #{discriminator_forward.6} parent=35 // pred_check
        %p256 = pneg %p255
      $region38: #{discriminator_forward.6} parent=35 // pred_check_branch
        %258 = sbr.rel (%p256) target = $region40
      $region39: #{discriminator_forward.6} parent=35 // pred_region
        %259 = vst [vmem:[#allocation2] sm:$0xff] 0.0
        %260 = vst [vmem:[#allocation2 + $0x8] sm:$0xff] 0.0
        %261 = vst [vmem:[#allocation2 + $0x10] sm:$0xff] 0.0
        %262 = vst [vmem:[#allocation2 + $0x18] sm:$0xff] 0.0
        %263 = vst [vmem:[#allocation2 + $0x20] sm:$0xff] 0.0
        %264 = vst [vmem:[#allocation2 + $0x28] sm:$0xff] 0.0
        %265 = vst [vmem:[#allocation2 + $0x30] sm:$0xff] 0.0
        %266 = vst [vmem:[#allocation2 + $0x38] sm:$0xff] 0.0
      $region40: #{discriminator_forward.6} parent=35 // pred_fallthru
        _
      %v267 = vld [vmem:[#allocation2] sm:$0xff]
      %v268 = vld [vmem:[#allocation2 + $0x8] sm:$0xff]
      %v269 = vld [vmem:[#allocation2 + $0x10] sm:$0xff]
      %v270 = vld [vmem:[#allocation2 + $0x18] sm:$0xff]
      %v271 = vld [vmem:[#allocation2 + $0x20] sm:$0xff]
      %v272 = vld [vmem:[#allocation2 + $0x28] sm:$0xff]
      %v273 = vld [vmem:[#allocation2 + $0x30] sm:$0xff]
      %v274 = vld [vmem:[#allocation2 + $0x38] sm:$0xff]
      %v275 = vld [vmem:[%s239] sm:$0xff]
      %v276 = vld [vmem:[%s239 + $0x8] sm:$0xff]
      %v277 = vld [vmem:[%s239 + $0x10] sm:$0xff]
      %v278 = vld [vmem:[%s239 + $0x18] sm:$0xff]
      %v279 = vld [vmem:[%s239 + $0x20] sm:$0xff]
      %v280 = vld [vmem:[%s239 + $0x28] sm:$0xff]
      %v281 = vld [vmem:[%s239 + $0x30] sm:$0xff]
      %v282 = vld [vmem:[%s239 + $0x38] sm:$0xff]
      %v283 = vld [vmem:[%s239 + $0x40] sm:$0xff]
      %v284 = vld [vmem:[%s239 + $0x48] sm:$0xff]
      %v285 = vld [vmem:[%s239 + $0x50] sm:$0xff]
      %v286 = vld [vmem:[%s239 + $0x58] sm:$0xff]
      %v287 = vld [vmem:[%s239 + $0x60] sm:$0xff]
      %v288 = vld [vmem:[%s239 + $0x68] sm:$0xff]
      %v289 = vld [vmem:[%s239 + $0x70] sm:$0xff]
      %v290 = vld [vmem:[%s239 + $0x78] sm:$0xff]
      %v291 = vld [vmem:[%s239 + $0x80] sm:$0xff]
      %v292 = vld [vmem:[%s239 + $0x88] sm:$0xff]
      %v293 = vld [vmem:[%s239 + $0x90] sm:$0xff]
      %v294 = vld [vmem:[%s239 + $0x98] sm:$0xff]
      %v295 = vld [vmem:[%s239 + $0xa0] sm:$0xff]
      %v296 = vld [vmem:[%s239 + $0xa8] sm:$0xff]
      %v297 = vld [vmem:[%s239 + $0xb0] sm:$0xff]
      %v298 = vld [vmem:[%s239 + $0xb8] sm:$0xff]
      %v299 = vld [vmem:[%s239 + $0xc0] sm:$0xff]
      %v300 = vld [vmem:[%s239 + $0xc8] sm:$0xff]
      %v301 = vld [vmem:[%s239 + $0xd0] sm:$0xff]
      %v302 = vld [vmem:[%s239 + $0xd8] sm:$0xff]
      %v303 = vld [vmem:[%s239 + $0xe0] sm:$0xff]
      %v304 = vld [vmem:[%s239 + $0xe8] sm:$0xff]
      %v305 = vld [vmem:[%s239 + $0xf0] sm:$0xff]
      %v306 = vld [vmem:[%s239 + $0xf8] sm:$0xff]
      %v307 = vld [vmem:[%s246] sm:$0xf]
      %v308 = vld [vmem:[%s246 + $0x4] sm:$0xf]
      %v309 = vld [vmem:[%s246 + $0x8] sm:$0xf]
      %v310 = vld [vmem:[%s246 + $0xc] sm:$0xf]
      %v311 = vld [vmem:[%s246 + $0x10] sm:$0xf]
      %v312 = vld [vmem:[%s246 + $0x14] sm:$0xf]
      %v313 = vld [vmem:[%s246 + $0x18] sm:$0xf]
      %v314 = vld [vmem:[%s246 + $0x1c] sm:$0xf]
      %v315 = vld [vmem:[%s246 + $0x20] sm:$0xf]
      %v316 = vld [vmem:[%s246 + $0x24] sm:$0xf]
      %v317 = vld [vmem:[%s246 + $0x28] sm:$0xf]
      %v318 = vld [vmem:[%s246 + $0x2c] sm:$0xf]
      %v319 = vld [vmem:[%s246 + $0x30] sm:$0xf]
      %v320 = vld [vmem:[%s246 + $0x34] sm:$0xf]
      %v321 = vld [vmem:[%s246 + $0x38] sm:$0xf]
      %v322 = vld [vmem:[%s246 + $0x3c] sm:$0xf]
      %v323 = vld [vmem:[%s246 + $0x40] sm:$0xf]
      %v324 = vld [vmem:[%s246 + $0x44] sm:$0xf]
      %v325 = vld [vmem:[%s246 + $0x48] sm:$0xf]
      %v326 = vld [vmem:[%s246 + $0x4c] sm:$0xf]
      %v327 = vld [vmem:[%s246 + $0x50] sm:$0xf]
      %v328 = vld [vmem:[%s246 + $0x54] sm:$0xf]
      %v329 = vld [vmem:[%s246 + $0x58] sm:$0xf]
      %v330 = vld [vmem:[%s246 + $0x5c] sm:$0xf]
      %v331 = vld [vmem:[%s246 + $0x60] sm:$0xf]
      %v332 = vld [vmem:[%s246 + $0x64] sm:$0xf]
      %v333 = vld [vmem:[%s246 + $0x68] sm:$0xf]
      %v334 = vld [vmem:[%s246 + $0x6c] sm:$0xf]
      %v335 = vld [vmem:[%s246 + $0x70] sm:$0xf]
      %v336 = vld [vmem:[%s246 + $0x74] sm:$0xf]
      %v337 = vld [vmem:[%s246 + $0x78] sm:$0xf]
      %v338 = vld [vmem:[%s246 + $0x7c] sm:$0xf]
      %v339 = vld [vmem:[%s246 + $0x80] sm:$0xf]
      %v340 = vld [vmem:[%s246 + $0x84] sm:$0xf]
      %v341 = vld [vmem:[%s246 + $0x88] sm:$0xf]
      %v342 = vld [vmem:[%s246 + $0x8c] sm:$0xf]
      %v343 = vld [vmem:[%s246 + $0x90] sm:$0xf]
      %v344 = vld [vmem:[%s246 + $0x94] sm:$0xf]
      %v345 = vld [vmem:[%s246 + $0x98] sm:$0xf]
      %v346 = vld [vmem:[%s246 + $0x9c] sm:$0xf]
      %v347 = vld [vmem:[%s246 + $0xa0] sm:$0xf]
      %v348 = vld [vmem:[%s246 + $0xa4] sm:$0xf]
      %v349 = vld [vmem:[%s246 + $0xa8] sm:$0xf]
      %v350 = vld [vmem:[%s246 + $0xac] sm:$0xf]
      %v351 = vld [vmem:[%s246 + $0xb0] sm:$0xf]
      %v352 = vld [vmem:[%s246 + $0xb4] sm:$0xf]
      %v353 = vld [vmem:[%s246 + $0xb8] sm:$0xf]
      %v354 = vld [vmem:[%s246 + $0xbc] sm:$0xf]
      %v355 = vld [vmem:[%s246 + $0xc0] sm:$0xf]
      %v356 = vld [vmem:[%s246 + $0xc4] sm:$0xf]
      %v357 = vld [vmem:[%s246 + $0xc8] sm:$0xf]
      %v358 = vld [vmem:[%s246 + $0xcc] sm:$0xf]
      %v359 = vld [vmem:[%s246 + $0xd0] sm:$0xf]
      %v360 = vld [vmem:[%s246 + $0xd4] sm:$0xf]
      %v361 = vld [vmem:[%s246 + $0xd8] sm:$0xf]
      %v362 = vld [vmem:[%s246 + $0xdc] sm:$0xf]
      %v363 = vld [vmem:[%s246 + $0xe0] sm:$0xf]
      %v364 = vld [vmem:[%s246 + $0xe4] sm:$0xf]
      %v365 = vld [vmem:[%s246 + $0xe8] sm:$0xf]
      %v366 = vld [vmem:[%s246 + $0xec] sm:$0xf]
      %v367 = vld [vmem:[%s246 + $0xf0] sm:$0xf]
      %v368 = vld [vmem:[%s246 + $0xf4] sm:$0xf]
      %v369 = vld [vmem:[%s246 + $0xf8] sm:$0xf]
      %v370 = vld [vmem:[%s246 + $0xfc] sm:$0xf]
      %v371 = vld [vmem:[%s246 + $0x100] sm:$0xf]
      %v372 = vld [vmem:[%s246 + $0x104] sm:$0xf]
      %v373 = vld [vmem:[%s246 + $0x108] sm:$0xf]
      %v374 = vld [vmem:[%s246 + $0x10c] sm:$0xf]
      %v375 = vld [vmem:[%s246 + $0x110] sm:$0xf]
      %v376 = vld [vmem:[%s246 + $0x114] sm:$0xf]
      %v377 = vld [vmem:[%s246 + $0x118] sm:$0xf]
      %v378 = vld [vmem:[%s246 + $0x11c] sm:$0xf]
      %v379 = vld [vmem:[%s246 + $0x120] sm:$0xf]
      %v380 = vld [vmem:[%s246 + $0x124] sm:$0xf]
      %v381 = vld [vmem:[%s246 + $0x128] sm:$0xf]
      %v382 = vld [vmem:[%s246 + $0x12c] sm:$0xf]
      %v383 = vld [vmem:[%s246 + $0x130] sm:$0xf]
      %v384 = vld [vmem:[%s246 + $0x134] sm:$0xf]
      %v385 = vld [vmem:[%s246 + $0x138] sm:$0xf]
      %v386 = vld [vmem:[%s246 + $0x13c] sm:$0xf]
      %v387 = vld [vmem:[%s246 + $0x140] sm:$0xf]
      %v388 = vld [vmem:[%s246 + $0x144] sm:$0xf]
      %v389 = vld [vmem:[%s246 + $0x148] sm:$0xf]
      %v390 = vld [vmem:[%s246 + $0x14c] sm:$0xf]
      %v391 = vld [vmem:[%s246 + $0x150] sm:$0xf]
      %v392 = vld [vmem:[%s246 + $0x154] sm:$0xf]
      %v393 = vld [vmem:[%s246 + $0x158] sm:$0xf]
      %v394 = vld [vmem:[%s246 + $0x15c] sm:$0xf]
      %v395 = vld [vmem:[%s246 + $0x160] sm:$0xf]
      %v396 = vld [vmem:[%s246 + $0x164] sm:$0xf]
      %v397 = vld [vmem:[%s246 + $0x168] sm:$0xf]
      %v398 = vld [vmem:[%s246 + $0x16c] sm:$0xf]
      %v399 = vld [vmem:[%s246 + $0x170] sm:$0xf]
      %v400 = vld [vmem:[%s246 + $0x174] sm:$0xf]
      %v401 = vld [vmem:[%s246 + $0x178] sm:$0xf]
      %v402 = vld [vmem:[%s246 + $0x17c] sm:$0xf]
      %v403 = vld [vmem:[%s246 + $0x180] sm:$0xf]
      %v404 = vld [vmem:[%s246 + $0x184] sm:$0xf]
      %v405 = vld [vmem:[%s246 + $0x188] sm:$0xf]
      %v406 = vld [vmem:[%s246 + $0x18c] sm:$0xf]
      %v407 = vld [vmem:[%s246 + $0x190] sm:$0xf]
      %v408 = vld [vmem:[%s246 + $0x194] sm:$0xf]
      %v409 = vld [vmem:[%s246 + $0x198] sm:$0xf]
      %v410 = vld [vmem:[%s246 + $0x19c] sm:$0xf]
      %v411 = vld [vmem:[%s246 + $0x1a0] sm:$0xf]
      %v412 = vld [vmem:[%s246 + $0x1a4] sm:$0xf]
      %v413 = vld [vmem:[%s246 + $0x1a8] sm:$0xf]
      %v414 = vld [vmem:[%s246 + $0x1ac] sm:$0xf]
      %v415 = vld [vmem:[%s246 + $0x1b0] sm:$0xf]
      %v416 = vld [vmem:[%s246 + $0x1b4] sm:$0xf]
      %v417 = vld [vmem:[%s246 + $0x1b8] sm:$0xf]
      %v418 = vld [vmem:[%s246 + $0x1bc] sm:$0xf]
      %v419 = vld [vmem:[%s246 + $0x1c0] sm:$0xf]
      %v420 = vld [vmem:[%s246 + $0x1c4] sm:$0xf]
      %v421 = vld [vmem:[%s246 + $0x1c8] sm:$0xf]
      %v422 = vld [vmem:[%s246 + $0x1cc] sm:$0xf]
      %v423 = vld [vmem:[%s246 + $0x1d0] sm:$0xf]
      %v424 = vld [vmem:[%s246 + $0x1d4] sm:$0xf]
      %v425 = vld [vmem:[%s246 + $0x1d8] sm:$0xf]
      %v426 = vld [vmem:[%s246 + $0x1dc] sm:$0xf]
      %v427 = vld [vmem:[%s246 + $0x1e0] sm:$0xf]
      %v428 = vld [vmem:[%s246 + $0x1e4] sm:$0xf]
      %v429 = vld [vmem:[%s246 + $0x1e8] sm:$0xf]
      %v430 = vld [vmem:[%s246 + $0x1ec] sm:$0xf]
      %v431 = vld [vmem:[%s246 + $0x1f0] sm:$0xf]
      %v432 = vld [vmem:[%s246 + $0x1f4] sm:$0xf]
      %v433 = vld [vmem:[%s246 + $0x1f8] sm:$0xf]
      %v434 = vld [vmem:[%s246 + $0x1fc] sm:$0xf]
      %v467 = vunpack.c.l.b16 %v275
      %v468 = vunpack.c.h.b16 %v275
      %v469 = vunpack.c.l.b16 %v276
      %v470 = vunpack.c.h.b16 %v276
      %v471 = vunpack.c.l.b16 %v277
      %v472 = vunpack.c.h.b16 %v277
      %v473 = vunpack.c.l.b16 %v278
      %v474 = vunpack.c.h.b16 %v278
      %v475 = vunpack.c.l.b16 %v279
      %v476 = vunpack.c.h.b16 %v279
      %v477 = vunpack.c.l.b16 %v280
      %v478 = vunpack.c.h.b16 %v280
      %v479 = vunpack.c.l.b16 %v281
      %v480 = vunpack.c.h.b16 %v281
      %v481 = vunpack.c.l.b16 %v282
      %v482 = vunpack.c.h.b16 %v282
      %v483 = vunpack.c.l.b16 %v283
      %v484 = vunpack.c.h.b16 %v283
      %v485 = vunpack.c.l.b16 %v284
      %v486 = vunpack.c.h.b16 %v284
      %v487 = vunpack.c.l.b16 %v285
      %v488 = vunpack.c.h.b16 %v285
      %v489 = vunpack.c.l.b16 %v286
      %v490 = vunpack.c.h.b16 %v286
      %v491 = vunpack.c.l.b16 %v287
      %v492 = vunpack.c.h.b16 %v287
      %v493 = vunpack.c.l.b16 %v288
      %v494 = vunpack.c.h.b16 %v288
      %v495 = vunpack.c.l.b16 %v289
      %v496 = vunpack.c.h.b16 %v289
      %v497 = vunpack.c.l.b16 %v290
      %v498 = vunpack.c.h.b16 %v290
      %v499 = vunpack.c.l.b16 %v291
      %v500 = vunpack.c.h.b16 %v291
      %v501 = vunpack.c.l.b16 %v292
      %v502 = vunpack.c.h.b16 %v292
      %v503 = vunpack.c.l.b16 %v293
      %v504 = vunpack.c.h.b16 %v293
      %v505 = vunpack.c.l.b16 %v294
      %v506 = vunpack.c.h.b16 %v294
      %v507 = vunpack.c.l.b16 %v295
      %v508 = vunpack.c.h.b16 %v295
      %v509 = vunpack.c.l.b16 %v296
      %v510 = vunpack.c.h.b16 %v296
      %v511 = vunpack.c.l.b16 %v297
      %v512 = vunpack.c.h.b16 %v297
      %v513 = vunpack.c.l.b16 %v298
      %v514 = vunpack.c.h.b16 %v298
      %v515 = vunpack.c.l.b16 %v299
      %v516 = vunpack.c.h.b16 %v299
      %v517 = vunpack.c.l.b16 %v300
      %v518 = vunpack.c.h.b16 %v300
      %v519 = vunpack.c.l.b16 %v301
      %v520 = vunpack.c.h.b16 %v301
      %v521 = vunpack.c.l.b16 %v302
      %v522 = vunpack.c.h.b16 %v302
      %v523 = vunpack.c.l.b16 %v303
      %v524 = vunpack.c.h.b16 %v303
      %v525 = vunpack.c.l.b16 %v304
      %v526 = vunpack.c.h.b16 %v304
      %v527 = vunpack.c.l.b16 %v305
      %v528 = vunpack.c.h.b16 %v305
      %v529 = vunpack.c.l.b16 %v306
      %v530 = vunpack.c.h.b16 %v306
      %v531 = vpack.c.b16 %v475, %v467
      %v532 = vpack.c.b16 %v476, %v468
      %v533 = vpack.c.b16 %v477, %v469
      %v534 = vpack.c.b16 %v478, %v470
      %v535 = vpack.c.b16 %v479, %v471
      %v536 = vpack.c.b16 %v480, %v472
      %v537 = vpack.c.b16 %v481, %v473
      %v538 = vpack.c.b16 %v482, %v474
      %v539 = vpack.c.b16 %v491, %v483
      %v540 = vpack.c.b16 %v492, %v484
      %v541 = vpack.c.b16 %v493, %v485
      %v542 = vpack.c.b16 %v494, %v486
      %v543 = vpack.c.b16 %v495, %v487
      %v544 = vpack.c.b16 %v496, %v488
      %v545 = vpack.c.b16 %v497, %v489
      %v546 = vpack.c.b16 %v498, %v490
      %v547 = vpack.c.b16 %v507, %v499
      %v548 = vpack.c.b16 %v508, %v500
      %v549 = vpack.c.b16 %v509, %v501
      %v550 = vpack.c.b16 %v510, %v502
      %v551 = vpack.c.b16 %v511, %v503
      %v552 = vpack.c.b16 %v512, %v504
      %v553 = vpack.c.b16 %v513, %v505
      %v554 = vpack.c.b16 %v514, %v506
      %v555 = vpack.c.b16 %v523, %v515
      %v556 = vpack.c.b16 %v524, %v516
      %v557 = vpack.c.b16 %v525, %v517
      %v558 = vpack.c.b16 %v526, %v518
      %v559 = vpack.c.b16 %v527, %v519
      %v560 = vpack.c.b16 %v528, %v520
      %v561 = vpack.c.b16 %v529, %v521
      %v562 = vpack.c.b16 %v530, %v522
      %v723 = vunpack.c.l.b16 %v307
      %v724 = vunpack.c.l.b16 %v308
      %v725 = vunpack.c.l.b16 %v309
      %v726 = vunpack.c.l.b16 %v310
      %v727 = vunpack.c.l.b16 %v311
      %v728 = vunpack.c.l.b16 %v312
      %v729 = vunpack.c.l.b16 %v313
      %v730 = vunpack.c.l.b16 %v314
      %v731 = vunpack.c.l.b16 %v315
      %v732 = vunpack.c.l.b16 %v316
      %v733 = vunpack.c.l.b16 %v317
      %v734 = vunpack.c.l.b16 %v318
      %v735 = vunpack.c.l.b16 %v319
      %v736 = vunpack.c.l.b16 %v320
      %v737 = vunpack.c.l.b16 %v321
      %v738 = vunpack.c.l.b16 %v322
      %v739 = vunpack.c.l.b16 %v323
      %v740 = vunpack.c.l.b16 %v324
      %v741 = vunpack.c.l.b16 %v325
      %v742 = vunpack.c.l.b16 %v326
      %v743 = vunpack.c.l.b16 %v327
      %v744 = vunpack.c.l.b16 %v328
      %v745 = vunpack.c.l.b16 %v329
      %v746 = vunpack.c.l.b16 %v330
      %v747 = vunpack.c.l.b16 %v331
      %v748 = vunpack.c.l.b16 %v332
      %v749 = vunpack.c.l.b16 %v333
      %v750 = vunpack.c.l.b16 %v334
      %v751 = vunpack.c.l.b16 %v335
      %v752 = vunpack.c.l.b16 %v336
      %v753 = vunpack.c.l.b16 %v337
      %v754 = vunpack.c.l.b16 %v338
      %v755 = vunpack.c.l.b16 %v339
      %v756 = vunpack.c.l.b16 %v340
      %v757 = vunpack.c.l.b16 %v341
      %v758 = vunpack.c.l.b16 %v342
      %v759 = vunpack.c.l.b16 %v343
      %v760 = vunpack.c.l.b16 %v344
      %v761 = vunpack.c.l.b16 %v345
      %v762 = vunpack.c.l.b16 %v346
      %v763 = vunpack.c.l.b16 %v347
      %v764 = vunpack.c.l.b16 %v348
      %v765 = vunpack.c.l.b16 %v349
      %v766 = vunpack.c.l.b16 %v350
      %v767 = vunpack.c.l.b16 %v351
      %v768 = vunpack.c.l.b16 %v352
      %v769 = vunpack.c.l.b16 %v353
      %v770 = vunpack.c.l.b16 %v354
      %v771 = vunpack.c.l.b16 %v355
      %v772 = vunpack.c.l.b16 %v356
      %v773 = vunpack.c.l.b16 %v357
      %v774 = vunpack.c.l.b16 %v358
      %v775 = vunpack.c.l.b16 %v359
      %v776 = vunpack.c.l.b16 %v360
      %v777 = vunpack.c.l.b16 %v361
      %v778 = vunpack.c.l.b16 %v362
      %v779 = vunpack.c.l.b16 %v363
      %v780 = vunpack.c.l.b16 %v364
      %v781 = vunpack.c.l.b16 %v365
      %v782 = vunpack.c.l.b16 %v366
      %v783 = vunpack.c.l.b16 %v367
      %v784 = vunpack.c.l.b16 %v368
      %v785 = vunpack.c.l.b16 %v369
      %v786 = vunpack.c.l.b16 %v370
      %v787 = vunpack.c.l.b16 %v371
      %v788 = vunpack.c.l.b16 %v372
      %v789 = vunpack.c.l.b16 %v373
      %v790 = vunpack.c.l.b16 %v374
      %v791 = vunpack.c.l.b16 %v375
      %v792 = vunpack.c.l.b16 %v376
      %v793 = vunpack.c.l.b16 %v377
      %v794 = vunpack.c.l.b16 %v378
      %v795 = vunpack.c.l.b16 %v379
      %v796 = vunpack.c.l.b16 %v380
      %v797 = vunpack.c.l.b16 %v381
      %v798 = vunpack.c.l.b16 %v382
      %v799 = vunpack.c.l.b16 %v383
      %v800 = vunpack.c.l.b16 %v384
      %v801 = vunpack.c.l.b16 %v385
      %v802 = vunpack.c.l.b16 %v386
      %v803 = vunpack.c.l.b16 %v387
      %v804 = vunpack.c.l.b16 %v388
      %v805 = vunpack.c.l.b16 %v389
      %v806 = vunpack.c.l.b16 %v390
      %v807 = vunpack.c.l.b16 %v391
      %v808 = vunpack.c.l.b16 %v392
      %v809 = vunpack.c.l.b16 %v393
      %v810 = vunpack.c.l.b16 %v394
      %v811 = vunpack.c.l.b16 %v395
      %v812 = vunpack.c.l.b16 %v396
      %v813 = vunpack.c.l.b16 %v397
      %v814 = vunpack.c.l.b16 %v398
      %v815 = vunpack.c.l.b16 %v399
      %v816 = vunpack.c.l.b16 %v400
      %v817 = vunpack.c.l.b16 %v401
      %v818 = vunpack.c.l.b16 %v402
      %v819 = vunpack.c.l.b16 %v403
      %v820 = vunpack.c.l.b16 %v404
      %v821 = vunpack.c.l.b16 %v405
      %v822 = vunpack.c.l.b16 %v406
      %v823 = vunpack.c.l.b16 %v407
      %v824 = vunpack.c.l.b16 %v408
      %v825 = vunpack.c.l.b16 %v409
      %v826 = vunpack.c.l.b16 %v410
      %v827 = vunpack.c.l.b16 %v411
      %v828 = vunpack.c.l.b16 %v412
      %v829 = vunpack.c.l.b16 %v413
      %v830 = vunpack.c.l.b16 %v414
      %v831 = vunpack.c.l.b16 %v415
      %v832 = vunpack.c.l.b16 %v416
      %v833 = vunpack.c.l.b16 %v417
      %v834 = vunpack.c.l.b16 %v418
      %v835 = vunpack.c.l.b16 %v419
      %v836 = vunpack.c.l.b16 %v420
      %v837 = vunpack.c.l.b16 %v421
      %v838 = vunpack.c.l.b16 %v422
      %v839 = vunpack.c.l.b16 %v423
      %v840 = vunpack.c.l.b16 %v424
      %v841 = vunpack.c.l.b16 %v425
      %v842 = vunpack.c.l.b16 %v426
      %v843 = vunpack.c.l.b16 %v427
      %v844 = vunpack.c.l.b16 %v428
      %v845 = vunpack.c.l.b16 %v429
      %v846 = vunpack.c.l.b16 %v430
      %v847 = vunpack.c.l.b16 %v431
      %v848 = vunpack.c.l.b16 %v432
      %v849 = vunpack.c.l.b16 %v433
      %v850 = vunpack.c.l.b16 %v434
      %v851 = vpack.c.b16 %v724, %v723
      %v852 = vpack.c.b16 %v726, %v725
      %v853 = vpack.c.b16 %v728, %v727
      %v854 = vpack.c.b16 %v730, %v729
      %v855 = vpack.c.b16 %v732, %v731
      %v856 = vpack.c.b16 %v734, %v733
      %v857 = vpack.c.b16 %v736, %v735
      %v858 = vpack.c.b16 %v738, %v737
      %v859 = vpack.c.b16 %v740, %v739
      %v860 = vpack.c.b16 %v742, %v741
      %v861 = vpack.c.b16 %v744, %v743
      %v862 = vpack.c.b16 %v746, %v745
      %v863 = vpack.c.b16 %v748, %v747
      %v864 = vpack.c.b16 %v750, %v749
      %v865 = vpack.c.b16 %v752, %v751
      %v866 = vpack.c.b16 %v754, %v753
      %v867 = vpack.c.b16 %v756, %v755
      %v868 = vpack.c.b16 %v758, %v757
      %v869 = vpack.c.b16 %v760, %v759
      %v870 = vpack.c.b16 %v762, %v761
      %v871 = vpack.c.b16 %v764, %v763
      %v872 = vpack.c.b16 %v766, %v765
      %v873 = vpack.c.b16 %v768, %v767
      %v874 = vpack.c.b16 %v770, %v769
      %v875 = vpack.c.b16 %v772, %v771
      %v876 = vpack.c.b16 %v774, %v773
      %v877 = vpack.c.b16 %v776, %v775
      %v878 = vpack.c.b16 %v778, %v777
      %v879 = vpack.c.b16 %v780, %v779
      %v880 = vpack.c.b16 %v782, %v781
      %v881 = vpack.c.b16 %v784, %v783
      %v882 = vpack.c.b16 %v786, %v785
      %v883 = vpack.c.b16 %v788, %v787
      %v884 = vpack.c.b16 %v790, %v789
      %v885 = vpack.c.b16 %v792, %v791
      %v886 = vpack.c.b16 %v794, %v793
      %v887 = vpack.c.b16 %v796, %v795
      %v888 = vpack.c.b16 %v798, %v797
      %v889 = vpack.c.b16 %v800, %v799
      %v890 = vpack.c.b16 %v802, %v801
      %v891 = vpack.c.b16 %v804, %v803
      %v892 = vpack.c.b16 %v806, %v805
      %v893 = vpack.c.b16 %v808, %v807
      %v894 = vpack.c.b16 %v810, %v809
      %v895 = vpack.c.b16 %v812, %v811
      %v896 = vpack.c.b16 %v814, %v813
      %v897 = vpack.c.b16 %v816, %v815
      %v898 = vpack.c.b16 %v818, %v817
      %v899 = vpack.c.b16 %v820, %v819
      %v900 = vpack.c.b16 %v822, %v821
      %v901 = vpack.c.b16 %v824, %v823
      %v902 = vpack.c.b16 %v826, %v825
      %v903 = vpack.c.b16 %v828, %v827
      %v904 = vpack.c.b16 %v830, %v829
      %v905 = vpack.c.b16 %v832, %v831
      %v906 = vpack.c.b16 %v834, %v833
      %v907 = vpack.c.b16 %v836, %v835
      %v908 = vpack.c.b16 %v838, %v837
      %v909 = vpack.c.b16 %v840, %v839
      %v910 = vpack.c.b16 %v842, %v841
      %v911 = vpack.c.b16 %v844, %v843
      %v912 = vpack.c.b16 %v846, %v845
      %v913 = vpack.c.b16 %v848, %v847
      %v914 = vpack.c.b16 %v850, %v849
      %979 = vmatprep.subr.bf16.mxu0 0
      %980 = vmatpush1.bf16.msra.mxu0 %v851
      %981 = vmatprep.subr.bf16.mxu0 0
      %982 = vmatpush1.bf16.msra.mxu0 %v852
      %983 = vmatprep.subr.bf16.mxu0 0
      %984 = vmatpush1.bf16.msra.mxu0 %v853
      %985 = vmatprep.subr.bf16.mxu0 0
      %986 = vmatpush1.bf16.msra.mxu0 %v854
      %987 = vmatprep.subr.bf16.mxu0 0
      %988 = vmatpush1.bf16.msra.mxu0 %v855
      %989 = vmatprep.subr.bf16.mxu0 0
      %990 = vmatpush1.bf16.msra.mxu0 %v856
      %991 = vmatprep.subr.bf16.mxu0 0
      %992 = vmatpush1.bf16.msra.mxu0 %v857
      %993 = vmatprep.subr.bf16.mxu0 0
      %994 = vmatpush1.bf16.msra.mxu0 %v858
      %995 = vmatprep.subr.bf16.mxu0 0
      %996 = vmatpush1.bf16.msra.mxu0 %v859
      %997 = vmatprep.subr.bf16.mxu0 0
      %998 = vmatpush1.bf16.msra.mxu0 %v860
      %999 = vmatprep.subr.bf16.mxu0 0
      %1000 = vmatpush1.bf16.msra.mxu0 %v861
      %1001 = vmatprep.subr.bf16.mxu0 0
      %1002 = vmatpush1.bf16.msra.mxu0 %v862
      %1003 = vmatprep.subr.bf16.mxu0 0
      %1004 = vmatpush1.bf16.msra.mxu0 %v863
      %1005 = vmatprep.subr.bf16.mxu0 0
      %1006 = vmatpush1.bf16.msra.mxu0 %v864
      %1007 = vmatprep.subr.bf16.mxu0 0
      %1008 = vmatpush1.bf16.msra.mxu0 %v865
      %1009 = vmatprep.subr.bf16.mxu0 0
      %1010 = vmatpush1.bf16.msra.mxu0 %v866
      %1011 = vmatprep.mubr.bf16.mxu0 %v532
      %1012 = vmatmul.mubr.bf16.gmra.mrb[0].mxu0 %v531
      %v1013 = vpop.f32.mrb[0].mxu0
      %v1014 = vadd.f32 0.0, %v1013
      %v1015 = vpop.f32.mrb[0].mxu0
      %v1016 = vpop.f32.mrb[0].mxu0
      %v1017 = vadd.f32 0.0, %v1016
      %v1018 = vpop.f32.mrb[0].mxu0
      %1019 = vmatprep.mubr.bf16.mxu0 %v540
      %1020 = vmatmul.mubr.bf16.gmra.mrb[0].mxu0 %v539
      %v1021 = vpop.f32.mrb[0].mxu0
      %v1022 = vadd.f32 0.0, %v1021
      %v1023 = vpop.f32.mrb[0].mxu0
      %v1024 = vpop.f32.mrb[0].mxu0
      %v1025 = vadd.f32 0.0, %v1024
      %v1026 = vpop.f32.mrb[0].mxu0
      %1027 = vmatprep.mubr.bf16.mxu0 %v548
      %1028 = vmatmul.mubr.bf16.gmra.mrb[0].mxu0 %v547
      %v1029 = vpop.f32.mrb[0].mxu0
      %v1030 = vadd.f32 0.0, %v1029
      %v1031 = vpop.f32.mrb[0].mxu0
      %v1032 = vpop.f32.mrb[0].mxu0
      %v1033 = vadd.f32 0.0, %v1032
      %v1034 = vpop.f32.mrb[0].mxu0
      %1035 = vmatprep.mubr.bf16.mxu0 %v556
      %1036 = vmatmul.mubr.bf16.gmra.mrb[0].mxu0 %v555
      %v1037 = vpop.f32.mrb[0].mxu0
      %v1038 = vadd.f32 0.0, %v1037
      %v1039 = vpop.f32.mrb[0].mxu0
      %v1040 = vpop.f32.mrb[0].mxu0
      %v1041 = vadd.f32 0.0, %v1040
      %v1042 = vpop.f32.mrb[0].mxu0
      %1043 = vdwg.mxu0
      %1044 = vmatprep.subr.bf16.mxu0 0
      %1045 = vmatpush1.bf16.msra.mxu0 %v867
      %1046 = vmatprep.subr.bf16.mxu0 0
      %1047 = vmatpush1.bf16.msra.mxu0 %v868
      %1048 = vmatprep.subr.bf16.mxu0 0
      %1049 = vmatpush1.bf16.msra.mxu0 %v869
      %1050 = vmatprep.subr.bf16.mxu0 0
      %1051 = vmatpush1.bf16.msra.mxu0 %v870
      %1052 = vmatprep.subr.bf16.mxu0 0
      %1053 = vmatpush1.bf16.msra.mxu0 %v871
      %1054 = vmatprep.subr.bf16.mxu0 0
      %1055 = vmatpush1.bf16.msra.mxu0 %v872
      %1056 = vmatprep.subr.bf16.mxu0 0
      %1057 = vmatpush1.bf16.msra.mxu0 %v873
      %1058 = vmatprep.subr.bf16.mxu0 0
      %1059 = vmatpush1.bf16.msra.mxu0 %v874
      %1060 = vmatprep.subr.bf16.mxu0 0
      %1061 = vmatpush1.bf16.msra.mxu0 %v875
      %1062 = vmatprep.subr.bf16.mxu0 0
      %1063 = vmatpush1.bf16.msra.mxu0 %v876
      %1064 = vmatprep.subr.bf16.mxu0 0
      %1065 = vmatpush1.bf16.msra.mxu0 %v877
      %1066 = vmatprep.subr.bf16.mxu0 0
      %1067 = vmatpush1.bf16.msra.mxu0 %v878
      %1068 = vmatprep.subr.bf16.mxu0 0
      %1069 = vmatpush1.bf16.msra.mxu0 %v879
      %1070 = vmatprep.subr.bf16.mxu0 0
      %1071 = vmatpush1.bf16.msra.mxu0 %v880
      %1072 = vmatprep.subr.bf16.mxu0 0
      %1073 = vmatpush1.bf16.msra.mxu0 %v881
      %1074 = vmatprep.subr.bf16.mxu0 0
      %1075 = vmatpush1.bf16.msra.mxu0 %v882
      %1076 = vmatprep.mubr.bf16.mxu0 %v534
      %1077 = vmatmul.mubr.bf16.gmra.mrb[0].mxu0 %v533
      %v1078 = vpop.f32.mrb[0].mxu0
      %v1079 = vadd.f32 %v1014, %v1078
      %v1080 = vpop.f32.mrb[0].mxu0
      %v1081 = vpop.f32.mrb[0].mxu0
      %v1082 = vadd.f32 %v1017, %v1081
      %v1083 = vpop.f32.mrb[0].mxu0
      %1084 = vmatprep.mubr.bf16.mxu0 %v542
      %1085 = vmatmul.mubr.bf16.gmra.mrb[0].mxu0 %v541
      %v1086 = vpop.f32.mrb[0].mxu0
      %v1087 = vadd.f32 %v1022, %v1086
      %v1088 = vpop.f32.mrb[0].mxu0
      %v1089 = vpop.f32.mrb[0].mxu0
      %v1090 = vadd.f32 %v1025, %v1089
      %v1091 = vpop.f32.mrb[0].mxu0
      %1092 = vmatprep.mubr.bf16.mxu0 %v550
      %1093 = vmatmul.mubr.bf16.gmra.mrb[0].mxu0 %v549
      %v1094 = vpop.f32.mrb[0].mxu0
      %v1095 = vadd.f32 %v1030, %v1094
      %v1096 = vpop.f32.mrb[0].mxu0
      %v1097 = vpop.f32.mrb[0].mxu0
      %v1098 = vadd.f32 %v1033, %v1097
      %v1099 = vpop.f32.mrb[0].mxu0
      %1100 = vmatprep.mubr.bf16.mxu0 %v558
      %1101 = vmatmul.mubr.bf16.gmra.mrb[0].mxu0 %v557
      %v1102 = vpop.f32.mrb[0].mxu0
      %v1103 = vadd.f32 %v1038, %v1102
      %v1104 = vpop.f32.mrb[0].mxu0
      %v1105 = vpop.f32.mrb[0].mxu0
      %v1106 = vadd.f32 %v1041, %v1105
      %v1107 = vpop.f32.mrb[0].mxu0
      %1108 = vdwg.mxu0
      %1109 = vmatprep.subr.bf16.mxu0 0
      %1110 = vmatpush1.bf16.msra.mxu0 %v883
      %1111 = vmatprep.subr.bf16.mxu0 0
      %1112 = vmatpush1.bf16.msra.mxu0 %v884
      %1113 = vmatprep.subr.bf16.mxu0 0
      %1114 = vmatpush1.bf16.msra.mxu0 %v885
      %1115 = vmatprep.subr.bf16.mxu0 0
      %1116 = vmatpush1.bf16.msra.mxu0 %v886
      %1117 = vmatprep.subr.bf16.mxu0 0
      %1118 = vmatpush1.bf16.msra.mxu0 %v887
      %1119 = vmatprep.subr.bf16.mxu0 0
      %1120 = vmatpush1.bf16.msra.mxu0 %v888
      %1121 = vmatprep.subr.bf16.mxu0 0
      %1122 = vmatpush1.bf16.msra.mxu0 %v889
      %1123 = vmatprep.subr.bf16.mxu0 0
      %1124 = vmatpush1.bf16.msra.mxu0 %v890
      %1125 = vmatprep.subr.bf16.mxu0 0
      %1126 = vmatpush1.bf16.msra.mxu0 %v891
      %1127 = vmatprep.subr.bf16.mxu0 0
      %1128 = vmatpush1.bf16.msra.mxu0 %v892
      %1129 = vmatprep.subr.bf16.mxu0 0
      %1130 = vmatpush1.bf16.msra.mxu0 %v893
      %1131 = vmatprep.subr.bf16.mxu0 0
      %1132 = vmatpush1.bf16.msra.mxu0 %v894
      %1133 = vmatprep.subr.bf16.mxu0 0
      %1134 = vmatpush1.bf16.msra.mxu0 %v895
      %1135 = vmatprep.subr.bf16.mxu0 0
      %1136 = vmatpush1.bf16.msra.mxu0 %v896
      %1137 = vmatprep.subr.bf16.mxu0 0
      %1138 = vmatpush1.bf16.msra.mxu0 %v897
      %1139 = vmatprep.subr.bf16.mxu0 0
      %1140 = vmatpush1.bf16.msra.mxu0 %v898
      %1141 = vmatprep.mubr.bf16.mxu0 %v536
      %1142 = vmatmul.mubr.bf16.gmra.mrb[0].mxu0 %v535
      %v1143 = vpop.f32.mrb[0].mxu0
      %v1144 = vadd.f32 %v1079, %v1143
      %v1145 = vpop.f32.mrb[0].mxu0
      %v1146 = vpop.f32.mrb[0].mxu0
      %v1147 = vadd.f32 %v1082, %v1146
      %v1148 = vpop.f32.mrb[0].mxu0
      %1149 = vmatprep.mubr.bf16.mxu0 %v544
      %1150 = vmatmul.mubr.bf16.gmra.mrb[0].mxu0 %v543
      %v1151 = vpop.f32.mrb[0].mxu0
      %v1152 = vadd.f32 %v1087, %v1151
      %v1153 = vpop.f32.mrb[0].mxu0
      %v1154 = vpop.f32.mrb[0].mxu0
      %v1155 = vadd.f32 %v1090, %v1154
      %v1156 = vpop.f32.mrb[0].mxu0
      %1157 = vmatprep.mubr.bf16.mxu0 %v552
      %1158 = vmatmul.mubr.bf16.gmra.mrb[0].mxu0 %v551
      %v1159 = vpop.f32.mrb[0].mxu0
      %v1160 = vadd.f32 %v1095, %v1159
      %v1161 = vpop.f32.mrb[0].mxu0
      %v1162 = vpop.f32.mrb[0].mxu0
      %v1163 = vadd.f32 %v1098, %v1162
      %v1164 = vpop.f32.mrb[0].mxu0
      %1165 = vmatprep.mubr.bf16.mxu0 %v560
      %1166 = vmatmul.mubr.bf16.gmra.mrb[0].mxu0 %v559
      %v1167 = vpop.f32.mrb[0].mxu0
      %v1168 = vadd.f32 %v1103, %v1167
      %v1169 = vpop.f32.mrb[0].mxu0
      %v1170 = vpop.f32.mrb[0].mxu0
      %v1171 = vadd.f32 %v1106, %v1170
      %v1172 = vpop.f32.mrb[0].mxu0
      %1173 = vdwg.mxu0
      %1174 = vmatprep.subr.bf16.mxu0 0
      %1175 = vmatpush1.bf16.msra.mxu0 %v899
      %1176 = vmatprep.subr.bf16.mxu0 0
      %1177 = vmatpush1.bf16.msra.mxu0 %v900
      %1178 = vmatprep.subr.bf16.mxu0 0
      %1179 = vmatpush1.bf16.msra.mxu0 %v901
      %1180 = vmatprep.subr.bf16.mxu0 0
      %1181 = vmatpush1.bf16.msra.mxu0 %v902
      %1182 = vmatprep.subr.bf16.mxu0 0
      %1183 = vmatpush1.bf16.msra.mxu0 %v903
      %1184 = vmatprep.subr.bf16.mxu0 0
      %1185 = vmatpush1.bf16.msra.mxu0 %v904
      %1186 = vmatprep.subr.bf16.mxu0 0
      %1187 = vmatpush1.bf16.msra.mxu0 %v905
      %1188 = vmatprep.subr.bf16.mxu0 0
      %1189 = vmatpush1.bf16.msra.mxu0 %v906
      %1190 = vmatprep.subr.bf16.mxu0 0
      %1191 = vmatpush1.bf16.msra.mxu0 %v907
      %1192 = vmatprep.subr.bf16.mxu0 0
      %1193 = vmatpush1.bf16.msra.mxu0 %v908
      %1194 = vmatprep.subr.bf16.mxu0 0
      %1195 = vmatpush1.bf16.msra.mxu0 %v909
      %1196 = vmatprep.subr.bf16.mxu0 0
      %1197 = vmatpush1.bf16.msra.mxu0 %v910
      %1198 = vmatprep.subr.bf16.mxu0 0
      %1199 = vmatpush1.bf16.msra.mxu0 %v911
      %1200 = vmatprep.subr.bf16.mxu0 0
      %1201 = vmatpush1.bf16.msra.mxu0 %v912
      %1202 = vmatprep.subr.bf16.mxu0 0
      %1203 = vmatpush1.bf16.msra.mxu0 %v913
      %1204 = vmatprep.subr.bf16.mxu0 0
      %1205 = vmatpush1.bf16.msra.mxu0 %v914
      %1206 = vmatprep.mubr.bf16.mxu0 %v538
      %1207 = vmatmul.mubr.bf16.gmra.mrb[0].mxu0 %v537
      %v1208 = vpop.f32.mrb[0].mxu0
      %v1209 = vadd.f32 %v1144, %v1208
      %v1210 = vpop.f32.mrb[0].mxu0
      %v1211 = vpop.f32.mrb[0].mxu0
      %v1212 = vadd.f32 %v1147, %v1211
      %v1213 = vpop.f32.mrb[0].mxu0
      %1214 = vmatprep.mubr.bf16.mxu0 %v546
      %1215 = vmatmul.mubr.bf16.gmra.mrb[0].mxu0 %v545
      %v1216 = vpop.f32.mrb[0].mxu0
      %v1217 = vadd.f32 %v1152, %v1216
      %v1218 = vpop.f32.mrb[0].mxu0
      %v1219 = vpop.f32.mrb[0].mxu0
      %v1220 = vadd.f32 %v1155, %v1219
      %v1221 = vpop.f32.mrb[0].mxu0
      %1222 = vmatprep.mubr.bf16.mxu0 %v554
      %1223 = vmatmul.mubr.bf16.gmra.mrb[0].mxu0 %v553
      %v1224 = vpop.f32.mrb[0].mxu0
      %v1225 = vadd.f32 %v1160, %v1224
      %v1226 = vpop.f32.mrb[0].mxu0
      %v1227 = vpop.f32.mrb[0].mxu0
      %v1228 = vadd.f32 %v1163, %v1227
      %v1229 = vpop.f32.mrb[0].mxu0
      %1230 = vmatprep.mubr.bf16.mxu0 %v562
      %1231 = vmatmul.mubr.bf16.gmra.mrb[0].mxu0 %v561
      %v1232 = vpop.f32.mrb[0].mxu0
      %v1233 = vadd.f32 %v1168, %v1232
      %v1234 = vpop.f32.mrb[0].mxu0
      %v1235 = vpop.f32.mrb[0].mxu0
      %v1236 = vadd.f32 %v1171, %v1235
      %v1237 = vpop.f32.mrb[0].mxu0
      %1238 = vdwg.mxu0
      %v1239 = vadd.f32 %v267, %v1209
      %v1240 = vadd.f32 %v268, %v1212
      %v1241 = vadd.f32 %v269, %v1217
      %v1242 = vadd.f32 %v270, %v1220
      %v1243 = vadd.f32 %v271, %v1225
      %v1244 = vadd.f32 %v272, %v1228
      %v1245 = vadd.f32 %v273, %v1233
      %v1246 = vadd.f32 %v274, %v1236
      %p1247 = scmp.lt.s32.totalorder %s20, 0
      // Predicated region
      $region41: #{discriminator_forward.6} parent=35 // pred_check
        %p1248 = pneg %p1247
      $region42: #{discriminator_forward.6} parent=35 // pred_check_branch
        %1250 = sbr.rel (%p1248) target = $region44
      $region43: #{discriminator_forward.6} parent=35 // pred_region
        %1251 = vst [vmem:[#allocation2] sm:$0xff] %v1239
        %1252 = vst [vmem:[#allocation2 + $0x8] sm:$0xff] %v1240
        %1253 = vst [vmem:[#allocation2 + $0x10] sm:$0xff] %v1241
        %1254 = vst [vmem:[#allocation2 + $0x18] sm:$0xff] %v1242
        %1255 = vst [vmem:[#allocation2 + $0x20] sm:$0xff] %v1243
        %1256 = vst [vmem:[#allocation2 + $0x28] sm:$0xff] %v1244
        %1257 = vst [vmem:[#allocation2 + $0x30] sm:$0xff] %v1245
        %1258 = vst [vmem:[#allocation2 + $0x38] sm:$0xff] %v1246
      $region44: #{discriminator_forward.6} parent=35 // pred_fallthru
        _
      // Predicated region
      $region45: #{discriminator_forward.6} parent=35 // pred_check
        %p1259 = pneg %p255
      $region46: #{discriminator_forward.6} parent=35 // pred_check_branch
        %1261 = sbr.rel (%p1259) target = $region48
      $region47: #{discriminator_forward.6} parent=35 // pred_region
        %v1262 = vld [vmem:[%s2] sm:$0x1]
        %v1264 = vlaneseq
        %v1265 = vshrl.u32 %v1264, 7
        %v1266 = vsub.s32 0, %v1265
        %v1267 = vrot.slane %v1262, %v1266
        %v1269 = vmul.f32 %v1239, %v1267
        %v1270 = vmul.f32 %v1240, %v1267
        %v1271 = vmul.f32 %v1241, %v1267
        %v1272 = vmul.f32 %v1242, %v1267
        %v1273 = vmul.f32 %v1243, %v1267
        %v1274 = vmul.f32 %v1244, %v1267
        %v1275 = vmul.f32 %v1245, %v1267
        %v1276 = vmul.f32 %v1246, %v1267
        %v1277 = vld [vmem:[%s3] sm:$0x1]
        %v1279 = vlaneseq
        %v1280 = vshrl.u32 %v1279, 7
        %v1281 = vsub.s32 0, %v1280
        %v1282 = vrot.slane %v1277, %v1281
        %v1284 = vadd.f32 %v1269, %v1282
        %v1285 = vadd.f32 %v1270, %v1282
        %v1286 = vadd.f32 %v1271, %v1282
        %v1287 = vadd.f32 %v1272, %v1282
        %v1288 = vadd.f32 %v1273, %v1282
        %v1289 = vadd.f32 %v1274, %v1282
        %v1290 = vadd.f32 %v1275, %v1282
        %v1291 = vadd.f32 %v1276, %v1282
        %vm1292 = vcmp.ge.f32.partialorder %v1284, 0.0
        %vm1293 = vcmp.ge.f32.partialorder %v1285, 0.0
        %vm1294 = vcmp.ge.f32.partialorder %v1286, 0.0
        %vm1295 = vcmp.ge.f32.partialorder %v1287, 0.0
        %vm1296 = vcmp.ge.f32.partialorder %v1288, 0.0
        %vm1297 = vcmp.ge.f32.partialorder %v1289, 0.0
        %vm1298 = vcmp.ge.f32.partialorder %v1290, 0.0
        %vm1299 = vcmp.ge.f32.partialorder %v1291, 0.0
        %v1300 = vmul.f32 %v1284, 0.2
        %v1301 = vmul.f32 %v1285, 0.2
        %v1302 = vmul.f32 %v1286, 0.2
        %v1303 = vmul.f32 %v1287, 0.2
        %v1304 = vmul.f32 %v1288, 0.2
        %v1305 = vmul.f32 %v1289, 0.2
        %v1306 = vmul.f32 %v1290, 0.2
        %v1307 = vmul.f32 %v1291, 0.2
        %v1308 = vsel %vm1292, %v1284, %v1300
        %v1309 = vsel %vm1293, %v1285, %v1301
        %v1310 = vsel %vm1294, %v1286, %v1302
        %v1311 = vsel %vm1295, %v1287, %v1303
        %v1312 = vsel %vm1296, %v1288, %v1304
        %v1313 = vsel %vm1297, %v1289, %v1305
        %v1314 = vsel %vm1298, %v1290, %v1306
        %v1315 = vsel %vm1299, %v1291, %v1307
        %v1316 = vpack.c.bf16 %v1309, %v1308
        %v1317 = vpack.c.bf16 %v1311, %v1310
        %v1318 = vpack.c.bf16 %v1313, %v1312
        %v1319 = vpack.c.bf16 %v1315, %v1314
        %v1324 = vunpack.c.l.b16 %v1316
        %v1325 = vunpack.c.h.b16 %v1316
        %v1326 = vunpack.c.l.b16 %v1317
        %v1327 = vunpack.c.h.b16 %v1317
        %v1328 = vunpack.c.l.b16 %v1318
        %v1329 = vunpack.c.h.b16 %v1318
        %v1330 = vunpack.c.l.b16 %v1319
        %v1331 = vunpack.c.h.b16 %v1319
        %v1332 = vpack.c.b16 %v1324, %v1324
        %v1333 = vpack.c.b16 %v1325, %v1325
        %v1334 = vpack.c.b16 %v1326, %v1326
        %v1335 = vpack.c.b16 %v1327, %v1327
        %v1336 = vpack.c.b16 %v1328, %v1328
        %v1337 = vpack.c.b16 %v1329, %v1329
        %v1338 = vpack.c.b16 %v1330, %v1330
        %v1339 = vpack.c.b16 %v1331, %v1331
        %1348 = vst [vmem:[%s252] sm:$0xf] %v1332
        %1349 = vst [vmem:[%s252 + $0x4] sm:$0xf] %v1333
        %1350 = vst [vmem:[%s252 + $0x8] sm:$0xf] %v1334
        %1351 = vst [vmem:[%s252 + $0xc] sm:$0xf] %v1335
        %1352 = vst [vmem:[%s252 + $0x10] sm:$0xf] %v1336
        %1353 = vst [vmem:[%s252 + $0x14] sm:$0xf] %v1337
        %1354 = vst [vmem:[%s252 + $0x18] sm:$0xf] %v1338
        %1355 = vst [vmem:[%s252 + $0x1c] sm:$0xf] %v1339
      $region48: #{discriminator_forward.6} parent=35 // pred_fallthru
        _
      %s1356 = smul.u32 8, %s19
      %p1357 = scmp.lt.s32.totalorder %s1356, 15
      %s1358 = scalar_select %p1357, %s1356, 15
      %s1359 = smul.addr %s1358, 4
      %s1360 = scalar_lea.vmem %s4, %s1359
      // Predicated region
      $region49: #{discriminator_forward.6} parent=35 // pred_check
        %p1361 = pneg %p141
      $region50: #{discriminator_forward.6} parent=35 // pred_check_branch
        %1363 = sbr.rel (%p1361) target = $region52
      $region51: #{discriminator_forward.6} parent=35 // pred_region
        %s1364 = smul.u32 8, %s19
      $region52: #{discriminator_forward.6} parent=35 // pred_fallthru
        _
    $region36: #{discriminator_forward.6} parent=5 // pred_fallthru
      _
    %p1365 = scmp.le.s32.totalorder 2, %s10
    // Predicated region
    $region53: #{discriminator_forward.6} parent=5 // pred_check
      %p1366 = pneg %p1365
    $region54: #{discriminator_forward.6} parent=5 // pred_check_branch
      %1368 = sbr.rel (%p1366) target = $region56
    $region55: #{discriminator_forward.6} parent=5 // pred_region
      %s1369 = ssub.s32 %s10, 2
      // Predicated region
      $region57: #{discriminator_forward.6} parent=55 // pred_check
        %p1370 = pneg %p147
      $region58: #{discriminator_forward.6} parent=55 // pred_check_branch
        %1372 = sbr.rel (%p1370) target = $region60
      $region59: #{discriminator_forward.6} parent=55 // pred_region
        %s1373 = smul.u32 8, %s21
        %p1374 = scmp.lt.s32.totalorder %s1373, 15
        %s1375 = scalar_select %p1374, %s1373, 15
        %s1376 = smul.addr %s1375, 4
        %s1377 = scalar_lea.vmem %s4, %s1376
      $region60: #{discriminator_forward.6} parent=55 // pred_fallthru
        _
    $region56: #{discriminator_forward.6} parent=5 // pred_fallthru
      _
  $region6: #{discriminator_forward.6} parent=0 // loop_footer
    %s14 = sadd.s32 1, %s10
  $region7: #{discriminator_forward.6} parent=0 // loop_footer_branch
    %9 = sbr.rel target = $region3
  $region8: #{discriminator_forward.6} parent=0 // loop_exit
    _

// kernel: discriminator_forward.7
$region0: #{discriminator_forward.7}
  #allocation0 [shape = 'u32[]', space=smem, size = 0x4, offset = 0x4, fixed_abs, tag = 'smem constant byte address 0x4 - core index']
  #allocation1 [shape = 'u32[144,128]{1,0:T(1,128)}', space=vmem, size = 0x12000, scoped, tag = 'internal scratch']
  #allocation2 [shape = 'f32[32,256]{1,0:T(8,128)}', space=vmem, size = 0x8000, scoped, tag = 'scratch operand']
  %s0 = inlined_call_operand.vmem [shape: bf16[32,2048], index: 0, kind: input, shape index: {}]
  %s1 = inlined_call_operand.vmem [shape: bf16[2048,256], index: 1, kind: input, shape index: {}]
  %s2 = inlined_call_operand.vmem [shape: f32[1,256], index: 2, kind: input, shape index: {}]
  %s3 = inlined_call_operand.vmem [shape: f32[1,256], index: 3, kind: input, shape index: {}]
  %s4 = inlined_call_operand.vmem [shape: bf16[32,256], index: 4, kind: output, shape index: {}]
  %s5 = sld [smem:[#allocation0]]
  $region38: #{discriminator_forward.7} parent=0
    _
  %s7 = ssub.s32 1, %s5
  %s8 = scalar_select 0, %s7, %s5
  // Predicated region
  $region2: #{discriminator_forward.7} parent=0 // pred_check
    _
  $region3: #{discriminator_forward.7} parent=0 // pred_check_branch
    %10 = sbr.rel (0) target = $region5
  $region4: #{discriminator_forward.7} parent=0 // pred_region
    _
  $region5: #{discriminator_forward.7} parent=0 // pred_fallthru
    _
  // Predicated region
  $region6: #{discriminator_forward.7} parent=0 // pred_check
    _
  $region7: #{discriminator_forward.7} parent=0 // pred_check_branch
    %12 = sbr.rel (0) target = $region9
  $region8: #{discriminator_forward.7} parent=0 // pred_region
    _
  $region9: #{discriminator_forward.7} parent=0 // pred_fallthru
    _
  // Predicated region
  $region10: #{discriminator_forward.7} parent=0 // pred_check
    _
  $region11: #{discriminator_forward.7} parent=0 // pred_check_branch
    %14 = sbr.rel (0) target = $region13
  $region12: #{discriminator_forward.7} parent=0 // pred_region
    _
  $region13: #{discriminator_forward.7} parent=0 // pred_fallthru
    _
  // Predicated region
  $region14: #{discriminator_forward.7} parent=0 // pred_check
    _
  $region15: #{discriminator_forward.7} parent=0 // pred_check_branch
    %16 = sbr.rel (0) target = $region17
  $region16: #{discriminator_forward.7} parent=0 // pred_region
    _
  $region17: #{discriminator_forward.7} parent=0 // pred_fallthru
    _
  %p17 = scmp.eq.s32.totalorder 0, 0
  // Predicated region
  $region18: #{discriminator_forward.7} parent=0 // pred_check
    %p18 = pneg %p17
  $region19: #{discriminator_forward.7} parent=0 // pred_check_branch
    %20 = sbr.rel (%p18) target = $region21
  $region20: #{discriminator_forward.7} parent=0 // pred_region
    %21 = vst [vmem:[#allocation2] sm:$0xff] 0.0
    %22 = vst [vmem:[#allocation2 + $0x8] sm:$0xff] 0.0
    %23 = vst [vmem:[#allocation2 + $0x10] sm:$0xff] 0.0
    %24 = vst [vmem:[#allocation2 + $0x18] sm:$0xff] 0.0
    %25 = vst [vmem:[#allocation2 + $0x20] sm:$0xff] 0.0
    %26 = vst [vmem:[#allocation2 + $0x28] sm:$0xff] 0.0
    %27 = vst [vmem:[#allocation2 + $0x30] sm:$0xff] 0.0
    %28 = vst [vmem:[#allocation2 + $0x38] sm:$0xff] 0.0
  $region21: #{discriminator_forward.7} parent=0 // pred_fallthru
    _
  %v29 = vld [vmem:[#allocation2] sm:$0xff]
  %v30 = vld [vmem:[#allocation2 + $0x8] sm:$0xff]
  %v31 = vld [vmem:[#allocation2 + $0x10] sm:$0xff]
  %v32 = vld [vmem:[#allocation2 + $0x18] sm:$0xff]
  %v33 = vld [vmem:[#allocation2 + $0x20] sm:$0xff]
  %v34 = vld [vmem:[#allocation2 + $0x28] sm:$0xff]
  %v35 = vld [vmem:[#allocation2 + $0x30] sm:$0xff]
  %v36 = vld [vmem:[#allocation2 + $0x38] sm:$0xff]
  %v37 = vld [vmem:[%s0] sm:$0xff]
  %v38 = vld [vmem:[%s0 + $0x8] sm:$0xff]
  %v39 = vld [vmem:[%s0 + $0x10] sm:$0xff]
  %v40 = vld [vmem:[%s0 + $0x18] sm:$0xff]
  %v41 = vld [vmem:[%s0 + $0x20] sm:$0xff]
  %v42 = vld [vmem:[%s0 + $0x28] sm:$0xff]
  %v43 = vld [vmem:[%s0 + $0x30] sm:$0xff]
  %v44 = vld [vmem:[%s0 + $0x38] sm:$0xff]
  %v45 = vld [vmem:[%s0 + $0x40] sm:$0xff]
  %v46 = vld [vmem:[%s0 + $0x48] sm:$0xff]
  %v47 = vld [vmem:[%s0 + $0x50] sm:$0xff]
  %v48 = vld [vmem:[%s0 + $0x58] sm:$0xff]
  %v49 = vld [vmem:[%s0 + $0x60] sm:$0xff]
  %v50 = vld [vmem:[%s0 + $0x68] sm:$0xff]
  %v51 = vld [vmem:[%s0 + $0x70] sm:$0xff]
  %v52 = vld [vmem:[%s0 + $0x78] sm:$0xff]
  %v53 = vld [vmem:[%s0 + $0x80] sm:$0xff]
  %v54 = vld [vmem:[%s0 + $0x88] sm:$0xff]
  %v55 = vld [vmem:[%s0 + $0x90] sm:$0xff]
  %v56 = vld [vmem:[%s0 + $0x98] sm:$0xff]
  %v57 = vld [vmem:[%s0 + $0xa0] sm:$0xff]
  %v58 = vld [vmem:[%s0 + $0xa8] sm:$0xff]
  %v59 = vld [vmem:[%s0 + $0xb0] sm:$0xff]
  %v60 = vld [vmem:[%s0 + $0xb8] sm:$0xff]
  %v61 = vld [vmem:[%s0 + $0xc0] sm:$0xff]
  %v62 = vld [vmem:[%s0 + $0xc8] sm:$0xff]
  %v63 = vld [vmem:[%s0 + $0xd0] sm:$0xff]
  %v64 = vld [vmem:[%s0 + $0xd8] sm:$0xff]
  %v65 = vld [vmem:[%s0 + $0xe0] sm:$0xff]
  %v66 = vld [vmem:[%s0 + $0xe8] sm:$0xff]
  %v67 = vld [vmem:[%s0 + $0xf0] sm:$0xff]
  %v68 = vld [vmem:[%s0 + $0xf8] sm:$0xff]
  %v69 = vld [vmem:[%s1] sm:$0xff]
  %v70 = vld [vmem:[%s1 + $0x8] sm:$0xff]
  %v71 = vld [vmem:[%s1 + $0x10] sm:$0xff]
  %v72 = vld [vmem:[%s1 + $0x18] sm:$0xff]
  %v73 = vld [vmem:[%s1 + $0x20] sm:$0xff]
  %v74 = vld [vmem:[%s1 + $0x28] sm:$0xff]
  %v75 = vld [vmem:[%s1 + $0x30] sm:$0xff]
  %v76 = vld [vmem:[%s1 + $0x38] sm:$0xff]
  %v77 = vld [vmem:[%s1 + $0x40] sm:$0xff]
  %v78 = vld [vmem:[%s1 + $0x48] sm:$0xff]
  %v79 = vld [vmem:[%s1 + $0x50] sm:$0xff]
  %v80 = vld [vmem:[%s1 + $0x58] sm:$0xff]
  %v81 = vld [vmem:[%s1 + $0x60] sm:$0xff]
  %v82 = vld [vmem:[%s1 + $0x68] sm:$0xff]
  %v83 = vld [vmem:[%s1 + $0x70] sm:$0xff]
  %v84 = vld [vmem:[%s1 + $0x78] sm:$0xff]
  %v85 = vld [vmem:[%s1 + $0x80] sm:$0xff]
  %v86 = vld [vmem:[%s1 + $0x88] sm:$0xff]
  %v87 = vld [vmem:[%s1 + $0x90] sm:$0xff]
  %v88 = vld [vmem:[%s1 + $0x98] sm:$0xff]
  %v89 = vld [vmem:[%s1 + $0xa0] sm:$0xff]
  %v90 = vld [vmem:[%s1 + $0xa8] sm:$0xff]
  %v91 = vld [vmem:[%s1 + $0xb0] sm:$0xff]
  %v92 = vld [vmem:[%s1 + $0xb8] sm:$0xff]
  %v93 = vld [vmem:[%s1 + $0xc0] sm:$0xff]
  %v94 = vld [vmem:[%s1 + $0xc8] sm:$0xff]
  %v95 = vld [vmem:[%s1 + $0xd0] sm:$0xff]
  %v96 = vld [vmem:[%s1 + $0xd8] sm:$0xff]
  %v97 = vld [vmem:[%s1 + $0xe0] sm:$0xff]
  %v98 = vld [vmem:[%s1 + $0xe8] sm:$0xff]
  %v99 = vld [vmem:[%s1 + $0xf0] sm:$0xff]
  %v100 = vld [vmem:[%s1 + $0xf8] sm:$0xff]
  %v101 = vld [vmem:[%s1 + $0x100] sm:$0xff]
  %v102 = vld [vmem:[%s1 + $0x108] sm:$0xff]
  %v103 = vld [vmem:[%s1 + $0x110] sm:$0xff]
  %v104 = vld [vmem:[%s1 + $0x118] sm:$0xff]
  %v105 = vld [vmem:[%s1 + $0x120] sm:$0xff]
  %v106 = vld [vmem:[%s1 + $0x128] sm:$0xff]
  %v107 = vld [vmem:[%s1 + $0x130] sm:$0xff]
  %v108 = vld [vmem:[%s1 + $0x138] sm:$0xff]
  %v109 = vld [vmem:[%s1 + $0x140] sm:$0xff]
  %v110 = vld [vmem:[%s1 + $0x148] sm:$0xff]
  %v111 = vld [vmem:[%s1 + $0x150] sm:$0xff]
  %v112 = vld [vmem:[%s1 + $0x158] sm:$0xff]
  %v113 = vld [vmem:[%s1 + $0x160] sm:$0xff]
  %v114 = vld [vmem:[%s1 + $0x168] sm:$0xff]
  %v115 = vld [vmem:[%s1 + $0x170] sm:$0xff]
  %v116 = vld [vmem:[%s1 + $0x178] sm:$0xff]
  %v117 = vld [vmem:[%s1 + $0x180] sm:$0xff]
  %v118 = vld [vmem:[%s1 + $0x188] sm:$0xff]
  %v119 = vld [vmem:[%s1 + $0x190] sm:$0xff]
  %v120 = vld [vmem:[%s1 + $0x198] sm:$0xff]
  %v121 = vld [vmem:[%s1 + $0x1a0] sm:$0xff]
  %v122 = vld [vmem:[%s1 + $0x1a8] sm:$0xff]
  %v123 = vld [vmem:[%s1 + $0x1b0] sm:$0xff]
  %v124 = vld [vmem:[%s1 + $0x1b8] sm:$0xff]
  %v125 = vld [vmem:[%s1 + $0x1c0] sm:$0xff]
  %v126 = vld [vmem:[%s1 + $0x1c8] sm:$0xff]
  %v127 = vld [vmem:[%s1 + $0x1d0] sm:$0xff]
  %v128 = vld [vmem:[%s1 + $0x1d8] sm:$0xff]
  %v129 = vld [vmem:[%s1 + $0x1e0] sm:$0xff]
  %v130 = vld [vmem:[%s1 + $0x1e8] sm:$0xff]
  %v131 = vld [vmem:[%s1 + $0x1f0] sm:$0xff]
  %v132 = vld [vmem:[%s1 + $0x1f8] sm:$0xff]
  %v133 = vld [vmem:[%s1 + $0x200] sm:$0xff]
  %v134 = vld [vmem:[%s1 + $0x208] sm:$0xff]
  %v135 = vld [vmem:[%s1 + $0x210] sm:$0xff]
  %v136 = vld [vmem:[%s1 + $0x218] sm:$0xff]
  %v137 = vld [vmem:[%s1 + $0x220] sm:$0xff]
  %v138 = vld [vmem:[%s1 + $0x228] sm:$0xff]
  %v139 = vld [vmem:[%s1 + $0x230] sm:$0xff]
  %v140 = vld [vmem:[%s1 + $0x238] sm:$0xff]
  %v141 = vld [vmem:[%s1 + $0x240] sm:$0xff]
  %v142 = vld [vmem:[%s1 + $0x248] sm:$0xff]
  %v143 = vld [vmem:[%s1 + $0x250] sm:$0xff]
  %v144 = vld [vmem:[%s1 + $0x258] sm:$0xff]
  %v145 = vld [vmem:[%s1 + $0x260] sm:$0xff]
  %v146 = vld [vmem:[%s1 + $0x268] sm:$0xff]
  %v147 = vld [vmem:[%s1 + $0x270] sm:$0xff]
  %v148 = vld [vmem:[%s1 + $0x278] sm:$0xff]
  %v149 = vld [vmem:[%s1 + $0x280] sm:$0xff]
  %v150 = vld [vmem:[%s1 + $0x288] sm:$0xff]
  %v151 = vld [vmem:[%s1 + $0x290] sm:$0xff]
  %v152 = vld [vmem:[%s1 + $0x298] sm:$0xff]
  %v153 = vld [vmem:[%s1 + $0x2a0] sm:$0xff]
  %v154 = vld [vmem:[%s1 + $0x2a8] sm:$0xff]
  %v155 = vld [vmem:[%s1 + $0x2b0] sm:$0xff]
  %v156 = vld [vmem:[%s1 + $0x2b8] sm:$0xff]
  %v157 = vld [vmem:[%s1 + $0x2c0] sm:$0xff]
  %v158 = vld [vmem:[%s1 + $0x2c8] sm:$0xff]
  %v159 = vld [vmem:[%s1 + $0x2d0] sm:$0xff]
  %v160 = vld [vmem:[%s1 + $0x2d8] sm:$0xff]
  %v161 = vld [vmem:[%s1 + $0x2e0] sm:$0xff]
  %v162 = vld [vmem:[%s1 + $0x2e8] sm:$0xff]
  %v163 = vld [vmem:[%s1 + $0x2f0] sm:$0xff]
  %v164 = vld [vmem:[%s1 + $0x2f8] sm:$0xff]
  %v165 = vld [vmem:[%s1 + $0x300] sm:$0xff]
  %v166 = vld [vmem:[%s1 + $0x308] sm:$0xff]
  %v167 = vld [vmem:[%s1 + $0x310] sm:$0xff]
  %v168 = vld [vmem:[%s1 + $0x318] sm:$0xff]
  %v169 = vld [vmem:[%s1 + $0x320] sm:$0xff]
  %v170 = vld [vmem:[%s1 + $0x328] sm:$0xff]
  %v171 = vld [vmem:[%s1 + $0x330] sm:$0xff]
  %v172 = vld [vmem:[%s1 + $0x338] sm:$0xff]
  %v173 = vld [vmem:[%s1 + $0x340] sm:$0xff]
  %v174 = vld [vmem:[%s1 + $0x348] sm:$0xff]
  %v175 = vld [vmem:[%s1 + $0x350] sm:$0xff]
  %v176 = vld [vmem:[%s1 + $0x358] sm:$0xff]
  %v177 = vld [vmem:[%s1 + $0x360] sm:$0xff]
  %v178 = vld [vmem:[%s1 + $0x368] sm:$0xff]
  %v179 = vld [vmem:[%s1 + $0x370] sm:$0xff]
  %v180 = vld [vmem:[%s1 + $0x378] sm:$0xff]
  %v181 = vld [vmem:[%s1 + $0x380] sm:$0xff]
  %v182 = vld [vmem:[%s1 + $0x388] sm:$0xff]
  %v183 = vld [vmem:[%s1 + $0x390] sm:$0xff]
  %v184 = vld [vmem:[%s1 + $0x398] sm:$0xff]
  %v185 = vld [vmem:[%s1 + $0x3a0] sm:$0xff]
  %v186 = vld [vmem:[%s1 + $0x3a8] sm:$0xff]
  %v187 = vld [vmem:[%s1 + $0x3b0] sm:$0xff]
  %v188 = vld [vmem:[%s1 + $0x3b8] sm:$0xff]
  %v189 = vld [vmem:[%s1 + $0x3c0] sm:$0xff]
  %v190 = vld [vmem:[%s1 + $0x3c8] sm:$0xff]
  %v191 = vld [vmem:[%s1 + $0x3d0] sm:$0xff]
  %v192 = vld [vmem:[%s1 + $0x3d8] sm:$0xff]
  %v193 = vld [vmem:[%s1 + $0x3e0] sm:$0xff]
  %v194 = vld [vmem:[%s1 + $0x3e8] sm:$0xff]
  %v195 = vld [vmem:[%s1 + $0x3f0] sm:$0xff]
  %v196 = vld [vmem:[%s1 + $0x3f8] sm:$0xff]
  %v197 = vld [vmem:[%s1 + $0x400] sm:$0xff]
  %v198 = vld [vmem:[%s1 + $0x408] sm:$0xff]
  %v199 = vld [vmem:[%s1 + $0x410] sm:$0xff]
  %v200 = vld [vmem:[%s1 + $0x418] sm:$0xff]
  %v201 = vld [vmem:[%s1 + $0x420] sm:$0xff]
  %v202 = vld [vmem:[%s1 + $0x428] sm:$0xff]
  %v203 = vld [vmem:[%s1 + $0x430] sm:$0xff]
  %v204 = vld [vmem:[%s1 + $0x438] sm:$0xff]
  %v205 = vld [vmem:[%s1 + $0x440] sm:$0xff]
  %v206 = vld [vmem:[%s1 + $0x448] sm:$0xff]
  %v207 = vld [vmem:[%s1 + $0x450] sm:$0xff]
  %v208 = vld [vmem:[%s1 + $0x458] sm:$0xff]
  %v209 = vld [vmem:[%s1 + $0x460] sm:$0xff]
  %v210 = vld [vmem:[%s1 + $0x468] sm:$0xff]
  %v211 = vld [vmem:[%s1 + $0x470] sm:$0xff]
  %v212 = vld [vmem:[%s1 + $0x478] sm:$0xff]
  %v213 = vld [vmem:[%s1 + $0x480] sm:$0xff]
  %v214 = vld [vmem:[%s1 + $0x488] sm:$0xff]
  %v215 = vld [vmem:[%s1 + $0x490] sm:$0xff]
  %v216 = vld [vmem:[%s1 + $0x498] sm:$0xff]
  %v217 = vld [vmem:[%s1 + $0x4a0] sm:$0xff]
  %v218 = vld [vmem:[%s1 + $0x4a8] sm:$0xff]
  %v219 = vld [vmem:[%s1 + $0x4b0] sm:$0xff]
  %v220 = vld [vmem:[%s1 + $0x4b8] sm:$0xff]
  %v221 = vld [vmem:[%s1 + $0x4c0] sm:$0xff]
  %v222 = vld [vmem:[%s1 + $0x4c8] sm:$0xff]
  %v223 = vld [vmem:[%s1 + $0x4d0] sm:$0xff]
  %v224 = vld [vmem:[%s1 + $0x4d8] sm:$0xff]
  %v225 = vld [vmem:[%s1 + $0x4e0] sm:$0xff]
  %v226 = vld [vmem:[%s1 + $0x4e8] sm:$0xff]
  %v227 = vld [vmem:[%s1 + $0x4f0] sm:$0xff]
  %v228 = vld [vmem:[%s1 + $0x4f8] sm:$0xff]
  %v229 = vld [vmem:[%s1 + $0x500] sm:$0xff]
  %v230 = vld [vmem:[%s1 + $0x508] sm:$0xff]
  %v231 = vld [vmem:[%s1 + $0x510] sm:$0xff]
  %v232 = vld [vmem:[%s1 + $0x518] sm:$0xff]
  %v233 = vld [vmem:[%s1 + $0x520] sm:$0xff]
  %v234 = vld [vmem:[%s1 + $0x528] sm:$0xff]
  %v235 = vld [vmem:[%s1 + $0x530] sm:$0xff]
  %v236 = vld [vmem:[%s1 + $0x538] sm:$0xff]
  %v237 = vld [vmem:[%s1 + $0x540] sm:$0xff]
  %v238 = vld [vmem:[%s1 + $0x548] sm:$0xff]
  %v239 = vld [vmem:[%s1 + $0x550] sm:$0xff]
  %v240 = vld [vmem:[%s1 + $0x558] sm:$0xff]
  %v241 = vld [vmem:[%s1 + $0x560] sm:$0xff]
  %v242 = vld [vmem:[%s1 + $0x568] sm:$0xff]
  %v243 = vld [vmem:[%s1 + $0x570] sm:$0xff]
  %v244 = vld [vmem:[%s1 + $0x578] sm:$0xff]
  %v245 = vld [vmem:[%s1 + $0x580] sm:$0xff]
  %v246 = vld [vmem:[%s1 + $0x588] sm:$0xff]
  %v247 = vld [vmem:[%s1 + $0x590] sm:$0xff]
  %v248 = vld [vmem:[%s1 + $0x598] sm:$0xff]
  %v249 = vld [vmem:[%s1 + $0x5a0] sm:$0xff]
  %v250 = vld [vmem:[%s1 + $0x5a8] sm:$0xff]
  %v251 = vld [vmem:[%s1 + $0x5b0] sm:$0xff]
  %v252 = vld [vmem:[%s1 + $0x5b8] sm:$0xff]
  %v253 = vld [vmem:[%s1 + $0x5c0] sm:$0xff]
  %v254 = vld [vmem:[%s1 + $0x5c8] sm:$0xff]
  %v255 = vld [vmem:[%s1 + $0x5d0] sm:$0xff]
  %v256 = vld [vmem:[%s1 + $0x5d8] sm:$0xff]
  %v257 = vld [vmem:[%s1 + $0x5e0] sm:$0xff]
  %v258 = vld [vmem:[%s1 + $0x5e8] sm:$0xff]
  %v259 = vld [vmem:[%s1 + $0x5f0] sm:$0xff]
  %v260 = vld [vmem:[%s1 + $0x5f8] sm:$0xff]
  %v261 = vld [vmem:[%s1 + $0x600] sm:$0xff]
  %v262 = vld [vmem:[%s1 + $0x608] sm:$0xff]
  %v263 = vld [vmem:[%s1 + $0x610] sm:$0xff]
  %v264 = vld [vmem:[%s1 + $0x618] sm:$0xff]
  %v265 = vld [vmem:[%s1 + $0x620] sm:$0xff]
  %v266 = vld [vmem:[%s1 + $0x628] sm:$0xff]
  %v267 = vld [vmem:[%s1 + $0x630] sm:$0xff]
  %v268 = vld [vmem:[%s1 + $0x638] sm:$0xff]
  %v269 = vld [vmem:[%s1 + $0x640] sm:$0xff]
  %v270 = vld [vmem:[%s1 + $0x648] sm:$0xff]
  %v271 = vld [vmem:[%s1 + $0x650] sm:$0xff]
  %v272 = vld [vmem:[%s1 + $0x658] sm:$0xff]
  %v273 = vld [vmem:[%s1 + $0x660] sm:$0xff]
  %v274 = vld [vmem:[%s1 + $0x668] sm:$0xff]
  %v275 = vld [vmem:[%s1 + $0x670] sm:$0xff]
  %v276 = vld [vmem:[%s1 + $0x678] sm:$0xff]
  %v277 = vld [vmem:[%s1 + $0x680] sm:$0xff]
  %v278 = vld [vmem:[%s1 + $0x688] sm:$0xff]
  %v279 = vld [vmem:[%s1 + $0x690] sm:$0xff]
  %v280 = vld [vmem:[%s1 + $0x698] sm:$0xff]
  %v281 = vld [vmem:[%s1 + $0x6a0] sm:$0xff]
  %v282 = vld [vmem:[%s1 + $0x6a8] sm:$0xff]
  %v283 = vld [vmem:[%s1 + $0x6b0] sm:$0xff]
  %v284 = vld [vmem:[%s1 + $0x6b8] sm:$0xff]
  %v285 = vld [vmem:[%s1 + $0x6c0] sm:$0xff]
  %v286 = vld [vmem:[%s1 + $0x6c8] sm:$0xff]
  %v287 = vld [vmem:[%s1 + $0x6d0] sm:$0xff]
  %v288 = vld [vmem:[%s1 + $0x6d8] sm:$0xff]
  %v289 = vld [vmem:[%s1 + $0x6e0] sm:$0xff]
  %v290 = vld [vmem:[%s1 + $0x6e8] sm:$0xff]
  %v291 = vld [vmem:[%s1 + $0x6f0] sm:$0xff]
  %v292 = vld [vmem:[%s1 + $0x6f8] sm:$0xff]
  %v293 = vld [vmem:[%s1 + $0x700] sm:$0xff]
  %v294 = vld [vmem:[%s1 + $0x708] sm:$0xff]
  %v295 = vld [vmem:[%s1 + $0x710] sm:$0xff]
  %v296 = vld [vmem:[%s1 + $0x718] sm:$0xff]
  %v297 = vld [vmem:[%s1 + $0x720] sm:$0xff]
  %v298 = vld [vmem:[%s1 + $0x728] sm:$0xff]
  %v299 = vld [vmem:[%s1 + $0x730] sm:$0xff]
  %v300 = vld [vmem:[%s1 + $0x738] sm:$0xff]
  %v301 = vld [vmem:[%s1 + $0x740] sm:$0xff]
  %v302 = vld [vmem:[%s1 + $0x748] sm:$0xff]
  %v303 = vld [vmem:[%s1 + $0x750] sm:$0xff]
  %v304 = vld [vmem:[%s1 + $0x758] sm:$0xff]
  %v305 = vld [vmem:[%s1 + $0x760] sm:$0xff]
  %v306 = vld [vmem:[%s1 + $0x768] sm:$0xff]
  %v307 = vld [vmem:[%s1 + $0x770] sm:$0xff]
  %v308 = vld [vmem:[%s1 + $0x778] sm:$0xff]
  %v309 = vld [vmem:[%s1 + $0x780] sm:$0xff]
  %v310 = vld [vmem:[%s1 + $0x788] sm:$0xff]
  %v311 = vld [vmem:[%s1 + $0x790] sm:$0xff]
  %v312 = vld [vmem:[%s1 + $0x798] sm:$0xff]
  %v313 = vld [vmem:[%s1 + $0x7a0] sm:$0xff]
  %v314 = vld [vmem:[%s1 + $0x7a8] sm:$0xff]
  %v315 = vld [vmem:[%s1 + $0x7b0] sm:$0xff]
  %v316 = vld [vmem:[%s1 + $0x7b8] sm:$0xff]
  %v317 = vld [vmem:[%s1 + $0x7c0] sm:$0xff]
  %v318 = vld [vmem:[%s1 + $0x7c8] sm:$0xff]
  %v319 = vld [vmem:[%s1 + $0x7d0] sm:$0xff]
  %v320 = vld [vmem:[%s1 + $0x7d8] sm:$0xff]
  %v321 = vld [vmem:[%s1 + $0x7e0] sm:$0xff]
  %v322 = vld [vmem:[%s1 + $0x7e8] sm:$0xff]
  %v323 = vld [vmem:[%s1 + $0x7f0] sm:$0xff]
  %v324 = vld [vmem:[%s1 + $0x7f8] sm:$0xff]
  %v357 = vunpack.c.l.b16 %v37
  %v358 = vunpack.c.h.b16 %v37
  %v359 = vunpack.c.l.b16 %v38
  %v360 = vunpack.c.h.b16 %v38
  %v361 = vunpack.c.l.b16 %v39
  %v362 = vunpack.c.h.b16 %v39
  %v363 = vunpack.c.l.b16 %v40
  %v364 = vunpack.c.h.b16 %v40
  %v365 = vunpack.c.l.b16 %v41
  %v366 = vunpack.c.h.b16 %v41
  %v367 = vunpack.c.l.b16 %v42
  %v368 = vunpack.c.h.b16 %v42
  %v369 = vunpack.c.l.b16 %v43
  %v370 = vunpack.c.h.b16 %v43
  %v371 = vunpack.c.l.b16 %v44
  %v372 = vunpack.c.h.b16 %v44
  %v373 = vunpack.c.l.b16 %v45
  %v374 = vunpack.c.h.b16 %v45
  %v375 = vunpack.c.l.b16 %v46
  %v376 = vunpack.c.h.b16 %v46
  %v377 = vunpack.c.l.b16 %v47
  %v378 = vunpack.c.h.b16 %v47
  %v379 = vunpack.c.l.b16 %v48
  %v380 = vunpack.c.h.b16 %v48
  %v381 = vunpack.c.l.b16 %v49
  %v382 = vunpack.c.h.b16 %v49
  %v383 = vunpack.c.l.b16 %v50
  %v384 = vunpack.c.h.b16 %v50
  %v385 = vunpack.c.l.b16 %v51
  %v386 = vunpack.c.h.b16 %v51
  %v387 = vunpack.c.l.b16 %v52
  %v388 = vunpack.c.h.b16 %v52
  %v389 = vunpack.c.l.b16 %v53
  %v390 = vunpack.c.h.b16 %v53
  %v391 = vunpack.c.l.b16 %v54
  %v392 = vunpack.c.h.b16 %v54
  %v393 = vunpack.c.l.b16 %v55
  %v394 = vunpack.c.h.b16 %v55
  %v395 = vunpack.c.l.b16 %v56
  %v396 = vunpack.c.h.b16 %v56
  %v397 = vunpack.c.l.b16 %v57
  %v398 = vunpack.c.h.b16 %v57
  %v399 = vunpack.c.l.b16 %v58
  %v400 = vunpack.c.h.b16 %v58
  %v401 = vunpack.c.l.b16 %v59
  %v402 = vunpack.c.h.b16 %v59
  %v403 = vunpack.c.l.b16 %v60
  %v404 = vunpack.c.h.b16 %v60
  %v405 = vunpack.c.l.b16 %v61
  %v406 = vunpack.c.h.b16 %v61
  %v407 = vunpack.c.l.b16 %v62
  %v408 = vunpack.c.h.b16 %v62
  %v409 = vunpack.c.l.b16 %v63
  %v410 = vunpack.c.h.b16 %v63
  %v411 = vunpack.c.l.b16 %v64
  %v412 = vunpack.c.h.b16 %v64
  %v413 = vunpack.c.l.b16 %v65
  %v414 = vunpack.c.h.b16 %v65
  %v415 = vunpack.c.l.b16 %v66
  %v416 = vunpack.c.h.b16 %v66
  %v417 = vunpack.c.l.b16 %v67
  %v418 = vunpack.c.h.b16 %v67
  %v419 = vunpack.c.l.b16 %v68
  %v420 = vunpack.c.h.b16 %v68
  %v421 = vpack.c.b16 %v373, %v357
  %v422 = vpack.c.b16 %v374, %v358
  %v423 = vpack.c.b16 %v375, %v359
  %v424 = vpack.c.b16 %v376, %v360
  %v425 = vpack.c.b16 %v377, %v361
  %v426 = vpack.c.b16 %v378, %v362
  %v427 = vpack.c.b16 %v379, %v363
  %v428 = vpack.c.b16 %v380, %v364
  %v429 = vpack.c.b16 %v381, %v365
  %v430 = vpack.c.b16 %v382, %v366
  %v431 = vpack.c.b16 %v383, %v367
  %v432 = vpack.c.b16 %v384, %v368
  %v433 = vpack.c.b16 %v385, %v369
  %v434 = vpack.c.b16 %v386, %v370
  %v435 = vpack.c.b16 %v387, %v371
  %v436 = vpack.c.b16 %v388, %v372
  %v437 = vpack.c.b16 %v405, %v389
  %v438 = vpack.c.b16 %v406, %v390
  %v439 = vpack.c.b16 %v407, %v391
  %v440 = vpack.c.b16 %v408, %v392
  %v441 = vpack.c.b16 %v409, %v393
  %v442 = vpack.c.b16 %v410, %v394
  %v443 = vpack.c.b16 %v411, %v395
  %v444 = vpack.c.b16 %v412, %v396
  %v445 = vpack.c.b16 %v413, %v397
  %v446 = vpack.c.b16 %v414, %v398
  %v447 = vpack.c.b16 %v415, %v399
  %v448 = vpack.c.b16 %v416, %v400
  %v449 = vpack.c.b16 %v417, %v401
  %v450 = vpack.c.b16 %v418, %v402
  %v451 = vpack.c.b16 %v419, %v403
  %v452 = vpack.c.b16 %v420, %v404
  %v741 = vunpack.c.l.b16 %v69
  %v742 = vunpack.c.h.b16 %v69
  %v743 = vunpack.c.l.b16 %v70
  %v744 = vunpack.c.h.b16 %v70
  %v745 = vunpack.c.l.b16 %v71
  %v746 = vunpack.c.h.b16 %v71
  %v747 = vunpack.c.l.b16 %v72
  %v748 = vunpack.c.h.b16 %v72
  %v749 = vunpack.c.l.b16 %v73
  %v750 = vunpack.c.h.b16 %v73
  %v751 = vunpack.c.l.b16 %v74
  %v752 = vunpack.c.h.b16 %v74
  %v753 = vunpack.c.l.b16 %v75
  %v754 = vunpack.c.h.b16 %v75
  %v755 = vunpack.c.l.b16 %v76
  %v756 = vunpack.c.h.b16 %v76
  %v757 = vunpack.c.l.b16 %v77
  %v758 = vunpack.c.h.b16 %v77
  %v759 = vunpack.c.l.b16 %v78
  %v760 = vunpack.c.h.b16 %v78
  %v761 = vunpack.c.l.b16 %v79
  %v762 = vunpack.c.h.b16 %v79
  %v763 = vunpack.c.l.b16 %v80
  %v764 = vunpack.c.h.b16 %v80
  %v765 = vunpack.c.l.b16 %v81
  %v766 = vunpack.c.h.b16 %v81
  %v767 = vunpack.c.l.b16 %v82
  %v768 = vunpack.c.h.b16 %v82
  %v769 = vunpack.c.l.b16 %v83
  %v770 = vunpack.c.h.b16 %v83
  %v771 = vunpack.c.l.b16 %v84
  %v772 = vunpack.c.h.b16 %v84
  %v773 = vunpack.c.l.b16 %v85
  %v774 = vunpack.c.h.b16 %v85
  %v775 = vunpack.c.l.b16 %v86
  %v776 = vunpack.c.h.b16 %v86
  %v777 = vunpack.c.l.b16 %v87
  %v778 = vunpack.c.h.b16 %v87
  %v779 = vunpack.c.l.b16 %v88
  %v780 = vunpack.c.h.b16 %v88
  %v781 = vunpack.c.l.b16 %v89
  %v782 = vunpack.c.h.b16 %v89
  %v783 = vunpack.c.l.b16 %v90
  %v784 = vunpack.c.h.b16 %v90
  %v785 = vunpack.c.l.b16 %v91
  %v786 = vunpack.c.h.b16 %v91
  %v787 = vunpack.c.l.b16 %v92
  %v788 = vunpack.c.h.b16 %v92
  %v789 = vunpack.c.l.b16 %v93
  %v790 = vunpack.c.h.b16 %v93
  %v791 = vunpack.c.l.b16 %v94
  %v792 = vunpack.c.h.b16 %v94
  %v793 = vunpack.c.l.b16 %v95
  %v794 = vunpack.c.h.b16 %v95
  %v795 = vunpack.c.l.b16 %v96
  %v796 = vunpack.c.h.b16 %v96
  %v797 = vunpack.c.l.b16 %v97
  %v798 = vunpack.c.h.b16 %v97
  %v799 = vunpack.c.l.b16 %v98
  %v800 = vunpack.c.h.b16 %v98
  %v801 = vunpack.c.l.b16 %v99
  %v802 = vunpack.c.h.b16 %v99
  %v803 = vunpack.c.l.b16 %v100
  %v804 = vunpack.c.h.b16 %v100
  %v805 = vunpack.c.l.b16 %v101
  %v806 = vunpack.c.h.b16 %v101
  %v807 = vunpack.c.l.b16 %v102
  %v808 = vunpack.c.h.b16 %v102
  %v809 = vunpack.c.l.b16 %v103
  %v810 = vunpack.c.h.b16 %v103
  %v811 = vunpack.c.l.b16 %v104
  %v812 = vunpack.c.h.b16 %v104
  %v813 = vunpack.c.l.b16 %v105
  %v814 = vunpack.c.h.b16 %v105
  %v815 = vunpack.c.l.b16 %v106
  %v816 = vunpack.c.h.b16 %v106
  %v817 = vunpack.c.l.b16 %v107
  %v818 = vunpack.c.h.b16 %v107
  %v819 = vunpack.c.l.b16 %v108
  %v820 = vunpack.c.h.b16 %v108
  %v821 = vunpack.c.l.b16 %v109
  %v822 = vunpack.c.h.b16 %v109
  %v823 = vunpack.c.l.b16 %v110
  %v824 = vunpack.c.h.b16 %v110
  %v825 = vunpack.c.l.b16 %v111
  %v826 = vunpack.c.h.b16 %v111
  %v827 = vunpack.c.l.b16 %v112
  %v828 = vunpack.c.h.b16 %v112
  %v829 = vunpack.c.l.b16 %v113
  %v830 = vunpack.c.h.b16 %v113
  %v831 = vunpack.c.l.b16 %v114
  %v832 = vunpack.c.h.b16 %v114
  %v833 = vunpack.c.l.b16 %v115
  %v834 = vunpack.c.h.b16 %v115
  %v835 = vunpack.c.l.b16 %v116
  %v836 = vunpack.c.h.b16 %v116
  %v837 = vunpack.c.l.b16 %v117
  %v838 = vunpack.c.h.b16 %v117
  %v839 = vunpack.c.l.b16 %v118
  %v840 = vunpack.c.h.b16 %v118
  %v841 = vunpack.c.l.b16 %v119
  %v842 = vunpack.c.h.b16 %v119
  %v843 = vunpack.c.l.b16 %v120
  %v844 = vunpack.c.h.b16 %v120
  %v845 = vunpack.c.l.b16 %v121
  %v846 = vunpack.c.h.b16 %v121
  %v847 = vunpack.c.l.b16 %v122
  %v848 = vunpack.c.h.b16 %v122
  %v849 = vunpack.c.l.b16 %v123
  %v850 = vunpack.c.h.b16 %v123
  %v851 = vunpack.c.l.b16 %v124
  %v852 = vunpack.c.h.b16 %v124
  %v853 = vunpack.c.l.b16 %v125
  %v854 = vunpack.c.h.b16 %v125
  %v855 = vunpack.c.l.b16 %v126
  %v856 = vunpack.c.h.b16 %v126
  %v857 = vunpack.c.l.b16 %v127
  %v858 = vunpack.c.h.b16 %v127
  %v859 = vunpack.c.l.b16 %v128
  %v860 = vunpack.c.h.b16 %v128
  %v861 = vunpack.c.l.b16 %v129
  %v862 = vunpack.c.h.b16 %v129
  %v863 = vunpack.c.l.b16 %v130
  %v864 = vunpack.c.h.b16 %v130
  %v865 = vunpack.c.l.b16 %v131
  %v866 = vunpack.c.h.b16 %v131
  %v867 = vunpack.c.l.b16 %v132
  %v868 = vunpack.c.h.b16 %v132
  %v869 = vunpack.c.l.b16 %v133
  %v870 = vunpack.c.h.b16 %v133
  %v871 = vunpack.c.l.b16 %v134
  %v872 = vunpack.c.h.b16 %v134
  %v873 = vunpack.c.l.b16 %v135
  %v874 = vunpack.c.h.b16 %v135
  %v875 = vunpack.c.l.b16 %v136
  %v876 = vunpack.c.h.b16 %v136
  %v877 = vunpack.c.l.b16 %v137
  %v878 = vunpack.c.h.b16 %v137
  %v879 = vunpack.c.l.b16 %v138
  %v880 = vunpack.c.h.b16 %v138
  %v881 = vunpack.c.l.b16 %v139
  %v882 = vunpack.c.h.b16 %v139
  %v883 = vunpack.c.l.b16 %v140
  %v884 = vunpack.c.h.b16 %v140
  %v885 = vunpack.c.l.b16 %v141
  %v886 = vunpack.c.h.b16 %v141
  %v887 = vunpack.c.l.b16 %v142
  %v888 = vunpack.c.h.b16 %v142
  %v889 = vunpack.c.l.b16 %v143
  %v890 = vunpack.c.h.b16 %v143
  %v891 = vunpack.c.l.b16 %v144
  %v892 = vunpack.c.h.b16 %v144
  %v893 = vunpack.c.l.b16 %v145
  %v894 = vunpack.c.h.b16 %v145
  %v895 = vunpack.c.l.b16 %v146
  %v896 = vunpack.c.h.b16 %v146
  %v897 = vunpack.c.l.b16 %v147
  %v898 = vunpack.c.h.b16 %v147
  %v899 = vunpack.c.l.b16 %v148
  %v900 = vunpack.c.h.b16 %v148
  %v901 = vunpack.c.l.b16 %v149
  %v902 = vunpack.c.h.b16 %v149
  %v903 = vunpack.c.l.b16 %v150
  %v904 = vunpack.c.h.b16 %v150
  %v905 = vunpack.c.l.b16 %v151
  %v906 = vunpack.c.h.b16 %v151
  %v907 = vunpack.c.l.b16 %v152
  %v908 = vunpack.c.h.b16 %v152
  %v909 = vunpack.c.l.b16 %v153
  %v910 = vunpack.c.h.b16 %v153
  %v911 = vunpack.c.l.b16 %v154
  %v912 = vunpack.c.h.b16 %v154
  %v913 = vunpack.c.l.b16 %v155
  %v914 = vunpack.c.h.b16 %v155
  %v915 = vunpack.c.l.b16 %v156
  %v916 = vunpack.c.h.b16 %v156
  %v917 = vunpack.c.l.b16 %v157
  %v918 = vunpack.c.h.b16 %v157
  %v919 = vunpack.c.l.b16 %v158
  %v920 = vunpack.c.h.b16 %v158
  %v921 = vunpack.c.l.b16 %v159
  %v922 = vunpack.c.h.b16 %v159
  %v923 = vunpack.c.l.b16 %v160
  %v924 = vunpack.c.h.b16 %v160
  %v925 = vunpack.c.l.b16 %v161
  %v926 = vunpack.c.h.b16 %v161
  %v927 = vunpack.c.l.b16 %v162
  %v928 = vunpack.c.h.b16 %v162
  %v929 = vunpack.c.l.b16 %v163
  %v930 = vunpack.c.h.b16 %v163
  %v931 = vunpack.c.l.b16 %v164
  %v932 = vunpack.c.h.b16 %v164
  %v933 = vunpack.c.l.b16 %v165
  %v934 = vunpack.c.h.b16 %v165
  %v935 = vunpack.c.l.b16 %v166
  %v936 = vunpack.c.h.b16 %v166
  %v937 = vunpack.c.l.b16 %v167
  %v938 = vunpack.c.h.b16 %v167
  %v939 = vunpack.c.l.b16 %v168
  %v940 = vunpack.c.h.b16 %v168
  %v941 = vunpack.c.l.b16 %v169
  %v942 = vunpack.c.h.b16 %v169
  %v943 = vunpack.c.l.b16 %v170
  %v944 = vunpack.c.h.b16 %v170
  %v945 = vunpack.c.l.b16 %v171
  %v946 = vunpack.c.h.b16 %v171
  %v947 = vunpack.c.l.b16 %v172
  %v948 = vunpack.c.h.b16 %v172
  %v949 = vunpack.c.l.b16 %v173
  %v950 = vunpack.c.h.b16 %v173
  %v951 = vunpack.c.l.b16 %v174
  %v952 = vunpack.c.h.b16 %v174
  %v953 = vunpack.c.l.b16 %v175
  %v954 = vunpack.c.h.b16 %v175
  %v955 = vunpack.c.l.b16 %v176
  %v956 = vunpack.c.h.b16 %v176
  %v957 = vunpack.c.l.b16 %v177
  %v958 = vunpack.c.h.b16 %v177
  %v959 = vunpack.c.l.b16 %v178
  %v960 = vunpack.c.h.b16 %v178
  %v961 = vunpack.c.l.b16 %v179
  %v962 = vunpack.c.h.b16 %v179
  %v963 = vunpack.c.l.b16 %v180
  %v964 = vunpack.c.h.b16 %v180
  %v965 = vunpack.c.l.b16 %v181
  %v966 = vunpack.c.h.b16 %v181
  %v967 = vunpack.c.l.b16 %v182
  %v968 = vunpack.c.h.b16 %v182
  %v969 = vunpack.c.l.b16 %v183
  %v970 = vunpack.c.h.b16 %v183
  %v971 = vunpack.c.l.b16 %v184
  %v972 = vunpack.c.h.b16 %v184
  %v973 = vunpack.c.l.b16 %v185
  %v974 = vunpack.c.h.b16 %v185
  %v975 = vunpack.c.l.b16 %v186
  %v976 = vunpack.c.h.b16 %v186
  %v977 = vunpack.c.l.b16 %v187
  %v978 = vunpack.c.h.b16 %v187
  %v979 = vunpack.c.l.b16 %v188
  %v980 = vunpack.c.h.b16 %v188
  %v981 = vunpack.c.l.b16 %v189
  %v982 = vunpack.c.h.b16 %v189
  %v983 = vunpack.c.l.b16 %v190
  %v984 = vunpack.c.h.b16 %v190
  %v985 = vunpack.c.l.b16 %v191
  %v986 = vunpack.c.h.b16 %v191
  %v987 = vunpack.c.l.b16 %v192
  %v988 = vunpack.c.h.b16 %v192
  %v989 = vunpack.c.l.b16 %v193
  %v990 = vunpack.c.h.b16 %v193
  %v991 = vunpack.c.l.b16 %v194
  %v992 = vunpack.c.h.b16 %v194
  %v993 = vunpack.c.l.b16 %v195
  %v994 = vunpack.c.h.b16 %v195
  %v995 = vunpack.c.l.b16 %v196
  %v996 = vunpack.c.h.b16 %v196
  %v997 = vunpack.c.l.b16 %v197
  %v998 = vunpack.c.h.b16 %v197
  %v999 = vunpack.c.l.b16 %v198
  %v1000 = vunpack.c.h.b16 %v198
  %v1001 = vunpack.c.l.b16 %v199
  %v1002 = vunpack.c.h.b16 %v199
  %v1003 = vunpack.c.l.b16 %v200
  %v1004 = vunpack.c.h.b16 %v200
  %v1005 = vunpack.c.l.b16 %v201
  %v1006 = vunpack.c.h.b16 %v201
  %v1007 = vunpack.c.l.b16 %v202
  %v1008 = vunpack.c.h.b16 %v202
  %v1009 = vunpack.c.l.b16 %v203
  %v1010 = vunpack.c.h.b16 %v203
  %v1011 = vunpack.c.l.b16 %v204
  %v1012 = vunpack.c.h.b16 %v204
  %v1013 = vunpack.c.l.b16 %v205
  %v1014 = vunpack.c.h.b16 %v205
  %v1015 = vunpack.c.l.b16 %v206
  %v1016 = vunpack.c.h.b16 %v206
  %v1017 = vunpack.c.l.b16 %v207
  %v1018 = vunpack.c.h.b16 %v207
  %v1019 = vunpack.c.l.b16 %v208
  %v1020 = vunpack.c.h.b16 %v208
  %v1021 = vunpack.c.l.b16 %v209
  %v1022 = vunpack.c.h.b16 %v209
  %v1023 = vunpack.c.l.b16 %v210
  %v1024 = vunpack.c.h.b16 %v210
  %v1025 = vunpack.c.l.b16 %v211
  %v1026 = vunpack.c.h.b16 %v211
  %v1027 = vunpack.c.l.b16 %v212
  %v1028 = vunpack.c.h.b16 %v212
  %v1029 = vunpack.c.l.b16 %v213
  %v1030 = vunpack.c.h.b16 %v213
  %v1031 = vunpack.c.l.b16 %v214
  %v1032 = vunpack.c.h.b16 %v214
  %v1033 = vunpack.c.l.b16 %v215
  %v1034 = vunpack.c.h.b16 %v215
  %v1035 = vunpack.c.l.b16 %v216
  %v1036 = vunpack.c.h.b16 %v216
  %v1037 = vunpack.c.l.b16 %v217
  %v1038 = vunpack.c.h.b16 %v217
  %v1039 = vunpack.c.l.b16 %v218
  %v1040 = vunpack.c.h.b16 %v218
  %v1041 = vunpack.c.l.b16 %v219
  %v1042 = vunpack.c.h.b16 %v219
  %v1043 = vunpack.c.l.b16 %v220
  %v1044 = vunpack.c.h.b16 %v220
  %v1045 = vunpack.c.l.b16 %v221
  %v1046 = vunpack.c.h.b16 %v221
  %v1047 = vunpack.c.l.b16 %v222
  %v1048 = vunpack.c.h.b16 %v222
  %v1049 = vunpack.c.l.b16 %v223
  %v1050 = vunpack.c.h.b16 %v223
  %v1051 = vunpack.c.l.b16 %v224
  %v1052 = vunpack.c.h.b16 %v224
  %v1053 = vunpack.c.l.b16 %v225
  %v1054 = vunpack.c.h.b16 %v225
  %v1055 = vunpack.c.l.b16 %v226
  %v1056 = vunpack.c.h.b16 %v226
  %v1057 = vunpack.c.l.b16 %v227
  %v1058 = vunpack.c.h.b16 %v227
  %v1059 = vunpack.c.l.b16 %v228
  %v1060 = vunpack.c.h.b16 %v228
  %v1061 = vunpack.c.l.b16 %v229
  %v1062 = vunpack.c.h.b16 %v229
  %v1063 = vunpack.c.l.b16 %v230
  %v1064 = vunpack.c.h.b16 %v230
  %v1065 = vunpack.c.l.b16 %v231
  %v1066 = vunpack.c.h.b16 %v231
  %v1067 = vunpack.c.l.b16 %v232
  %v1068 = vunpack.c.h.b16 %v232
  %v1069 = vunpack.c.l.b16 %v233
  %v1070 = vunpack.c.h.b16 %v233
  %v1071 = vunpack.c.l.b16 %v234
  %v1072 = vunpack.c.h.b16 %v234
  %v1073 = vunpack.c.l.b16 %v235
  %v1074 = vunpack.c.h.b16 %v235
  %v1075 = vunpack.c.l.b16 %v236
  %v1076 = vunpack.c.h.b16 %v236
  %v1077 = vunpack.c.l.b16 %v237
  %v1078 = vunpack.c.h.b16 %v237
  %v1079 = vunpack.c.l.b16 %v238
  %v1080 = vunpack.c.h.b16 %v238
  %v1081 = vunpack.c.l.b16 %v239
  %v1082 = vunpack.c.h.b16 %v239
  %v1083 = vunpack.c.l.b16 %v240
  %v1084 = vunpack.c.h.b16 %v240
  %v1085 = vunpack.c.l.b16 %v241
  %v1086 = vunpack.c.h.b16 %v241
  %v1087 = vunpack.c.l.b16 %v242
  %v1088 = vunpack.c.h.b16 %v242
  %v1089 = vunpack.c.l.b16 %v243
  %v1090 = vunpack.c.h.b16 %v243
  %v1091 = vunpack.c.l.b16 %v244
  %v1092 = vunpack.c.h.b16 %v244
  %v1093 = vunpack.c.l.b16 %v245
  %v1094 = vunpack.c.h.b16 %v245
  %v1095 = vunpack.c.l.b16 %v246
  %v1096 = vunpack.c.h.b16 %v246
  %v1097 = vunpack.c.l.b16 %v247
  %v1098 = vunpack.c.h.b16 %v247
  %v1099 = vunpack.c.l.b16 %v248
  %v1100 = vunpack.c.h.b16 %v248
  %v1101 = vunpack.c.l.b16 %v249
  %v1102 = vunpack.c.h.b16 %v249
  %v1103 = vunpack.c.l.b16 %v250
  %v1104 = vunpack.c.h.b16 %v250
  %v1105 = vunpack.c.l.b16 %v251
  %v1106 = vunpack.c.h.b16 %v251
  %v1107 = vunpack.c.l.b16 %v252
  %v1108 = vunpack.c.h.b16 %v252
  %v1109 = vunpack.c.l.b16 %v253
  %v1110 = vunpack.c.h.b16 %v253
  %v1111 = vunpack.c.l.b16 %v254
  %v1112 = vunpack.c.h.b16 %v254
  %v1113 = vunpack.c.l.b16 %v255
  %v1114 = vunpack.c.h.b16 %v255
  %v1115 = vunpack.c.l.b16 %v256
  %v1116 = vunpack.c.h.b16 %v256
  %v1117 = vunpack.c.l.b16 %v257
  %v1118 = vunpack.c.h.b16 %v257
  %v1119 = vunpack.c.l.b16 %v258
  %v1120 = vunpack.c.h.b16 %v258
  %v1121 = vunpack.c.l.b16 %v259
  %v1122 = vunpack.c.h.b16 %v259
  %v1123 = vunpack.c.l.b16 %v260
  %v1124 = vunpack.c.h.b16 %v260
  %v1125 = vunpack.c.l.b16 %v261
  %v1126 = vunpack.c.h.b16 %v261
  %v1127 = vunpack.c.l.b16 %v262
  %v1128 = vunpack.c.h.b16 %v262
  %v1129 = vunpack.c.l.b16 %v263
  %v1130 = vunpack.c.h.b16 %v263
  %v1131 = vunpack.c.l.b16 %v264
  %v1132 = vunpack.c.h.b16 %v264
  %v1133 = vunpack.c.l.b16 %v265
  %v1134 = vunpack.c.h.b16 %v265
  %v1135 = vunpack.c.l.b16 %v266
  %v1136 = vunpack.c.h.b16 %v266
  %v1137 = vunpack.c.l.b16 %v267
  %v1138 = vunpack.c.h.b16 %v267
  %v1139 = vunpack.c.l.b16 %v268
  %v1140 = vunpack.c.h.b16 %v268
  %v1141 = vunpack.c.l.b16 %v269
  %v1142 = vunpack.c.h.b16 %v269
  %v1143 = vunpack.c.l.b16 %v270
  %v1144 = vunpack.c.h.b16 %v270
  %v1145 = vunpack.c.l.b16 %v271
  %v1146 = vunpack.c.h.b16 %v271
  %v1147 = vunpack.c.l.b16 %v272
  %v1148 = vunpack.c.h.b16 %v272
  %v1149 = vunpack.c.l.b16 %v273
  %v1150 = vunpack.c.h.b16 %v273
  %v1151 = vunpack.c.l.b16 %v274
  %v1152 = vunpack.c.h.b16 %v274
  %v1153 = vunpack.c.l.b16 %v275
  %v1154 = vunpack.c.h.b16 %v275
  %v1155 = vunpack.c.l.b16 %v276
  %v1156 = vunpack.c.h.b16 %v276
  %v1157 = vunpack.c.l.b16 %v277
  %v1158 = vunpack.c.h.b16 %v277
  %v1159 = vunpack.c.l.b16 %v278
  %v1160 = vunpack.c.h.b16 %v278
  %v1161 = vunpack.c.l.b16 %v279
  %v1162 = vunpack.c.h.b16 %v279
  %v1163 = vunpack.c.l.b16 %v280
  %v1164 = vunpack.c.h.b16 %v280
  %v1165 = vunpack.c.l.b16 %v281
  %v1166 = vunpack.c.h.b16 %v281
  %v1167 = vunpack.c.l.b16 %v282
  %v1168 = vunpack.c.h.b16 %v282
  %v1169 = vunpack.c.l.b16 %v283
  %v1170 = vunpack.c.h.b16 %v283
  %v1171 = vunpack.c.l.b16 %v284
  %v1172 = vunpack.c.h.b16 %v284
  %v1173 = vunpack.c.l.b16 %v285
  %v1174 = vunpack.c.h.b16 %v285
  %v1175 = vunpack.c.l.b16 %v286
  %v1176 = vunpack.c.h.b16 %v286
  %v1177 = vunpack.c.l.b16 %v287
  %v1178 = vunpack.c.h.b16 %v287
  %v1179 = vunpack.c.l.b16 %v288
  %v1180 = vunpack.c.h.b16 %v288
  %v1181 = vunpack.c.l.b16 %v289
  %v1182 = vunpack.c.h.b16 %v289
  %v1183 = vunpack.c.l.b16 %v290
  %v1184 = vunpack.c.h.b16 %v290
  %v1185 = vunpack.c.l.b16 %v291
  %v1186 = vunpack.c.h.b16 %v291
  %v1187 = vunpack.c.l.b16 %v292
  %v1188 = vunpack.c.h.b16 %v292
  %v1189 = vunpack.c.l.b16 %v293
  %v1190 = vunpack.c.h.b16 %v293
  %v1191 = vunpack.c.l.b16 %v294
  %v1192 = vunpack.c.h.b16 %v294
  %v1193 = vunpack.c.l.b16 %v295
  %v1194 = vunpack.c.h.b16 %v295
  %v1195 = vunpack.c.l.b16 %v296
  %v1196 = vunpack.c.h.b16 %v296
  %v1197 = vunpack.c.l.b16 %v297
  %v1198 = vunpack.c.h.b16 %v297
  %v1199 = vunpack.c.l.b16 %v298
  %v1200 = vunpack.c.h.b16 %v298
  %v1201 = vunpack.c.l.b16 %v299
  %v1202 = vunpack.c.h.b16 %v299
  %v1203 = vunpack.c.l.b16 %v300
  %v1204 = vunpack.c.h.b16 %v300
  %v1205 = vunpack.c.l.b16 %v301
  %v1206 = vunpack.c.h.b16 %v301
  %v1207 = vunpack.c.l.b16 %v302
  %v1208 = vunpack.c.h.b16 %v302
  %v1209 = vunpack.c.l.b16 %v303
  %v1210 = vunpack.c.h.b16 %v303
  %v1211 = vunpack.c.l.b16 %v304
  %v1212 = vunpack.c.h.b16 %v304
  %v1213 = vunpack.c.l.b16 %v305
  %v1214 = vunpack.c.h.b16 %v305
  %v1215 = vunpack.c.l.b16 %v306
  %v1216 = vunpack.c.h.b16 %v306
  %v1217 = vunpack.c.l.b16 %v307
  %v1218 = vunpack.c.h.b16 %v307
  %v1219 = vunpack.c.l.b16 %v308
  %v1220 = vunpack.c.h.b16 %v308
  %v1221 = vunpack.c.l.b16 %v309
  %v1222 = vunpack.c.h.b16 %v309
  %v1223 = vunpack.c.l.b16 %v310
  %v1224 = vunpack.c.h.b16 %v310
  %v1225 = vunpack.c.l.b16 %v311
  %v1226 = vunpack.c.h.b16 %v311
  %v1227 = vunpack.c.l.b16 %v312
  %v1228 = vunpack.c.h.b16 %v312
  %v1229 = vunpack.c.l.b16 %v313
  %v1230 = vunpack.c.h.b16 %v313
  %v1231 = vunpack.c.l.b16 %v314
  %v1232 = vunpack.c.h.b16 %v314
  %v1233 = vunpack.c.l.b16 %v315
  %v1234 = vunpack.c.h.b16 %v315
  %v1235 = vunpack.c.l.b16 %v316
  %v1236 = vunpack.c.h.b16 %v316
  %v1237 = vunpack.c.l.b16 %v317
  %v1238 = vunpack.c.h.b16 %v317
  %v1239 = vunpack.c.l.b16 %v318
  %v1240 = vunpack.c.h.b16 %v318
  %v1241 = vunpack.c.l.b16 %v319
  %v1242 = vunpack.c.h.b16 %v319
  %v1243 = vunpack.c.l.b16 %v320
  %v1244 = vunpack.c.h.b16 %v320
  %v1245 = vunpack.c.l.b16 %v321
  %v1246 = vunpack.c.h.b16 %v321
  %v1247 = vunpack.c.l.b16 %v322
  %v1248 = vunpack.c.h.b16 %v322
  %v1249 = vunpack.c.l.b16 %v323
  %v1250 = vunpack.c.h.b16 %v323
  %v1251 = vunpack.c.l.b16 %v324
  %v1252 = vunpack.c.h.b16 %v324
  %v1253 = vpack.c.b16 %v743, %v741
  %v1254 = vpack.c.b16 %v744, %v742
  %v1255 = vpack.c.b16 %v747, %v745
  %v1256 = vpack.c.b16 %v748, %v746
  %v1257 = vpack.c.b16 %v751, %v749
  %v1258 = vpack.c.b16 %v752, %v750
  %v1259 = vpack.c.b16 %v755, %v753
  %v1260 = vpack.c.b16 %v756, %v754
  %v1261 = vpack.c.b16 %v759, %v757
  %v1262 = vpack.c.b16 %v760, %v758
  %v1263 = vpack.c.b16 %v763, %v761
  %v1264 = vpack.c.b16 %v764, %v762
  %v1265 = vpack.c.b16 %v767, %v765
  %v1266 = vpack.c.b16 %v768, %v766
  %v1267 = vpack.c.b16 %v771, %v769
  %v1268 = vpack.c.b16 %v772, %v770
  %v1269 = vpack.c.b16 %v775, %v773
  %v1270 = vpack.c.b16 %v776, %v774
  %v1271 = vpack.c.b16 %v779, %v777
  %v1272 = vpack.c.b16 %v780, %v778
  %v1273 = vpack.c.b16 %v783, %v781
  %v1274 = vpack.c.b16 %v784, %v782
  %v1275 = vpack.c.b16 %v787, %v785
  %v1276 = vpack.c.b16 %v788, %v786
  %v1277 = vpack.c.b16 %v791, %v789
  %v1278 = vpack.c.b16 %v792, %v790
  %v1279 = vpack.c.b16 %v795, %v793
  %v1280 = vpack.c.b16 %v796, %v794
  %v1281 = vpack.c.b16 %v799, %v797
  %v1282 = vpack.c.b16 %v800, %v798
  %v1283 = vpack.c.b16 %v803, %v801
  %v1284 = vpack.c.b16 %v804, %v802
  %v1285 = vpack.c.b16 %v807, %v805
  %v1286 = vpack.c.b16 %v808, %v806
  %v1287 = vpack.c.b16 %v811, %v809
  %v1288 = vpack.c.b16 %v812, %v810
  %v1289 = vpack.c.b16 %v815, %v813
  %v1290 = vpack.c.b16 %v816, %v814
  %v1291 = vpack.c.b16 %v819, %v817
  %v1292 = vpack.c.b16 %v820, %v818
  %v1293 = vpack.c.b16 %v823, %v821
  %v1294 = vpack.c.b16 %v824, %v822
  %v1295 = vpack.c.b16 %v827, %v825
  %v1296 = vpack.c.b16 %v828, %v826
  %v1297 = vpack.c.b16 %v831, %v829
  %v1298 = vpack.c.b16 %v832, %v830
  %v1299 = vpack.c.b16 %v835, %v833
  %v1300 = vpack.c.b16 %v836, %v834
  %v1301 = vpack.c.b16 %v839, %v837
  %v1302 = vpack.c.b16 %v840, %v838
  %v1303 = vpack.c.b16 %v843, %v841
  %v1304 = vpack.c.b16 %v844, %v842
  %v1305 = vpack.c.b16 %v847, %v845
  %v1306 = vpack.c.b16 %v848, %v846
  %v1307 = vpack.c.b16 %v851, %v849
  %v1308 = vpack.c.b16 %v852, %v850
  %v1309 = vpack.c.b16 %v855, %v853
  %v1310 = vpack.c.b16 %v856, %v854
  %v1311 = vpack.c.b16 %v859, %v857
  %v1312 = vpack.c.b16 %v860, %v858
  %v1313 = vpack.c.b16 %v863, %v861
  %v1314 = vpack.c.b16 %v864, %v862
  %v1315 = vpack.c.b16 %v867, %v865
  %v1316 = vpack.c.b16 %v868, %v866
  %v1317 = vpack.c.b16 %v871, %v869
  %v1318 = vpack.c.b16 %v872, %v870
  %v1319 = vpack.c.b16 %v875, %v873
  %v1320 = vpack.c.b16 %v876, %v874
  %v1321 = vpack.c.b16 %v879, %v877
  %v1322 = vpack.c.b16 %v880, %v878
  %v1323 = vpack.c.b16 %v883, %v881
  %v1324 = vpack.c.b16 %v884, %v882
  %v1325 = vpack.c.b16 %v887, %v885
  %v1326 = vpack.c.b16 %v888, %v886
  %v1327 = vpack.c.b16 %v891, %v889
  %v1328 = vpack.c.b16 %v892, %v890
  %v1329 = vpack.c.b16 %v895, %v893
  %v1330 = vpack.c.b16 %v896, %v894
  %v1331 = vpack.c.b16 %v899, %v897
  %v1332 = vpack.c.b16 %v900, %v898
  %v1333 = vpack.c.b16 %v903, %v901
  %v1334 = vpack.c.b16 %v904, %v902
  %v1335 = vpack.c.b16 %v907, %v905
  %v1336 = vpack.c.b16 %v908, %v906
  %v1337 = vpack.c.b16 %v911, %v909
  %v1338 = vpack.c.b16 %v912, %v910
  %v1339 = vpack.c.b16 %v915, %v913
  %v1340 = vpack.c.b16 %v916, %v914
  %v1341 = vpack.c.b16 %v919, %v917
  %v1342 = vpack.c.b16 %v920, %v918
  %v1343 = vpack.c.b16 %v923, %v921
  %v1344 = vpack.c.b16 %v924, %v922
  %v1345 = vpack.c.b16 %v927, %v925
  %v1346 = vpack.c.b16 %v928, %v926
  %v1347 = vpack.c.b16 %v931, %v929
  %v1348 = vpack.c.b16 %v932, %v930
  %v1349 = vpack.c.b16 %v935, %v933
  %v1350 = vpack.c.b16 %v936, %v934
  %v1351 = vpack.c.b16 %v939, %v937
  %v1352 = vpack.c.b16 %v940, %v938
  %v1353 = vpack.c.b16 %v943, %v941
  %v1354 = vpack.c.b16 %v944, %v942
  %v1355 = vpack.c.b16 %v947, %v945
  %v1356 = vpack.c.b16 %v948, %v946
  %v1357 = vpack.c.b16 %v951, %v949
  %v1358 = vpack.c.b16 %v952, %v950
  %v1359 = vpack.c.b16 %v955, %v953
  %v1360 = vpack.c.b16 %v956, %v954
  %v1361 = vpack.c.b16 %v959, %v957
  %v1362 = vpack.c.b16 %v960, %v958
  %v1363 = vpack.c.b16 %v963, %v961
  %v1364 = vpack.c.b16 %v964, %v962
  %v1365 = vpack.c.b16 %v967, %v965
  %v1366 = vpack.c.b16 %v968, %v966
  %v1367 = vpack.c.b16 %v971, %v969
  %v1368 = vpack.c.b16 %v972, %v970
  %v1369 = vpack.c.b16 %v975, %v973
  %v1370 = vpack.c.b16 %v976, %v974
  %v1371 = vpack.c.b16 %v979, %v977
  %v1372 = vpack.c.b16 %v980, %v978
  %v1373 = vpack.c.b16 %v983, %v981
  %v1374 = vpack.c.b16 %v984, %v982
  %v1375 = vpack.c.b16 %v987, %v985
  %v1376 = vpack.c.b16 %v988, %v986
  %v1377 = vpack.c.b16 %v991, %v989
  %v1378 = vpack.c.b16 %v992, %v990
  %v1379 = vpack.c.b16 %v995, %v993
  %v1380 = vpack.c.b16 %v996, %v994
  %v1381 = vpack.c.b16 %v999, %v997
  %v1382 = vpack.c.b16 %v1000, %v998
  %v1383 = vpack.c.b16 %v1003, %v1001
  %v1384 = vpack.c.b16 %v1004, %v1002
  %v1385 = vpack.c.b16 %v1007, %v1005
  %v1386 = vpack.c.b16 %v1008, %v1006
  %v1387 = vpack.c.b16 %v1011, %v1009
  %v1388 = vpack.c.b16 %v1012, %v1010
  %v1389 = vpack.c.b16 %v1015, %v1013
  %v1390 = vpack.c.b16 %v1016, %v1014
  %v1391 = vpack.c.b16 %v1019, %v1017
  %v1392 = vpack.c.b16 %v1020, %v1018
  %v1393 = vpack.c.b16 %v1023, %v1021
  %v1394 = vpack.c.b16 %v1024, %v1022
  %v1395 = vpack.c.b16 %v1027, %v1025
  %v1396 = vpack.c.b16 %v1028, %v1026
  %v1397 = vpack.c.b16 %v1031, %v1029
  %v1398 = vpack.c.b16 %v1032, %v1030
  %v1399 = vpack.c.b16 %v1035, %v1033
  %v1400 = vpack.c.b16 %v1036, %v1034
  %v1401 = vpack.c.b16 %v1039, %v1037
  %v1402 = vpack.c.b16 %v1040, %v1038
  %v1403 = vpack.c.b16 %v1043, %v1041
  %v1404 = vpack.c.b16 %v1044, %v1042
  %v1405 = vpack.c.b16 %v1047, %v1045
  %v1406 = vpack.c.b16 %v1048, %v1046
  %v1407 = vpack.c.b16 %v1051, %v1049
  %v1408 = vpack.c.b16 %v1052, %v1050
  %v1409 = vpack.c.b16 %v1055, %v1053
  %v1410 = vpack.c.b16 %v1056, %v1054
  %v1411 = vpack.c.b16 %v1059, %v1057
  %v1412 = vpack.c.b16 %v1060, %v1058
  %v1413 = vpack.c.b16 %v1063, %v1061
  %v1414 = vpack.c.b16 %v1064, %v1062
  %v1415 = vpack.c.b16 %v1067, %v1065
  %v1416 = vpack.c.b16 %v1068, %v1066
  %v1417 = vpack.c.b16 %v1071, %v1069
  %v1418 = vpack.c.b16 %v1072, %v1070
  %v1419 = vpack.c.b16 %v1075, %v1073
  %v1420 = vpack.c.b16 %v1076, %v1074
  %v1421 = vpack.c.b16 %v1079, %v1077
  %v1422 = vpack.c.b16 %v1080, %v1078
  %v1423 = vpack.c.b16 %v1083, %v1081
  %v1424 = vpack.c.b16 %v1084, %v1082
  %v1425 = vpack.c.b16 %v1087, %v1085
  %v1426 = vpack.c.b16 %v1088, %v1086
  %v1427 = vpack.c.b16 %v1091, %v1089
  %v1428 = vpack.c.b16 %v1092, %v1090
  %v1429 = vpack.c.b16 %v1095, %v1093
  %v1430 = vpack.c.b16 %v1096, %v1094
  %v1431 = vpack.c.b16 %v1099, %v1097
  %v1432 = vpack.c.b16 %v1100, %v1098
  %v1433 = vpack.c.b16 %v1103, %v1101
  %v1434 = vpack.c.b16 %v1104, %v1102
  %v1435 = vpack.c.b16 %v1107, %v1105
  %v1436 = vpack.c.b16 %v1108, %v1106
  %v1437 = vpack.c.b16 %v1111, %v1109
  %v1438 = vpack.c.b16 %v1112, %v1110
  %v1439 = vpack.c.b16 %v1115, %v1113
  %v1440 = vpack.c.b16 %v1116, %v1114
  %v1441 = vpack.c.b16 %v1119, %v1117
  %v1442 = vpack.c.b16 %v1120, %v1118
  %v1443 = vpack.c.b16 %v1123, %v1121
  %v1444 = vpack.c.b16 %v1124, %v1122
  %v1445 = vpack.c.b16 %v1127, %v1125
  %v1446 = vpack.c.b16 %v1128, %v1126
  %v1447 = vpack.c.b16 %v1131, %v1129
  %v1448 = vpack.c.b16 %v1132, %v1130
  %v1449 = vpack.c.b16 %v1135, %v1133
  %v1450 = vpack.c.b16 %v1136, %v1134
  %v1451 = vpack.c.b16 %v1139, %v1137
  %v1452 = vpack.c.b16 %v1140, %v1138
  %v1453 = vpack.c.b16 %v1143, %v1141
  %v1454 = vpack.c.b16 %v1144, %v1142
  %v1455 = vpack.c.b16 %v1147, %v1145
  %v1456 = vpack.c.b16 %v1148, %v1146
  %v1457 = vpack.c.b16 %v1151, %v1149
  %v1458 = vpack.c.b16 %v1152, %v1150
  %v1459 = vpack.c.b16 %v1155, %v1153
  %v1460 = vpack.c.b16 %v1156, %v1154
  %v1461 = vpack.c.b16 %v1159, %v1157
  %v1462 = vpack.c.b16 %v1160, %v1158
  %v1463 = vpack.c.b16 %v1163, %v1161
  %v1464 = vpack.c.b16 %v1164, %v1162
  %v1465 = vpack.c.b16 %v1167, %v1165
  %v1466 = vpack.c.b16 %v1168, %v1166
  %v1467 = vpack.c.b16 %v1171, %v1169
  %v1468 = vpack.c.b16 %v1172, %v1170
  %v1469 = vpack.c.b16 %v1175, %v1173
  %v1470 = vpack.c.b16 %v1176, %v1174
  %v1471 = vpack.c.b16 %v1179, %v1177
  %v1472 = vpack.c.b16 %v1180, %v1178
  %v1473 = vpack.c.b16 %v1183, %v1181
  %v1474 = vpack.c.b16 %v1184, %v1182
  %v1475 = vpack.c.b16 %v1187, %v1185
  %v1476 = vpack.c.b16 %v1188, %v1186
  %v1477 = vpack.c.b16 %v1191, %v1189
  %v1478 = vpack.c.b16 %v1192, %v1190
  %v1479 = vpack.c.b16 %v1195, %v1193
  %v1480 = vpack.c.b16 %v1196, %v1194
  %v1481 = vpack.c.b16 %v1199, %v1197
  %v1482 = vpack.c.b16 %v1200, %v1198
  %v1483 = vpack.c.b16 %v1203, %v1201
  %v1484 = vpack.c.b16 %v1204, %v1202
  %v1485 = vpack.c.b16 %v1207, %v1205
  %v1486 = vpack.c.b16 %v1208, %v1206
  %v1487 = vpack.c.b16 %v1211, %v1209
  %v1488 = vpack.c.b16 %v1212, %v1210
  %v1489 = vpack.c.b16 %v1215, %v1213
  %v1490 = vpack.c.b16 %v1216, %v1214
  %v1491 = vpack.c.b16 %v1219, %v1217
  %v1492 = vpack.c.b16 %v1220, %v1218
  %v1493 = vpack.c.b16 %v1223, %v1221
  %v1494 = vpack.c.b16 %v1224, %v1222
  %v1495 = vpack.c.b16 %v1227, %v1225
  %v1496 = vpack.c.b16 %v1228, %v1226
  %v1497 = vpack.c.b16 %v1231, %v1229
  %v1498 = vpack.c.b16 %v1232, %v1230
  %v1499 = vpack.c.b16 %v1235, %v1233
  %v1500 = vpack.c.b16 %v1236, %v1234
  %v1501 = vpack.c.b16 %v1239, %v1237
  %v1502 = vpack.c.b16 %v1240, %v1238
  %v1503 = vpack.c.b16 %v1243, %v1241
  %v1504 = vpack.c.b16 %v1244, %v1242
  %v1505 = vpack.c.b16 %v1247, %v1245
  %v1506 = vpack.c.b16 %v1248, %v1246
  %v1507 = vpack.c.b16 %v1251, %v1249
  %v1508 = vpack.c.b16 %v1252, %v1250
  %1765 = vmatprep.subr.bf16.mxu0 %v1254
  %1766 = vmatpush1.bf16.msra.mxu0 %v1253
  %1767 = vmatprep.subr.bf16.mxu0 %v1256
  %1768 = vmatpush1.bf16.msra.mxu0 %v1255
  %1769 = vmatprep.subr.bf16.mxu0 %v1258
  %1770 = vmatpush1.bf16.msra.mxu0 %v1257
  %1771 = vmatprep.subr.bf16.mxu0 %v1260
  %1772 = vmatpush1.bf16.msra.mxu0 %v1259
  %1773 = vmatprep.subr.bf16.mxu0 %v1262
  %1774 = vmatpush1.bf16.msra.mxu0 %v1261
  %1775 = vmatprep.subr.bf16.mxu0 %v1264
  %1776 = vmatpush1.bf16.msra.mxu0 %v1263
  %1777 = vmatprep.subr.bf16.mxu0 %v1266
  %1778 = vmatpush1.bf16.msra.mxu0 %v1265
  %1779 = vmatprep.subr.bf16.mxu0 %v1268
  %1780 = vmatpush1.bf16.msra.mxu0 %v1267
  %1781 = vmatprep.subr.bf16.mxu0 %v1270
  %1782 = vmatpush1.bf16.msra.mxu0 %v1269
  %1783 = vmatprep.subr.bf16.mxu0 %v1272
  %1784 = vmatpush1.bf16.msra.mxu0 %v1271
  %1785 = vmatprep.subr.bf16.mxu0 %v1274
  %1786 = vmatpush1.bf16.msra.mxu0 %v1273
  %1787 = vmatprep.subr.bf16.mxu0 %v1276
  %1788 = vmatpush1.bf16.msra.mxu0 %v1275
  %1789 = vmatprep.subr.bf16.mxu0 %v1278
  %1790 = vmatpush1.bf16.msra.mxu0 %v1277
  %1791 = vmatprep.subr.bf16.mxu0 %v1280
  %1792 = vmatpush1.bf16.msra.mxu0 %v1279
  %1793 = vmatprep.subr.bf16.mxu0 %v1282
  %1794 = vmatpush1.bf16.msra.mxu0 %v1281
  %1795 = vmatprep.subr.bf16.mxu0 %v1284
  %1796 = vmatpush1.bf16.msra.mxu0 %v1283
  %1797 = vmatprep.mubr.bf16.mxu0 %v422
  %1798 = vmatmul.mubr.bf16.gmra.mrb[0].mxu0 %v421
  %v1799 = vpop.f32.mrb[0].mxu0
  %v1800 = vadd.f32 0.0, %v1799
  %v1801 = vpop.f32.mrb[0].mxu0
  %v1802 = vadd.f32 0.0, %v1801
  %v1803 = vpop.f32.mrb[0].mxu0
  %v1804 = vadd.f32 0.0, %v1803
  %v1805 = vpop.f32.mrb[0].mxu0
  %v1806 = vadd.f32 0.0, %v1805
  %1807 = vmatprep.mubr.bf16.mxu0 %v438
  %1808 = vmatmul.mubr.bf16.gmra.mrb[0].mxu0 %v437
  %v1809 = vpop.f32.mrb[0].mxu0
  %v1810 = vadd.f32 0.0, %v1809
  %v1811 = vpop.f32.mrb[0].mxu0
  %v1812 = vadd.f32 0.0, %v1811
  %v1813 = vpop.f32.mrb[0].mxu0
  %v1814 = vadd.f32 0.0, %v1813
  %v1815 = vpop.f32.mrb[0].mxu0
  %v1816 = vadd.f32 0.0, %v1815
  %1817 = vdwg.mxu0
  %1818 = vmatprep.subr.bf16.mxu0 %v1286
  %1819 = vmatpush1.bf16.msra.mxu0 %v1285
  %1820 = vmatprep.subr.bf16.mxu0 %v1288
  %1821 = vmatpush1.bf16.msra.mxu0 %v1287
  %1822 = vmatprep.subr.bf16.mxu0 %v1290
  %1823 = vmatpush1.bf16.msra.mxu0 %v1289
  %1824 = vmatprep.subr.bf16.mxu0 %v1292
  %1825 = vmatpush1.bf16.msra.mxu0 %v1291
  %1826 = vmatprep.subr.bf16.mxu0 %v1294
  %1827 = vmatpush1.bf16.msra.mxu0 %v1293
  %1828 = vmatprep.subr.bf16.mxu0 %v1296
  %1829 = vmatpush1.bf16.msra.mxu0 %v1295
  %1830 = vmatprep.subr.bf16.mxu0 %v1298
  %1831 = vmatpush1.bf16.msra.mxu0 %v1297
  %1832 = vmatprep.subr.bf16.mxu0 %v1300
  %1833 = vmatpush1.bf16.msra.mxu0 %v1299
  %1834 = vmatprep.subr.bf16.mxu0 %v1302
  %1835 = vmatpush1.bf16.msra.mxu0 %v1301
  %1836 = vmatprep.subr.bf16.mxu0 %v1304
  %1837 = vmatpush1.bf16.msra.mxu0 %v1303
  %1838 = vmatprep.subr.bf16.mxu0 %v1306
  %1839 = vmatpush1.bf16.msra.mxu0 %v1305
  %1840 = vmatprep.subr.bf16.mxu0 %v1308
  %1841 = vmatpush1.bf16.msra.mxu0 %v1307
  %1842 = vmatprep.subr.bf16.mxu0 %v1310
  %1843 = vmatpush1.bf16.msra.mxu0 %v1309
  %1844 = vmatprep.subr.bf16.mxu0 %v1312
  %1845 = vmatpush1.bf16.msra.mxu0 %v1311
  %1846 = vmatprep.subr.bf16.mxu0 %v1314
  %1847 = vmatpush1.bf16.msra.mxu0 %v1313
  %1848 = vmatprep.subr.bf16.mxu0 %v1316
  %1849 = vmatpush1.bf16.msra.mxu0 %v1315
  %1850 = vmatprep.mubr.bf16.mxu0 %v424
  %1851 = vmatmul.mubr.bf16.gmra.mrb[0].mxu0 %v423
  %v1852 = vpop.f32.mrb[0].mxu0
  %v1853 = vadd.f32 %v1800, %v1852
  %v1854 = vpop.f32.mrb[0].mxu0
  %v1855 = vadd.f32 %v1802, %v1854
  %v1856 = vpop.f32.mrb[0].mxu0
  %v1857 = vadd.f32 %v1804, %v1856
  %v1858 = vpop.f32.mrb[0].mxu0
  %v1859 = vadd.f32 %v1806, %v1858
  %1860 = vmatprep.mubr.bf16.mxu0 %v440
  %1861 = vmatmul.mubr.bf16.gmra.mrb[0].mxu0 %v439
  %v1862 = vpop.f32.mrb[0].mxu0
  %v1863 = vadd.f32 %v1810, %v1862
  %v1864 = vpop.f32.mrb[0].mxu0
  %v1865 = vadd.f32 %v1812, %v1864
  %v1866 = vpop.f32.mrb[0].mxu0
  %v1867 = vadd.f32 %v1814, %v1866
  %v1868 = vpop.f32.mrb[0].mxu0
  %v1869 = vadd.f32 %v1816, %v1868
  %1870 = vdwg.mxu0
  %1871 = vmatprep.subr.bf16.mxu0 %v1318
  %1872 = vmatpush1.bf16.msra.mxu0 %v1317
  %1873 = vmatprep.subr.bf16.mxu0 %v1320
  %1874 = vmatpush1.bf16.msra.mxu0 %v1319
  %1875 = vmatprep.subr.bf16.mxu0 %v1322
  %1876 = vmatpush1.bf16.msra.mxu0 %v1321
  %1877 = vmatprep.subr.bf16.mxu0 %v1324
  %1878 = vmatpush1.bf16.msra.mxu0 %v1323
  %1879 = vmatprep.subr.bf16.mxu0 %v1326
  %1880 = vmatpush1.bf16.msra.mxu0 %v1325
  %1881 = vmatprep.subr.bf16.mxu0 %v1328
  %1882 = vmatpush1.bf16.msra.mxu0 %v1327
  %1883 = vmatprep.subr.bf16.mxu0 %v1330
  %1884 = vmatpush1.bf16.msra.mxu0 %v1329
  %1885 = vmatprep.subr.bf16.mxu0 %v1332
  %1886 = vmatpush1.bf16.msra.mxu0 %v1331
  %1887 = vmatprep.subr.bf16.mxu0 %v1334
  %1888 = vmatpush1.bf16.msra.mxu0 %v1333
  %1889 = vmatprep.subr.bf16.mxu0 %v1336
  %1890 = vmatpush1.bf16.msra.mxu0 %v1335
  %1891 = vmatprep.subr.bf16.mxu0 %v1338
  %1892 = vmatpush1.bf16.msra.mxu0 %v1337
  %1893 = vmatprep.subr.bf16.mxu0 %v1340
  %1894 = vmatpush1.bf16.msra.mxu0 %v1339
  %1895 = vmatprep.subr.bf16.mxu0 %v1342
  %1896 = vmatpush1.bf16.msra.mxu0 %v1341
  %1897 = vmatprep.subr.bf16.mxu0 %v1344
  %1898 = vmatpush1.bf16.msra.mxu0 %v1343
  %1899 = vmatprep.subr.bf16.mxu0 %v1346
  %1900 = vmatpush1.bf16.msra.mxu0 %v1345
  %1901 = vmatprep.subr.bf16.mxu0 %v1348
  %1902 = vmatpush1.bf16.msra.mxu0 %v1347
  %1903 = vmatprep.mubr.bf16.mxu0 %v426
  %1904 = vmatmul.mubr.bf16.gmra.mrb[0].mxu0 %v425
  %v1905 = vpop.f32.mrb[0].mxu0
  %v1906 = vadd.f32 %v1853, %v1905
  %v1907 = vpop.f32.mrb[0].mxu0
  %v1908 = vadd.f32 %v1855, %v1907
  %v1909 = vpop.f32.mrb[0].mxu0
  %v1910 = vadd.f32 %v1857, %v1909
  %v1911 = vpop.f32.mrb[0].mxu0
  %v1912 = vadd.f32 %v1859, %v1911
  %1913 = vmatprep.mubr.bf16.mxu0 %v442
  %1914 = vmatmul.mubr.bf16.gmra.mrb[0].mxu0 %v441
  %v1915 = vpop.f32.mrb[0].mxu0
  %v1916 = vadd.f32 %v1863, %v1915
  %v1917 = vpop.f32.mrb[0].mxu0
  %v1918 = vadd.f32 %v1865, %v1917
  %v1919 = vpop.f32.mrb[0].mxu0
  %v1920 = vadd.f32 %v1867, %v1919
  %v1921 = vpop.f32.mrb[0].mxu0
  %v1922 = vadd.f32 %v1869, %v1921
  %1923 = vdwg.mxu0
  %1924 = vmatprep.subr.bf16.mxu0 %v1350
  %1925 = vmatpush1.bf16.msra.mxu0 %v1349
  %1926 = vmatprep.subr.bf16.mxu0 %v1352
  %1927 = vmatpush1.bf16.msra.mxu0 %v1351
  %1928 = vmatprep.subr.bf16.mxu0 %v1354
  %1929 = vmatpush1.bf16.msra.mxu0 %v1353
  %1930 = vmatprep.subr.bf16.mxu0 %v1356
  %1931 = vmatpush1.bf16.msra.mxu0 %v1355
  %1932 = vmatprep.subr.bf16.mxu0 %v1358
  %1933 = vmatpush1.bf16.msra.mxu0 %v1357
  %1934 = vmatprep.subr.bf16.mxu0 %v1360
  %1935 = vmatpush1.bf16.msra.mxu0 %v1359
  %1936 = vmatprep.subr.bf16.mxu0 %v1362
  %1937 = vmatpush1.bf16.msra.mxu0 %v1361
  %1938 = vmatprep.subr.bf16.mxu0 %v1364
  %1939 = vmatpush1.bf16.msra.mxu0 %v1363
  %1940 = vmatprep.subr.bf16.mxu0 %v1366
  %1941 = vmatpush1.bf16.msra.mxu0 %v1365
  %1942 = vmatprep.subr.bf16.mxu0 %v1368
  %1943 = vmatpush1.bf16.msra.mxu0 %v1367
  %1944 = vmatprep.subr.bf16.mxu0 %v1370
  %1945 = vmatpush1.bf16.msra.mxu0 %v1369
  %1946 = vmatprep.subr.bf16.mxu0 %v1372
  %1947 = vmatpush1.bf16.msra.mxu0 %v1371
  %1948 = vmatprep.subr.bf16.mxu0 %v1374
  %1949 = vmatpush1.bf16.msra.mxu0 %v1373
  %1950 = vmatprep.subr.bf16.mxu0 %v1376
  %1951 = vmatpush1.bf16.msra.mxu0 %v1375
  %1952 = vmatprep.subr.bf16.mxu0 %v1378
  %1953 = vmatpush1.bf16.msra.mxu0 %v1377
  %1954 = vmatprep.subr.bf16.mxu0 %v1380
  %1955 = vmatpush1.bf16.msra.mxu0 %v1379
  %1956 = vmatprep.mubr.bf16.mxu0 %v428
  %1957 = vmatmul.mubr.bf16.gmra.mrb[0].mxu0 %v427
  %v1958 = vpop.f32.mrb[0].mxu0
  %v1959 = vadd.f32 %v1906, %v1958
  %v1960 = vpop.f32.mrb[0].mxu0
  %v1961 = vadd.f32 %v1908, %v1960
  %v1962 = vpop.f32.mrb[0].mxu0
  %v1963 = vadd.f32 %v1910, %v1962
  %v1964 = vpop.f32.mrb[0].mxu0
  %v1965 = vadd.f32 %v1912, %v1964
  %1966 = vmatprep.mubr.bf16.mxu0 %v444
  %1967 = vmatmul.mubr.bf16.gmra.mrb[0].mxu0 %v443
  %v1968 = vpop.f32.mrb[0].mxu0
  %v1969 = vadd.f32 %v1916, %v1968
  %v1970 = vpop.f32.mrb[0].mxu0
  %v1971 = vadd.f32 %v1918, %v1970
  %v1972 = vpop.f32.mrb[0].mxu0
  %v1973 = vadd.f32 %v1920, %v1972
  %v1974 = vpop.f32.mrb[0].mxu0
  %v1975 = vadd.f32 %v1922, %v1974
  %1976 = vdwg.mxu0
  %1977 = vmatprep.subr.bf16.mxu0 %v1382
  %1978 = vmatpush1.bf16.msra.mxu0 %v1381
  %1979 = vmatprep.subr.bf16.mxu0 %v1384
  %1980 = vmatpush1.bf16.msra.mxu0 %v1383
  %1981 = vmatprep.subr.bf16.mxu0 %v1386
  %1982 = vmatpush1.bf16.msra.mxu0 %v1385
  %1983 = vmatprep.subr.bf16.mxu0 %v1388
  %1984 = vmatpush1.bf16.msra.mxu0 %v1387
  %1985 = vmatprep.subr.bf16.mxu0 %v1390
  %1986 = vmatpush1.bf16.msra.mxu0 %v1389
  %1987 = vmatprep.subr.bf16.mxu0 %v1392
  %1988 = vmatpush1.bf16.msra.mxu0 %v1391
  %1989 = vmatprep.subr.bf16.mxu0 %v1394
  %1990 = vmatpush1.bf16.msra.mxu0 %v1393
  %1991 = vmatprep.subr.bf16.mxu0 %v1396
  %1992 = vmatpush1.bf16.msra.mxu0 %v1395
  %1993 = vmatprep.subr.bf16.mxu0 %v1398
  %1994 = vmatpush1.bf16.msra.mxu0 %v1397
  %1995 = vmatprep.subr.bf16.mxu0 %v1400
  %1996 = vmatpush1.bf16.msra.mxu0 %v1399
  %1997 = vmatprep.subr.bf16.mxu0 %v1402
  %1998 = vmatpush1.bf16.msra.mxu0 %v1401
  %1999 = vmatprep.subr.bf16.mxu0 %v1404
  %2000 = vmatpush1.bf16.msra.mxu0 %v1403
  %2001 = vmatprep.subr.bf16.mxu0 %v1406
  %2002 = vmatpush1.bf16.msra.mxu0 %v1405
  %2003 = vmatprep.subr.bf16.mxu0 %v1408
  %2004 = vmatpush1.bf16.msra.mxu0 %v1407
  %2005 = vmatprep.subr.bf16.mxu0 %v1410
  %2006 = vmatpush1.bf16.msra.mxu0 %v1409
  %2007 = vmatprep.subr.bf16.mxu0 %v1412
  %2008 = vmatpush1.bf16.msra.mxu0 %v1411
  %2009 = vmatprep.mubr.bf16.mxu0 %v430
  %2010 = vmatmul.mubr.bf16.gmra.mrb[0].mxu0 %v429
  %v2011 = vpop.f32.mrb[0].mxu0
  %v2012 = vadd.f32 %v1959, %v2011
  %v2013 = vpop.f32.mrb[0].mxu0
  %v2014 = vadd.f32 %v1961, %v2013
  %v2015 = vpop.f32.mrb[0].mxu0
  %v2016 = vadd.f32 %v1963, %v2015
  %v2017 = vpop.f32.mrb[0].mxu0
  %v2018 = vadd.f32 %v1965, %v2017
  %2019 = vmatprep.mubr.bf16.mxu0 %v446
  %2020 = vmatmul.mubr.bf16.gmra.mrb[0].mxu0 %v445
  %v2021 = vpop.f32.mrb[0].mxu0
  %v2022 = vadd.f32 %v1969, %v2021
  %v2023 = vpop.f32.mrb[0].mxu0
  %v2024 = vadd.f32 %v1971, %v2023
  %v2025 = vpop.f32.mrb[0].mxu0
  %v2026 = vadd.f32 %v1973, %v2025
  %v2027 = vpop.f32.mrb[0].mxu0
  %v2028 = vadd.f32 %v1975, %v2027
  %2029 = vdwg.mxu0
  %2030 = vmatprep.subr.bf16.mxu0 %v1414
  %2031 = vmatpush1.bf16.msra.mxu0 %v1413
  %2032 = vmatprep.subr.bf16.mxu0 %v1416
  %2033 = vmatpush1.bf16.msra.mxu0 %v1415
  %2034 = vmatprep.subr.bf16.mxu0 %v1418
  %2035 = vmatpush1.bf16.msra.mxu0 %v1417
  %2036 = vmatprep.subr.bf16.mxu0 %v1420
  %2037 = vmatpush1.bf16.msra.mxu0 %v1419
  %2038 = vmatprep.subr.bf16.mxu0 %v1422
  %2039 = vmatpush1.bf16.msra.mxu0 %v1421
  %2040 = vmatprep.subr.bf16.mxu0 %v1424
  %2041 = vmatpush1.bf16.msra.mxu0 %v1423
  %2042 = vmatprep.subr.bf16.mxu0 %v1426
  %2043 = vmatpush1.bf16.msra.mxu0 %v1425
  %2044 = vmatprep.subr.bf16.mxu0 %v1428
  %2045 = vmatpush1.bf16.msra.mxu0 %v1427
  %2046 = vmatprep.subr.bf16.mxu0 %v1430
  %2047 = vmatpush1.bf16.msra.mxu0 %v1429
  %2048 = vmatprep.subr.bf16.mxu0 %v1432
  %2049 = vmatpush1.bf16.msra.mxu0 %v1431
  %2050 = vmatprep.subr.bf16.mxu0 %v1434
  %2051 = vmatpush1.bf16.msra.mxu0 %v1433
  %2052 = vmatprep.subr.bf16.mxu0 %v1436
  %2053 = vmatpush1.bf16.msra.mxu0 %v1435
  %2054 = vmatprep.subr.bf16.mxu0 %v1438
  %2055 = vmatpush1.bf16.msra.mxu0 %v1437
  %2056 = vmatprep.subr.bf16.mxu0 %v1440
  %2057 = vmatpush1.bf16.msra.mxu0 %v1439
  %2058 = vmatprep.subr.bf16.mxu0 %v1442
  %2059 = vmatpush1.bf16.msra.mxu0 %v1441
  %2060 = vmatprep.subr.bf16.mxu0 %v1444
  %2061 = vmatpush1.bf16.msra.mxu0 %v1443
  %2062 = vmatprep.mubr.bf16.mxu0 %v432
  %2063 = vmatmul.mubr.bf16.gmra.mrb[0].mxu0 %v431
  %v2064 = vpop.f32.mrb[0].mxu0
  %v2065 = vadd.f32 %v2012, %v2064
  %v2066 = vpop.f32.mrb[0].mxu0
  %v2067 = vadd.f32 %v2014, %v2066
  %v2068 = vpop.f32.mrb[0].mxu0
  %v2069 = vadd.f32 %v2016, %v2068
  %v2070 = vpop.f32.mrb[0].mxu0
  %v2071 = vadd.f32 %v2018, %v2070
  %2072 = vmatprep.mubr.bf16.mxu0 %v448
  %2073 = vmatmul.mubr.bf16.gmra.mrb[0].mxu0 %v447
  %v2074 = vpop.f32.mrb[0].mxu0
  %v2075 = vadd.f32 %v2022, %v2074
  %v2076 = vpop.f32.mrb[0].mxu0
  %v2077 = vadd.f32 %v2024, %v2076
  %v2078 = vpop.f32.mrb[0].mxu0
  %v2079 = vadd.f32 %v2026, %v2078
  %v2080 = vpop.f32.mrb[0].mxu0
  %v2081 = vadd.f32 %v2028, %v2080
  %2082 = vdwg.mxu0
  %2083 = vmatprep.subr.bf16.mxu0 %v1446
  %2084 = vmatpush1.bf16.msra.mxu0 %v1445
  %2085 = vmatprep.subr.bf16.mxu0 %v1448
  %2086 = vmatpush1.bf16.msra.mxu0 %v1447
  %2087 = vmatprep.subr.bf16.mxu0 %v1450
  %2088 = vmatpush1.bf16.msra.mxu0 %v1449
  %2089 = vmatprep.subr.bf16.mxu0 %v1452
  %2090 = vmatpush1.bf16.msra.mxu0 %v1451
  %2091 = vmatprep.subr.bf16.mxu0 %v1454
  %2092 = vmatpush1.bf16.msra.mxu0 %v1453
  %2093 = vmatprep.subr.bf16.mxu0 %v1456
  %2094 = vmatpush1.bf16.msra.mxu0 %v1455
  %2095 = vmatprep.subr.bf16.mxu0 %v1458
  %2096 = vmatpush1.bf16.msra.mxu0 %v1457
  %2097 = vmatprep.subr.bf16.mxu0 %v1460
  %2098 = vmatpush1.bf16.msra.mxu0 %v1459
  %2099 = vmatprep.subr.bf16.mxu0 %v1462
  %2100 = vmatpush1.bf16.msra.mxu0 %v1461
  %2101 = vmatprep.subr.bf16.mxu0 %v1464
  %2102 = vmatpush1.bf16.msra.mxu0 %v1463
  %2103 = vmatprep.subr.bf16.mxu0 %v1466
  %2104 = vmatpush1.bf16.msra.mxu0 %v1465
  %2105 = vmatprep.subr.bf16.mxu0 %v1468
  %2106 = vmatpush1.bf16.msra.mxu0 %v1467
  %2107 = vmatprep.subr.bf16.mxu0 %v1470
  %2108 = vmatpush1.bf16.msra.mxu0 %v1469
  %2109 = vmatprep.subr.bf16.mxu0 %v1472
  %2110 = vmatpush1.bf16.msra.mxu0 %v1471
  %2111 = vmatprep.subr.bf16.mxu0 %v1474
  %2112 = vmatpush1.bf16.msra.mxu0 %v1473
  %2113 = vmatprep.subr.bf16.mxu0 %v1476
  %2114 = vmatpush1.bf16.msra.mxu0 %v1475
  %2115 = vmatprep.mubr.bf16.mxu0 %v434
  %2116 = vmatmul.mubr.bf16.gmra.mrb[0].mxu0 %v433
  %v2117 = vpop.f32.mrb[0].mxu0
  %v2118 = vadd.f32 %v2065, %v2117
  %v2119 = vpop.f32.mrb[0].mxu0
  %v2120 = vadd.f32 %v2067, %v2119
  %v2121 = vpop.f32.mrb[0].mxu0
  %v2122 = vadd.f32 %v2069, %v2121
  %v2123 = vpop.f32.mrb[0].mxu0
  %v2124 = vadd.f32 %v2071, %v2123
  %2125 = vmatprep.mubr.bf16.mxu0 %v450
  %2126 = vmatmul.mubr.bf16.gmra.mrb[0].mxu0 %v449
  %v2127 = vpop.f32.mrb[0].mxu0
  %v2128 = vadd.f32 %v2075, %v2127
  %v2129 = vpop.f32.mrb[0].mxu0
  %v2130 = vadd.f32 %v2077, %v2129
  %v2131 = vpop.f32.mrb[0].mxu0
  %v2132 = vadd.f32 %v2079, %v2131
  %v2133 = vpop.f32.mrb[0].mxu0
  %v2134 = vadd.f32 %v2081, %v2133
  %2135 = vdwg.mxu0
  %2136 = vmatprep.subr.bf16.mxu0 %v1478
  %2137 = vmatpush1.bf16.msra.mxu0 %v1477
  %2138 = vmatprep.subr.bf16.mxu0 %v1480
  %2139 = vmatpush1.bf16.msra.mxu0 %v1479
  %2140 = vmatprep.subr.bf16.mxu0 %v1482
  %2141 = vmatpush1.bf16.msra.mxu0 %v1481
  %2142 = vmatprep.subr.bf16.mxu0 %v1484
  %2143 = vmatpush1.bf16.msra.mxu0 %v1483
  %2144 = vmatprep.subr.bf16.mxu0 %v1486
  %2145 = vmatpush1.bf16.msra.mxu0 %v1485
  %2146 = vmatprep.subr.bf16.mxu0 %v1488
  %2147 = vmatpush1.bf16.msra.mxu0 %v1487
  %2148 = vmatprep.subr.bf16.mxu0 %v1490
  %2149 = vmatpush1.bf16.msra.mxu0 %v1489
  %2150 = vmatprep.subr.bf16.mxu0 %v1492
  %2151 = vmatpush1.bf16.msra.mxu0 %v1491
  %2152 = vmatprep.subr.bf16.mxu0 %v1494
  %2153 = vmatpush1.bf16.msra.mxu0 %v1493
  %2154 = vmatprep.subr.bf16.mxu0 %v1496
  %2155 = vmatpush1.bf16.msra.mxu0 %v1495
  %2156 = vmatprep.subr.bf16.mxu0 %v1498
  %2157 = vmatpush1.bf16.msra.mxu0 %v1497
  %2158 = vmatprep.subr.bf16.mxu0 %v1500
  %2159 = vmatpush1.bf16.msra.mxu0 %v1499
  %2160 = vmatprep.subr.bf16.mxu0 %v1502
  %2161 = vmatpush1.bf16.msra.mxu0 %v1501
  %2162 = vmatprep.subr.bf16.mxu0 %v1504
  %2163 = vmatpush1.bf16.msra.mxu0 %v1503
  %2164 = vmatprep.subr.bf16.mxu0 %v1506
  %2165 = vmatpush1.bf16.msra.mxu0 %v1505
  %2166 = vmatprep.subr.bf16.mxu0 %v1508
  %2167 = vmatpush1.bf16.msra.mxu0 %v1507
  %2168 = vmatprep.mubr.bf16.mxu0 %v436
  %2169 = vmatmul.mubr.bf16.gmra.mrb[0].mxu0 %v435
  %v2170 = vpop.f32.mrb[0].mxu0
  %v2171 = vadd.f32 %v2118, %v2170
  %v2172 = vpop.f32.mrb[0].mxu0
  %v2173 = vadd.f32 %v2120, %v2172
  %v2174 = vpop.f32.mrb[0].mxu0
  %v2175 = vadd.f32 %v2122, %v2174
  %v2176 = vpop.f32.mrb[0].mxu0
  %v2177 = vadd.f32 %v2124, %v2176
  %2178 = vmatprep.mubr.bf16.mxu0 %v452
  %2179 = vmatmul.mubr.bf16.gmra.mrb[0].mxu0 %v451
  %v2180 = vpop.f32.mrb[0].mxu0
  %v2181 = vadd.f32 %v2128, %v2180
  %v2182 = vpop.f32.mrb[0].mxu0
  %v2183 = vadd.f32 %v2130, %v2182
  %v2184 = vpop.f32.mrb[0].mxu0
  %v2185 = vadd.f32 %v2132, %v2184
  %v2186 = vpop.f32.mrb[0].mxu0
  %v2187 = vadd.f32 %v2134, %v2186
  %2188 = vdwg.mxu0
  %v2189 = vadd.f32 %v29, %v2171
  %v2190 = vadd.f32 %v30, %v2173
  %v2191 = vadd.f32 %v31, %v2175
  %v2192 = vadd.f32 %v32, %v2177
  %v2193 = vadd.f32 %v33, %v2181
  %v2194 = vadd.f32 %v34, %v2183
  %v2195 = vadd.f32 %v35, %v2185
  %v2196 = vadd.f32 %v36, %v2187
  %p2197 = scmp.lt.s32.totalorder 0, 0
  // Predicated region
  $region22: #{discriminator_forward.7} parent=0 // pred_check
    %p2198 = pneg %p2197
  $region23: #{discriminator_forward.7} parent=0 // pred_check_branch
    %2200 = sbr.rel (%p2198) target = $region25
  $region24: #{discriminator_forward.7} parent=0 // pred_region
    %2201 = vst [vmem:[#allocation2] sm:$0xff] %v2189
    %2202 = vst [vmem:[#allocation2 + $0x8] sm:$0xff] %v2190
    %2203 = vst [vmem:[#allocation2 + $0x10] sm:$0xff] %v2191
    %2204 = vst [vmem:[#allocation2 + $0x18] sm:$0xff] %v2192
    %2205 = vst [vmem:[#allocation2 + $0x20] sm:$0xff] %v2193
    %2206 = vst [vmem:[#allocation2 + $0x28] sm:$0xff] %v2194
    %2207 = vst [vmem:[#allocation2 + $0x30] sm:$0xff] %v2195
    %2208 = vst [vmem:[#allocation2 + $0x38] sm:$0xff] %v2196
  $region25: #{discriminator_forward.7} parent=0 // pred_fallthru
    _
  // Predicated region
  $region26: #{discriminator_forward.7} parent=0 // pred_check
    %p2209 = pneg %p17
  $region27: #{discriminator_forward.7} parent=0 // pred_check_branch
    %2211 = sbr.rel (%p2209) target = $region29
  $region28: #{discriminator_forward.7} parent=0 // pred_region
    %v2212 = vld [vmem:[%s2] sm:$0x3]
    %v2214 = vlaneseq
    %v2215 = vshrl.u32 %v2214, 7
    %v2216 = vsub.s32 0, %v2215
    %v2217 = vrot.slane %v2212, %v2216
    %v2218 = vlaneseq
    %v2219 = vshrl.u32 %v2218, 7
    %v2220 = vsub.s32 1, %v2219
    %v2221 = vrot.slane %v2212, %v2220
    %v2224 = vmul.f32 %v2189, %v2217
    %v2225 = vmul.f32 %v2190, %v2221
    %v2226 = vmul.f32 %v2191, %v2217
    %v2227 = vmul.f32 %v2192, %v2221
    %v2228 = vmul.f32 %v2193, %v2217
    %v2229 = vmul.f32 %v2194, %v2221
    %v2230 = vmul.f32 %v2195, %v2217
    %v2231 = vmul.f32 %v2196, %v2221
    %v2232 = vld [vmem:[%s3] sm:$0x3]
    %v2234 = vlaneseq
    %v2235 = vshrl.u32 %v2234, 7
    %v2236 = vsub.s32 0, %v2235
    %v2237 = vrot.slane %v2232, %v2236
    %v2238 = vlaneseq
    %v2239 = vshrl.u32 %v2238, 7
    %v2240 = vsub.s32 1, %v2239
    %v2241 = vrot.slane %v2232, %v2240
    %v2244 = vadd.f32 %v2224, %v2237
    %v2245 = vadd.f32 %v2225, %v2241
    %v2246 = vadd.f32 %v2226, %v2237
    %v2247 = vadd.f32 %v2227, %v2241
    %v2248 = vadd.f32 %v2228, %v2237
    %v2249 = vadd.f32 %v2229, %v2241
    %v2250 = vadd.f32 %v2230, %v2237
    %v2251 = vadd.f32 %v2231, %v2241
    %vm2252 = vcmp.ge.f32.partialorder %v2244, 0.0
    %vm2253 = vcmp.ge.f32.partialorder %v2245, 0.0
    %vm2254 = vcmp.ge.f32.partialorder %v2246, 0.0
    %vm2255 = vcmp.ge.f32.partialorder %v2247, 0.0
    %vm2256 = vcmp.ge.f32.partialorder %v2248, 0.0
    %vm2257 = vcmp.ge.f32.partialorder %v2249, 0.0
    %vm2258 = vcmp.ge.f32.partialorder %v2250, 0.0
    %vm2259 = vcmp.ge.f32.partialorder %v2251, 0.0
    %v2260 = vmul.f32 %v2244, 0.2
    %v2261 = vmul.f32 %v2245, 0.2
    %v2262 = vmul.f32 %v2246, 0.2
    %v2263 = vmul.f32 %v2247, 0.2
    %v2264 = vmul.f32 %v2248, 0.2
    %v2265 = vmul.f32 %v2249, 0.2
    %v2266 = vmul.f32 %v2250, 0.2
    %v2267 = vmul.f32 %v2251, 0.2
    %v2268 = vsel %vm2252, %v2244, %v2260
    %v2269 = vsel %vm2253, %v2245, %v2261
    %v2270 = vsel %vm2254, %v2246, %v2262
    %v2271 = vsel %vm2255, %v2247, %v2263
    %v2272 = vsel %vm2256, %v2248, %v2264
    %v2273 = vsel %vm2257, %v2249, %v2265
    %v2274 = vsel %vm2258, %v2250, %v2266
    %v2275 = vsel %vm2259, %v2251, %v2267
    %v2276 = vpack.c.bf16 %v2270, %v2268
    %v2277 = vpack.c.bf16 %v2271, %v2269
    %v2278 = vpack.c.bf16 %v2274, %v2272
    %v2279 = vpack.c.bf16 %v2275, %v2273
    %v2284 = vunpack.c.l.b16 %v2276
    %v2285 = vunpack.c.l.b16 %v2277
    %v2286 = vunpack.c.h.b16 %v2276
    %v2287 = vunpack.c.h.b16 %v2277
    %v2288 = vunpack.c.l.b16 %v2278
    %v2289 = vunpack.c.l.b16 %v2279
    %v2290 = vunpack.c.h.b16 %v2278
    %v2291 = vunpack.c.h.b16 %v2279
    %v2292 = vpack.c.b16 %v2285, %v2284
    %v2293 = vpack.c.b16 %v2287, %v2286
    %v2294 = vpack.c.b16 %v2289, %v2288
    %v2295 = vpack.c.b16 %v2291, %v2290
    %2300 = vst [vmem:[%s4] sm:$0xff] %v2292
    %2301 = vst [vmem:[%s4 + $0x8] sm:$0xff] %v2293
    %2302 = vst [vmem:[%s4 + $0x10] sm:$0xff] %v2294
    %2303 = vst [vmem:[%s4 + $0x18] sm:$0xff] %v2295
  $region29: #{discriminator_forward.7} parent=0 // pred_fallthru
    _
  // Predicated region
  $region30: #{discriminator_forward.7} parent=0 // pred_check
    _
  $region31: #{discriminator_forward.7} parent=0 // pred_check_branch
    %2305 = sbr.rel (0) target = $region33
  $region32: #{discriminator_forward.7} parent=0 // pred_region
    _
  $region33: #{discriminator_forward.7} parent=0 // pred_fallthru
    _
  // Predicated region
  $region34: #{discriminator_forward.7} parent=0 // pred_check
    _
  $region35: #{discriminator_forward.7} parent=0 // pred_check_branch
    %2307 = sbr.rel (0) target = $region37
  $region36: #{discriminator_forward.7} parent=0 // pred_region
    _
  $region37: #{discriminator_forward.7} parent=0 // pred_fallthru
    _

// kernel: discriminator_forward.8
$region0: #{discriminator_forward.8}
  #allocation0 [shape = 'u32[]', space=smem, size = 0x4, offset = 0x4, fixed_abs, tag = 'smem constant byte address 0x4 - core index']
  #allocation1 [shape = 'u32[144,128]{1,0:T(1,128)}', space=vmem, size = 0x12000, scoped, tag = 'internal scratch']
  #allocation2 [shape = 'f32[18,512]{1,0:T(8,128)}', space=vmem, size = 0xc000, scoped, tag = 'scratch operand']
  %s0 = inlined_call_operand.vmem [shape: bf16[18,4096], index: 0, kind: input, shape index: {}]
  %s1 = inlined_call_operand.vmem [shape: bf16[4096,512], index: 1, kind: input, shape index: {}]
  %s2 = inlined_call_operand.vmem [shape: f32[1,512], index: 2, kind: input, shape index: {}]
  %s3 = inlined_call_operand.vmem [shape: f32[1,512], index: 3, kind: input, shape index: {}]
  %s4 = inlined_call_operand.vmem [shape: bf16[18,512], index: 4, kind: output, shape index: {}]
  %s5 = sld [smem:[#allocation0]]
  $region84: #{discriminator_forward.8} parent=0
    _
  %s7 = ssub.s32 1, %s5
  %s8 = scalar_select 0, %s7, %s5
  $region1: #{discriminator_forward.8} parent=0
    #allocation3 [shape = 'u8[196608]{0}', space=vmem, size = 0x30000, scoped, tag = 'input window, operand 0']
    loop: start=0, step=1, limit=4
    $region2: #{discriminator_forward.8} parent=1 // loop_pre_header
      _
    $region3: #{discriminator_forward.8} parent=1 // loop_header
      %s10 = sphi 0, %s14
      %p11 = scmp.ge.s32.totalorder %s10, 4
      %s17 = sphi 0, %s29
      %s18 = sphi 0, %s25
      %s19 = sphi 0, %s17
      %s20 = sphi 0, %s18
      %s21 = sphi 0, %s19
      %s22 = sphi 0, %s20
      %s34 = sphi 0, %s36
      %s37 = sphi 0, %s34
      %s38 = sphi 0, %s37
      %s54 = sphi 0, %s38
      %s60 = sphi 0, %s62
      %s63 = sphi 0, %s60
      %s64 = sphi 0, %s63
      %s80 = sphi 0, %s64
      %s84 = sphi 0, %s84
      %s86 = sphi 0, %s84
      %s87 = sphi 0, %s86
      %s101 = sphi 0, %s87
      %s105 = sphi 0, %s105
      %s107 = sphi 0, %s105
      %s108 = sphi 0, %s107
      %s122 = sphi 0, %s108
      %s128 = sphi 0, %s130
      %s131 = sphi 0, %s128
      %s132 = sphi 0, %s131
      %s148 = sphi 0, %s132
    $region4: #{discriminator_forward.8} parent=1 // loop_header_branch
      %13 = sbr.rel (%p11) target = $region8
    $region5: #{discriminator_forward.8} parent=1 // loop_body
      %s15 = ssub.s32 %s10, 1
      %s16 = ssub.s32 %s10, 2
      %s23 = sadd.s32 1, %s18
      %p24 = scmp.ge.s32.totalorder %s23, 2
      %s25 = scalar_select %p24, 0, %s23
      %s26 = sadd.s32 1, %s17
      %s27 = scalar_select %p24, %s26, %s17
      %p28 = scmp.ge.s32.totalorder %s27, 1
      %s29 = scalar_select %p28, 0, %s27
      %s30 = ssub.s32 %s17, %s29
      %s31 = ssub.s32 %s18, %s25
      %s32 = sor.u32 %s30, %s31
      %p33 = scmp.eq.s32.totalorder %s32, 0
      %s35 = sadd.s32 %s34, 1
      %s36 = scalar_select %p33, %s34, %s35
      %p39 = pneg %p33
      %p40 = scmp.eq.s32.totalorder %s10, 1
      %p41 = por %p39, %p40
      %p42 = scmp.ne.s32.totalorder %s34, %s37
      %p43 = scmp.eq.s32.totalorder %s10, 0
      %p44 = por %p42, %p43
      %p45 = scmp.ne.s32.totalorder %s34, %s37
      %p46 = scmp.eq.s32.totalorder %s15, 1
      %p47 = por %p45, %p46
      %p48 = scmp.ne.s32.totalorder %s37, %s38
      %p49 = scmp.eq.s32.totalorder %s15, 0
      %p50 = por %p48, %p49
      %p51 = scmp.ne.s32.totalorder %s37, %s38
      %p52 = scmp.eq.s32.totalorder %s16, 1
      %p53 = por %p51, %p52
      %p55 = scmp.ne.s32.totalorder %s38, %s54
      %p56 = scmp.eq.s32.totalorder %s16, 0
      %p57 = por %p55, %p56
      %s58 = ssub.s32 %s18, %s25
      %p59 = scmp.eq.s32.totalorder %s58, 0
      %s61 = sadd.s32 %s60, 1
      %s62 = scalar_select %p59, %s60, %s61
      %p65 = pneg %p59
      %p66 = scmp.eq.s32.totalorder %s10, 1
      %p67 = por %p65, %p66
      %p68 = scmp.ne.s32.totalorder %s60, %s63
      %p69 = scmp.eq.s32.totalorder %s10, 0
      %p70 = por %p68, %p69
      %p71 = scmp.ne.s32.totalorder %s60, %s63
      %p72 = scmp.eq.s32.totalorder %s15, 1
      %p73 = por %p71, %p72
      %p74 = scmp.ne.s32.totalorder %s63, %s64
      %p75 = scmp.eq.s32.totalorder %s15, 0
      %p76 = por %p74, %p75
      %p77 = scmp.ne.s32.totalorder %s63, %s64
      %p78 = scmp.eq.s32.totalorder %s16, 1
      %p79 = por %p77, %p78
      %p81 = scmp.ne.s32.totalorder %s64, %s80
      %p82 = scmp.eq.s32.totalorder %s16, 0
      %p83 = por %p81, %p82
      %s85 = sadd.s32 %s84, 1
      %p88 = scmp.eq.s32.totalorder %s10, 1
      %p89 = scmp.ne.s32.totalorder %s84, %s86
      %p90 = scmp.eq.s32.totalorder %s10, 0
      %p91 = por %p89, %p90
      %p92 = scmp.ne.s32.totalorder %s84, %s86
      %p93 = scmp.eq.s32.totalorder %s15, 1
      %p94 = por %p92, %p93
      %p95 = scmp.ne.s32.totalorder %s86, %s87
      %p96 = scmp.eq.s32.totalorder %s15, 0
      %p97 = por %p95, %p96
      %p98 = scmp.ne.s32.totalorder %s86, %s87
      %p99 = scmp.eq.s32.totalorder %s16, 1
      %p100 = por %p98, %p99
      %p102 = scmp.ne.s32.totalorder %s87, %s101
      %p103 = scmp.eq.s32.totalorder %s16, 0
      %p104 = por %p102, %p103
      %s106 = sadd.s32 %s105, 1
      %p109 = scmp.eq.s32.totalorder %s10, 1
      %p110 = scmp.ne.s32.totalorder %s105, %s107
      %p111 = scmp.eq.s32.totalorder %s10, 0
      %p112 = por %p110, %p111
      %p113 = scmp.ne.s32.totalorder %s105, %s107
      %p114 = scmp.eq.s32.totalorder %s15, 1
      %p115 = por %p113, %p114
      %p116 = scmp.ne.s32.totalorder %s107, %s108
      %p117 = scmp.eq.s32.totalorder %s15, 0
      %p118 = por %p116, %p117
      %p119 = scmp.ne.s32.totalorder %s107, %s108
      %p120 = scmp.eq.s32.totalorder %s16, 1
      %p121 = por %p119, %p120
      %p123 = scmp.ne.s32.totalorder %s108, %s122
      %p124 = scmp.eq.s32.totalorder %s16, 0
      %p125 = por %p123, %p124
      %s126 = ssub.s32 %s17, %s29
      %p127 = scmp.eq.s32.totalorder %s126, 0
      %s129 = sadd.s32 %s128, 1
      %s130 = scalar_select %p127, %s128, %s129
      %p133 = pneg %p127
      %p134 = scmp.eq.s32.totalorder %s10, 1
      %p135 = por %p133, %p134
      %p136 = scmp.ne.s32.totalorder %s128, %s131
      %p137 = scmp.eq.s32.totalorder %s10, 0
      %p138 = por %p136, %p137
      %p139 = scmp.ne.s32.totalorder %s128, %s131
      %p140 = scmp.eq.s32.totalorder %s15, 1
      %p141 = por %p139, %p140
      %p142 = scmp.ne.s32.totalorder %s131, %s132
      %p143 = scmp.eq.s32.totalorder %s15, 0
      %p144 = por %p142, %p143
      %p145 = scmp.ne.s32.totalorder %s131, %s132
      %p146 = scmp.eq.s32.totalorder %s16, 1
      %p147 = por %p145, %p146
      %p149 = scmp.ne.s32.totalorder %s132, %s148
      %p150 = scmp.eq.s32.totalorder %s16, 0
      %p151 = por %p149, %p150
      %p152 = scmp.le.s32.totalorder 1, %s10
      %p153 = scmp.lt.s32.totalorder %s10, 3
      %p154 = pnand %p152, %p153
      %p155 = pneg %p154
      // Predicated region
      $region9: #{discriminator_forward.8} parent=5 // pred_check
        _
      $region10: #{discriminator_forward.8} parent=5 // pred_check_branch
        %157 = sbr.rel (%p154) target = $region12
      $region11: #{discriminator_forward.8} parent=5 // pred_region
        %s158 = ssub.s32 %s10, 1
        // Predicated region
        $region13: #{discriminator_forward.8} parent=11 // pred_check
          %p159 = pneg %p97
        $region14: #{discriminator_forward.8} parent=11 // pred_check_branch
          %161 = sbr.rel (%p159) target = $region16
        $region15: #{discriminator_forward.8} parent=11 // pred_region
          _
        $region16: #{discriminator_forward.8} parent=11 // pred_fallthru
          _
        // Predicated region
        $region17: #{discriminator_forward.8} parent=11 // pred_check
          %p162 = pneg %p118
        $region18: #{discriminator_forward.8} parent=11 // pred_check_branch
          %164 = sbr.rel (%p162) target = $region20
        $region19: #{discriminator_forward.8} parent=11 // pred_region
          _
        $region20: #{discriminator_forward.8} parent=11 // pred_fallthru
          _
      $region12: #{discriminator_forward.8} parent=5 // pred_fallthru
        _
      %p165 = scmp.lt.s32.totalorder %s10, 2
      // Predicated region
      $region21: #{discriminator_forward.8} parent=5 // pred_check
        %p166 = pneg %p165
      $region22: #{discriminator_forward.8} parent=5 // pred_check_branch
        %168 = sbr.rel (%p166) target = $region24
      $region23: #{discriminator_forward.8} parent=5 // pred_region
        // Predicated region
        $region25: #{discriminator_forward.8} parent=23 // pred_check
          %p169 = pneg %p44
        $region26: #{discriminator_forward.8} parent=23 // pred_check_branch
          %171 = sbr.rel (%p169) target = $region28
        $region27: #{discriminator_forward.8} parent=23 // pred_region
          %s172 = sand.u32 %s34, 1
          %s173 = sand.u32 %s34, 1
          %s174 = smul.addr %s173, 192
          %s175 = scalar_lea.vmem [#allocation3], %s174
          %s176 = smul.u32 3, %s17
          %s177 = smul.u32 16, %s18
          %s178 = smul.addr %s176, 32
          %s179 = sadd.s32 %s177, %s178
          %s180 = smul.addr %s179, 4
          %s181 = scalar_lea.vmem %s0, %s180
          // Predicated region
          $region29: #{discriminator_forward.8} parent=27 // pred_check
            _
          $region30: #{discriminator_forward.8} parent=27 // pred_check_branch
            %183 = sbr.rel (0) target = $region32
          $region31: #{discriminator_forward.8} parent=27 // pred_region
            // Predicated region
            $region33: #{discriminator_forward.8} parent=31 // pred_check
              _
            $region34: #{discriminator_forward.8} parent=31 // pred_check_branch
              %185 = sbr.rel (0) target = $region36
            $region35: #{discriminator_forward.8} parent=31 // pred_region
              loop: start=0, step=1, limit=1
              $region37: #{discriminator_forward.8} parent=35 // loop_pre_header
                _
              $region38: #{discriminator_forward.8} parent=35 // loop_header
                %s187 = sphi 0, %s191
                %p188 = scmp.ge.s32.totalorder %s187, 1
                %s192 = sphi %s181, %s181
                %s193 = sphi %s175, %s175
              $region39: #{discriminator_forward.8} parent=35 // loop_header_branch
                %190 = sbr.rel (%p188) target = $region43
              $region40: #{discriminator_forward.8} parent=35 // loop_body
                %v194 = vld [vmem:[%s192] sm:$0xff]
                %195 = vst [vmem:[%s193] sm:$0xff] %v194
                %v196 = vld [vmem:[%s192 + $0x8] sm:$0xff]
                %197 = vst [vmem:[%s193 + $0x8] sm:$0xff] %v196
                %v198 = vld [vmem:[%s192 + $0x10] sm:$0xff]
                %199 = vst [vmem:[%s193 + $0x10] sm:$0xff] %v198
                %v200 = vld [vmem:[%s192 + $0x18] sm:$0xff]
                %201 = vst [vmem:[%s193 + $0x18] sm:$0xff] %v200
                %v202 = vld [vmem:[%s192 + $0x20] sm:$0xff]
                %203 = vst [vmem:[%s193 + $0x20] sm:$0xff] %v202
                %v204 = vld [vmem:[%s192 + $0x28] sm:$0xff]
                %205 = vst [vmem:[%s193 + $0x28] sm:$0xff] %v204
                %v206 = vld [vmem:[%s192 + $0x30] sm:$0xff]
                %207 = vst [vmem:[%s193 + $0x30] sm:$0xff] %v206
                %v208 = vld [vmem:[%s192 + $0x38] sm:$0xff]
                %209 = vst [vmem:[%s193 + $0x38] sm:$0xff] %v208
                %v210 = vld [vmem:[%s192 + $0x80] sm:$0xff]
                %211 = vst [vmem:[%s193 + $0x40] sm:$0xff] %v210
                %v212 = vld [vmem:[%s192 + $0x88] sm:$0xff]
                %213 = vst [vmem:[%s193 + $0x48] sm:$0xff] %v212
                %v214 = vld [vmem:[%s192 + $0x90] sm:$0xff]
                %215 = vst [vmem:[%s193 + $0x50] sm:$0xff] %v214
                %v216 = vld [vmem:[%s192 + $0x98] sm:$0xff]
                %217 = vst [vmem:[%s193 + $0x58] sm:$0xff] %v216
                %v218 = vld [vmem:[%s192 + $0xa0] sm:$0xff]
                %219 = vst [vmem:[%s193 + $0x60] sm:$0xff] %v218
                %v220 = vld [vmem:[%s192 + $0xa8] sm:$0xff]
                %221 = vst [vmem:[%s193 + $0x68] sm:$0xff] %v220
                %v222 = vld [vmem:[%s192 + $0xb0] sm:$0xff]
                %223 = vst [vmem:[%s193 + $0x70] sm:$0xff] %v222
                %v224 = vld [vmem:[%s192 + $0xb8] sm:$0xff]
                %225 = vst [vmem:[%s193 + $0x78] sm:$0xff] %v224
                %v226 = vld [vmem:[%s192 + $0x100] sm:$0xff]
                %227 = vst [vmem:[%s193 + $0x80] sm:$0xff] %v226
                %v228 = vld [vmem:[%s192 + $0x108] sm:$0xff]
                %229 = vst [vmem:[%s193 + $0x88] sm:$0xff] %v228
                %v230 = vld [vmem:[%s192 + $0x110] sm:$0xff]
                %231 = vst [vmem:[%s193 + $0x90] sm:$0xff] %v230
                %v232 = vld [vmem:[%s192 + $0x118] sm:$0xff]
                %233 = vst [vmem:[%s193 + $0x98] sm:$0xff] %v232
                %v234 = vld [vmem:[%s192 + $0x120] sm:$0xff]
                %235 = vst [vmem:[%s193 + $0xa0] sm:$0xff] %v234
                %v236 = vld [vmem:[%s192 + $0x128] sm:$0xff]
                %237 = vst [vmem:[%s193 + $0xa8] sm:$0xff] %v236
                %v238 = vld [vmem:[%s192 + $0x130] sm:$0xff]
                %239 = vst [vmem:[%s193 + $0xb0] sm:$0xff] %v238
                %v240 = vld [vmem:[%s192 + $0x138] sm:$0xff]
                %241 = vst [vmem:[%s193 + $0xb8] sm:$0xff] %v240
              $region41: #{discriminator_forward.8} parent=35 // loop_footer
                %s191 = sadd.s32 1, %s187
              $region42: #{discriminator_forward.8} parent=35 // loop_footer_branch
                %186 = sbr.rel target = $region38
              $region43: #{discriminator_forward.8} parent=35 // loop_exit
                _
            $region36: #{discriminator_forward.8} parent=31 // pred_fallthru
              _
            // Predicated region
            $region44: #{discriminator_forward.8} parent=31 // pred_check
              _
            $region45: #{discriminator_forward.8} parent=31 // pred_check_branch
              %243 = sbr.rel target = $region47
            $region46: #{discriminator_forward.8} parent=31 // pred_region
              _
            $region47: #{discriminator_forward.8} parent=31 // pred_fallthru
              _
          $region32: #{discriminator_forward.8} parent=27 // pred_fallthru
            _
          %244 = vnop
        $region28: #{discriminator_forward.8} parent=23 // pred_fallthru
          _
        // Predicated region
        $region48: #{discriminator_forward.8} parent=23 // pred_check
          %p245 = pneg %p70
        $region49: #{discriminator_forward.8} parent=23 // pred_check_branch
          %247 = sbr.rel (%p245) target = $region51
        $region50: #{discriminator_forward.8} parent=23 // pred_region
          %s248 = smul.u32 256, %s18
          %p249 = scmp.lt.s32.totalorder %s248, 511
          %s250 = scalar_select %p249, %s248, 511
          %s251 = smul.addr %s250, 4
          %s252 = smul.addr %s251, 4
          %s253 = scalar_lea.vmem %s1, %s252
          %s254 = smul.u32 256, %s18
        $region51: #{discriminator_forward.8} parent=23 // pred_fallthru
          _
      $region24: #{discriminator_forward.8} parent=5 // pred_fallthru
        _
      %p255 = scmp.le.s32.totalorder 1, %s10
      %p256 = scmp.lt.s32.totalorder %s10, 3
      %p257 = pnand %p255, %p256
      %p258 = pneg %p257
      // Predicated region
      $region52: #{discriminator_forward.8} parent=5 // pred_check
        _
      $region53: #{discriminator_forward.8} parent=5 // pred_check_branch
        %260 = sbr.rel (%p257) target = $region55
      $region54: #{discriminator_forward.8} parent=5 // pred_region
        %s261 = ssub.s32 %s10, 1
        %s262 = sand.u32 %s37, 1
        %s263 = sand.u32 %s37, 1
        %s264 = smul.addr %s263, 192
        %s265 = scalar_lea.vmem [#allocation3], %s264
        // Predicated region
        $region56: #{discriminator_forward.8} parent=54 // pred_check
          %p266 = pneg %p50
        $region57: #{discriminator_forward.8} parent=54 // pred_check_branch
          %268 = sbr.rel (%p266) target = $region59
        $region58: #{discriminator_forward.8} parent=54 // pred_region
          _
        $region59: #{discriminator_forward.8} parent=54 // pred_fallthru
          _
        %s269 = sand.u32 %s37, 1
        %s270 = sand.u32 %s37, 1
        %s271 = smul.addr %s270, 192
        %s272 = scalar_lea.vmem [#allocation3], %s271
        %p273 = pneg %p50
        %p274 = pneg %p47
        %s275 = smul.u32 256, %s20
        %p276 = scmp.lt.s32.totalorder %s275, 511
        %s277 = scalar_select %p276, %s275, 511
        %s278 = smul.addr %s277, 4
        %s279 = smul.addr %s278, 4
        %s280 = scalar_lea.vmem %s1, %s279
        %p281 = pneg %p76
        %p282 = pneg %p73
        %p283 = pneg %p97
        %p284 = pneg %p94
        %p285 = pneg %p118
        %p286 = pneg %p115
        %p287 = pneg %p144
        %p288 = pneg %p141
        %s289 = smul.u32 3, %s19
        %p290 = scmp.lt.s32.totalorder %s289, 2
        %s291 = scalar_select %p290, %s289, 2
        %s292 = smul.addr %s291, 4
        %s293 = smul.addr %s292, 4
        %s294 = scalar_lea.vmem %s4, %s293
        %s295 = smul.u32 3, %s19
        %s296 = smul.u32 16, %s20
        %s297 = smul.u32 256, %s20
        %p298 = scmp.lt.s32.totalorder %s297, 511
        %s299 = scalar_select %p298, %s297, 511
        %s300 = smul.addr %s299, 4
        %s301 = smul.addr %s300, 4
        %s302 = scalar_lea.vmem %s1, %s301
        %s303 = smul.u32 256, %s20
        %s304 = smul.u32 3, %s19
        %p305 = scmp.lt.s32.totalorder %s304, 2
        %s306 = scalar_select %p305, %s304, 2
        %s307 = smul.addr %s306, 4
        %s308 = smul.addr %s307, 4
        %s309 = scalar_lea.vmem %s4, %s308
        %s310 = smul.u32 3, %s19
        %p311 = scmp.eq.s32.totalorder %s20, 0
        // Predicated region
        $region60: #{discriminator_forward.8} parent=54 // pred_check
          %p312 = pneg %p311
        $region61: #{discriminator_forward.8} parent=54 // pred_check_branch
          %314 = sbr.rel (%p312) target = $region63
        $region62: #{discriminator_forward.8} parent=54 // pred_region
          %315 = vst [vmem:[#allocation2] sm:$0xff] 0.0
          %316 = vst [vmem:[#allocation2 + $0x8] sm:$0xff] 0.0
          %317 = vst [vmem:[#allocation2 + $0x10] sm:$0xff] 0.0
          %318 = vst [vmem:[#allocation2 + $0x18] sm:$0xff] 0.0
          %319 = vst [vmem:[#allocation2 + $0x20] sm:$0xff] 0.0
          %320 = vst [vmem:[#allocation2 + $0x28] sm:$0xff] 0.0
          %321 = vst [vmem:[#allocation2 + $0x30] sm:$0xff] 0.0
          %322 = vst [vmem:[#allocation2 + $0x38] sm:$0xff] 0.0
          %323 = vst [vmem:[#allocation2 + $0x40] sm:$0x3] 0.0
          %324 = vst [vmem:[#allocation2 + $0x48] sm:$0x3] 0.0
          %325 = vst [vmem:[#allocation2 + $0x50] sm:$0x3] 0.0
          %326 = vst [vmem:[#allocation2 + $0x58] sm:$0x3] 0.0
        $region63: #{discriminator_forward.8} parent=54 // pred_fallthru
          _
        %v327 = vld [vmem:[#allocation2] sm:$0xff]
        %v328 = vld [vmem:[#allocation2 + $0x8] sm:$0xff]
        %v329 = vld [vmem:[#allocation2 + $0x10] sm:$0xff]
        %v330 = vld [vmem:[#allocation2 + $0x18] sm:$0xff]
        %v331 = vld [vmem:[#allocation2 + $0x20] sm:$0xff]
        %v332 = vld [vmem:[#allocation2 + $0x28] sm:$0xff]
        %v333 = vld [vmem:[#allocation2 + $0x30] sm:$0xff]
        %v334 = vld [vmem:[#allocation2 + $0x38] sm:$0xff]
        %v335 = vld [vmem:[#allocation2 + $0x40] sm:$0x3]
        %v336 = vld [vmem:[#allocation2 + $0x48] sm:$0x3]
        %v337 = vld [vmem:[#allocation2 + $0x50] sm:$0x3]
        %v338 = vld [vmem:[#allocation2 + $0x58] sm:$0x3]
        %v339 = vld [vmem:[%s265] sm:$0xff]
        %v340 = vld [vmem:[%s265 + $0x8] sm:$0xff]
        %v341 = vld [vmem:[%s265 + $0x10] sm:$0xff]
        %v342 = vld [vmem:[%s265 + $0x18] sm:$0xff]
        %v343 = vld [vmem:[%s265 + $0x20] sm:$0xff]
        %v344 = vld [vmem:[%s265 + $0x28] sm:$0xff]
        %v345 = vld [vmem:[%s265 + $0x30] sm:$0xff]
        %v346 = vld [vmem:[%s265 + $0x38] sm:$0xff]
        %v347 = vld [vmem:[%s265 + $0x40] sm:$0xff]
        %v348 = vld [vmem:[%s265 + $0x48] sm:$0xff]
        %v349 = vld [vmem:[%s265 + $0x50] sm:$0xff]
        %v350 = vld [vmem:[%s265 + $0x58] sm:$0xff]
        %v351 = vld [vmem:[%s265 + $0x60] sm:$0xff]
        %v352 = vld [vmem:[%s265 + $0x68] sm:$0xff]
        %v353 = vld [vmem:[%s265 + $0x70] sm:$0xff]
        %v354 = vld [vmem:[%s265 + $0x78] sm:$0xff]
        %v355 = vld [vmem:[%s265 + $0x80] sm:$0x11]
        %v356 = vld [vmem:[%s265 + $0x88] sm:$0x11]
        %v357 = vld [vmem:[%s265 + $0x90] sm:$0x11]
        %v358 = vld [vmem:[%s265 + $0x98] sm:$0x11]
        %v359 = vld [vmem:[%s265 + $0xa0] sm:$0x11]
        %v360 = vld [vmem:[%s265 + $0xa8] sm:$0x11]
        %v361 = vld [vmem:[%s265 + $0xb0] sm:$0x11]
        %v362 = vld [vmem:[%s265 + $0xb8] sm:$0x11]
        %v363 = vld [vmem:[%s302] sm:$0xff]
        %v364 = vld [vmem:[%s302 + $0x8] sm:$0xff]
        %v365 = vld [vmem:[%s302 + $0x10] sm:$0xff]
        %v366 = vld [vmem:[%s302 + $0x18] sm:$0xff]
        %v367 = vld [vmem:[%s302 + $0x20] sm:$0xff]
        %v368 = vld [vmem:[%s302 + $0x28] sm:$0xff]
        %v369 = vld [vmem:[%s302 + $0x30] sm:$0xff]
        %v370 = vld [vmem:[%s302 + $0x38] sm:$0xff]
        %v371 = vld [vmem:[%s302 + $0x40] sm:$0xff]
        %v372 = vld [vmem:[%s302 + $0x48] sm:$0xff]
        %v373 = vld [vmem:[%s302 + $0x50] sm:$0xff]
        %v374 = vld [vmem:[%s302 + $0x58] sm:$0xff]
        %v375 = vld [vmem:[%s302 + $0x60] sm:$0xff]
        %v376 = vld [vmem:[%s302 + $0x68] sm:$0xff]
        %v377 = vld [vmem:[%s302 + $0x70] sm:$0xff]
        %v378 = vld [vmem:[%s302 + $0x78] sm:$0xff]
        %v379 = vld [vmem:[%s302 + $0x80] sm:$0xff]
        %v380 = vld [vmem:[%s302 + $0x88] sm:$0xff]
        %v381 = vld [vmem:[%s302 + $0x90] sm:$0xff]
        %v382 = vld [vmem:[%s302 + $0x98] sm:$0xff]
        %v383 = vld [vmem:[%s302 + $0xa0] sm:$0xff]
        %v384 = vld [vmem:[%s302 + $0xa8] sm:$0xff]
        %v385 = vld [vmem:[%s302 + $0xb0] sm:$0xff]
        %v386 = vld [vmem:[%s302 + $0xb8] sm:$0xff]
        %v387 = vld [vmem:[%s302 + $0xc0] sm:$0xff]
        %v388 = vld [vmem:[%s302 + $0xc8] sm:$0xff]
        %v389 = vld [vmem:[%s302 + $0xd0] sm:$0xff]
        %v390 = vld [vmem:[%s302 + $0xd8] sm:$0xff]
        %v391 = vld [vmem:[%s302 + $0xe0] sm:$0xff]
        %v392 = vld [vmem:[%s302 + $0xe8] sm:$0xff]
        %v393 = vld [vmem:[%s302 + $0xf0] sm:$0xff]
        %v394 = vld [vmem:[%s302 + $0xf8] sm:$0xff]
        %v395 = vld [vmem:[%s302 + $0x100] sm:$0xff]
        %v396 = vld [vmem:[%s302 + $0x108] sm:$0xff]
        %v397 = vld [vmem:[%s302 + $0x110] sm:$0xff]
        %v398 = vld [vmem:[%s302 + $0x118] sm:$0xff]
        %v399 = vld [vmem:[%s302 + $0x120] sm:$0xff]
        %v400 = vld [vmem:[%s302 + $0x128] sm:$0xff]
        %v401 = vld [vmem:[%s302 + $0x130] sm:$0xff]
        %v402 = vld [vmem:[%s302 + $0x138] sm:$0xff]
        %v403 = vld [vmem:[%s302 + $0x140] sm:$0xff]
        %v404 = vld [vmem:[%s302 + $0x148] sm:$0xff]
        %v405 = vld [vmem:[%s302 + $0x150] sm:$0xff]
        %v406 = vld [vmem:[%s302 + $0x158] sm:$0xff]
        %v407 = vld [vmem:[%s302 + $0x160] sm:$0xff]
        %v408 = vld [vmem:[%s302 + $0x168] sm:$0xff]
        %v409 = vld [vmem:[%s302 + $0x170] sm:$0xff]
        %v410 = vld [vmem:[%s302 + $0x178] sm:$0xff]
        %v411 = vld [vmem:[%s302 + $0x180] sm:$0xff]
        %v412 = vld [vmem:[%s302 + $0x188] sm:$0xff]
        %v413 = vld [vmem:[%s302 + $0x190] sm:$0xff]
        %v414 = vld [vmem:[%s302 + $0x198] sm:$0xff]
        %v415 = vld [vmem:[%s302 + $0x1a0] sm:$0xff]
        %v416 = vld [vmem:[%s302 + $0x1a8] sm:$0xff]
        %v417 = vld [vmem:[%s302 + $0x1b0] sm:$0xff]
        %v418 = vld [vmem:[%s302 + $0x1b8] sm:$0xff]
        %v419 = vld [vmem:[%s302 + $0x1c0] sm:$0xff]
        %v420 = vld [vmem:[%s302 + $0x1c8] sm:$0xff]
        %v421 = vld [vmem:[%s302 + $0x1d0] sm:$0xff]
        %v422 = vld [vmem:[%s302 + $0x1d8] sm:$0xff]
        %v423 = vld [vmem:[%s302 + $0x1e0] sm:$0xff]
        %v424 = vld [vmem:[%s302 + $0x1e8] sm:$0xff]
        %v425 = vld [vmem:[%s302 + $0x1f0] sm:$0xff]
        %v426 = vld [vmem:[%s302 + $0x1f8] sm:$0xff]
        %v427 = vld [vmem:[%s302 + $0x200] sm:$0xff]
        %v428 = vld [vmem:[%s302 + $0x208] sm:$0xff]
        %v429 = vld [vmem:[%s302 + $0x210] sm:$0xff]
        %v430 = vld [vmem:[%s302 + $0x218] sm:$0xff]
        %v431 = vld [vmem:[%s302 + $0x220] sm:$0xff]
        %v432 = vld [vmem:[%s302 + $0x228] sm:$0xff]
        %v433 = vld [vmem:[%s302 + $0x230] sm:$0xff]
        %v434 = vld [vmem:[%s302 + $0x238] sm:$0xff]
        %v435 = vld [vmem:[%s302 + $0x240] sm:$0xff]
        %v436 = vld [vmem:[%s302 + $0x248] sm:$0xff]
        %v437 = vld [vmem:[%s302 + $0x250] sm:$0xff]
        %v438 = vld [vmem:[%s302 + $0x258] sm:$0xff]
        %v439 = vld [vmem:[%s302 + $0x260] sm:$0xff]
        %v440 = vld [vmem:[%s302 + $0x268] sm:$0xff]
        %v441 = vld [vmem:[%s302 + $0x270] sm:$0xff]
        %v442 = vld [vmem:[%s302 + $0x278] sm:$0xff]
        %v443 = vld [vmem:[%s302 + $0x280] sm:$0xff]
        %v444 = vld [vmem:[%s302 + $0x288] sm:$0xff]
        %v445 = vld [vmem:[%s302 + $0x290] sm:$0xff]
        %v446 = vld [vmem:[%s302 + $0x298] sm:$0xff]
        %v447 = vld [vmem:[%s302 + $0x2a0] sm:$0xff]
        %v448 = vld [vmem:[%s302 + $0x2a8] sm:$0xff]
        %v449 = vld [vmem:[%s302 + $0x2b0] sm:$0xff]
        %v450 = vld [vmem:[%s302 + $0x2b8] sm:$0xff]
        %v451 = vld [vmem:[%s302 + $0x2c0] sm:$0xff]
        %v452 = vld [vmem:[%s302 + $0x2c8] sm:$0xff]
        %v453 = vld [vmem:[%s302 + $0x2d0] sm:$0xff]
        %v454 = vld [vmem:[%s302 + $0x2d8] sm:$0xff]
        %v455 = vld [vmem:[%s302 + $0x2e0] sm:$0xff]
        %v456 = vld [vmem:[%s302 + $0x2e8] sm:$0xff]
        %v457 = vld [vmem:[%s302 + $0x2f0] sm:$0xff]
        %v458 = vld [vmem:[%s302 + $0x2f8] sm:$0xff]
        %v459 = vld [vmem:[%s302 + $0x300] sm:$0xff]
        %v460 = vld [vmem:[%s302 + $0x308] sm:$0xff]
        %v461 = vld [vmem:[%s302 + $0x310] sm:$0xff]
        %v462 = vld [vmem:[%s302 + $0x318] sm:$0xff]
        %v463 = vld [vmem:[%s302 + $0x320] sm:$0xff]
        %v464 = vld [vmem:[%s302 + $0x328] sm:$0xff]
        %v465 = vld [vmem:[%s302 + $0x330] sm:$0xff]
        %v466 = vld [vmem:[%s302 + $0x338] sm:$0xff]
        %v467 = vld [vmem:[%s302 + $0x340] sm:$0xff]
        %v468 = vld [vmem:[%s302 + $0x348] sm:$0xff]
        %v469 = vld [vmem:[%s302 + $0x350] sm:$0xff]
        %v470 = vld [vmem:[%s302 + $0x358] sm:$0xff]
        %v471 = vld [vmem:[%s302 + $0x360] sm:$0xff]
        %v472 = vld [vmem:[%s302 + $0x368] sm:$0xff]
        %v473 = vld [vmem:[%s302 + $0x370] sm:$0xff]
        %v474 = vld [vmem:[%s302 + $0x378] sm:$0xff]
        %v475 = vld [vmem:[%s302 + $0x380] sm:$0xff]
        %v476 = vld [vmem:[%s302 + $0x388] sm:$0xff]
        %v477 = vld [vmem:[%s302 + $0x390] sm:$0xff]
        %v478 = vld [vmem:[%s302 + $0x398] sm:$0xff]
        %v479 = vld [vmem:[%s302 + $0x3a0] sm:$0xff]
        %v480 = vld [vmem:[%s302 + $0x3a8] sm:$0xff]
        %v481 = vld [vmem:[%s302 + $0x3b0] sm:$0xff]
        %v482 = vld [vmem:[%s302 + $0x3b8] sm:$0xff]
        %v483 = vld [vmem:[%s302 + $0x3c0] sm:$0xff]
        %v484 = vld [vmem:[%s302 + $0x3c8] sm:$0xff]
        %v485 = vld [vmem:[%s302 + $0x3d0] sm:$0xff]
        %v486 = vld [vmem:[%s302 + $0x3d8] sm:$0xff]
        %v487 = vld [vmem:[%s302 + $0x3e0] sm:$0xff]
        %v488 = vld [vmem:[%s302 + $0x3e8] sm:$0xff]
        %v489 = vld [vmem:[%s302 + $0x3f0] sm:$0xff]
        %v490 = vld [vmem:[%s302 + $0x3f8] sm:$0xff]
        %v491 = vld [vmem:[%s302 + $0x400] sm:$0xff]
        %v492 = vld [vmem:[%s302 + $0x408] sm:$0xff]
        %v493 = vld [vmem:[%s302 + $0x410] sm:$0xff]
        %v494 = vld [vmem:[%s302 + $0x418] sm:$0xff]
        %v495 = vld [vmem:[%s302 + $0x420] sm:$0xff]
        %v496 = vld [vmem:[%s302 + $0x428] sm:$0xff]
        %v497 = vld [vmem:[%s302 + $0x430] sm:$0xff]
        %v498 = vld [vmem:[%s302 + $0x438] sm:$0xff]
        %v499 = vld [vmem:[%s302 + $0x440] sm:$0xff]
        %v500 = vld [vmem:[%s302 + $0x448] sm:$0xff]
        %v501 = vld [vmem:[%s302 + $0x450] sm:$0xff]
        %v502 = vld [vmem:[%s302 + $0x458] sm:$0xff]
        %v503 = vld [vmem:[%s302 + $0x460] sm:$0xff]
        %v504 = vld [vmem:[%s302 + $0x468] sm:$0xff]
        %v505 = vld [vmem:[%s302 + $0x470] sm:$0xff]
        %v506 = vld [vmem:[%s302 + $0x478] sm:$0xff]
        %v507 = vld [vmem:[%s302 + $0x480] sm:$0xff]
        %v508 = vld [vmem:[%s302 + $0x488] sm:$0xff]
        %v509 = vld [vmem:[%s302 + $0x490] sm:$0xff]
        %v510 = vld [vmem:[%s302 + $0x498] sm:$0xff]
        %v511 = vld [vmem:[%s302 + $0x4a0] sm:$0xff]
        %v512 = vld [vmem:[%s302 + $0x4a8] sm:$0xff]
        %v513 = vld [vmem:[%s302 + $0x4b0] sm:$0xff]
        %v514 = vld [vmem:[%s302 + $0x4b8] sm:$0xff]
        %v515 = vld [vmem:[%s302 + $0x4c0] sm:$0xff]
        %v516 = vld [vmem:[%s302 + $0x4c8] sm:$0xff]
        %v517 = vld [vmem:[%s302 + $0x4d0] sm:$0xff]
        %v518 = vld [vmem:[%s302 + $0x4d8] sm:$0xff]
        %v519 = vld [vmem:[%s302 + $0x4e0] sm:$0xff]
        %v520 = vld [vmem:[%s302 + $0x4e8] sm:$0xff]
        %v521 = vld [vmem:[%s302 + $0x4f0] sm:$0xff]
        %v522 = vld [vmem:[%s302 + $0x4f8] sm:$0xff]
        %v523 = vld [vmem:[%s302 + $0x500] sm:$0xff]
        %v524 = vld [vmem:[%s302 + $0x508] sm:$0xff]
        %v525 = vld [vmem:[%s302 + $0x510] sm:$0xff]
        %v526 = vld [vmem:[%s302 + $0x518] sm:$0xff]
        %v527 = vld [vmem:[%s302 + $0x520] sm:$0xff]
        %v528 = vld [vmem:[%s302 + $0x528] sm:$0xff]
        %v529 = vld [vmem:[%s302 + $0x530] sm:$0xff]
        %v530 = vld [vmem:[%s302 + $0x538] sm:$0xff]
        %v531 = vld [vmem:[%s302 + $0x540] sm:$0xff]
        %v532 = vld [vmem:[%s302 + $0x548] sm:$0xff]
        %v533 = vld [vmem:[%s302 + $0x550] sm:$0xff]
        %v534 = vld [vmem:[%s302 + $0x558] sm:$0xff]
        %v535 = vld [vmem:[%s302 + $0x560] sm:$0xff]
        %v536 = vld [vmem:[%s302 + $0x568] sm:$0xff]
        %v537 = vld [vmem:[%s302 + $0x570] sm:$0xff]
        %v538 = vld [vmem:[%s302 + $0x578] sm:$0xff]
        %v539 = vld [vmem:[%s302 + $0x580] sm:$0xff]
        %v540 = vld [vmem:[%s302 + $0x588] sm:$0xff]
        %v541 = vld [vmem:[%s302 + $0x590] sm:$0xff]
        %v542 = vld [vmem:[%s302 + $0x598] sm:$0xff]
        %v543 = vld [vmem:[%s302 + $0x5a0] sm:$0xff]
        %v544 = vld [vmem:[%s302 + $0x5a8] sm:$0xff]
        %v545 = vld [vmem:[%s302 + $0x5b0] sm:$0xff]
        %v546 = vld [vmem:[%s302 + $0x5b8] sm:$0xff]
        %v547 = vld [vmem:[%s302 + $0x5c0] sm:$0xff]
        %v548 = vld [vmem:[%s302 + $0x5c8] sm:$0xff]
        %v549 = vld [vmem:[%s302 + $0x5d0] sm:$0xff]
        %v550 = vld [vmem:[%s302 + $0x5d8] sm:$0xff]
        %v551 = vld [vmem:[%s302 + $0x5e0] sm:$0xff]
        %v552 = vld [vmem:[%s302 + $0x5e8] sm:$0xff]
        %v553 = vld [vmem:[%s302 + $0x5f0] sm:$0xff]
        %v554 = vld [vmem:[%s302 + $0x5f8] sm:$0xff]
        %v555 = vld [vmem:[%s302 + $0x600] sm:$0xff]
        %v556 = vld [vmem:[%s302 + $0x608] sm:$0xff]
        %v557 = vld [vmem:[%s302 + $0x610] sm:$0xff]
        %v558 = vld [vmem:[%s302 + $0x618] sm:$0xff]
        %v559 = vld [vmem:[%s302 + $0x620] sm:$0xff]
        %v560 = vld [vmem:[%s302 + $0x628] sm:$0xff]
        %v561 = vld [vmem:[%s302 + $0x630] sm:$0xff]
        %v562 = vld [vmem:[%s302 + $0x638] sm:$0xff]
        %v563 = vld [vmem:[%s302 + $0x640] sm:$0xff]
        %v564 = vld [vmem:[%s302 + $0x648] sm:$0xff]
        %v565 = vld [vmem:[%s302 + $0x650] sm:$0xff]
        %v566 = vld [vmem:[%s302 + $0x658] sm:$0xff]
        %v567 = vld [vmem:[%s302 + $0x660] sm:$0xff]
        %v568 = vld [vmem:[%s302 + $0x668] sm:$0xff]
        %v569 = vld [vmem:[%s302 + $0x670] sm:$0xff]
        %v570 = vld [vmem:[%s302 + $0x678] sm:$0xff]
        %v571 = vld [vmem:[%s302 + $0x680] sm:$0xff]
        %v572 = vld [vmem:[%s302 + $0x688] sm:$0xff]
        %v573 = vld [vmem:[%s302 + $0x690] sm:$0xff]
        %v574 = vld [vmem:[%s302 + $0x698] sm:$0xff]
        %v575 = vld [vmem:[%s302 + $0x6a0] sm:$0xff]
        %v576 = vld [vmem:[%s302 + $0x6a8] sm:$0xff]
        %v577 = vld [vmem:[%s302 + $0x6b0] sm:$0xff]
        %v578 = vld [vmem:[%s302 + $0x6b8] sm:$0xff]
        %v579 = vld [vmem:[%s302 + $0x6c0] sm:$0xff]
        %v580 = vld [vmem:[%s302 + $0x6c8] sm:$0xff]
        %v581 = vld [vmem:[%s302 + $0x6d0] sm:$0xff]
        %v582 = vld [vmem:[%s302 + $0x6d8] sm:$0xff]
        %v583 = vld [vmem:[%s302 + $0x6e0] sm:$0xff]
        %v584 = vld [vmem:[%s302 + $0x6e8] sm:$0xff]
        %v585 = vld [vmem:[%s302 + $0x6f0] sm:$0xff]
        %v586 = vld [vmem:[%s302 + $0x6f8] sm:$0xff]
        %v587 = vld [vmem:[%s302 + $0x700] sm:$0xff]
        %v588 = vld [vmem:[%s302 + $0x708] sm:$0xff]
        %v589 = vld [vmem:[%s302 + $0x710] sm:$0xff]
        %v590 = vld [vmem:[%s302 + $0x718] sm:$0xff]
        %v591 = vld [vmem:[%s302 + $0x720] sm:$0xff]
        %v592 = vld [vmem:[%s302 + $0x728] sm:$0xff]
        %v593 = vld [vmem:[%s302 + $0x730] sm:$0xff]
        %v594 = vld [vmem:[%s302 + $0x738] sm:$0xff]
        %v595 = vld [vmem:[%s302 + $0x740] sm:$0xff]
        %v596 = vld [vmem:[%s302 + $0x748] sm:$0xff]
        %v597 = vld [vmem:[%s302 + $0x750] sm:$0xff]
        %v598 = vld [vmem:[%s302 + $0x758] sm:$0xff]
        %v599 = vld [vmem:[%s302 + $0x760] sm:$0xff]
        %v600 = vld [vmem:[%s302 + $0x768] sm:$0xff]
        %v601 = vld [vmem:[%s302 + $0x770] sm:$0xff]
        %v602 = vld [vmem:[%s302 + $0x778] sm:$0xff]
        %v603 = vld [vmem:[%s302 + $0x780] sm:$0xff]
        %v604 = vld [vmem:[%s302 + $0x788] sm:$0xff]
        %v605 = vld [vmem:[%s302 + $0x790] sm:$0xff]
        %v606 = vld [vmem:[%s302 + $0x798] sm:$0xff]
        %v607 = vld [vmem:[%s302 + $0x7a0] sm:$0xff]
        %v608 = vld [vmem:[%s302 + $0x7a8] sm:$0xff]
        %v609 = vld [vmem:[%s302 + $0x7b0] sm:$0xff]
        %v610 = vld [vmem:[%s302 + $0x7b8] sm:$0xff]
        %v611 = vld [vmem:[%s302 + $0x7c0] sm:$0xff]
        %v612 = vld [vmem:[%s302 + $0x7c8] sm:$0xff]
        %v613 = vld [vmem:[%s302 + $0x7d0] sm:$0xff]
        %v614 = vld [vmem:[%s302 + $0x7d8] sm:$0xff]
        %v615 = vld [vmem:[%s302 + $0x7e0] sm:$0xff]
        %v616 = vld [vmem:[%s302 + $0x7e8] sm:$0xff]
        %v617 = vld [vmem:[%s302 + $0x7f0] sm:$0xff]
        %v618 = vld [vmem:[%s302 + $0x7f8] sm:$0xff]
        %v619 = vld [vmem:[%s302 + $0x800] sm:$0xff]
        %v620 = vld [vmem:[%s302 + $0x808] sm:$0xff]
        %v621 = vld [vmem:[%s302 + $0x810] sm:$0xff]
        %v622 = vld [vmem:[%s302 + $0x818] sm:$0xff]
        %v623 = vld [vmem:[%s302 + $0x820] sm:$0xff]
        %v624 = vld [vmem:[%s302 + $0x828] sm:$0xff]
        %v625 = vld [vmem:[%s302 + $0x830] sm:$0xff]
        %v626 = vld [vmem:[%s302 + $0x838] sm:$0xff]
        %v627 = vld [vmem:[%s302 + $0x840] sm:$0xff]
        %v628 = vld [vmem:[%s302 + $0x848] sm:$0xff]
        %v629 = vld [vmem:[%s302 + $0x850] sm:$0xff]
        %v630 = vld [vmem:[%s302 + $0x858] sm:$0xff]
        %v631 = vld [vmem:[%s302 + $0x860] sm:$0xff]
        %v632 = vld [vmem:[%s302 + $0x868] sm:$0xff]
        %v633 = vld [vmem:[%s302 + $0x870] sm:$0xff]
        %v634 = vld [vmem:[%s302 + $0x878] sm:$0xff]
        %v635 = vld [vmem:[%s302 + $0x880] sm:$0xff]
        %v636 = vld [vmem:[%s302 + $0x888] sm:$0xff]
        %v637 = vld [vmem:[%s302 + $0x890] sm:$0xff]
        %v638 = vld [vmem:[%s302 + $0x898] sm:$0xff]
        %v639 = vld [vmem:[%s302 + $0x8a0] sm:$0xff]
        %v640 = vld [vmem:[%s302 + $0x8a8] sm:$0xff]
        %v641 = vld [vmem:[%s302 + $0x8b0] sm:$0xff]
        %v642 = vld [vmem:[%s302 + $0x8b8] sm:$0xff]
        %v643 = vld [vmem:[%s302 + $0x8c0] sm:$0xff]
        %v644 = vld [vmem:[%s302 + $0x8c8] sm:$0xff]
        %v645 = vld [vmem:[%s302 + $0x8d0] sm:$0xff]
        %v646 = vld [vmem:[%s302 + $0x8d8] sm:$0xff]
        %v647 = vld [vmem:[%s302 + $0x8e0] sm:$0xff]
        %v648 = vld [vmem:[%s302 + $0x8e8] sm:$0xff]
        %v649 = vld [vmem:[%s302 + $0x8f0] sm:$0xff]
        %v650 = vld [vmem:[%s302 + $0x8f8] sm:$0xff]
        %v651 = vld [vmem:[%s302 + $0x900] sm:$0xff]
        %v652 = vld [vmem:[%s302 + $0x908] sm:$0xff]
        %v653 = vld [vmem:[%s302 + $0x910] sm:$0xff]
        %v654 = vld [vmem:[%s302 + $0x918] sm:$0xff]
        %v655 = vld [vmem:[%s302 + $0x920] sm:$0xff]
        %v656 = vld [vmem:[%s302 + $0x928] sm:$0xff]
        %v657 = vld [vmem:[%s302 + $0x930] sm:$0xff]
        %v658 = vld [vmem:[%s302 + $0x938] sm:$0xff]
        %v659 = vld [vmem:[%s302 + $0x940] sm:$0xff]
        %v660 = vld [vmem:[%s302 + $0x948] sm:$0xff]
        %v661 = vld [vmem:[%s302 + $0x950] sm:$0xff]
        %v662 = vld [vmem:[%s302 + $0x958] sm:$0xff]
        %v663 = vld [vmem:[%s302 + $0x960] sm:$0xff]
        %v664 = vld [vmem:[%s302 + $0x968] sm:$0xff]
        %v665 = vld [vmem:[%s302 + $0x970] sm:$0xff]
        %v666 = vld [vmem:[%s302 + $0x978] sm:$0xff]
        %v667 = vld [vmem:[%s302 + $0x980] sm:$0xff]
        %v668 = vld [vmem:[%s302 + $0x988] sm:$0xff]
        %v669 = vld [vmem:[%s302 + $0x990] sm:$0xff]
        %v670 = vld [vmem:[%s302 + $0x998] sm:$0xff]
        %v671 = vld [vmem:[%s302 + $0x9a0] sm:$0xff]
        %v672 = vld [vmem:[%s302 + $0x9a8] sm:$0xff]
        %v673 = vld [vmem:[%s302 + $0x9b0] sm:$0xff]
        %v674 = vld [vmem:[%s302 + $0x9b8] sm:$0xff]
        %v675 = vld [vmem:[%s302 + $0x9c0] sm:$0xff]
        %v676 = vld [vmem:[%s302 + $0x9c8] sm:$0xff]
        %v677 = vld [vmem:[%s302 + $0x9d0] sm:$0xff]
        %v678 = vld [vmem:[%s302 + $0x9d8] sm:$0xff]
        %v679 = vld [vmem:[%s302 + $0x9e0] sm:$0xff]
        %v680 = vld [vmem:[%s302 + $0x9e8] sm:$0xff]
        %v681 = vld [vmem:[%s302 + $0x9f0] sm:$0xff]
        %v682 = vld [vmem:[%s302 + $0x9f8] sm:$0xff]
        %v683 = vld [vmem:[%s302 + $0xa00] sm:$0xff]
        %v684 = vld [vmem:[%s302 + $0xa08] sm:$0xff]
        %v685 = vld [vmem:[%s302 + $0xa10] sm:$0xff]
        %v686 = vld [vmem:[%s302 + $0xa18] sm:$0xff]
        %v687 = vld [vmem:[%s302 + $0xa20] sm:$0xff]
        %v688 = vld [vmem:[%s302 + $0xa28] sm:$0xff]
        %v689 = vld [vmem:[%s302 + $0xa30] sm:$0xff]
        %v690 = vld [vmem:[%s302 + $0xa38] sm:$0xff]
        %v691 = vld [vmem:[%s302 + $0xa40] sm:$0xff]
        %v692 = vld [vmem:[%s302 + $0xa48] sm:$0xff]
        %v693 = vld [vmem:[%s302 + $0xa50] sm:$0xff]
        %v694 = vld [vmem:[%s302 + $0xa58] sm:$0xff]
        %v695 = vld [vmem:[%s302 + $0xa60] sm:$0xff]
        %v696 = vld [vmem:[%s302 + $0xa68] sm:$0xff]
        %v697 = vld [vmem:[%s302 + $0xa70] sm:$0xff]
        %v698 = vld [vmem:[%s302 + $0xa78] sm:$0xff]
        %v699 = vld [vmem:[%s302 + $0xa80] sm:$0xff]
        %v700 = vld [vmem:[%s302 + $0xa88] sm:$0xff]
        %v701 = vld [vmem:[%s302 + $0xa90] sm:$0xff]
        %v702 = vld [vmem:[%s302 + $0xa98] sm:$0xff]
        %v703 = vld [vmem:[%s302 + $0xaa0] sm:$0xff]
        %v704 = vld [vmem:[%s302 + $0xaa8] sm:$0xff]
        %v705 = vld [vmem:[%s302 + $0xab0] sm:$0xff]
        %v706 = vld [vmem:[%s302 + $0xab8] sm:$0xff]
        %v707 = vld [vmem:[%s302 + $0xac0] sm:$0xff]
        %v708 = vld [vmem:[%s302 + $0xac8] sm:$0xff]
        %v709 = vld [vmem:[%s302 + $0xad0] sm:$0xff]
        %v710 = vld [vmem:[%s302 + $0xad8] sm:$0xff]
        %v711 = vld [vmem:[%s302 + $0xae0] sm:$0xff]
        %v712 = vld [vmem:[%s302 + $0xae8] sm:$0xff]
        %v713 = vld [vmem:[%s302 + $0xaf0] sm:$0xff]
        %v714 = vld [vmem:[%s302 + $0xaf8] sm:$0xff]
        %v715 = vld [vmem:[%s302 + $0xb00] sm:$0xff]
        %v716 = vld [vmem:[%s302 + $0xb08] sm:$0xff]
        %v717 = vld [vmem:[%s302 + $0xb10] sm:$0xff]
        %v718 = vld [vmem:[%s302 + $0xb18] sm:$0xff]
        %v719 = vld [vmem:[%s302 + $0xb20] sm:$0xff]
        %v720 = vld [vmem:[%s302 + $0xb28] sm:$0xff]
        %v721 = vld [vmem:[%s302 + $0xb30] sm:$0xff]
        %v722 = vld [vmem:[%s302 + $0xb38] sm:$0xff]
        %v723 = vld [vmem:[%s302 + $0xb40] sm:$0xff]
        %v724 = vld [vmem:[%s302 + $0xb48] sm:$0xff]
        %v725 = vld [vmem:[%s302 + $0xb50] sm:$0xff]
        %v726 = vld [vmem:[%s302 + $0xb58] sm:$0xff]
        %v727 = vld [vmem:[%s302 + $0xb60] sm:$0xff]
        %v728 = vld [vmem:[%s302 + $0xb68] sm:$0xff]
        %v729 = vld [vmem:[%s302 + $0xb70] sm:$0xff]
        %v730 = vld [vmem:[%s302 + $0xb78] sm:$0xff]
        %v731 = vld [vmem:[%s302 + $0xb80] sm:$0xff]
        %v732 = vld [vmem:[%s302 + $0xb88] sm:$0xff]
        %v733 = vld [vmem:[%s302 + $0xb90] sm:$0xff]
        %v734 = vld [vmem:[%s302 + $0xb98] sm:$0xff]
        %v735 = vld [vmem:[%s302 + $0xba0] sm:$0xff]
        %v736 = vld [vmem:[%s302 + $0xba8] sm:$0xff]
        %v737 = vld [vmem:[%s302 + $0xbb0] sm:$0xff]
        %v738 = vld [vmem:[%s302 + $0xbb8] sm:$0xff]
        %v739 = vld [vmem:[%s302 + $0xbc0] sm:$0xff]
        %v740 = vld [vmem:[%s302 + $0xbc8] sm:$0xff]
        %v741 = vld [vmem:[%s302 + $0xbd0] sm:$0xff]
        %v742 = vld [vmem:[%s302 + $0xbd8] sm:$0xff]
        %v743 = vld [vmem:[%s302 + $0xbe0] sm:$0xff]
        %v744 = vld [vmem:[%s302 + $0xbe8] sm:$0xff]
        %v745 = vld [vmem:[%s302 + $0xbf0] sm:$0xff]
        %v746 = vld [vmem:[%s302 + $0xbf8] sm:$0xff]
        %v747 = vld [vmem:[%s302 + $0xc00] sm:$0xff]
        %v748 = vld [vmem:[%s302 + $0xc08] sm:$0xff]
        %v749 = vld [vmem:[%s302 + $0xc10] sm:$0xff]
        %v750 = vld [vmem:[%s302 + $0xc18] sm:$0xff]
        %v751 = vld [vmem:[%s302 + $0xc20] sm:$0xff]
        %v752 = vld [vmem:[%s302 + $0xc28] sm:$0xff]
        %v753 = vld [vmem:[%s302 + $0xc30] sm:$0xff]
        %v754 = vld [vmem:[%s302 + $0xc38] sm:$0xff]
        %v755 = vld [vmem:[%s302 + $0xc40] sm:$0xff]
        %v756 = vld [vmem:[%s302 + $0xc48] sm:$0xff]
        %v757 = vld [vmem:[%s302 + $0xc50] sm:$0xff]
        %v758 = vld [vmem:[%s302 + $0xc58] sm:$0xff]
        %v759 = vld [vmem:[%s302 + $0xc60] sm:$0xff]
        %v760 = vld [vmem:[%s302 + $0xc68] sm:$0xff]
        %v761 = vld [vmem:[%s302 + $0xc70] sm:$0xff]
        %v762 = vld [vmem:[%s302 + $0xc78] sm:$0xff]
        %v763 = vld [vmem:[%s302 + $0xc80] sm:$0xff]
        %v764 = vld [vmem:[%s302 + $0xc88] sm:$0xff]
        %v765 = vld [vmem:[%s302 + $0xc90] sm:$0xff]
        %v766 = vld [vmem:[%s302 + $0xc98] sm:$0xff]
        %v767 = vld [vmem:[%s302 + $0xca0] sm:$0xff]
        %v768 = vld [vmem:[%s302 + $0xca8] sm:$0xff]
        %v769 = vld [vmem:[%s302 + $0xcb0] sm:$0xff]
        %v770 = vld [vmem:[%s302 + $0xcb8] sm:$0xff]
        %v771 = vld [vmem:[%s302 + $0xcc0] sm:$0xff]
        %v772 = vld [vmem:[%s302 + $0xcc8] sm:$0xff]
        %v773 = vld [vmem:[%s302 + $0xcd0] sm:$0xff]
        %v774 = vld [vmem:[%s302 + $0xcd8] sm:$0xff]
        %v775 = vld [vmem:[%s302 + $0xce0] sm:$0xff]
        %v776 = vld [vmem:[%s302 + $0xce8] sm:$0xff]
        %v777 = vld [vmem:[%s302 + $0xcf0] sm:$0xff]
        %v778 = vld [vmem:[%s302 + $0xcf8] sm:$0xff]
        %v779 = vld [vmem:[%s302 + $0xd00] sm:$0xff]
        %v780 = vld [vmem:[%s302 + $0xd08] sm:$0xff]
        %v781 = vld [vmem:[%s302 + $0xd10] sm:$0xff]
        %v782 = vld [vmem:[%s302 + $0xd18] sm:$0xff]
        %v783 = vld [vmem:[%s302 + $0xd20] sm:$0xff]
        %v784 = vld [vmem:[%s302 + $0xd28] sm:$0xff]
        %v785 = vld [vmem:[%s302 + $0xd30] sm:$0xff]
        %v786 = vld [vmem:[%s302 + $0xd38] sm:$0xff]
        %v787 = vld [vmem:[%s302 + $0xd40] sm:$0xff]
        %v788 = vld [vmem:[%s302 + $0xd48] sm:$0xff]
        %v789 = vld [vmem:[%s302 + $0xd50] sm:$0xff]
        %v790 = vld [vmem:[%s302 + $0xd58] sm:$0xff]
        %v791 = vld [vmem:[%s302 + $0xd60] sm:$0xff]
        %v792 = vld [vmem:[%s302 + $0xd68] sm:$0xff]
        %v793 = vld [vmem:[%s302 + $0xd70] sm:$0xff]
        %v794 = vld [vmem:[%s302 + $0xd78] sm:$0xff]
        %v795 = vld [vmem:[%s302 + $0xd80] sm:$0xff]
        %v796 = vld [vmem:[%s302 + $0xd88] sm:$0xff]
        %v797 = vld [vmem:[%s302 + $0xd90] sm:$0xff]
        %v798 = vld [vmem:[%s302 + $0xd98] sm:$0xff]
        %v799 = vld [vmem:[%s302 + $0xda0] sm:$0xff]
        %v800 = vld [vmem:[%s302 + $0xda8] sm:$0xff]
        %v801 = vld [vmem:[%s302 + $0xdb0] sm:$0xff]
        %v802 = vld [vmem:[%s302 + $0xdb8] sm:$0xff]
        %v803 = vld [vmem:[%s302 + $0xdc0] sm:$0xff]
        %v804 = vld [vmem:[%s302 + $0xdc8] sm:$0xff]
        %v805 = vld [vmem:[%s302 + $0xdd0] sm:$0xff]
        %v806 = vld [vmem:[%s302 + $0xdd8] sm:$0xff]
        %v807 = vld [vmem:[%s302 + $0xde0] sm:$0xff]
        %v808 = vld [vmem:[%s302 + $0xde8] sm:$0xff]
        %v809 = vld [vmem:[%s302 + $0xdf0] sm:$0xff]
        %v810 = vld [vmem:[%s302 + $0xdf8] sm:$0xff]
        %v811 = vld [vmem:[%s302 + $0xe00] sm:$0xff]
        %v812 = vld [vmem:[%s302 + $0xe08] sm:$0xff]
        %v813 = vld [vmem:[%s302 + $0xe10] sm:$0xff]
        %v814 = vld [vmem:[%s302 + $0xe18] sm:$0xff]
        %v815 = vld [vmem:[%s302 + $0xe20] sm:$0xff]
        %v816 = vld [vmem:[%s302 + $0xe28] sm:$0xff]
        %v817 = vld [vmem:[%s302 + $0xe30] sm:$0xff]
        %v818 = vld [vmem:[%s302 + $0xe38] sm:$0xff]
        %v819 = vld [vmem:[%s302 + $0xe40] sm:$0xff]
        %v820 = vld [vmem:[%s302 + $0xe48] sm:$0xff]
        %v821 = vld [vmem:[%s302 + $0xe50] sm:$0xff]
        %v822 = vld [vmem:[%s302 + $0xe58] sm:$0xff]
        %v823 = vld [vmem:[%s302 + $0xe60] sm:$0xff]
        %v824 = vld [vmem:[%s302 + $0xe68] sm:$0xff]
        %v825 = vld [vmem:[%s302 + $0xe70] sm:$0xff]
        %v826 = vld [vmem:[%s302 + $0xe78] sm:$0xff]
        %v827 = vld [vmem:[%s302 + $0xe80] sm:$0xff]
        %v828 = vld [vmem:[%s302 + $0xe88] sm:$0xff]
        %v829 = vld [vmem:[%s302 + $0xe90] sm:$0xff]
        %v830 = vld [vmem:[%s302 + $0xe98] sm:$0xff]
        %v831 = vld [vmem:[%s302 + $0xea0] sm:$0xff]
        %v832 = vld [vmem:[%s302 + $0xea8] sm:$0xff]
        %v833 = vld [vmem:[%s302 + $0xeb0] sm:$0xff]
        %v834 = vld [vmem:[%s302 + $0xeb8] sm:$0xff]
        %v835 = vld [vmem:[%s302 + $0xec0] sm:$0xff]
        %v836 = vld [vmem:[%s302 + $0xec8] sm:$0xff]
        %v837 = vld [vmem:[%s302 + $0xed0] sm:$0xff]
        %v838 = vld [vmem:[%s302 + $0xed8] sm:$0xff]
        %v839 = vld [vmem:[%s302 + $0xee0] sm:$0xff]
        %v840 = vld [vmem:[%s302 + $0xee8] sm:$0xff]
        %v841 = vld [vmem:[%s302 + $0xef0] sm:$0xff]
        %v842 = vld [vmem:[%s302 + $0xef8] sm:$0xff]
        %v843 = vld [vmem:[%s302 + $0xf00] sm:$0xff]
        %v844 = vld [vmem:[%s302 + $0xf08] sm:$0xff]
        %v845 = vld [vmem:[%s302 + $0xf10] sm:$0xff]
        %v846 = vld [vmem:[%s302 + $0xf18] sm:$0xff]
        %v847 = vld [vmem:[%s302 + $0xf20] sm:$0xff]
        %v848 = vld [vmem:[%s302 + $0xf28] sm:$0xff]
        %v849 = vld [vmem:[%s302 + $0xf30] sm:$0xff]
        %v850 = vld [vmem:[%s302 + $0xf38] sm:$0xff]
        %v851 = vld [vmem:[%s302 + $0xf40] sm:$0xff]
        %v852 = vld [vmem:[%s302 + $0xf48] sm:$0xff]
        %v853 = vld [vmem:[%s302 + $0xf50] sm:$0xff]
        %v854 = vld [vmem:[%s302 + $0xf58] sm:$0xff]
        %v855 = vld [vmem:[%s302 + $0xf60] sm:$0xff]
        %v856 = vld [vmem:[%s302 + $0xf68] sm:$0xff]
        %v857 = vld [vmem:[%s302 + $0xf70] sm:$0xff]
        %v858 = vld [vmem:[%s302 + $0xf78] sm:$0xff]
        %v859 = vld [vmem:[%s302 + $0xf80] sm:$0xff]
        %v860 = vld [vmem:[%s302 + $0xf88] sm:$0xff]
        %v861 = vld [vmem:[%s302 + $0xf90] sm:$0xff]
        %v862 = vld [vmem:[%s302 + $0xf98] sm:$0xff]
        %v863 = vld [vmem:[%s302 + $0xfa0] sm:$0xff]
        %v864 = vld [vmem:[%s302 + $0xfa8] sm:$0xff]
        %v865 = vld [vmem:[%s302 + $0xfb0] sm:$0xff]
        %v866 = vld [vmem:[%s302 + $0xfb8] sm:$0xff]
        %v867 = vld [vmem:[%s302 + $0xfc0] sm:$0xff]
        %v868 = vld [vmem:[%s302 + $0xfc8] sm:$0xff]
        %v869 = vld [vmem:[%s302 + $0xfd0] sm:$0xff]
        %v870 = vld [vmem:[%s302 + $0xfd8] sm:$0xff]
        %v871 = vld [vmem:[%s302 + $0xfe0] sm:$0xff]
        %v872 = vld [vmem:[%s302 + $0xfe8] sm:$0xff]
        %v873 = vld [vmem:[%s302 + $0xff0] sm:$0xff]
        %v874 = vld [vmem:[%s302 + $0xff8] sm:$0xff]
        %v899 = vunpack.c.l.b16 %v339
        %v900 = vunpack.c.h.b16 %v339
        %v901 = vunpack.c.l.b16 %v340
        %v902 = vunpack.c.h.b16 %v340
        %v903 = vunpack.c.l.b16 %v341
        %v904 = vunpack.c.h.b16 %v341
        %v905 = vunpack.c.l.b16 %v342
        %v906 = vunpack.c.h.b16 %v342
        %v907 = vunpack.c.l.b16 %v343
        %v908 = vunpack.c.h.b16 %v343
        %v909 = vunpack.c.l.b16 %v344
        %v910 = vunpack.c.h.b16 %v344
        %v911 = vunpack.c.l.b16 %v345
        %v912 = vunpack.c.h.b16 %v345
        %v913 = vunpack.c.l.b16 %v346
        %v914 = vunpack.c.h.b16 %v346
        %v915 = vunpack.c.l.b16 %v347
        %v916 = vunpack.c.h.b16 %v347
        %v917 = vunpack.c.l.b16 %v348
        %v918 = vunpack.c.h.b16 %v348
        %v919 = vunpack.c.l.b16 %v349
        %v920 = vunpack.c.h.b16 %v349
        %v921 = vunpack.c.l.b16 %v350
        %v922 = vunpack.c.h.b16 %v350
        %v923 = vunpack.c.l.b16 %v351
        %v924 = vunpack.c.h.b16 %v351
        %v925 = vunpack.c.l.b16 %v352
        %v926 = vunpack.c.h.b16 %v352
        %v927 = vunpack.c.l.b16 %v353
        %v928 = vunpack.c.h.b16 %v353
        %v929 = vunpack.c.l.b16 %v354
        %v930 = vunpack.c.h.b16 %v354
        %v931 = vunpack.c.l.b16 %v355
        %v932 = vunpack.c.h.b16 %v355
        %v933 = vunpack.c.l.b16 %v356
        %v934 = vunpack.c.h.b16 %v356
        %v935 = vunpack.c.l.b16 %v357
        %v936 = vunpack.c.h.b16 %v357
        %v937 = vunpack.c.l.b16 %v358
        %v938 = vunpack.c.h.b16 %v358
        %v939 = vunpack.c.l.b16 %v359
        %v940 = vunpack.c.h.b16 %v359
        %v941 = vunpack.c.l.b16 %v360
        %v942 = vunpack.c.h.b16 %v360
        %v943 = vunpack.c.l.b16 %v361
        %v944 = vunpack.c.h.b16 %v361
        %v945 = vunpack.c.l.b16 %v362
        %v946 = vunpack.c.h.b16 %v362
        %v947 = vpack.c.b16 %v915, %v899
        %v948 = vpack.c.b16 %v916, %v900
        %v949 = vpack.c.b16 %v917, %v901
        %v950 = vpack.c.b16 %v918, %v902
        %v951 = vpack.c.b16 %v919, %v903
        %v952 = vpack.c.b16 %v920, %v904
        %v953 = vpack.c.b16 %v921, %v905
        %v954 = vpack.c.b16 %v922, %v906
        %v955 = vpack.c.b16 %v923, %v907
        %v956 = vpack.c.b16 %v924, %v908
        %v957 = vpack.c.b16 %v925, %v909
        %v958 = vpack.c.b16 %v926, %v910
        %v959 = vpack.c.b16 %v927, %v911
        %v960 = vpack.c.b16 %v928, %v912
        %v961 = vpack.c.b16 %v929, %v913
        %v962 = vpack.c.b16 %v930, %v914
        %v963 = vpack.c.b16 %v931, %v931
        %v964 = vpack.c.b16 %v932, %v932
        %v965 = vpack.c.b16 %v933, %v933
        %v966 = vpack.c.b16 %v934, %v934
        %v967 = vpack.c.b16 %v935, %v935
        %v968 = vpack.c.b16 %v936, %v936
        %v969 = vpack.c.b16 %v937, %v937
        %v970 = vpack.c.b16 %v938, %v938
        %v971 = vpack.c.b16 %v939, %v939
        %v972 = vpack.c.b16 %v940, %v940
        %v973 = vpack.c.b16 %v941, %v941
        %v974 = vpack.c.b16 %v942, %v942
        %v975 = vpack.c.b16 %v943, %v943
        %v976 = vpack.c.b16 %v944, %v944
        %v977 = vpack.c.b16 %v945, %v945
        %v978 = vpack.c.b16 %v946, %v946
        %v1523 = vunpack.c.l.b16 %v363
        %v1524 = vunpack.c.h.b16 %v363
        %v1525 = vunpack.c.l.b16 %v364
        %v1526 = vunpack.c.h.b16 %v364
        %v1527 = vunpack.c.l.b16 %v365
        %v1528 = vunpack.c.h.b16 %v365
        %v1529 = vunpack.c.l.b16 %v366
        %v1530 = vunpack.c.h.b16 %v366
        %v1531 = vunpack.c.l.b16 %v367
        %v1532 = vunpack.c.h.b16 %v367
        %v1533 = vunpack.c.l.b16 %v368
        %v1534 = vunpack.c.h.b16 %v368
        %v1535 = vunpack.c.l.b16 %v369
        %v1536 = vunpack.c.h.b16 %v369
        %v1537 = vunpack.c.l.b16 %v370
        %v1538 = vunpack.c.h.b16 %v370
        %v1539 = vunpack.c.l.b16 %v371
        %v1540 = vunpack.c.h.b16 %v371
        %v1541 = vunpack.c.l.b16 %v372
        %v1542 = vunpack.c.h.b16 %v372
        %v1543 = vunpack.c.l.b16 %v373
        %v1544 = vunpack.c.h.b16 %v373
        %v1545 = vunpack.c.l.b16 %v374
        %v1546 = vunpack.c.h.b16 %v374
        %v1547 = vunpack.c.l.b16 %v375
        %v1548 = vunpack.c.h.b16 %v375
        %v1549 = vunpack.c.l.b16 %v376
        %v1550 = vunpack.c.h.b16 %v376
        %v1551 = vunpack.c.l.b16 %v377
        %v1552 = vunpack.c.h.b16 %v377
        %v1553 = vunpack.c.l.b16 %v378
        %v1554 = vunpack.c.h.b16 %v378
        %v1555 = vunpack.c.l.b16 %v379
        %v1556 = vunpack.c.h.b16 %v379
        %v1557 = vunpack.c.l.b16 %v380
        %v1558 = vunpack.c.h.b16 %v380
        %v1559 = vunpack.c.l.b16 %v381
        %v1560 = vunpack.c.h.b16 %v381
        %v1561 = vunpack.c.l.b16 %v382
        %v1562 = vunpack.c.h.b16 %v382
        %v1563 = vunpack.c.l.b16 %v383
        %v1564 = vunpack.c.h.b16 %v383
        %v1565 = vunpack.c.l.b16 %v384
        %v1566 = vunpack.c.h.b16 %v384
        %v1567 = vunpack.c.l.b16 %v385
        %v1568 = vunpack.c.h.b16 %v385
        %v1569 = vunpack.c.l.b16 %v386
        %v1570 = vunpack.c.h.b16 %v386
        %v1571 = vunpack.c.l.b16 %v387
        %v1572 = vunpack.c.h.b16 %v387
        %v1573 = vunpack.c.l.b16 %v388
        %v1574 = vunpack.c.h.b16 %v388
        %v1575 = vunpack.c.l.b16 %v389
        %v1576 = vunpack.c.h.b16 %v389
        %v1577 = vunpack.c.l.b16 %v390
        %v1578 = vunpack.c.h.b16 %v390
        %v1579 = vunpack.c.l.b16 %v391
        %v1580 = vunpack.c.h.b16 %v391
        %v1581 = vunpack.c.l.b16 %v392
        %v1582 = vunpack.c.h.b16 %v392
        %v1583 = vunpack.c.l.b16 %v393
        %v1584 = vunpack.c.h.b16 %v393
        %v1585 = vunpack.c.l.b16 %v394
        %v1586 = vunpack.c.h.b16 %v394
        %v1587 = vunpack.c.l.b16 %v395
        %v1588 = vunpack.c.h.b16 %v395
        %v1589 = vunpack.c.l.b16 %v396
        %v1590 = vunpack.c.h.b16 %v396
        %v1591 = vunpack.c.l.b16 %v397
        %v1592 = vunpack.c.h.b16 %v397
        %v1593 = vunpack.c.l.b16 %v398
        %v1594 = vunpack.c.h.b16 %v398
        %v1595 = vunpack.c.l.b16 %v399
        %v1596 = vunpack.c.h.b16 %v399
        %v1597 = vunpack.c.l.b16 %v400
        %v1598 = vunpack.c.h.b16 %v400
        %v1599 = vunpack.c.l.b16 %v401
        %v1600 = vunpack.c.h.b16 %v401
        %v1601 = vunpack.c.l.b16 %v402
        %v1602 = vunpack.c.h.b16 %v402
        %v1603 = vunpack.c.l.b16 %v403
        %v1604 = vunpack.c.h.b16 %v403
        %v1605 = vunpack.c.l.b16 %v404
        %v1606 = vunpack.c.h.b16 %v404
        %v1607 = vunpack.c.l.b16 %v405
        %v1608 = vunpack.c.h.b16 %v405
        %v1609 = vunpack.c.l.b16 %v406
        %v1610 = vunpack.c.h.b16 %v406
        %v1611 = vunpack.c.l.b16 %v407
        %v1612 = vunpack.c.h.b16 %v407
        %v1613 = vunpack.c.l.b16 %v408
        %v1614 = vunpack.c.h.b16 %v408
        %v1615 = vunpack.c.l.b16 %v409
        %v1616 = vunpack.c.h.b16 %v409
        %v1617 = vunpack.c.l.b16 %v410
        %v1618 = vunpack.c.h.b16 %v410
        %v1619 = vunpack.c.l.b16 %v411
        %v1620 = vunpack.c.h.b16 %v411
        %v1621 = vunpack.c.l.b16 %v412
        %v1622 = vunpack.c.h.b16 %v412
        %v1623 = vunpack.c.l.b16 %v413
        %v1624 = vunpack.c.h.b16 %v413
        %v1625 = vunpack.c.l.b16 %v414
        %v1626 = vunpack.c.h.b16 %v414
        %v1627 = vunpack.c.l.b16 %v415
        %v1628 = vunpack.c.h.b16 %v415
        %v1629 = vunpack.c.l.b16 %v416
        %v1630 = vunpack.c.h.b16 %v416
        %v1631 = vunpack.c.l.b16 %v417
        %v1632 = vunpack.c.h.b16 %v417
        %v1633 = vunpack.c.l.b16 %v418
        %v1634 = vunpack.c.h.b16 %v418
        %v1635 = vunpack.c.l.b16 %v419
        %v1636 = vunpack.c.h.b16 %v419
        %v1637 = vunpack.c.l.b16 %v420
        %v1638 = vunpack.c.h.b16 %v420
        %v1639 = vunpack.c.l.b16 %v421
        %v1640 = vunpack.c.h.b16 %v421
        %v1641 = vunpack.c.l.b16 %v422
        %v1642 = vunpack.c.h.b16 %v422
        %v1643 = vunpack.c.l.b16 %v423
        %v1644 = vunpack.c.h.b16 %v423
        %v1645 = vunpack.c.l.b16 %v424
        %v1646 = vunpack.c.h.b16 %v424
        %v1647 = vunpack.c.l.b16 %v425
        %v1648 = vunpack.c.h.b16 %v425
        %v1649 = vunpack.c.l.b16 %v426
        %v1650 = vunpack.c.h.b16 %v426
        %v1651 = vunpack.c.l.b16 %v427
        %v1652 = vunpack.c.h.b16 %v427
        %v1653 = vunpack.c.l.b16 %v428
        %v1654 = vunpack.c.h.b16 %v428
        %v1655 = vunpack.c.l.b16 %v429
        %v1656 = vunpack.c.h.b16 %v429
        %v1657 = vunpack.c.l.b16 %v430
        %v1658 = vunpack.c.h.b16 %v430
        %v1659 = vunpack.c.l.b16 %v431
        %v1660 = vunpack.c.h.b16 %v431
        %v1661 = vunpack.c.l.b16 %v432
        %v1662 = vunpack.c.h.b16 %v432
        %v1663 = vunpack.c.l.b16 %v433
        %v1664 = vunpack.c.h.b16 %v433
        %v1665 = vunpack.c.l.b16 %v434
        %v1666 = vunpack.c.h.b16 %v434
        %v1667 = vunpack.c.l.b16 %v435
        %v1668 = vunpack.c.h.b16 %v435
        %v1669 = vunpack.c.l.b16 %v436
        %v1670 = vunpack.c.h.b16 %v436
        %v1671 = vunpack.c.l.b16 %v437
        %v1672 = vunpack.c.h.b16 %v437
        %v1673 = vunpack.c.l.b16 %v438
        %v1674 = vunpack.c.h.b16 %v438
        %v1675 = vunpack.c.l.b16 %v439
        %v1676 = vunpack.c.h.b16 %v439
        %v1677 = vunpack.c.l.b16 %v440
        %v1678 = vunpack.c.h.b16 %v440
        %v1679 = vunpack.c.l.b16 %v441
        %v1680 = vunpack.c.h.b16 %v441
        %v1681 = vunpack.c.l.b16 %v442
        %v1682 = vunpack.c.h.b16 %v442
        %v1683 = vunpack.c.l.b16 %v443
        %v1684 = vunpack.c.h.b16 %v443
        %v1685 = vunpack.c.l.b16 %v444
        %v1686 = vunpack.c.h.b16 %v444
        %v1687 = vunpack.c.l.b16 %v445
        %v1688 = vunpack.c.h.b16 %v445
        %v1689 = vunpack.c.l.b16 %v446
        %v1690 = vunpack.c.h.b16 %v446
        %v1691 = vunpack.c.l.b16 %v447
        %v1692 = vunpack.c.h.b16 %v447
        %v1693 = vunpack.c.l.b16 %v448
        %v1694 = vunpack.c.h.b16 %v448
        %v1695 = vunpack.c.l.b16 %v449
        %v1696 = vunpack.c.h.b16 %v449
        %v1697 = vunpack.c.l.b16 %v450
        %v1698 = vunpack.c.h.b16 %v450
        %v1699 = vunpack.c.l.b16 %v451
        %v1700 = vunpack.c.h.b16 %v451
        %v1701 = vunpack.c.l.b16 %v452
        %v1702 = vunpack.c.h.b16 %v452
        %v1703 = vunpack.c.l.b16 %v453
        %v1704 = vunpack.c.h.b16 %v453
        %v1705 = vunpack.c.l.b16 %v454
        %v1706 = vunpack.c.h.b16 %v454
        %v1707 = vunpack.c.l.b16 %v455
        %v1708 = vunpack.c.h.b16 %v455
        %v1709 = vunpack.c.l.b16 %v456
        %v1710 = vunpack.c.h.b16 %v456
        %v1711 = vunpack.c.l.b16 %v457
        %v1712 = vunpack.c.h.b16 %v457
        %v1713 = vunpack.c.l.b16 %v458
        %v1714 = vunpack.c.h.b16 %v458
        %v1715 = vunpack.c.l.b16 %v459
        %v1716 = vunpack.c.h.b16 %v459
        %v1717 = vunpack.c.l.b16 %v460
        %v1718 = vunpack.c.h.b16 %v460
        %v1719 = vunpack.c.l.b16 %v461
        %v1720 = vunpack.c.h.b16 %v461
        %v1721 = vunpack.c.l.b16 %v462
        %v1722 = vunpack.c.h.b16 %v462
        %v1723 = vunpack.c.l.b16 %v463
        %v1724 = vunpack.c.h.b16 %v463
        %v1725 = vunpack.c.l.b16 %v464
        %v1726 = vunpack.c.h.b16 %v464
        %v1727 = vunpack.c.l.b16 %v465
        %v1728 = vunpack.c.h.b16 %v465
        %v1729 = vunpack.c.l.b16 %v466
        %v1730 = vunpack.c.h.b16 %v466
        %v1731 = vunpack.c.l.b16 %v467
        %v1732 = vunpack.c.h.b16 %v467
        %v1733 = vunpack.c.l.b16 %v468
        %v1734 = vunpack.c.h.b16 %v468
        %v1735 = vunpack.c.l.b16 %v469
        %v1736 = vunpack.c.h.b16 %v469
        %v1737 = vunpack.c.l.b16 %v470
        %v1738 = vunpack.c.h.b16 %v470
        %v1739 = vunpack.c.l.b16 %v471
        %v1740 = vunpack.c.h.b16 %v471
        %v1741 = vunpack.c.l.b16 %v472
        %v1742 = vunpack.c.h.b16 %v472
        %v1743 = vunpack.c.l.b16 %v473
        %v1744 = vunpack.c.h.b16 %v473
        %v1745 = vunpack.c.l.b16 %v474
        %v1746 = vunpack.c.h.b16 %v474
        %v1747 = vunpack.c.l.b16 %v475
        %v1748 = vunpack.c.h.b16 %v475
        %v1749 = vunpack.c.l.b16 %v476
        %v1750 = vunpack.c.h.b16 %v476
        %v1751 = vunpack.c.l.b16 %v477
        %v1752 = vunpack.c.h.b16 %v477
        %v1753 = vunpack.c.l.b16 %v478
        %v1754 = vunpack.c.h.b16 %v478
        %v1755 = vunpack.c.l.b16 %v479
        %v1756 = vunpack.c.h.b16 %v479
        %v1757 = vunpack.c.l.b16 %v480
        %v1758 = vunpack.c.h.b16 %v480
        %v1759 = vunpack.c.l.b16 %v481
        %v1760 = vunpack.c.h.b16 %v481
        %v1761 = vunpack.c.l.b16 %v482
        %v1762 = vunpack.c.h.b16 %v482
        %v1763 = vunpack.c.l.b16 %v483
        %v1764 = vunpack.c.h.b16 %v483
        %v1765 = vunpack.c.l.b16 %v484
        %v1766 = vunpack.c.h.b16 %v484
        %v1767 = vunpack.c.l.b16 %v485
        %v1768 = vunpack.c.h.b16 %v485
        %v1769 = vunpack.c.l.b16 %v486
        %v1770 = vunpack.c.h.b16 %v486
        %v1771 = vunpack.c.l.b16 %v487
        %v1772 = vunpack.c.h.b16 %v487
        %v1773 = vunpack.c.l.b16 %v488
        %v1774 = vunpack.c.h.b16 %v488
        %v1775 = vunpack.c.l.b16 %v489
        %v1776 = vunpack.c.h.b16 %v489
        %v1777 = vunpack.c.l.b16 %v490
        %v1778 = vunpack.c.h.b16 %v490
        %v1779 = vunpack.c.l.b16 %v491
        %v1780 = vunpack.c.h.b16 %v491
        %v1781 = vunpack.c.l.b16 %v492
        %v1782 = vunpack.c.h.b16 %v492
        %v1783 = vunpack.c.l.b16 %v493
        %v1784 = vunpack.c.h.b16 %v493
        %v1785 = vunpack.c.l.b16 %v494
        %v1786 = vunpack.c.h.b16 %v494
        %v1787 = vunpack.c.l.b16 %v495
        %v1788 = vunpack.c.h.b16 %v495
        %v1789 = vunpack.c.l.b16 %v496
        %v1790 = vunpack.c.h.b16 %v496
        %v1791 = vunpack.c.l.b16 %v497
        %v1792 = vunpack.c.h.b16 %v497
        %v1793 = vunpack.c.l.b16 %v498
        %v1794 = vunpack.c.h.b16 %v498
        %v1795 = vunpack.c.l.b16 %v499
        %v1796 = vunpack.c.h.b16 %v499
        %v1797 = vunpack.c.l.b16 %v500
        %v1798 = vunpack.c.h.b16 %v500
        %v1799 = vunpack.c.l.b16 %v501
        %v1800 = vunpack.c.h.b16 %v501
        %v1801 = vunpack.c.l.b16 %v502
        %v1802 = vunpack.c.h.b16 %v502
        %v1803 = vunpack.c.l.b16 %v503
        %v1804 = vunpack.c.h.b16 %v503
        %v1805 = vunpack.c.l.b16 %v504
        %v1806 = vunpack.c.h.b16 %v504
        %v1807 = vunpack.c.l.b16 %v505
        %v1808 = vunpack.c.h.b16 %v505
        %v1809 = vunpack.c.l.b16 %v506
        %v1810 = vunpack.c.h.b16 %v506
        %v1811 = vunpack.c.l.b16 %v507
        %v1812 = vunpack.c.h.b16 %v507
        %v1813 = vunpack.c.l.b16 %v508
        %v1814 = vunpack.c.h.b16 %v508
        %v1815 = vunpack.c.l.b16 %v509
        %v1816 = vunpack.c.h.b16 %v509
        %v1817 = vunpack.c.l.b16 %v510
        %v1818 = vunpack.c.h.b16 %v510
        %v1819 = vunpack.c.l.b16 %v511
        %v1820 = vunpack.c.h.b16 %v511
        %v1821 = vunpack.c.l.b16 %v512
        %v1822 = vunpack.c.h.b16 %v512
        %v1823 = vunpack.c.l.b16 %v513
        %v1824 = vunpack.c.h.b16 %v513
        %v1825 = vunpack.c.l.b16 %v514
        %v1826 = vunpack.c.h.b16 %v514
        %v1827 = vunpack.c.l.b16 %v515
        %v1828 = vunpack.c.h.b16 %v515
        %v1829 = vunpack.c.l.b16 %v516
        %v1830 = vunpack.c.h.b16 %v516
        %v1831 = vunpack.c.l.b16 %v517
        %v1832 = vunpack.c.h.b16 %v517
        %v1833 = vunpack.c.l.b16 %v518
        %v1834 = vunpack.c.h.b16 %v518
        %v1835 = vunpack.c.l.b16 %v519
        %v1836 = vunpack.c.h.b16 %v519
        %v1837 = vunpack.c.l.b16 %v520
        %v1838 = vunpack.c.h.b16 %v520
        %v1839 = vunpack.c.l.b16 %v521
        %v1840 = vunpack.c.h.b16 %v521
        %v1841 = vunpack.c.l.b16 %v522
        %v1842 = vunpack.c.h.b16 %v522
        %v1843 = vunpack.c.l.b16 %v523
        %v1844 = vunpack.c.h.b16 %v523
        %v1845 = vunpack.c.l.b16 %v524
        %v1846 = vunpack.c.h.b16 %v524
        %v1847 = vunpack.c.l.b16 %v525
        %v1848 = vunpack.c.h.b16 %v525
        %v1849 = vunpack.c.l.b16 %v526
        %v1850 = vunpack.c.h.b16 %v526
        %v1851 = vunpack.c.l.b16 %v527
        %v1852 = vunpack.c.h.b16 %v527
        %v1853 = vunpack.c.l.b16 %v528
        %v1854 = vunpack.c.h.b16 %v528
        %v1855 = vunpack.c.l.b16 %v529
        %v1856 = vunpack.c.h.b16 %v529
        %v1857 = vunpack.c.l.b16 %v530
        %v1858 = vunpack.c.h.b16 %v530
        %v1859 = vunpack.c.l.b16 %v531
        %v1860 = vunpack.c.h.b16 %v531
        %v1861 = vunpack.c.l.b16 %v532
        %v1862 = vunpack.c.h.b16 %v532
        %v1863 = vunpack.c.l.b16 %v533
        %v1864 = vunpack.c.h.b16 %v533
        %v1865 = vunpack.c.l.b16 %v534
        %v1866 = vunpack.c.h.b16 %v534
        %v1867 = vunpack.c.l.b16 %v535
        %v1868 = vunpack.c.h.b16 %v535
        %v1869 = vunpack.c.l.b16 %v536
        %v1870 = vunpack.c.h.b16 %v536
        %v1871 = vunpack.c.l.b16 %v537
        %v1872 = vunpack.c.h.b16 %v537
        %v1873 = vunpack.c.l.b16 %v538
        %v1874 = vunpack.c.h.b16 %v538
        %v1875 = vunpack.c.l.b16 %v539
        %v1876 = vunpack.c.h.b16 %v539
        %v1877 = vunpack.c.l.b16 %v540
        %v1878 = vunpack.c.h.b16 %v540
        %v1879 = vunpack.c.l.b16 %v541
        %v1880 = vunpack.c.h.b16 %v541
        %v1881 = vunpack.c.l.b16 %v542
        %v1882 = vunpack.c.h.b16 %v542
        %v1883 = vunpack.c.l.b16 %v543
        %v1884 = vunpack.c.h.b16 %v543
        %v1885 = vunpack.c.l.b16 %v544
        %v1886 = vunpack.c.h.b16 %v544
        %v1887 = vunpack.c.l.b16 %v545
        %v1888 = vunpack.c.h.b16 %v545
        %v1889 = vunpack.c.l.b16 %v546
        %v1890 = vunpack.c.h.b16 %v546
        %v1891 = vunpack.c.l.b16 %v547
        %v1892 = vunpack.c.h.b16 %v547
        %v1893 = vunpack.c.l.b16 %v548
        %v1894 = vunpack.c.h.b16 %v548
        %v1895 = vunpack.c.l.b16 %v549
        %v1896 = vunpack.c.h.b16 %v549
        %v1897 = vunpack.c.l.b16 %v550
        %v1898 = vunpack.c.h.b16 %v550
        %v1899 = vunpack.c.l.b16 %v551
        %v1900 = vunpack.c.h.b16 %v551
        %v1901 = vunpack.c.l.b16 %v552
        %v1902 = vunpack.c.h.b16 %v552
        %v1903 = vunpack.c.l.b16 %v553
        %v1904 = vunpack.c.h.b16 %v553
        %v1905 = vunpack.c.l.b16 %v554
        %v1906 = vunpack.c.h.b16 %v554
        %v1907 = vunpack.c.l.b16 %v555
        %v1908 = vunpack.c.h.b16 %v555
        %v1909 = vunpack.c.l.b16 %v556
        %v1910 = vunpack.c.h.b16 %v556
        %v1911 = vunpack.c.l.b16 %v557
        %v1912 = vunpack.c.h.b16 %v557
        %v1913 = vunpack.c.l.b16 %v558
        %v1914 = vunpack.c.h.b16 %v558
        %v1915 = vunpack.c.l.b16 %v559
        %v1916 = vunpack.c.h.b16 %v559
        %v1917 = vunpack.c.l.b16 %v560
        %v1918 = vunpack.c.h.b16 %v560
        %v1919 = vunpack.c.l.b16 %v561
        %v1920 = vunpack.c.h.b16 %v561
        %v1921 = vunpack.c.l.b16 %v562
        %v1922 = vunpack.c.h.b16 %v562
        %v1923 = vunpack.c.l.b16 %v563
        %v1924 = vunpack.c.h.b16 %v563
        %v1925 = vunpack.c.l.b16 %v564
        %v1926 = vunpack.c.h.b16 %v564
        %v1927 = vunpack.c.l.b16 %v565
        %v1928 = vunpack.c.h.b16 %v565
        %v1929 = vunpack.c.l.b16 %v566
        %v1930 = vunpack.c.h.b16 %v566
        %v1931 = vunpack.c.l.b16 %v567
        %v1932 = vunpack.c.h.b16 %v567
        %v1933 = vunpack.c.l.b16 %v568
        %v1934 = vunpack.c.h.b16 %v568
        %v1935 = vunpack.c.l.b16 %v569
        %v1936 = vunpack.c.h.b16 %v569
        %v1937 = vunpack.c.l.b16 %v570
        %v1938 = vunpack.c.h.b16 %v570
        %v1939 = vunpack.c.l.b16 %v571
        %v1940 = vunpack.c.h.b16 %v571
        %v1941 = vunpack.c.l.b16 %v572
        %v1942 = vunpack.c.h.b16 %v572
        %v1943 = vunpack.c.l.b16 %v573
        %v1944 = vunpack.c.h.b16 %v573
        %v1945 = vunpack.c.l.b16 %v574
        %v1946 = vunpack.c.h.b16 %v574
        %v1947 = vunpack.c.l.b16 %v575
        %v1948 = vunpack.c.h.b16 %v575
        %v1949 = vunpack.c.l.b16 %v576
        %v1950 = vunpack.c.h.b16 %v576
        %v1951 = vunpack.c.l.b16 %v577
        %v1952 = vunpack.c.h.b16 %v577
        %v1953 = vunpack.c.l.b16 %v578
        %v1954 = vunpack.c.h.b16 %v578
        %v1955 = vunpack.c.l.b16 %v579
        %v1956 = vunpack.c.h.b16 %v579
        %v1957 = vunpack.c.l.b16 %v580
        %v1958 = vunpack.c.h.b16 %v580
        %v1959 = vunpack.c.l.b16 %v581
        %v1960 = vunpack.c.h.b16 %v581
        %v1961 = vunpack.c.l.b16 %v582
        %v1962 = vunpack.c.h.b16 %v582
        %v1963 = vunpack.c.l.b16 %v583
        %v1964 = vunpack.c.h.b16 %v583
        %v1965 = vunpack.c.l.b16 %v584
        %v1966 = vunpack.c.h.b16 %v584
        %v1967 = vunpack.c.l.b16 %v585
        %v1968 = vunpack.c.h.b16 %v585
        %v1969 = vunpack.c.l.b16 %v586
        %v1970 = vunpack.c.h.b16 %v586
        %v1971 = vunpack.c.l.b16 %v587
        %v1972 = vunpack.c.h.b16 %v587
        %v1973 = vunpack.c.l.b16 %v588
        %v1974 = vunpack.c.h.b16 %v588
        %v1975 = vunpack.c.l.b16 %v589
        %v1976 = vunpack.c.h.b16 %v589
        %v1977 = vunpack.c.l.b16 %v590
        %v1978 = vunpack.c.h.b16 %v590
        %v1979 = vunpack.c.l.b16 %v591
        %v1980 = vunpack.c.h.b16 %v591
        %v1981 = vunpack.c.l.b16 %v592
        %v1982 = vunpack.c.h.b16 %v592
        %v1983 = vunpack.c.l.b16 %v593
        %v1984 = vunpack.c.h.b16 %v593
        %v1985 = vunpack.c.l.b16 %v594
        %v1986 = vunpack.c.h.b16 %v594
        %v1987 = vunpack.c.l.b16 %v595
        %v1988 = vunpack.c.h.b16 %v595
        %v1989 = vunpack.c.l.b16 %v596
        %v1990 = vunpack.c.h.b16 %v596
        %v1991 = vunpack.c.l.b16 %v597
        %v1992 = vunpack.c.h.b16 %v597
        %v1993 = vunpack.c.l.b16 %v598
        %v1994 = vunpack.c.h.b16 %v598
        %v1995 = vunpack.c.l.b16 %v599
        %v1996 = vunpack.c.h.b16 %v599
        %v1997 = vunpack.c.l.b16 %v600
        %v1998 = vunpack.c.h.b16 %v600
        %v1999 = vunpack.c.l.b16 %v601
        %v2000 = vunpack.c.h.b16 %v601
        %v2001 = vunpack.c.l.b16 %v602
        %v2002 = vunpack.c.h.b16 %v602
        %v2003 = vunpack.c.l.b16 %v603
        %v2004 = vunpack.c.h.b16 %v603
        %v2005 = vunpack.c.l.b16 %v604
        %v2006 = vunpack.c.h.b16 %v604
        %v2007 = vunpack.c.l.b16 %v605
        %v2008 = vunpack.c.h.b16 %v605
        %v2009 = vunpack.c.l.b16 %v606
        %v2010 = vunpack.c.h.b16 %v606
        %v2011 = vunpack.c.l.b16 %v607
        %v2012 = vunpack.c.h.b16 %v607
        %v2013 = vunpack.c.l.b16 %v608
        %v2014 = vunpack.c.h.b16 %v608
        %v2015 = vunpack.c.l.b16 %v609
        %v2016 = vunpack.c.h.b16 %v609
        %v2017 = vunpack.c.l.b16 %v610
        %v2018 = vunpack.c.h.b16 %v610
        %v2019 = vunpack.c.l.b16 %v611
        %v2020 = vunpack.c.h.b16 %v611
        %v2021 = vunpack.c.l.b16 %v612
        %v2022 = vunpack.c.h.b16 %v612
        %v2023 = vunpack.c.l.b16 %v613
        %v2024 = vunpack.c.h.b16 %v613
        %v2025 = vunpack.c.l.b16 %v614
        %v2026 = vunpack.c.h.b16 %v614
        %v2027 = vunpack.c.l.b16 %v615
        %v2028 = vunpack.c.h.b16 %v615
        %v2029 = vunpack.c.l.b16 %v616
        %v2030 = vunpack.c.h.b16 %v616
        %v2031 = vunpack.c.l.b16 %v617
        %v2032 = vunpack.c.h.b16 %v617
        %v2033 = vunpack.c.l.b16 %v618
        %v2034 = vunpack.c.h.b16 %v618
        %v2035 = vunpack.c.l.b16 %v619
        %v2036 = vunpack.c.h.b16 %v619
        %v2037 = vunpack.c.l.b16 %v620
        %v2038 = vunpack.c.h.b16 %v620
        %v2039 = vunpack.c.l.b16 %v621
        %v2040 = vunpack.c.h.b16 %v621
        %v2041 = vunpack.c.l.b16 %v622
        %v2042 = vunpack.c.h.b16 %v622
        %v2043 = vunpack.c.l.b16 %v623
        %v2044 = vunpack.c.h.b16 %v623
        %v2045 = vunpack.c.l.b16 %v624
        %v2046 = vunpack.c.h.b16 %v624
        %v2047 = vunpack.c.l.b16 %v625
        %v2048 = vunpack.c.h.b16 %v625
        %v2049 = vunpack.c.l.b16 %v626
        %v2050 = vunpack.c.h.b16 %v626
        %v2051 = vunpack.c.l.b16 %v627
        %v2052 = vunpack.c.h.b16 %v627
        %v2053 = vunpack.c.l.b16 %v628
        %v2054 = vunpack.c.h.b16 %v628
        %v2055 = vunpack.c.l.b16 %v629
        %v2056 = vunpack.c.h.b16 %v629
        %v2057 = vunpack.c.l.b16 %v630
        %v2058 = vunpack.c.h.b16 %v630
        %v2059 = vunpack.c.l.b16 %v631
        %v2060 = vunpack.c.h.b16 %v631
        %v2061 = vunpack.c.l.b16 %v632
        %v2062 = vunpack.c.h.b16 %v632
        %v2063 = vunpack.c.l.b16 %v633
        %v2064 = vunpack.c.h.b16 %v633
        %v2065 = vunpack.c.l.b16 %v634
        %v2066 = vunpack.c.h.b16 %v634
        %v2067 = vunpack.c.l.b16 %v635
        %v2068 = vunpack.c.h.b16 %v635
        %v2069 = vunpack.c.l.b16 %v636
        %v2070 = vunpack.c.h.b16 %v636
        %v2071 = vunpack.c.l.b16 %v637
        %v2072 = vunpack.c.h.b16 %v637
        %v2073 = vunpack.c.l.b16 %v638
        %v2074 = vunpack.c.h.b16 %v638
        %v2075 = vunpack.c.l.b16 %v639
        %v2076 = vunpack.c.h.b16 %v639
        %v2077 = vunpack.c.l.b16 %v640
        %v2078 = vunpack.c.h.b16 %v640
        %v2079 = vunpack.c.l.b16 %v641
        %v2080 = vunpack.c.h.b16 %v641
        %v2081 = vunpack.c.l.b16 %v642
        %v2082 = vunpack.c.h.b16 %v642
        %v2083 = vunpack.c.l.b16 %v643
        %v2084 = vunpack.c.h.b16 %v643
        %v2085 = vunpack.c.l.b16 %v644
        %v2086 = vunpack.c.h.b16 %v644
        %v2087 = vunpack.c.l.b16 %v645
        %v2088 = vunpack.c.h.b16 %v645
        %v2089 = vunpack.c.l.b16 %v646
        %v2090 = vunpack.c.h.b16 %v646
        %v2091 = vunpack.c.l.b16 %v647
        %v2092 = vunpack.c.h.b16 %v647
        %v2093 = vunpack.c.l.b16 %v648
        %v2094 = vunpack.c.h.b16 %v648
        %v2095 = vunpack.c.l.b16 %v649
        %v2096 = vunpack.c.h.b16 %v649
        %v2097 = vunpack.c.l.b16 %v650
        %v2098 = vunpack.c.h.b16 %v650
        %v2099 = vunpack.c.l.b16 %v651
        %v2100 = vunpack.c.h.b16 %v651
        %v2101 = vunpack.c.l.b16 %v652
        %v2102 = vunpack.c.h.b16 %v652
        %v2103 = vunpack.c.l.b16 %v653
        %v2104 = vunpack.c.h.b16 %v653
        %v2105 = vunpack.c.l.b16 %v654
        %v2106 = vunpack.c.h.b16 %v654
        %v2107 = vunpack.c.l.b16 %v655
        %v2108 = vunpack.c.h.b16 %v655
        %v2109 = vunpack.c.l.b16 %v656
        %v2110 = vunpack.c.h.b16 %v656
        %v2111 = vunpack.c.l.b16 %v657
        %v2112 = vunpack.c.h.b16 %v657
        %v2113 = vunpack.c.l.b16 %v658
        %v2114 = vunpack.c.h.b16 %v658
        %v2115 = vunpack.c.l.b16 %v659
        %v2116 = vunpack.c.h.b16 %v659
        %v2117 = vunpack.c.l.b16 %v660
        %v2118 = vunpack.c.h.b16 %v660
        %v2119 = vunpack.c.l.b16 %v661
        %v2120 = vunpack.c.h.b16 %v661
        %v2121 = vunpack.c.l.b16 %v662
        %v2122 = vunpack.c.h.b16 %v662
        %v2123 = vunpack.c.l.b16 %v663
        %v2124 = vunpack.c.h.b16 %v663
        %v2125 = vunpack.c.l.b16 %v664
        %v2126 = vunpack.c.h.b16 %v664
        %v2127 = vunpack.c.l.b16 %v665
        %v2128 = vunpack.c.h.b16 %v665
        %v2129 = vunpack.c.l.b16 %v666
        %v2130 = vunpack.c.h.b16 %v666
        %v2131 = vunpack.c.l.b16 %v667
        %v2132 = vunpack.c.h.b16 %v667
        %v2133 = vunpack.c.l.b16 %v668
        %v2134 = vunpack.c.h.b16 %v668
        %v2135 = vunpack.c.l.b16 %v669
        %v2136 = vunpack.c.h.b16 %v669
        %v2137 = vunpack.c.l.b16 %v670
        %v2138 = vunpack.c.h.b16 %v670
        %v2139 = vunpack.c.l.b16 %v671
        %v2140 = vunpack.c.h.b16 %v671
        %v2141 = vunpack.c.l.b16 %v672
        %v2142 = vunpack.c.h.b16 %v672
        %v2143 = vunpack.c.l.b16 %v673
        %v2144 = vunpack.c.h.b16 %v673
        %v2145 = vunpack.c.l.b16 %v674
        %v2146 = vunpack.c.h.b16 %v674
        %v2147 = vunpack.c.l.b16 %v675
        %v2148 = vunpack.c.h.b16 %v675
        %v2149 = vunpack.c.l.b16 %v676
        %v2150 = vunpack.c.h.b16 %v676
        %v2151 = vunpack.c.l.b16 %v677
        %v2152 = vunpack.c.h.b16 %v677
        %v2153 = vunpack.c.l.b16 %v678
        %v2154 = vunpack.c.h.b16 %v678
        %v2155 = vunpack.c.l.b16 %v679
        %v2156 = vunpack.c.h.b16 %v679
        %v2157 = vunpack.c.l.b16 %v680
        %v2158 = vunpack.c.h.b16 %v680
        %v2159 = vunpack.c.l.b16 %v681
        %v2160 = vunpack.c.h.b16 %v681
        %v2161 = vunpack.c.l.b16 %v682
        %v2162 = vunpack.c.h.b16 %v682
        %v2163 = vunpack.c.l.b16 %v683
        %v2164 = vunpack.c.h.b16 %v683
        %v2165 = vunpack.c.l.b16 %v684
        %v2166 = vunpack.c.h.b16 %v684
        %v2167 = vunpack.c.l.b16 %v685
        %v2168 = vunpack.c.h.b16 %v685
        %v2169 = vunpack.c.l.b16 %v686
        %v2170 = vunpack.c.h.b16 %v686
        %v2171 = vunpack.c.l.b16 %v687
        %v2172 = vunpack.c.h.b16 %v687
        %v2173 = vunpack.c.l.b16 %v688
        %v2174 = vunpack.c.h.b16 %v688
        %v2175 = vunpack.c.l.b16 %v689
        %v2176 = vunpack.c.h.b16 %v689
        %v2177 = vunpack.c.l.b16 %v690
        %v2178 = vunpack.c.h.b16 %v690
        %v2179 = vunpack.c.l.b16 %v691
        %v2180 = vunpack.c.h.b16 %v691
        %v2181 = vunpack.c.l.b16 %v692
        %v2182 = vunpack.c.h.b16 %v692
        %v2183 = vunpack.c.l.b16 %v693
        %v2184 = vunpack.c.h.b16 %v693
        %v2185 = vunpack.c.l.b16 %v694
        %v2186 = vunpack.c.h.b16 %v694
        %v2187 = vunpack.c.l.b16 %v695
        %v2188 = vunpack.c.h.b16 %v695
        %v2189 = vunpack.c.l.b16 %v696
        %v2190 = vunpack.c.h.b16 %v696
        %v2191 = vunpack.c.l.b16 %v697
        %v2192 = vunpack.c.h.b16 %v697
        %v2193 = vunpack.c.l.b16 %v698
        %v2194 = vunpack.c.h.b16 %v698
        %v2195 = vunpack.c.l.b16 %v699
        %v2196 = vunpack.c.h.b16 %v699
        %v2197 = vunpack.c.l.b16 %v700
        %v2198 = vunpack.c.h.b16 %v700
        %v2199 = vunpack.c.l.b16 %v701
        %v2200 = vunpack.c.h.b16 %v701
        %v2201 = vunpack.c.l.b16 %v702
        %v2202 = vunpack.c.h.b16 %v702
        %v2203 = vunpack.c.l.b16 %v703
        %v2204 = vunpack.c.h.b16 %v703
        %v2205 = vunpack.c.l.b16 %v704
        %v2206 = vunpack.c.h.b16 %v704
        %v2207 = vunpack.c.l.b16 %v705
        %v2208 = vunpack.c.h.b16 %v705
        %v2209 = vunpack.c.l.b16 %v706
        %v2210 = vunpack.c.h.b16 %v706
        %v2211 = vunpack.c.l.b16 %v707
        %v2212 = vunpack.c.h.b16 %v707
        %v2213 = vunpack.c.l.b16 %v708
        %v2214 = vunpack.c.h.b16 %v708
        %v2215 = vunpack.c.l.b16 %v709
        %v2216 = vunpack.c.h.b16 %v709
        %v2217 = vunpack.c.l.b16 %v710
        %v2218 = vunpack.c.h.b16 %v710
        %v2219 = vunpack.c.l.b16 %v711
        %v2220 = vunpack.c.h.b16 %v711
        %v2221 = vunpack.c.l.b16 %v712
        %v2222 = vunpack.c.h.b16 %v712
        %v2223 = vunpack.c.l.b16 %v713
        %v2224 = vunpack.c.h.b16 %v713
        %v2225 = vunpack.c.l.b16 %v714
        %v2226 = vunpack.c.h.b16 %v714
        %v2227 = vunpack.c.l.b16 %v715
        %v2228 = vunpack.c.h.b16 %v715
        %v2229 = vunpack.c.l.b16 %v716
        %v2230 = vunpack.c.h.b16 %v716
        %v2231 = vunpack.c.l.b16 %v717
        %v2232 = vunpack.c.h.b16 %v717
        %v2233 = vunpack.c.l.b16 %v718
        %v2234 = vunpack.c.h.b16 %v718
        %v2235 = vunpack.c.l.b16 %v719
        %v2236 = vunpack.c.h.b16 %v719
        %v2237 = vunpack.c.l.b16 %v720
        %v2238 = vunpack.c.h.b16 %v720
        %v2239 = vunpack.c.l.b16 %v721
        %v2240 = vunpack.c.h.b16 %v721
        %v2241 = vunpack.c.l.b16 %v722
        %v2242 = vunpack.c.h.b16 %v722
        %v2243 = vunpack.c.l.b16 %v723
        %v2244 = vunpack.c.h.b16 %v723
        %v2245 = vunpack.c.l.b16 %v724
        %v2246 = vunpack.c.h.b16 %v724
        %v2247 = vunpack.c.l.b16 %v725
        %v2248 = vunpack.c.h.b16 %v725
        %v2249 = vunpack.c.l.b16 %v726
        %v2250 = vunpack.c.h.b16 %v726
        %v2251 = vunpack.c.l.b16 %v727
        %v2252 = vunpack.c.h.b16 %v727
        %v2253 = vunpack.c.l.b16 %v728
        %v2254 = vunpack.c.h.b16 %v728
        %v2255 = vunpack.c.l.b16 %v729
        %v2256 = vunpack.c.h.b16 %v729
        %v2257 = vunpack.c.l.b16 %v730
        %v2258 = vunpack.c.h.b16 %v730
        %v2259 = vunpack.c.l.b16 %v731
        %v2260 = vunpack.c.h.b16 %v731
        %v2261 = vunpack.c.l.b16 %v732
        %v2262 = vunpack.c.h.b16 %v732
        %v2263 = vunpack.c.l.b16 %v733
        %v2264 = vunpack.c.h.b16 %v733
        %v2265 = vunpack.c.l.b16 %v734
        %v2266 = vunpack.c.h.b16 %v734
        %v2267 = vunpack.c.l.b16 %v735
        %v2268 = vunpack.c.h.b16 %v735
        %v2269 = vunpack.c.l.b16 %v736
        %v2270 = vunpack.c.h.b16 %v736
        %v2271 = vunpack.c.l.b16 %v737
        %v2272 = vunpack.c.h.b16 %v737
        %v2273 = vunpack.c.l.b16 %v738
        %v2274 = vunpack.c.h.b16 %v738
        %v2275 = vunpack.c.l.b16 %v739
        %v2276 = vunpack.c.h.b16 %v739
        %v2277 = vunpack.c.l.b16 %v740
        %v2278 = vunpack.c.h.b16 %v740
        %v2279 = vunpack.c.l.b16 %v741
        %v2280 = vunpack.c.h.b16 %v741
        %v2281 = vunpack.c.l.b16 %v742
        %v2282 = vunpack.c.h.b16 %v742
        %v2283 = vunpack.c.l.b16 %v743
        %v2284 = vunpack.c.h.b16 %v743
        %v2285 = vunpack.c.l.b16 %v744
        %v2286 = vunpack.c.h.b16 %v744
        %v2287 = vunpack.c.l.b16 %v745
        %v2288 = vunpack.c.h.b16 %v745
        %v2289 = vunpack.c.l.b16 %v746
        %v2290 = vunpack.c.h.b16 %v746
        %v2291 = vunpack.c.l.b16 %v747
        %v2292 = vunpack.c.h.b16 %v747
        %v2293 = vunpack.c.l.b16 %v748
        %v2294 = vunpack.c.h.b16 %v748
        %v2295 = vunpack.c.l.b16 %v749
        %v2296 = vunpack.c.h.b16 %v749
        %v2297 = vunpack.c.l.b16 %v750
        %v2298 = vunpack.c.h.b16 %v750
        %v2299 = vunpack.c.l.b16 %v751
        %v2300 = vunpack.c.h.b16 %v751
        %v2301 = vunpack.c.l.b16 %v752
        %v2302 = vunpack.c.h.b16 %v752
        %v2303 = vunpack.c.l.b16 %v753
        %v2304 = vunpack.c.h.b16 %v753
        %v2305 = vunpack.c.l.b16 %v754
        %v2306 = vunpack.c.h.b16 %v754
        %v2307 = vunpack.c.l.b16 %v755
        %v2308 = vunpack.c.h.b16 %v755
        %v2309 = vunpack.c.l.b16 %v756
        %v2310 = vunpack.c.h.b16 %v756
        %v2311 = vunpack.c.l.b16 %v757
        %v2312 = vunpack.c.h.b16 %v757
        %v2313 = vunpack.c.l.b16 %v758
        %v2314 = vunpack.c.h.b16 %v758
        %v2315 = vunpack.c.l.b16 %v759
        %v2316 = vunpack.c.h.b16 %v759
        %v2317 = vunpack.c.l.b16 %v760
        %v2318 = vunpack.c.h.b16 %v760
        %v2319 = vunpack.c.l.b16 %v761
        %v2320 = vunpack.c.h.b16 %v761
        %v2321 = vunpack.c.l.b16 %v762
        %v2322 = vunpack.c.h.b16 %v762
        %v2323 = vunpack.c.l.b16 %v763
        %v2324 = vunpack.c.h.b16 %v763
        %v2325 = vunpack.c.l.b16 %v764
        %v2326 = vunpack.c.h.b16 %v764
        %v2327 = vunpack.c.l.b16 %v765
        %v2328 = vunpack.c.h.b16 %v765
        %v2329 = vunpack.c.l.b16 %v766
        %v2330 = vunpack.c.h.b16 %v766
        %v2331 = vunpack.c.l.b16 %v767
        %v2332 = vunpack.c.h.b16 %v767
        %v2333 = vunpack.c.l.b16 %v768
        %v2334 = vunpack.c.h.b16 %v768
        %v2335 = vunpack.c.l.b16 %v769
        %v2336 = vunpack.c.h.b16 %v769
        %v2337 = vunpack.c.l.b16 %v770
        %v2338 = vunpack.c.h.b16 %v770
        %v2339 = vunpack.c.l.b16 %v771
        %v2340 = vunpack.c.h.b16 %v771
        %v2341 = vunpack.c.l.b16 %v772
        %v2342 = vunpack.c.h.b16 %v772
        %v2343 = vunpack.c.l.b16 %v773
        %v2344 = vunpack.c.h.b16 %v773
        %v2345 = vunpack.c.l.b16 %v774
        %v2346 = vunpack.c.h.b16 %v774
        %v2347 = vunpack.c.l.b16 %v775
        %v2348 = vunpack.c.h.b16 %v775
        %v2349 = vunpack.c.l.b16 %v776
        %v2350 = vunpack.c.h.b16 %v776
        %v2351 = vunpack.c.l.b16 %v777
        %v2352 = vunpack.c.h.b16 %v777
        %v2353 = vunpack.c.l.b16 %v778
        %v2354 = vunpack.c.h.b16 %v778
        %v2355 = vunpack.c.l.b16 %v779
        %v2356 = vunpack.c.h.b16 %v779
        %v2357 = vunpack.c.l.b16 %v780
        %v2358 = vunpack.c.h.b16 %v780
        %v2359 = vunpack.c.l.b16 %v781
        %v2360 = vunpack.c.h.b16 %v781
        %v2361 = vunpack.c.l.b16 %v782
        %v2362 = vunpack.c.h.b16 %v782
        %v2363 = vunpack.c.l.b16 %v783
        %v2364 = vunpack.c.h.b16 %v783
        %v2365 = vunpack.c.l.b16 %v784
        %v2366 = vunpack.c.h.b16 %v784
        %v2367 = vunpack.c.l.b16 %v785
        %v2368 = vunpack.c.h.b16 %v785
        %v2369 = vunpack.c.l.b16 %v786
        %v2370 = vunpack.c.h.b16 %v786
        %v2371 = vunpack.c.l.b16 %v787
        %v2372 = vunpack.c.h.b16 %v787
        %v2373 = vunpack.c.l.b16 %v788
        %v2374 = vunpack.c.h.b16 %v788
        %v2375 = vunpack.c.l.b16 %v789
        %v2376 = vunpack.c.h.b16 %v789
        %v2377 = vunpack.c.l.b16 %v790
        %v2378 = vunpack.c.h.b16 %v790
        %v2379 = vunpack.c.l.b16 %v791
        %v2380 = vunpack.c.h.b16 %v791
        %v2381 = vunpack.c.l.b16 %v792
        %v2382 = vunpack.c.h.b16 %v792
        %v2383 = vunpack.c.l.b16 %v793
        %v2384 = vunpack.c.h.b16 %v793
        %v2385 = vunpack.c.l.b16 %v794
        %v2386 = vunpack.c.h.b16 %v794
        %v2387 = vunpack.c.l.b16 %v795
        %v2388 = vunpack.c.h.b16 %v795
        %v2389 = vunpack.c.l.b16 %v796
        %v2390 = vunpack.c.h.b16 %v796
        %v2391 = vunpack.c.l.b16 %v797
        %v2392 = vunpack.c.h.b16 %v797
        %v2393 = vunpack.c.l.b16 %v798
        %v2394 = vunpack.c.h.b16 %v798
        %v2395 = vunpack.c.l.b16 %v799
        %v2396 = vunpack.c.h.b16 %v799
        %v2397 = vunpack.c.l.b16 %v800
        %v2398 = vunpack.c.h.b16 %v800
        %v2399 = vunpack.c.l.b16 %v801
        %v2400 = vunpack.c.h.b16 %v801
        %v2401 = vunpack.c.l.b16 %v802
        %v2402 = vunpack.c.h.b16 %v802
        %v2403 = vunpack.c.l.b16 %v803
        %v2404 = vunpack.c.h.b16 %v803
        %v2405 = vunpack.c.l.b16 %v804
        %v2406 = vunpack.c.h.b16 %v804
        %v2407 = vunpack.c.l.b16 %v805
        %v2408 = vunpack.c.h.b16 %v805
        %v2409 = vunpack.c.l.b16 %v806
        %v2410 = vunpack.c.h.b16 %v806
        %v2411 = vunpack.c.l.b16 %v807
        %v2412 = vunpack.c.h.b16 %v807
        %v2413 = vunpack.c.l.b16 %v808
        %v2414 = vunpack.c.h.b16 %v808
        %v2415 = vunpack.c.l.b16 %v809
        %v2416 = vunpack.c.h.b16 %v809
        %v2417 = vunpack.c.l.b16 %v810
        %v2418 = vunpack.c.h.b16 %v810
        %v2419 = vunpack.c.l.b16 %v811
        %v2420 = vunpack.c.h.b16 %v811
        %v2421 = vunpack.c.l.b16 %v812
        %v2422 = vunpack.c.h.b16 %v812
        %v2423 = vunpack.c.l.b16 %v813
        %v2424 = vunpack.c.h.b16 %v813
        %v2425 = vunpack.c.l.b16 %v814
        %v2426 = vunpack.c.h.b16 %v814
        %v2427 = vunpack.c.l.b16 %v815
        %v2428 = vunpack.c.h.b16 %v815
        %v2429 = vunpack.c.l.b16 %v816
        %v2430 = vunpack.c.h.b16 %v816
        %v2431 = vunpack.c.l.b16 %v817
        %v2432 = vunpack.c.h.b16 %v817
        %v2433 = vunpack.c.l.b16 %v818
        %v2434 = vunpack.c.h.b16 %v818
        %v2435 = vunpack.c.l.b16 %v819
        %v2436 = vunpack.c.h.b16 %v819
        %v2437 = vunpack.c.l.b16 %v820
        %v2438 = vunpack.c.h.b16 %v820
        %v2439 = vunpack.c.l.b16 %v821
        %v2440 = vunpack.c.h.b16 %v821
        %v2441 = vunpack.c.l.b16 %v822
        %v2442 = vunpack.c.h.b16 %v822
        %v2443 = vunpack.c.l.b16 %v823
        %v2444 = vunpack.c.h.b16 %v823
        %v2445 = vunpack.c.l.b16 %v824
        %v2446 = vunpack.c.h.b16 %v824
        %v2447 = vunpack.c.l.b16 %v825
        %v2448 = vunpack.c.h.b16 %v825
        %v2449 = vunpack.c.l.b16 %v826
        %v2450 = vunpack.c.h.b16 %v826
        %v2451 = vunpack.c.l.b16 %v827
        %v2452 = vunpack.c.h.b16 %v827
        %v2453 = vunpack.c.l.b16 %v828
        %v2454 = vunpack.c.h.b16 %v828
        %v2455 = vunpack.c.l.b16 %v829
        %v2456 = vunpack.c.h.b16 %v829
        %v2457 = vunpack.c.l.b16 %v830
        %v2458 = vunpack.c.h.b16 %v830
        %v2459 = vunpack.c.l.b16 %v831
        %v2460 = vunpack.c.h.b16 %v831
        %v2461 = vunpack.c.l.b16 %v832
        %v2462 = vunpack.c.h.b16 %v832
        %v2463 = vunpack.c.l.b16 %v833
        %v2464 = vunpack.c.h.b16 %v833
        %v2465 = vunpack.c.l.b16 %v834
        %v2466 = vunpack.c.h.b16 %v834
        %v2467 = vunpack.c.l.b16 %v835
        %v2468 = vunpack.c.h.b16 %v835
        %v2469 = vunpack.c.l.b16 %v836
        %v2470 = vunpack.c.h.b16 %v836
        %v2471 = vunpack.c.l.b16 %v837
        %v2472 = vunpack.c.h.b16 %v837
        %v2473 = vunpack.c.l.b16 %v838
        %v2474 = vunpack.c.h.b16 %v838
        %v2475 = vunpack.c.l.b16 %v839
        %v2476 = vunpack.c.h.b16 %v839
        %v2477 = vunpack.c.l.b16 %v840
        %v2478 = vunpack.c.h.b16 %v840
        %v2479 = vunpack.c.l.b16 %v841
        %v2480 = vunpack.c.h.b16 %v841
        %v2481 = vunpack.c.l.b16 %v842
        %v2482 = vunpack.c.h.b16 %v842
        %v2483 = vunpack.c.l.b16 %v843
        %v2484 = vunpack.c.h.b16 %v843
        %v2485 = vunpack.c.l.b16 %v844
        %v2486 = vunpack.c.h.b16 %v844
        %v2487 = vunpack.c.l.b16 %v845
        %v2488 = vunpack.c.h.b16 %v845
        %v2489 = vunpack.c.l.b16 %v846
        %v2490 = vunpack.c.h.b16 %v846
        %v2491 = vunpack.c.l.b16 %v847
        %v2492 = vunpack.c.h.b16 %v847
        %v2493 = vunpack.c.l.b16 %v848
        %v2494 = vunpack.c.h.b16 %v848
        %v2495 = vunpack.c.l.b16 %v849
        %v2496 = vunpack.c.h.b16 %v849
        %v2497 = vunpack.c.l.b16 %v850
        %v2498 = vunpack.c.h.b16 %v850
        %v2499 = vunpack.c.l.b16 %v851
        %v2500 = vunpack.c.h.b16 %v851
        %v2501 = vunpack.c.l.b16 %v852
        %v2502 = vunpack.c.h.b16 %v852
        %v2503 = vunpack.c.l.b16 %v853
        %v2504 = vunpack.c.h.b16 %v853
        %v2505 = vunpack.c.l.b16 %v854
        %v2506 = vunpack.c.h.b16 %v854
        %v2507 = vunpack.c.l.b16 %v855
        %v2508 = vunpack.c.h.b16 %v855
        %v2509 = vunpack.c.l.b16 %v856
        %v2510 = vunpack.c.h.b16 %v856
        %v2511 = vunpack.c.l.b16 %v857
        %v2512 = vunpack.c.h.b16 %v857
        %v2513 = vunpack.c.l.b16 %v858
        %v2514 = vunpack.c.h.b16 %v858
        %v2515 = vunpack.c.l.b16 %v859
        %v2516 = vunpack.c.h.b16 %v859
        %v2517 = vunpack.c.l.b16 %v860
        %v2518 = vunpack.c.h.b16 %v860
        %v2519 = vunpack.c.l.b16 %v861
        %v2520 = vunpack.c.h.b16 %v861
        %v2521 = vunpack.c.l.b16 %v862
        %v2522 = vunpack.c.h.b16 %v862
        %v2523 = vunpack.c.l.b16 %v863
        %v2524 = vunpack.c.h.b16 %v863
        %v2525 = vunpack.c.l.b16 %v864
        %v2526 = vunpack.c.h.b16 %v864
        %v2527 = vunpack.c.l.b16 %v865
        %v2528 = vunpack.c.h.b16 %v865
        %v2529 = vunpack.c.l.b16 %v866
        %v2530 = vunpack.c.h.b16 %v866
        %v2531 = vunpack.c.l.b16 %v867
        %v2532 = vunpack.c.h.b16 %v867
        %v2533 = vunpack.c.l.b16 %v868
        %v2534 = vunpack.c.h.b16 %v868
        %v2535 = vunpack.c.l.b16 %v869
        %v2536 = vunpack.c.h.b16 %v869
        %v2537 = vunpack.c.l.b16 %v870
        %v2538 = vunpack.c.h.b16 %v870
        %v2539 = vunpack.c.l.b16 %v871
        %v2540 = vunpack.c.h.b16 %v871
        %v2541 = vunpack.c.l.b16 %v872
        %v2542 = vunpack.c.h.b16 %v872
        %v2543 = vunpack.c.l.b16 %v873
        %v2544 = vunpack.c.h.b16 %v873
        %v2545 = vunpack.c.l.b16 %v874
        %v2546 = vunpack.c.h.b16 %v874
        %v2547 = vpack.c.b16 %v1527, %v1523
        %v2548 = vpack.c.b16 %v1528, %v1524
        %v2549 = vpack.c.b16 %v1529, %v1525
        %v2550 = vpack.c.b16 %v1530, %v1526
        %v2551 = vpack.c.b16 %v1535, %v1531
        %v2552 = vpack.c.b16 %v1536, %v1532
        %v2553 = vpack.c.b16 %v1537, %v1533
        %v2554 = vpack.c.b16 %v1538, %v1534
        %v2555 = vpack.c.b16 %v1543, %v1539
        %v2556 = vpack.c.b16 %v1544, %v1540
        %v2557 = vpack.c.b16 %v1545, %v1541
        %v2558 = vpack.c.b16 %v1546, %v1542
        %v2559 = vpack.c.b16 %v1551, %v1547
        %v2560 = vpack.c.b16 %v1552, %v1548
        %v2561 = vpack.c.b16 %v1553, %v1549
        %v2562 = vpack.c.b16 %v1554, %v1550
        %v2563 = vpack.c.b16 %v1559, %v1555
        %v2564 = vpack.c.b16 %v1560, %v1556
        %v2565 = vpack.c.b16 %v1561, %v1557
        %v2566 = vpack.c.b16 %v1562, %v1558
        %v2567 = vpack.c.b16 %v1567, %v1563
        %v2568 = vpack.c.b16 %v1568, %v1564
        %v2569 = vpack.c.b16 %v1569, %v1565
        %v2570 = vpack.c.b16 %v1570, %v1566
        %v2571 = vpack.c.b16 %v1575, %v1571
        %v2572 = vpack.c.b16 %v1576, %v1572
        %v2573 = vpack.c.b16 %v1577, %v1573
        %v2574 = vpack.c.b16 %v1578, %v1574
        %v2575 = vpack.c.b16 %v1583, %v1579
        %v2576 = vpack.c.b16 %v1584, %v1580
        %v2577 = vpack.c.b16 %v1585, %v1581
        %v2578 = vpack.c.b16 %v1586, %v1582
        %v2579 = vpack.c.b16 %v1591, %v1587
        %v2580 = vpack.c.b16 %v1592, %v1588
        %v2581 = vpack.c.b16 %v1593, %v1589
        %v2582 = vpack.c.b16 %v1594, %v1590
        %v2583 = vpack.c.b16 %v1599, %v1595
        %v2584 = vpack.c.b16 %v1600, %v1596
        %v2585 = vpack.c.b16 %v1601, %v1597
        %v2586 = vpack.c.b16 %v1602, %v1598
        %v2587 = vpack.c.b16 %v1607, %v1603
        %v2588 = vpack.c.b16 %v1608, %v1604
        %v2589 = vpack.c.b16 %v1609, %v1605
        %v2590 = vpack.c.b16 %v1610, %v1606
        %v2591 = vpack.c.b16 %v1615, %v1611
        %v2592 = vpack.c.b16 %v1616, %v1612
        %v2593 = vpack.c.b16 %v1617, %v1613
        %v2594 = vpack.c.b16 %v1618, %v1614
        %v2595 = vpack.c.b16 %v1623, %v1619
        %v2596 = vpack.c.b16 %v1624, %v1620
        %v2597 = vpack.c.b16 %v1625, %v1621
        %v2598 = vpack.c.b16 %v1626, %v1622
        %v2599 = vpack.c.b16 %v1631, %v1627
        %v2600 = vpack.c.b16 %v1632, %v1628
        %v2601 = vpack.c.b16 %v1633, %v1629
        %v2602 = vpack.c.b16 %v1634, %v1630
        %v2603 = vpack.c.b16 %v1639, %v1635
        %v2604 = vpack.c.b16 %v1640, %v1636
        %v2605 = vpack.c.b16 %v1641, %v1637
        %v2606 = vpack.c.b16 %v1642, %v1638
        %v2607 = vpack.c.b16 %v1647, %v1643
        %v2608 = vpack.c.b16 %v1648, %v1644
        %v2609 = vpack.c.b16 %v1649, %v1645
        %v2610 = vpack.c.b16 %v1650, %v1646
        %v2611 = vpack.c.b16 %v1655, %v1651
        %v2612 = vpack.c.b16 %v1656, %v1652
        %v2613 = vpack.c.b16 %v1657, %v1653
        %v2614 = vpack.c.b16 %v1658, %v1654
        %v2615 = vpack.c.b16 %v1663, %v1659
        %v2616 = vpack.c.b16 %v1664, %v1660
        %v2617 = vpack.c.b16 %v1665, %v1661
        %v2618 = vpack.c.b16 %v1666, %v1662
        %v2619 = vpack.c.b16 %v1671, %v1667
        %v2620 = vpack.c.b16 %v1672, %v1668
        %v2621 = vpack.c.b16 %v1673, %v1669
        %v2622 = vpack.c.b16 %v1674, %v1670
        %v2623 = vpack.c.b16 %v1679, %v1675
        %v2624 = vpack.c.b16 %v1680, %v1676
        %v2625 = vpack.c.b16 %v1681, %v1677
        %v2626 = vpack.c.b16 %v1682, %v1678
        %v2627 = vpack.c.b16 %v1687, %v1683
        %v2628 = vpack.c.b16 %v1688, %v1684
        %v2629 = vpack.c.b16 %v1689, %v1685
        %v2630 = vpack.c.b16 %v1690, %v1686
        %v2631 = vpack.c.b16 %v1695, %v1691
        %v2632 = vpack.c.b16 %v1696, %v1692
        %v2633 = vpack.c.b16 %v1697, %v1693
        %v2634 = vpack.c.b16 %v1698, %v1694
        %v2635 = vpack.c.b16 %v1703, %v1699
        %v2636 = vpack.c.b16 %v1704, %v1700
        %v2637 = vpack.c.b16 %v1705, %v1701
        %v2638 = vpack.c.b16 %v1706, %v1702
        %v2639 = vpack.c.b16 %v1711, %v1707
        %v2640 = vpack.c.b16 %v1712, %v1708
        %v2641 = vpack.c.b16 %v1713, %v1709
        %v2642 = vpack.c.b16 %v1714, %v1710
        %v2643 = vpack.c.b16 %v1719, %v1715
        %v2644 = vpack.c.b16 %v1720, %v1716
        %v2645 = vpack.c.b16 %v1721, %v1717
        %v2646 = vpack.c.b16 %v1722, %v1718
        %v2647 = vpack.c.b16 %v1727, %v1723
        %v2648 = vpack.c.b16 %v1728, %v1724
        %v2649 = vpack.c.b16 %v1729, %v1725
        %v2650 = vpack.c.b16 %v1730, %v1726
        %v2651 = vpack.c.b16 %v1735, %v1731
        %v2652 = vpack.c.b16 %v1736, %v1732
        %v2653 = vpack.c.b16 %v1737, %v1733
        %v2654 = vpack.c.b16 %v1738, %v1734
        %v2655 = vpack.c.b16 %v1743, %v1739
        %v2656 = vpack.c.b16 %v1744, %v1740
        %v2657 = vpack.c.b16 %v1745, %v1741
        %v2658 = vpack.c.b16 %v1746, %v1742
        %v2659 = vpack.c.b16 %v1751, %v1747
        %v2660 = vpack.c.b16 %v1752, %v1748
        %v2661 = vpack.c.b16 %v1753, %v1749
        %v2662 = vpack.c.b16 %v1754, %v1750
        %v2663 = vpack.c.b16 %v1759, %v1755
        %v2664 = vpack.c.b16 %v1760, %v1756
        %v2665 = vpack.c.b16 %v1761, %v1757
        %v2666 = vpack.c.b16 %v1762, %v1758
        %v2667 = vpack.c.b16 %v1767, %v1763
        %v2668 = vpack.c.b16 %v1768, %v1764
        %v2669 = vpack.c.b16 %v1769, %v1765
        %v2670 = vpack.c.b16 %v1770, %v1766
        %v2671 = vpack.c.b16 %v1775, %v1771
        %v2672 = vpack.c.b16 %v1776, %v1772
        %v2673 = vpack.c.b16 %v1777, %v1773
        %v2674 = vpack.c.b16 %v1778, %v1774
        %v2675 = vpack.c.b16 %v1783, %v1779
        %v2676 = vpack.c.b16 %v1784, %v1780
        %v2677 = vpack.c.b16 %v1785, %v1781
        %v2678 = vpack.c.b16 %v1786, %v1782
        %v2679 = vpack.c.b16 %v1791, %v1787
        %v2680 = vpack.c.b16 %v1792, %v1788
        %v2681 = vpack.c.b16 %v1793, %v1789
        %v2682 = vpack.c.b16 %v1794, %v1790
        %v2683 = vpack.c.b16 %v1799, %v1795
        %v2684 = vpack.c.b16 %v1800, %v1796
        %v2685 = vpack.c.b16 %v1801, %v1797
        %v2686 = vpack.c.b16 %v1802, %v1798
        %v2687 = vpack.c.b16 %v1807, %v1803
        %v2688 = vpack.c.b16 %v1808, %v1804
        %v2689 = vpack.c.b16 %v1809, %v1805
        %v2690 = vpack.c.b16 %v1810, %v1806
        %v2691 = vpack.c.b16 %v1815, %v1811
        %v2692 = vpack.c.b16 %v1816, %v1812
        %v2693 = vpack.c.b16 %v1817, %v1813
        %v2694 = vpack.c.b16 %v1818, %v1814
        %v2695 = vpack.c.b16 %v1823, %v1819
        %v2696 = vpack.c.b16 %v1824, %v1820
        %v2697 = vpack.c.b16 %v1825, %v1821
        %v2698 = vpack.c.b16 %v1826, %v1822
        %v2699 = vpack.c.b16 %v1831, %v1827
        %v2700 = vpack.c.b16 %v1832, %v1828
        %v2701 = vpack.c.b16 %v1833, %v1829
        %v2702 = vpack.c.b16 %v1834, %v1830
        %v2703 = vpack.c.b16 %v1839, %v1835
        %v2704 = vpack.c.b16 %v1840, %v1836
        %v2705 = vpack.c.b16 %v1841, %v1837
        %v2706 = vpack.c.b16 %v1842, %v1838
        %v2707 = vpack.c.b16 %v1847, %v1843
        %v2708 = vpack.c.b16 %v1848, %v1844
        %v2709 = vpack.c.b16 %v1849, %v1845
        %v2710 = vpack.c.b16 %v1850, %v1846
        %v2711 = vpack.c.b16 %v1855, %v1851
        %v2712 = vpack.c.b16 %v1856, %v1852
        %v2713 = vpack.c.b16 %v1857, %v1853
        %v2714 = vpack.c.b16 %v1858, %v1854
        %v2715 = vpack.c.b16 %v1863, %v1859
        %v2716 = vpack.c.b16 %v1864, %v1860
        %v2717 = vpack.c.b16 %v1865, %v1861
        %v2718 = vpack.c.b16 %v1866, %v1862
        %v2719 = vpack.c.b16 %v1871, %v1867
        %v2720 = vpack.c.b16 %v1872, %v1868
        %v2721 = vpack.c.b16 %v1873, %v1869
        %v2722 = vpack.c.b16 %v1874, %v1870
        %v2723 = vpack.c.b16 %v1879, %v1875
        %v2724 = vpack.c.b16 %v1880, %v1876
        %v2725 = vpack.c.b16 %v1881, %v1877
        %v2726 = vpack.c.b16 %v1882, %v1878
        %v2727 = vpack.c.b16 %v1887, %v1883
        %v2728 = vpack.c.b16 %v1888, %v1884
        %v2729 = vpack.c.b16 %v1889, %v1885
        %v2730 = vpack.c.b16 %v1890, %v1886
        %v2731 = vpack.c.b16 %v1895, %v1891
        %v2732 = vpack.c.b16 %v1896, %v1892
        %v2733 = vpack.c.b16 %v1897, %v1893
        %v2734 = vpack.c.b16 %v1898, %v1894
        %v2735 = vpack.c.b16 %v1903, %v1899
        %v2736 = vpack.c.b16 %v1904, %v1900
        %v2737 = vpack.c.b16 %v1905, %v1901
        %v2738 = vpack.c.b16 %v1906, %v1902
        %v2739 = vpack.c.b16 %v1911, %v1907
        %v2740 = vpack.c.b16 %v1912, %v1908
        %v2741 = vpack.c.b16 %v1913, %v1909
        %v2742 = vpack.c.b16 %v1914, %v1910
        %v2743 = vpack.c.b16 %v1919, %v1915
        %v2744 = vpack.c.b16 %v1920, %v1916
        %v2745 = vpack.c.b16 %v1921, %v1917
        %v2746 = vpack.c.b16 %v1922, %v1918
        %v2747 = vpack.c.b16 %v1927, %v1923
        %v2748 = vpack.c.b16 %v1928, %v1924
        %v2749 = vpack.c.b16 %v1929, %v1925
        %v2750 = vpack.c.b16 %v1930, %v1926
        %v2751 = vpack.c.b16 %v1935, %v1931
        %v2752 = vpack.c.b16 %v1936, %v1932
        %v2753 = vpack.c.b16 %v1937, %v1933
        %v2754 = vpack.c.b16 %v1938, %v1934
        %v2755 = vpack.c.b16 %v1943, %v1939
        %v2756 = vpack.c.b16 %v1944, %v1940
        %v2757 = vpack.c.b16 %v1945, %v1941
        %v2758 = vpack.c.b16 %v1946, %v1942
        %v2759 = vpack.c.b16 %v1951, %v1947
        %v2760 = vpack.c.b16 %v1952, %v1948
        %v2761 = vpack.c.b16 %v1953, %v1949
        %v2762 = vpack.c.b16 %v1954, %v1950
        %v2763 = vpack.c.b16 %v1959, %v1955
        %v2764 = vpack.c.b16 %v1960, %v1956
        %v2765 = vpack.c.b16 %v1961, %v1957
        %v2766 = vpack.c.b16 %v1962, %v1958
        %v2767 = vpack.c.b16 %v1967, %v1963
        %v2768 = vpack.c.b16 %v1968, %v1964
        %v2769 = vpack.c.b16 %v1969, %v1965
        %v2770 = vpack.c.b16 %v1970, %v1966
        %v2771 = vpack.c.b16 %v1975, %v1971
        %v2772 = vpack.c.b16 %v1976, %v1972
        %v2773 = vpack.c.b16 %v1977, %v1973
        %v2774 = vpack.c.b16 %v1978, %v1974
        %v2775 = vpack.c.b16 %v1983, %v1979
        %v2776 = vpack.c.b16 %v1984, %v1980
        %v2777 = vpack.c.b16 %v1985, %v1981
        %v2778 = vpack.c.b16 %v1986, %v1982
        %v2779 = vpack.c.b16 %v1991, %v1987
        %v2780 = vpack.c.b16 %v1992, %v1988
        %v2781 = vpack.c.b16 %v1993, %v1989
        %v2782 = vpack.c.b16 %v1994, %v1990
        %v2783 = vpack.c.b16 %v1999, %v1995
        %v2784 = vpack.c.b16 %v2000, %v1996
        %v2785 = vpack.c.b16 %v2001, %v1997
        %v2786 = vpack.c.b16 %v2002, %v1998
        %v2787 = vpack.c.b16 %v2007, %v2003
        %v2788 = vpack.c.b16 %v2008, %v2004
        %v2789 = vpack.c.b16 %v2009, %v2005
        %v2790 = vpack.c.b16 %v2010, %v2006
        %v2791 = vpack.c.b16 %v2015, %v2011
        %v2792 = vpack.c.b16 %v2016, %v2012
        %v2793 = vpack.c.b16 %v2017, %v2013
        %v2794 = vpack.c.b16 %v2018, %v2014
        %v2795 = vpack.c.b16 %v2023, %v2019
        %v2796 = vpack.c.b16 %v2024, %v2020
        %v2797 = vpack.c.b16 %v2025, %v2021
        %v2798 = vpack.c.b16 %v2026, %v2022
        %v2799 = vpack.c.b16 %v2031, %v2027
        %v2800 = vpack.c.b16 %v2032, %v2028
        %v2801 = vpack.c.b16 %v2033, %v2029
        %v2802 = vpack.c.b16 %v2034, %v2030
        %v2803 = vpack.c.b16 %v2039, %v2035
        %v2804 = vpack.c.b16 %v2040, %v2036
        %v2805 = vpack.c.b16 %v2041, %v2037
        %v2806 = vpack.c.b16 %v2042, %v2038
        %v2807 = vpack.c.b16 %v2047, %v2043
        %v2808 = vpack.c.b16 %v2048, %v2044
        %v2809 = vpack.c.b16 %v2049, %v2045
        %v2810 = vpack.c.b16 %v2050, %v2046
        %v2811 = vpack.c.b16 %v2055, %v2051
        %v2812 = vpack.c.b16 %v2056, %v2052
        %v2813 = vpack.c.b16 %v2057, %v2053
        %v2814 = vpack.c.b16 %v2058, %v2054
        %v2815 = vpack.c.b16 %v2063, %v2059
        %v2816 = vpack.c.b16 %v2064, %v2060
        %v2817 = vpack.c.b16 %v2065, %v2061
        %v2818 = vpack.c.b16 %v2066, %v2062
        %v2819 = vpack.c.b16 %v2071, %v2067
        %v2820 = vpack.c.b16 %v2072, %v2068
        %v2821 = vpack.c.b16 %v2073, %v2069
        %v2822 = vpack.c.b16 %v2074, %v2070
        %v2823 = vpack.c.b16 %v2079, %v2075
        %v2824 = vpack.c.b16 %v2080, %v2076
        %v2825 = vpack.c.b16 %v2081, %v2077
        %v2826 = vpack.c.b16 %v2082, %v2078
        %v2827 = vpack.c.b16 %v2087, %v2083
        %v2828 = vpack.c.b16 %v2088, %v2084
        %v2829 = vpack.c.b16 %v2089, %v2085
        %v2830 = vpack.c.b16 %v2090, %v2086
        %v2831 = vpack.c.b16 %v2095, %v2091
        %v2832 = vpack.c.b16 %v2096, %v2092
        %v2833 = vpack.c.b16 %v2097, %v2093
        %v2834 = vpack.c.b16 %v2098, %v2094
        %v2835 = vpack.c.b16 %v2103, %v2099
        %v2836 = vpack.c.b16 %v2104, %v2100
        %v2837 = vpack.c.b16 %v2105, %v2101
        %v2838 = vpack.c.b16 %v2106, %v2102
        %v2839 = vpack.c.b16 %v2111, %v2107
        %v2840 = vpack.c.b16 %v2112, %v2108
        %v2841 = vpack.c.b16 %v2113, %v2109
        %v2842 = vpack.c.b16 %v2114, %v2110
        %v2843 = vpack.c.b16 %v2119, %v2115
        %v2844 = vpack.c.b16 %v2120, %v2116
        %v2845 = vpack.c.b16 %v2121, %v2117
        %v2846 = vpack.c.b16 %v2122, %v2118
        %v2847 = vpack.c.b16 %v2127, %v2123
        %v2848 = vpack.c.b16 %v2128, %v2124
        %v2849 = vpack.c.b16 %v2129, %v2125
        %v2850 = vpack.c.b16 %v2130, %v2126
        %v2851 = vpack.c.b16 %v2135, %v2131
        %v2852 = vpack.c.b16 %v2136, %v2132
        %v2853 = vpack.c.b16 %v2137, %v2133
        %v2854 = vpack.c.b16 %v2138, %v2134
        %v2855 = vpack.c.b16 %v2143, %v2139
        %v2856 = vpack.c.b16 %v2144, %v2140
        %v2857 = vpack.c.b16 %v2145, %v2141
        %v2858 = vpack.c.b16 %v2146, %v2142
        %v2859 = vpack.c.b16 %v2151, %v2147
        %v2860 = vpack.c.b16 %v2152, %v2148
        %v2861 = vpack.c.b16 %v2153, %v2149
        %v2862 = vpack.c.b16 %v2154, %v2150
        %v2863 = vpack.c.b16 %v2159, %v2155
        %v2864 = vpack.c.b16 %v2160, %v2156
        %v2865 = vpack.c.b16 %v2161, %v2157
        %v2866 = vpack.c.b16 %v2162, %v2158
        %v2867 = vpack.c.b16 %v2167, %v2163
        %v2868 = vpack.c.b16 %v2168, %v2164
        %v2869 = vpack.c.b16 %v2169, %v2165
        %v2870 = vpack.c.b16 %v2170, %v2166
        %v2871 = vpack.c.b16 %v2175, %v2171
        %v2872 = vpack.c.b16 %v2176, %v2172
        %v2873 = vpack.c.b16 %v2177, %v2173
        %v2874 = vpack.c.b16 %v2178, %v2174
        %v2875 = vpack.c.b16 %v2183, %v2179
        %v2876 = vpack.c.b16 %v2184, %v2180
        %v2877 = vpack.c.b16 %v2185, %v2181
        %v2878 = vpack.c.b16 %v2186, %v2182
        %v2879 = vpack.c.b16 %v2191, %v2187
        %v2880 = vpack.c.b16 %v2192, %v2188
        %v2881 = vpack.c.b16 %v2193, %v2189
        %v2882 = vpack.c.b16 %v2194, %v2190
        %v2883 = vpack.c.b16 %v2199, %v2195
        %v2884 = vpack.c.b16 %v2200, %v2196
        %v2885 = vpack.c.b16 %v2201, %v2197
        %v2886 = vpack.c.b16 %v2202, %v2198
        %v2887 = vpack.c.b16 %v2207, %v2203
        %v2888 = vpack.c.b16 %v2208, %v2204
        %v2889 = vpack.c.b16 %v2209, %v2205
        %v2890 = vpack.c.b16 %v2210, %v2206
        %v2891 = vpack.c.b16 %v2215, %v2211
        %v2892 = vpack.c.b16 %v2216, %v2212
        %v2893 = vpack.c.b16 %v2217, %v2213
        %v2894 = vpack.c.b16 %v2218, %v2214
        %v2895 = vpack.c.b16 %v2223, %v2219
        %v2896 = vpack.c.b16 %v2224, %v2220
        %v2897 = vpack.c.b16 %v2225, %v2221
        %v2898 = vpack.c.b16 %v2226, %v2222
        %v2899 = vpack.c.b16 %v2231, %v2227
        %v2900 = vpack.c.b16 %v2232, %v2228
        %v2901 = vpack.c.b16 %v2233, %v2229
        %v2902 = vpack.c.b16 %v2234, %v2230
        %v2903 = vpack.c.b16 %v2239, %v2235
        %v2904 = vpack.c.b16 %v2240, %v2236
        %v2905 = vpack.c.b16 %v2241, %v2237
        %v2906 = vpack.c.b16 %v2242, %v2238
        %v2907 = vpack.c.b16 %v2247, %v2243
        %v2908 = vpack.c.b16 %v2248, %v2244
        %v2909 = vpack.c.b16 %v2249, %v2245
        %v2910 = vpack.c.b16 %v2250, %v2246
        %v2911 = vpack.c.b16 %v2255, %v2251
        %v2912 = vpack.c.b16 %v2256, %v2252
        %v2913 = vpack.c.b16 %v2257, %v2253
        %v2914 = vpack.c.b16 %v2258, %v2254
        %v2915 = vpack.c.b16 %v2263, %v2259
        %v2916 = vpack.c.b16 %v2264, %v2260
        %v2917 = vpack.c.b16 %v2265, %v2261
        %v2918 = vpack.c.b16 %v2266, %v2262
        %v2919 = vpack.c.b16 %v2271, %v2267
        %v2920 = vpack.c.b16 %v2272, %v2268
        %v2921 = vpack.c.b16 %v2273, %v2269
        %v2922 = vpack.c.b16 %v2274, %v2270
        %v2923 = vpack.c.b16 %v2279, %v2275
        %v2924 = vpack.c.b16 %v2280, %v2276
        %v2925 = vpack.c.b16 %v2281, %v2277
        %v2926 = vpack.c.b16 %v2282, %v2278
        %v2927 = vpack.c.b16 %v2287, %v2283
        %v2928 = vpack.c.b16 %v2288, %v2284
        %v2929 = vpack.c.b16 %v2289, %v2285
        %v2930 = vpack.c.b16 %v2290, %v2286
        %v2931 = vpack.c.b16 %v2295, %v2291
        %v2932 = vpack.c.b16 %v2296, %v2292
        %v2933 = vpack.c.b16 %v2297, %v2293
        %v2934 = vpack.c.b16 %v2298, %v2294
        %v2935 = vpack.c.b16 %v2303, %v2299
        %v2936 = vpack.c.b16 %v2304, %v2300
        %v2937 = vpack.c.b16 %v2305, %v2301
        %v2938 = vpack.c.b16 %v2306, %v2302
        %v2939 = vpack.c.b16 %v2311, %v2307
        %v2940 = vpack.c.b16 %v2312, %v2308
        %v2941 = vpack.c.b16 %v2313, %v2309
        %v2942 = vpack.c.b16 %v2314, %v2310
        %v2943 = vpack.c.b16 %v2319, %v2315
        %v2944 = vpack.c.b16 %v2320, %v2316
        %v2945 = vpack.c.b16 %v2321, %v2317
        %v2946 = vpack.c.b16 %v2322, %v2318
        %v2947 = vpack.c.b16 %v2327, %v2323
        %v2948 = vpack.c.b16 %v2328, %v2324
        %v2949 = vpack.c.b16 %v2329, %v2325
        %v2950 = vpack.c.b16 %v2330, %v2326
        %v2951 = vpack.c.b16 %v2335, %v2331
        %v2952 = vpack.c.b16 %v2336, %v2332
        %v2953 = vpack.c.b16 %v2337, %v2333
        %v2954 = vpack.c.b16 %v2338, %v2334
        %v2955 = vpack.c.b16 %v2343, %v2339
        %v2956 = vpack.c.b16 %v2344, %v2340
        %v2957 = vpack.c.b16 %v2345, %v2341
        %v2958 = vpack.c.b16 %v2346, %v2342
        %v2959 = vpack.c.b16 %v2351, %v2347
        %v2960 = vpack.c.b16 %v2352, %v2348
        %v2961 = vpack.c.b16 %v2353, %v2349
        %v2962 = vpack.c.b16 %v2354, %v2350
        %v2963 = vpack.c.b16 %v2359, %v2355
        %v2964 = vpack.c.b16 %v2360, %v2356
        %v2965 = vpack.c.b16 %v2361, %v2357
        %v2966 = vpack.c.b16 %v2362, %v2358
        %v2967 = vpack.c.b16 %v2367, %v2363
        %v2968 = vpack.c.b16 %v2368, %v2364
        %v2969 = vpack.c.b16 %v2369, %v2365
        %v2970 = vpack.c.b16 %v2370, %v2366
        %v2971 = vpack.c.b16 %v2375, %v2371
        %v2972 = vpack.c.b16 %v2376, %v2372
        %v2973 = vpack.c.b16 %v2377, %v2373
        %v2974 = vpack.c.b16 %v2378, %v2374
        %v2975 = vpack.c.b16 %v2383, %v2379
        %v2976 = vpack.c.b16 %v2384, %v2380
        %v2977 = vpack.c.b16 %v2385, %v2381
        %v2978 = vpack.c.b16 %v2386, %v2382
        %v2979 = vpack.c.b16 %v2391, %v2387
        %v2980 = vpack.c.b16 %v2392, %v2388
        %v2981 = vpack.c.b16 %v2393, %v2389
        %v2982 = vpack.c.b16 %v2394, %v2390
        %v2983 = vpack.c.b16 %v2399, %v2395
        %v2984 = vpack.c.b16 %v2400, %v2396
        %v2985 = vpack.c.b16 %v2401, %v2397
        %v2986 = vpack.c.b16 %v2402, %v2398
        %v2987 = vpack.c.b16 %v2407, %v2403
        %v2988 = vpack.c.b16 %v2408, %v2404
        %v2989 = vpack.c.b16 %v2409, %v2405
        %v2990 = vpack.c.b16 %v2410, %v2406
        %v2991 = vpack.c.b16 %v2415, %v2411
        %v2992 = vpack.c.b16 %v2416, %v2412
        %v2993 = vpack.c.b16 %v2417, %v2413
        %v2994 = vpack.c.b16 %v2418, %v2414
        %v2995 = vpack.c.b16 %v2423, %v2419
        %v2996 = vpack.c.b16 %v2424, %v2420
        %v2997 = vpack.c.b16 %v2425, %v2421
        %v2998 = vpack.c.b16 %v2426, %v2422
        %v2999 = vpack.c.b16 %v2431, %v2427
        %v3000 = vpack.c.b16 %v2432, %v2428
        %v3001 = vpack.c.b16 %v2433, %v2429
        %v3002 = vpack.c.b16 %v2434, %v2430
        %v3003 = vpack.c.b16 %v2439, %v2435
        %v3004 = vpack.c.b16 %v2440, %v2436
        %v3005 = vpack.c.b16 %v2441, %v2437
        %v3006 = vpack.c.b16 %v2442, %v2438
        %v3007 = vpack.c.b16 %v2447, %v2443
        %v3008 = vpack.c.b16 %v2448, %v2444
        %v3009 = vpack.c.b16 %v2449, %v2445
        %v3010 = vpack.c.b16 %v2450, %v2446
        %v3011 = vpack.c.b16 %v2455, %v2451
        %v3012 = vpack.c.b16 %v2456, %v2452
        %v3013 = vpack.c.b16 %v2457, %v2453
        %v3014 = vpack.c.b16 %v2458, %v2454
        %v3015 = vpack.c.b16 %v2463, %v2459
        %v3016 = vpack.c.b16 %v2464, %v2460
        %v3017 = vpack.c.b16 %v2465, %v2461
        %v3018 = vpack.c.b16 %v2466, %v2462
        %v3019 = vpack.c.b16 %v2471, %v2467
        %v3020 = vpack.c.b16 %v2472, %v2468
        %v3021 = vpack.c.b16 %v2473, %v2469
        %v3022 = vpack.c.b16 %v2474, %v2470
        %v3023 = vpack.c.b16 %v2479, %v2475
        %v3024 = vpack.c.b16 %v2480, %v2476
        %v3025 = vpack.c.b16 %v2481, %v2477
        %v3026 = vpack.c.b16 %v2482, %v2478
        %v3027 = vpack.c.b16 %v2487, %v2483
        %v3028 = vpack.c.b16 %v2488, %v2484
        %v3029 = vpack.c.b16 %v2489, %v2485
        %v3030 = vpack.c.b16 %v2490, %v2486
        %v3031 = vpack.c.b16 %v2495, %v2491
        %v3032 = vpack.c.b16 %v2496, %v2492
        %v3033 = vpack.c.b16 %v2497, %v2493
        %v3034 = vpack.c.b16 %v2498, %v2494
        %v3035 = vpack.c.b16 %v2503, %v2499
        %v3036 = vpack.c.b16 %v2504, %v2500
        %v3037 = vpack.c.b16 %v2505, %v2501
        %v3038 = vpack.c.b16 %v2506, %v2502
        %v3039 = vpack.c.b16 %v2511, %v2507
        %v3040 = vpack.c.b16 %v2512, %v2508
        %v3041 = vpack.c.b16 %v2513, %v2509
        %v3042 = vpack.c.b16 %v2514, %v2510
        %v3043 = vpack.c.b16 %v2519, %v2515
        %v3044 = vpack.c.b16 %v2520, %v2516
        %v3045 = vpack.c.b16 %v2521, %v2517
        %v3046 = vpack.c.b16 %v2522, %v2518
        %v3047 = vpack.c.b16 %v2527, %v2523
        %v3048 = vpack.c.b16 %v2528, %v2524
        %v3049 = vpack.c.b16 %v2529, %v2525
        %v3050 = vpack.c.b16 %v2530, %v2526
        %v3051 = vpack.c.b16 %v2535, %v2531
        %v3052 = vpack.c.b16 %v2536, %v2532
        %v3053 = vpack.c.b16 %v2537, %v2533
        %v3054 = vpack.c.b16 %v2538, %v2534
        %v3055 = vpack.c.b16 %v2543, %v2539
        %v3056 = vpack.c.b16 %v2544, %v2540
        %v3057 = vpack.c.b16 %v2545, %v2541
        %v3058 = vpack.c.b16 %v2546, %v2542
        %3571 = vmatprep.subr.bf16.mxu0 %v2548
        %3572 = vmatpush1.bf16.msra.mxu0 %v2547
        %3573 = vmatprep.subr.bf16.mxu0 %v2552
        %3574 = vmatpush1.bf16.msra.mxu0 %v2551
        %3575 = vmatprep.subr.bf16.mxu0 %v2556
        %3576 = vmatpush1.bf16.msra.mxu0 %v2555
        %3577 = vmatprep.subr.bf16.mxu0 %v2560
        %3578 = vmatpush1.bf16.msra.mxu0 %v2559
        %3579 = vmatprep.subr.bf16.mxu0 %v2564
        %3580 = vmatpush1.bf16.msra.mxu0 %v2563
        %3581 = vmatprep.subr.bf16.mxu0 %v2568
        %3582 = vmatpush1.bf16.msra.mxu0 %v2567
        %3583 = vmatprep.subr.bf16.mxu0 %v2572
        %3584 = vmatpush1.bf16.msra.mxu0 %v2571
        %3585 = vmatprep.subr.bf16.mxu0 %v2576
        %3586 = vmatpush1.bf16.msra.mxu0 %v2575
        %3587 = vmatprep.subr.bf16.mxu0 %v2580
        %3588 = vmatpush1.bf16.msra.mxu0 %v2579
        %3589 = vmatprep.subr.bf16.mxu0 %v2584
        %3590 = vmatpush1.bf16.msra.mxu0 %v2583
        %3591 = vmatprep.subr.bf16.mxu0 %v2588
        %3592 = vmatpush1.bf16.msra.mxu0 %v2587
        %3593 = vmatprep.subr.bf16.mxu0 %v2592
        %3594 = vmatpush1.bf16.msra.mxu0 %v2591
        %3595 = vmatprep.subr.bf16.mxu0 %v2596
        %3596 = vmatpush1.bf16.msra.mxu0 %v2595
        %3597 = vmatprep.subr.bf16.mxu0 %v2600
        %3598 = vmatpush1.bf16.msra.mxu0 %v2599
        %3599 = vmatprep.subr.bf16.mxu0 %v2604
        %3600 = vmatpush1.bf16.msra.mxu0 %v2603
        %3601 = vmatprep.subr.bf16.mxu0 %v2608
        %3602 = vmatpush1.bf16.msra.mxu0 %v2607
        %3603 = vmatprep.mubr.bf16.mxu0 %v948
        %3604 = vmatmul.mubr.bf16.gmra.mrb[0].mxu0 %v947
        %v3605 = vpop.f32.mrb[0].mxu0
        %v3606 = vadd.f32 0.0, %v3605
        %v3607 = vpop.f32.mrb[0].mxu0
        %v3608 = vadd.f32 0.0, %v3607
        %v3609 = vpop.f32.mrb[0].mxu0
        %v3610 = vadd.f32 0.0, %v3609
        %v3611 = vpop.f32.mrb[0].mxu0
        %v3612 = vadd.f32 0.0, %v3611
        %3613 = vmatprep.mubr.bf16.mxu0 %v964
        %3614 = vmatmul.mubr.bf16.gmra.mrb[0].mxu0 %v963
        %v3615 = vpop.f32.mrb[0].mxu0
        %v3616 = vadd.f32 0.0, %v3615
        %v3617 = vpop.f32.mrb[0].mxu0
        %v3618 = vadd.f32 0.0, %v3617
        %v3619 = vpop.f32.mrb[0].mxu0
        %v3620 = vpop.f32.mrb[0].mxu0
        %3621 = vdwg.mxu0
        %3622 = vmatprep.subr.bf16.mxu0 %v2612
        %3623 = vmatpush1.bf16.msra.mxu0 %v2611
        %3624 = vmatprep.subr.bf16.mxu0 %v2616
        %3625 = vmatpush1.bf16.msra.mxu0 %v2615
        %3626 = vmatprep.subr.bf16.mxu0 %v2620
        %3627 = vmatpush1.bf16.msra.mxu0 %v2619
        %3628 = vmatprep.subr.bf16.mxu0 %v2624
        %3629 = vmatpush1.bf16.msra.mxu0 %v2623
        %3630 = vmatprep.subr.bf16.mxu0 %v2628
        %3631 = vmatpush1.bf16.msra.mxu0 %v2627
        %3632 = vmatprep.subr.bf16.mxu0 %v2632
        %3633 = vmatpush1.bf16.msra.mxu0 %v2631
        %3634 = vmatprep.subr.bf16.mxu0 %v2636
        %3635 = vmatpush1.bf16.msra.mxu0 %v2635
        %3636 = vmatprep.subr.bf16.mxu0 %v2640
        %3637 = vmatpush1.bf16.msra.mxu0 %v2639
        %3638 = vmatprep.subr.bf16.mxu0 %v2644
        %3639 = vmatpush1.bf16.msra.mxu0 %v2643
        %3640 = vmatprep.subr.bf16.mxu0 %v2648
        %3641 = vmatpush1.bf16.msra.mxu0 %v2647
        %3642 = vmatprep.subr.bf16.mxu0 %v2652
        %3643 = vmatpush1.bf16.msra.mxu0 %v2651
        %3644 = vmatprep.subr.bf16.mxu0 %v2656
        %3645 = vmatpush1.bf16.msra.mxu0 %v2655
        %3646 = vmatprep.subr.bf16.mxu0 %v2660
        %3647 = vmatpush1.bf16.msra.mxu0 %v2659
        %3648 = vmatprep.subr.bf16.mxu0 %v2664
        %3649 = vmatpush1.bf16.msra.mxu0 %v2663
        %3650 = vmatprep.subr.bf16.mxu0 %v2668
        %3651 = vmatpush1.bf16.msra.mxu0 %v2667
        %3652 = vmatprep.subr.bf16.mxu0 %v2672
        %3653 = vmatpush1.bf16.msra.mxu0 %v2671
        %3654 = vmatprep.mubr.bf16.mxu0 %v950
        %3655 = vmatmul.mubr.bf16.gmra.mrb[0].mxu0 %v949
        %v3656 = vpop.f32.mrb[0].mxu0
        %v3657 = vadd.f32 %v3606, %v3656
        %v3658 = vpop.f32.mrb[0].mxu0
        %v3659 = vadd.f32 %v3608, %v3658
        %v3660 = vpop.f32.mrb[0].mxu0
        %v3661 = vadd.f32 %v3610, %v3660
        %v3662 = vpop.f32.mrb[0].mxu0
        %v3663 = vadd.f32 %v3612, %v3662
        %3664 = vmatprep.mubr.bf16.mxu0 %v966
        %3665 = vmatmul.mubr.bf16.gmra.mrb[0].mxu0 %v965
        %v3666 = vpop.f32.mrb[0].mxu0
        %v3667 = vadd.f32 %v3616, %v3666
        %v3668 = vpop.f32.mrb[0].mxu0
        %v3669 = vadd.f32 %v3618, %v3668
        %v3670 = vpop.f32.mrb[0].mxu0
        %v3671 = vpop.f32.mrb[0].mxu0
        %3672 = vdwg.mxu0
        %3673 = vmatprep.subr.bf16.mxu0 %v2676
        %3674 = vmatpush1.bf16.msra.mxu0 %v2675
        %3675 = vmatprep.subr.bf16.mxu0 %v2680
        %3676 = vmatpush1.bf16.msra.mxu0 %v2679
        %3677 = vmatprep.subr.bf16.mxu0 %v2684
        %3678 = vmatpush1.bf16.msra.mxu0 %v2683
        %3679 = vmatprep.subr.bf16.mxu0 %v2688
        %3680 = vmatpush1.bf16.msra.mxu0 %v2687
        %3681 = vmatprep.subr.bf16.mxu0 %v2692
        %3682 = vmatpush1.bf16.msra.mxu0 %v2691
        %3683 = vmatprep.subr.bf16.mxu0 %v2696
        %3684 = vmatpush1.bf16.msra.mxu0 %v2695
        %3685 = vmatprep.subr.bf16.mxu0 %v2700
        %3686 = vmatpush1.bf16.msra.mxu0 %v2699
        %3687 = vmatprep.subr.bf16.mxu0 %v2704
        %3688 = vmatpush1.bf16.msra.mxu0 %v2703
        %3689 = vmatprep.subr.bf16.mxu0 %v2708
        %3690 = vmatpush1.bf16.msra.mxu0 %v2707
        %3691 = vmatprep.subr.bf16.mxu0 %v2712
        %3692 = vmatpush1.bf16.msra.mxu0 %v2711
        %3693 = vmatprep.subr.bf16.mxu0 %v2716
        %3694 = vmatpush1.bf16.msra.mxu0 %v2715
        %3695 = vmatprep.subr.bf16.mxu0 %v2720
        %3696 = vmatpush1.bf16.msra.mxu0 %v2719
        %3697 = vmatprep.subr.bf16.mxu0 %v2724
        %3698 = vmatpush1.bf16.msra.mxu0 %v2723
        %3699 = vmatprep.subr.bf16.mxu0 %v2728
        %3700 = vmatpush1.bf16.msra.mxu0 %v2727
        %3701 = vmatprep.subr.bf16.mxu0 %v2732
        %3702 = vmatpush1.bf16.msra.mxu0 %v2731
        %3703 = vmatprep.subr.bf16.mxu0 %v2736
        %3704 = vmatpush1.bf16.msra.mxu0 %v2735
        %3705 = vmatprep.mubr.bf16.mxu0 %v952
        %3706 = vmatmul.mubr.bf16.gmra.mrb[0].mxu0 %v951
        %v3707 = vpop.f32.mrb[0].mxu0
        %v3708 = vadd.f32 %v3657, %v3707
        %v3709 = vpop.f32.mrb[0].mxu0
        %v3710 = vadd.f32 %v3659, %v3709
        %v3711 = vpop.f32.mrb[0].mxu0
        %v3712 = vadd.f32 %v3661, %v3711
        %v3713 = vpop.f32.mrb[0].mxu0
        %v3714 = vadd.f32 %v3663, %v3713
        %3715 = vmatprep.mubr.bf16.mxu0 %v968
        %3716 = vmatmul.mubr.bf16.gmra.mrb[0].mxu0 %v967
        %v3717 = vpop.f32.mrb[0].mxu0
        %v3718 = vadd.f32 %v3667, %v3717
        %v3719 = vpop.f32.mrb[0].mxu0
        %v3720 = vadd.f32 %v3669, %v3719
        %v3721 = vpop.f32.mrb[0].mxu0
        %v3722 = vpop.f32.mrb[0].mxu0
        %3723 = vdwg.mxu0
        %3724 = vmatprep.subr.bf16.mxu0 %v2740
        %3725 = vmatpush1.bf16.msra.mxu0 %v2739
        %3726 = vmatprep.subr.bf16.mxu0 %v2744
        %3727 = vmatpush1.bf16.msra.mxu0 %v2743
        %3728 = vmatprep.subr.bf16.mxu0 %v2748
        %3729 = vmatpush1.bf16.msra.mxu0 %v2747
        %3730 = vmatprep.subr.bf16.mxu0 %v2752
        %3731 = vmatpush1.bf16.msra.mxu0 %v2751
        %3732 = vmatprep.subr.bf16.mxu0 %v2756
        %3733 = vmatpush1.bf16.msra.mxu0 %v2755
        %3734 = vmatprep.subr.bf16.mxu0 %v2760
        %3735 = vmatpush1.bf16.msra.mxu0 %v2759
        %3736 = vmatprep.subr.bf16.mxu0 %v2764
        %3737 = vmatpush1.bf16.msra.mxu0 %v2763
        %3738 = vmatprep.subr.bf16.mxu0 %v2768
        %3739 = vmatpush1.bf16.msra.mxu0 %v2767
        %3740 = vmatprep.subr.bf16.mxu0 %v2772
        %3741 = vmatpush1.bf16.msra.mxu0 %v2771
        %3742 = vmatprep.subr.bf16.mxu0 %v2776
        %3743 = vmatpush1.bf16.msra.mxu0 %v2775
        %3744 = vmatprep.subr.bf16.mxu0 %v2780
        %3745 = vmatpush1.bf16.msra.mxu0 %v2779
        %3746 = vmatprep.subr.bf16.mxu0 %v2784
        %3747 = vmatpush1.bf16.msra.mxu0 %v2783
        %3748 = vmatprep.subr.bf16.mxu0 %v2788
        %3749 = vmatpush1.bf16.msra.mxu0 %v2787
        %3750 = vmatprep.subr.bf16.mxu0 %v2792
        %3751 = vmatpush1.bf16.msra.mxu0 %v2791
        %3752 = vmatprep.subr.bf16.mxu0 %v2796
        %3753 = vmatpush1.bf16.msra.mxu0 %v2795
        %3754 = vmatprep.subr.bf16.mxu0 %v2800
        %3755 = vmatpush1.bf16.msra.mxu0 %v2799
        %3756 = vmatprep.mubr.bf16.mxu0 %v954
        %3757 = vmatmul.mubr.bf16.gmra.mrb[0].mxu0 %v953
        %v3758 = vpop.f32.mrb[0].mxu0
        %v3759 = vadd.f32 %v3708, %v3758
        %v3760 = vpop.f32.mrb[0].mxu0
        %v3761 = vadd.f32 %v3710, %v3760
        %v3762 = vpop.f32.mrb[0].mxu0
        %v3763 = vadd.f32 %v3712, %v3762
        %v3764 = vpop.f32.mrb[0].mxu0
        %v3765 = vadd.f32 %v3714, %v3764
        %3766 = vmatprep.mubr.bf16.mxu0 %v970
        %3767 = vmatmul.mubr.bf16.gmra.mrb[0].mxu0 %v969
        %v3768 = vpop.f32.mrb[0].mxu0
        %v3769 = vadd.f32 %v3718, %v3768
        %v3770 = vpop.f32.mrb[0].mxu0
        %v3771 = vadd.f32 %v3720, %v3770
        %v3772 = vpop.f32.mrb[0].mxu0
        %v3773 = vpop.f32.mrb[0].mxu0
        %3774 = vdwg.mxu0
        %3775 = vmatprep.subr.bf16.mxu0 %v2804
        %3776 = vmatpush1.bf16.msra.mxu0 %v2803
        %3777 = vmatprep.subr.bf16.mxu0 %v2808
        %3778 = vmatpush1.bf16.msra.mxu0 %v2807
        %3779 = vmatprep.subr.bf16.mxu0 %v2812
        %3780 = vmatpush1.bf16.msra.mxu0 %v2811
        %3781 = vmatprep.subr.bf16.mxu0 %v2816
        %3782 = vmatpush1.bf16.msra.mxu0 %v2815
        %3783 = vmatprep.subr.bf16.mxu0 %v2820
        %3784 = vmatpush1.bf16.msra.mxu0 %v2819
        %3785 = vmatprep.subr.bf16.mxu0 %v2824
        %3786 = vmatpush1.bf16.msra.mxu0 %v2823
        %3787 = vmatprep.subr.bf16.mxu0 %v2828
        %3788 = vmatpush1.bf16.msra.mxu0 %v2827
        %3789 = vmatprep.subr.bf16.mxu0 %v2832
        %3790 = vmatpush1.bf16.msra.mxu0 %v2831
        %3791 = vmatprep.subr.bf16.mxu0 %v2836
        %3792 = vmatpush1.bf16.msra.mxu0 %v2835
        %3793 = vmatprep.subr.bf16.mxu0 %v2840
        %3794 = vmatpush1.bf16.msra.mxu0 %v2839
        %3795 = vmatprep.subr.bf16.mxu0 %v2844
        %3796 = vmatpush1.bf16.msra.mxu0 %v2843
        %3797 = vmatprep.subr.bf16.mxu0 %v2848
        %3798 = vmatpush1.bf16.msra.mxu0 %v2847
        %3799 = vmatprep.subr.bf16.mxu0 %v2852
        %3800 = vmatpush1.bf16.msra.mxu0 %v2851
        %3801 = vmatprep.subr.bf16.mxu0 %v2856
        %3802 = vmatpush1.bf16.msra.mxu0 %v2855
        %3803 = vmatprep.subr.bf16.mxu0 %v2860
        %3804 = vmatpush1.bf16.msra.mxu0 %v2859
        %3805 = vmatprep.subr.bf16.mxu0 %v2864
        %3806 = vmatpush1.bf16.msra.mxu0 %v2863
        %3807 = vmatprep.mubr.bf16.mxu0 %v956
        %3808 = vmatmul.mubr.bf16.gmra.mrb[0].mxu0 %v955
        %v3809 = vpop.f32.mrb[0].mxu0
        %v3810 = vadd.f32 %v3759, %v3809
        %v3811 = vpop.f32.mrb[0].mxu0
        %v3812 = vadd.f32 %v3761, %v3811
        %v3813 = vpop.f32.mrb[0].mxu0
        %v3814 = vadd.f32 %v3763, %v3813
        %v3815 = vpop.f32.mrb[0].mxu0
        %v3816 = vadd.f32 %v3765, %v3815
        %3817 = vmatprep.mubr.bf16.mxu0 %v972
        %3818 = vmatmul.mubr.bf16.gmra.mrb[0].mxu0 %v971
        %v3819 = vpop.f32.mrb[0].mxu0
        %v3820 = vadd.f32 %v3769, %v3819
        %v3821 = vpop.f32.mrb[0].mxu0
        %v3822 = vadd.f32 %v3771, %v3821
        %v3823 = vpop.f32.mrb[0].mxu0
        %v3824 = vpop.f32.mrb[0].mxu0
        %3825 = vdwg.mxu0
        %3826 = vmatprep.subr.bf16.mxu0 %v2868
        %3827 = vmatpush1.bf16.msra.mxu0 %v2867
        %3828 = vmatprep.subr.bf16.mxu0 %v2872
        %3829 = vmatpush1.bf16.msra.mxu0 %v2871
        %3830 = vmatprep.subr.bf16.mxu0 %v2876
        %3831 = vmatpush1.bf16.msra.mxu0 %v2875
        %3832 = vmatprep.subr.bf16.mxu0 %v2880
        %3833 = vmatpush1.bf16.msra.mxu0 %v2879
        %3834 = vmatprep.subr.bf16.mxu0 %v2884
        %3835 = vmatpush1.bf16.msra.mxu0 %v2883
        %3836 = vmatprep.subr.bf16.mxu0 %v2888
        %3837 = vmatpush1.bf16.msra.mxu0 %v2887
        %3838 = vmatprep.subr.bf16.mxu0 %v2892
        %3839 = vmatpush1.bf16.msra.mxu0 %v2891
        %3840 = vmatprep.subr.bf16.mxu0 %v2896
        %3841 = vmatpush1.bf16.msra.mxu0 %v2895
        %3842 = vmatprep.subr.bf16.mxu0 %v2900
        %3843 = vmatpush1.bf16.msra.mxu0 %v2899
        %3844 = vmatprep.subr.bf16.mxu0 %v2904
        %3845 = vmatpush1.bf16.msra.mxu0 %v2903
        %3846 = vmatprep.subr.bf16.mxu0 %v2908
        %3847 = vmatpush1.bf16.msra.mxu0 %v2907
        %3848 = vmatprep.subr.bf16.mxu0 %v2912
        %3849 = vmatpush1.bf16.msra.mxu0 %v2911
        %3850 = vmatprep.subr.bf16.mxu0 %v2916
        %3851 = vmatpush1.bf16.msra.mxu0 %v2915
        %3852 = vmatprep.subr.bf16.mxu0 %v2920
        %3853 = vmatpush1.bf16.msra.mxu0 %v2919
        %3854 = vmatprep.subr.bf16.mxu0 %v2924
        %3855 = vmatpush1.bf16.msra.mxu0 %v2923
        %3856 = vmatprep.subr.bf16.mxu0 %v2928
        %3857 = vmatpush1.bf16.msra.mxu0 %v2927
        %3858 = vmatprep.mubr.bf16.mxu0 %v958
        %3859 = vmatmul.mubr.bf16.gmra.mrb[0].mxu0 %v957
        %v3860 = vpop.f32.mrb[0].mxu0
        %v3861 = vadd.f32 %v3810, %v3860
        %v3862 = vpop.f32.mrb[0].mxu0
        %v3863 = vadd.f32 %v3812, %v3862
        %v3864 = vpop.f32.mrb[0].mxu0
        %v3865 = vadd.f32 %v3814, %v3864
        %v3866 = vpop.f32.mrb[0].mxu0
        %v3867 = vadd.f32 %v3816, %v3866
        %3868 = vmatprep.mubr.bf16.mxu0 %v974
        %3869 = vmatmul.mubr.bf16.gmra.mrb[0].mxu0 %v973
        %v3870 = vpop.f32.mrb[0].mxu0
        %v3871 = vadd.f32 %v3820, %v3870
        %v3872 = vpop.f32.mrb[0].mxu0
        %v3873 = vadd.f32 %v3822, %v3872
        %v3874 = vpop.f32.mrb[0].mxu0
        %v3875 = vpop.f32.mrb[0].mxu0
        %3876 = vdwg.mxu0
        %3877 = vmatprep.subr.bf16.mxu0 %v2932
        %3878 = vmatpush1.bf16.msra.mxu0 %v2931
        %3879 = vmatprep.subr.bf16.mxu0 %v2936
        %3880 = vmatpush1.bf16.msra.mxu0 %v2935
        %3881 = vmatprep.subr.bf16.mxu0 %v2940
        %3882 = vmatpush1.bf16.msra.mxu0 %v2939
        %3883 = vmatprep.subr.bf16.mxu0 %v2944
        %3884 = vmatpush1.bf16.msra.mxu0 %v2943
        %3885 = vmatprep.subr.bf16.mxu0 %v2948
        %3886 = vmatpush1.bf16.msra.mxu0 %v2947
        %3887 = vmatprep.subr.bf16.mxu0 %v2952
        %3888 = vmatpush1.bf16.msra.mxu0 %v2951
        %3889 = vmatprep.subr.bf16.mxu0 %v2956
        %3890 = vmatpush1.bf16.msra.mxu0 %v2955
        %3891 = vmatprep.subr.bf16.mxu0 %v2960
        %3892 = vmatpush1.bf16.msra.mxu0 %v2959
        %3893 = vmatprep.subr.bf16.mxu0 %v2964
        %3894 = vmatpush1.bf16.msra.mxu0 %v2963
        %3895 = vmatprep.subr.bf16.mxu0 %v2968
        %3896 = vmatpush1.bf16.msra.mxu0 %v2967
        %3897 = vmatprep.subr.bf16.mxu0 %v2972
        %3898 = vmatpush1.bf16.msra.mxu0 %v2971
        %3899 = vmatprep.subr.bf16.mxu0 %v2976
        %3900 = vmatpush1.bf16.msra.mxu0 %v2975
        %3901 = vmatprep.subr.bf16.mxu0 %v2980
        %3902 = vmatpush1.bf16.msra.mxu0 %v2979
        %3903 = vmatprep.subr.bf16.mxu0 %v2984
        %3904 = vmatpush1.bf16.msra.mxu0 %v2983
        %3905 = vmatprep.subr.bf16.mxu0 %v2988
        %3906 = vmatpush1.bf16.msra.mxu0 %v2987
        %3907 = vmatprep.subr.bf16.mxu0 %v2992
        %3908 = vmatpush1.bf16.msra.mxu0 %v2991
        %3909 = vmatprep.mubr.bf16.mxu0 %v960
        %3910 = vmatmul.mubr.bf16.gmra.mrb[0].mxu0 %v959
        %v3911 = vpop.f32.mrb[0].mxu0
        %v3912 = vadd.f32 %v3861, %v3911
        %v3913 = vpop.f32.mrb[0].mxu0
        %v3914 = vadd.f32 %v3863, %v3913
        %v3915 = vpop.f32.mrb[0].mxu0
        %v3916 = vadd.f32 %v3865, %v3915
        %v3917 = vpop.f32.mrb[0].mxu0
        %v3918 = vadd.f32 %v3867, %v3917
        %3919 = vmatprep.mubr.bf16.mxu0 %v976
        %3920 = vmatmul.mubr.bf16.gmra.mrb[0].mxu0 %v975
        %v3921 = vpop.f32.mrb[0].mxu0
        %v3922 = vadd.f32 %v3871, %v3921
        %v3923 = vpop.f32.mrb[0].mxu0
        %v3924 = vadd.f32 %v3873, %v3923
        %v3925 = vpop.f32.mrb[0].mxu0
        %v3926 = vpop.f32.mrb[0].mxu0
        %3927 = vdwg.mxu0
        %3928 = vmatprep.subr.bf16.mxu0 %v2996
        %3929 = vmatpush1.bf16.msra.mxu0 %v2995
        %3930 = vmatprep.subr.bf16.mxu0 %v3000
        %3931 = vmatpush1.bf16.msra.mxu0 %v2999
        %3932 = vmatprep.subr.bf16.mxu0 %v3004
        %3933 = vmatpush1.bf16.msra.mxu0 %v3003
        %3934 = vmatprep.subr.bf16.mxu0 %v3008
        %3935 = vmatpush1.bf16.msra.mxu0 %v3007
        %3936 = vmatprep.subr.bf16.mxu0 %v3012
        %3937 = vmatpush1.bf16.msra.mxu0 %v3011
        %3938 = vmatprep.subr.bf16.mxu0 %v3016
        %3939 = vmatpush1.bf16.msra.mxu0 %v3015
        %3940 = vmatprep.subr.bf16.mxu0 %v3020
        %3941 = vmatpush1.bf16.msra.mxu0 %v3019
        %3942 = vmatprep.subr.bf16.mxu0 %v3024
        %3943 = vmatpush1.bf16.msra.mxu0 %v3023
        %3944 = vmatprep.subr.bf16.mxu0 %v3028
        %3945 = vmatpush1.bf16.msra.mxu0 %v3027
        %3946 = vmatprep.subr.bf16.mxu0 %v3032
        %3947 = vmatpush1.bf16.msra.mxu0 %v3031
        %3948 = vmatprep.subr.bf16.mxu0 %v3036
        %3949 = vmatpush1.bf16.msra.mxu0 %v3035
        %3950 = vmatprep.subr.bf16.mxu0 %v3040
        %3951 = vmatpush1.bf16.msra.mxu0 %v3039
        %3952 = vmatprep.subr.bf16.mxu0 %v3044
        %3953 = vmatpush1.bf16.msra.mxu0 %v3043
        %3954 = vmatprep.subr.bf16.mxu0 %v3048
        %3955 = vmatpush1.bf16.msra.mxu0 %v3047
        %3956 = vmatprep.subr.bf16.mxu0 %v3052
        %3957 = vmatpush1.bf16.msra.mxu0 %v3051
        %3958 = vmatprep.subr.bf16.mxu0 %v3056
        %3959 = vmatpush1.bf16.msra.mxu0 %v3055
        %3960 = vmatprep.mubr.bf16.mxu0 %v962
        %3961 = vmatmul.mubr.bf16.gmra.mrb[0].mxu0 %v961
        %v3962 = vpop.f32.mrb[0].mxu0
        %v3963 = vadd.f32 %v3912, %v3962
        %v3964 = vpop.f32.mrb[0].mxu0
        %v3965 = vadd.f32 %v3914, %v3964
        %v3966 = vpop.f32.mrb[0].mxu0
        %v3967 = vadd.f32 %v3916, %v3966
        %v3968 = vpop.f32.mrb[0].mxu0
        %v3969 = vadd.f32 %v3918, %v3968
        %3970 = vmatprep.mubr.bf16.mxu0 %v978
        %3971 = vmatmul.mubr.bf16.gmra.mrb[0].mxu0 %v977
        %v3972 = vpop.f32.mrb[0].mxu0
        %v3973 = vadd.f32 %v3922, %v3972
        %v3974 = vpop.f32.mrb[0].mxu0
        %v3975 = vadd.f32 %v3924, %v3974
        %v3976 = vpop.f32.mrb[0].mxu0
        %v3977 = vpop.f32.mrb[0].mxu0
        %3978 = vdwg.mxu0
        %3979 = vmatprep.subr.bf16.mxu0 %v2550
        %3980 = vmatpush1.bf16.msra.mxu0 %v2549
        %3981 = vmatprep.subr.bf16.mxu0 %v2554
        %3982 = vmatpush1.bf16.msra.mxu0 %v2553
        %3983 = vmatprep.subr.bf16.mxu0 %v2558
        %3984 = vmatpush1.bf16.msra.mxu0 %v2557
        %3985 = vmatprep.subr.bf16.mxu0 %v2562
        %3986 = vmatpush1.bf16.msra.mxu0 %v2561
        %3987 = vmatprep.subr.bf16.mxu0 %v2566
        %3988 = vmatpush1.bf16.msra.mxu0 %v2565
        %3989 = vmatprep.subr.bf16.mxu0 %v2570
        %3990 = vmatpush1.bf16.msra.mxu0 %v2569
        %3991 = vmatprep.subr.bf16.mxu0 %v2574
        %3992 = vmatpush1.bf16.msra.mxu0 %v2573
        %3993 = vmatprep.subr.bf16.mxu0 %v2578
        %3994 = vmatpush1.bf16.msra.mxu0 %v2577
        %3995 = vmatprep.subr.bf16.mxu0 %v2582
        %3996 = vmatpush1.bf16.msra.mxu0 %v2581
        %3997 = vmatprep.subr.bf16.mxu0 %v2586
        %3998 = vmatpush1.bf16.msra.mxu0 %v2585
        %3999 = vmatprep.subr.bf16.mxu0 %v2590
        %4000 = vmatpush1.bf16.msra.mxu0 %v2589
        %4001 = vmatprep.subr.bf16.mxu0 %v2594
        %4002 = vmatpush1.bf16.msra.mxu0 %v2593
        %4003 = vmatprep.subr.bf16.mxu0 %v2598
        %4004 = vmatpush1.bf16.msra.mxu0 %v2597
        %4005 = vmatprep.subr.bf16.mxu0 %v2602
        %4006 = vmatpush1.bf16.msra.mxu0 %v2601
        %4007 = vmatprep.subr.bf16.mxu0 %v2606
        %4008 = vmatpush1.bf16.msra.mxu0 %v2605
        %4009 = vmatprep.subr.bf16.mxu0 %v2610
        %4010 = vmatpush1.bf16.msra.mxu0 %v2609
        %4011 = vmatprep.mubr.bf16.mxu0 %v948
        %4012 = vmatmul.mubr.bf16.gmra.mrb[0].mxu0 %v947
        %v4013 = vpop.f32.mrb[0].mxu0
        %v4014 = vadd.f32 0.0, %v4013
        %v4015 = vpop.f32.mrb[0].mxu0
        %v4016 = vadd.f32 0.0, %v4015
        %v4017 = vpop.f32.mrb[0].mxu0
        %v4018 = vadd.f32 0.0, %v4017
        %v4019 = vpop.f32.mrb[0].mxu0
        %v4020 = vadd.f32 0.0, %v4019
        %4021 = vmatprep.mubr.bf16.mxu0 %v964
        %4022 = vmatmul.mubr.bf16.gmra.mrb[0].mxu0 %v963
        %v4023 = vpop.f32.mrb[0].mxu0
        %v4024 = vadd.f32 0.0, %v4023
        %v4025 = vpop.f32.mrb[0].mxu0
        %v4026 = vadd.f32 0.0, %v4025
        %v4027 = vpop.f32.mrb[0].mxu0
        %v4028 = vpop.f32.mrb[0].mxu0
        %4029 = vdwg.mxu0
        %4030 = vmatprep.subr.bf16.mxu0 %v2614
        %4031 = vmatpush1.bf16.msra.mxu0 %v2613
        %4032 = vmatprep.subr.bf16.mxu0 %v2618
        %4033 = vmatpush1.bf16.msra.mxu0 %v2617
        %4034 = vmatprep.subr.bf16.mxu0 %v2622
        %4035 = vmatpush1.bf16.msra.mxu0 %v2621
        %4036 = vmatprep.subr.bf16.mxu0 %v2626
        %4037 = vmatpush1.bf16.msra.mxu0 %v2625
        %4038 = vmatprep.subr.bf16.mxu0 %v2630
        %4039 = vmatpush1.bf16.msra.mxu0 %v2629
        %4040 = vmatprep.subr.bf16.mxu0 %v2634
        %4041 = vmatpush1.bf16.msra.mxu0 %v2633
        %4042 = vmatprep.subr.bf16.mxu0 %v2638
        %4043 = vmatpush1.bf16.msra.mxu0 %v2637
        %4044 = vmatprep.subr.bf16.mxu0 %v2642
        %4045 = vmatpush1.bf16.msra.mxu0 %v2641
        %4046 = vmatprep.subr.bf16.mxu0 %v2646
        %4047 = vmatpush1.bf16.msra.mxu0 %v2645
        %4048 = vmatprep.subr.bf16.mxu0 %v2650
        %4049 = vmatpush1.bf16.msra.mxu0 %v2649
        %4050 = vmatprep.subr.bf16.mxu0 %v2654
        %4051 = vmatpush1.bf16.msra.mxu0 %v2653
        %4052 = vmatprep.subr.bf16.mxu0 %v2658
        %4053 = vmatpush1.bf16.msra.mxu0 %v2657
        %4054 = vmatprep.subr.bf16.mxu0 %v2662
        %4055 = vmatpush1.bf16.msra.mxu0 %v2661
        %4056 = vmatprep.subr.bf16.mxu0 %v2666
        %4057 = vmatpush1.bf16.msra.mxu0 %v2665
        %4058 = vmatprep.subr.bf16.mxu0 %v2670
        %4059 = vmatpush1.bf16.msra.mxu0 %v2669
        %4060 = vmatprep.subr.bf16.mxu0 %v2674
        %4061 = vmatpush1.bf16.msra.mxu0 %v2673
        %4062 = vmatprep.mubr.bf16.mxu0 %v950
        %4063 = vmatmul.mubr.bf16.gmra.mrb[0].mxu0 %v949
        %v4064 = vpop.f32.mrb[0].mxu0
        %v4065 = vadd.f32 %v4014, %v4064
        %v4066 = vpop.f32.mrb[0].mxu0
        %v4067 = vadd.f32 %v4016, %v4066
        %v4068 = vpop.f32.mrb[0].mxu0
        %v4069 = vadd.f32 %v4018, %v4068
        %v4070 = vpop.f32.mrb[0].mxu0
        %v4071 = vadd.f32 %v4020, %v4070
        %4072 = vmatprep.mubr.bf16.mxu0 %v966
        %4073 = vmatmul.mubr.bf16.gmra.mrb[0].mxu0 %v965
        %v4074 = vpop.f32.mrb[0].mxu0
        %v4075 = vadd.f32 %v4024, %v4074
        %v4076 = vpop.f32.mrb[0].mxu0
        %v4077 = vadd.f32 %v4026, %v4076
        %v4078 = vpop.f32.mrb[0].mxu0
        %v4079 = vpop.f32.mrb[0].mxu0
        %4080 = vdwg.mxu0
        %4081 = vmatprep.subr.bf16.mxu0 %v2678
        %4082 = vmatpush1.bf16.msra.mxu0 %v2677
        %4083 = vmatprep.subr.bf16.mxu0 %v2682
        %4084 = vmatpush1.bf16.msra.mxu0 %v2681
        %4085 = vmatprep.subr.bf16.mxu0 %v2686
        %4086 = vmatpush1.bf16.msra.mxu0 %v2685
        %4087 = vmatprep.subr.bf16.mxu0 %v2690
        %4088 = vmatpush1.bf16.msra.mxu0 %v2689
        %4089 = vmatprep.subr.bf16.mxu0 %v2694
        %4090 = vmatpush1.bf16.msra.mxu0 %v2693
        %4091 = vmatprep.subr.bf16.mxu0 %v2698
        %4092 = vmatpush1.bf16.msra.mxu0 %v2697
        %4093 = vmatprep.subr.bf16.mxu0 %v2702
        %4094 = vmatpush1.bf16.msra.mxu0 %v2701
        %4095 = vmatprep.subr.bf16.mxu0 %v2706
        %4096 = vmatpush1.bf16.msra.mxu0 %v2705
        %4097 = vmatprep.subr.bf16.mxu0 %v2710
        %4098 = vmatpush1.bf16.msra.mxu0 %v2709
        %4099 = vmatprep.subr.bf16.mxu0 %v2714
        %4100 = vmatpush1.bf16.msra.mxu0 %v2713
        %4101 = vmatprep.subr.bf16.mxu0 %v2718
        %4102 = vmatpush1.bf16.msra.mxu0 %v2717
        %4103 = vmatprep.subr.bf16.mxu0 %v2722
        %4104 = vmatpush1.bf16.msra.mxu0 %v2721
        %4105 = vmatprep.subr.bf16.mxu0 %v2726
        %4106 = vmatpush1.bf16.msra.mxu0 %v2725
        %4107 = vmatprep.subr.bf16.mxu0 %v2730
        %4108 = vmatpush1.bf16.msra.mxu0 %v2729
        %4109 = vmatprep.subr.bf16.mxu0 %v2734
        %4110 = vmatpush1.bf16.msra.mxu0 %v2733
        %4111 = vmatprep.subr.bf16.mxu0 %v2738
        %4112 = vmatpush1.bf16.msra.mxu0 %v2737
        %4113 = vmatprep.mubr.bf16.mxu0 %v952
        %4114 = vmatmul.mubr.bf16.gmra.mrb[0].mxu0 %v951
        %v4115 = vpop.f32.mrb[0].mxu0
        %v4116 = vadd.f32 %v4065, %v4115
        %v4117 = vpop.f32.mrb[0].mxu0
        %v4118 = vadd.f32 %v4067, %v4117
        %v4119 = vpop.f32.mrb[0].mxu0
        %v4120 = vadd.f32 %v4069, %v4119
        %v4121 = vpop.f32.mrb[0].mxu0
        %v4122 = vadd.f32 %v4071, %v4121
        %4123 = vmatprep.mubr.bf16.mxu0 %v968
        %4124 = vmatmul.mubr.bf16.gmra.mrb[0].mxu0 %v967
        %v4125 = vpop.f32.mrb[0].mxu0
        %v4126 = vadd.f32 %v4075, %v4125
        %v4127 = vpop.f32.mrb[0].mxu0
        %v4128 = vadd.f32 %v4077, %v4127
        %v4129 = vpop.f32.mrb[0].mxu0
        %v4130 = vpop.f32.mrb[0].mxu0
        %4131 = vdwg.mxu0
        %4132 = vmatprep.subr.bf16.mxu0 %v2742
        %4133 = vmatpush1.bf16.msra.mxu0 %v2741
        %4134 = vmatprep.subr.bf16.mxu0 %v2746
        %4135 = vmatpush1.bf16.msra.mxu0 %v2745
        %4136 = vmatprep.subr.bf16.mxu0 %v2750
        %4137 = vmatpush1.bf16.msra.mxu0 %v2749
        %4138 = vmatprep.subr.bf16.mxu0 %v2754
        %4139 = vmatpush1.bf16.msra.mxu0 %v2753
        %4140 = vmatprep.subr.bf16.mxu0 %v2758
        %4141 = vmatpush1.bf16.msra.mxu0 %v2757
        %4142 = vmatprep.subr.bf16.mxu0 %v2762
        %4143 = vmatpush1.bf16.msra.mxu0 %v2761
        %4144 = vmatprep.subr.bf16.mxu0 %v2766
        %4145 = vmatpush1.bf16.msra.mxu0 %v2765
        %4146 = vmatprep.subr.bf16.mxu0 %v2770
        %4147 = vmatpush1.bf16.msra.mxu0 %v2769
        %4148 = vmatprep.subr.bf16.mxu0 %v2774
        %4149 = vmatpush1.bf16.msra.mxu0 %v2773
        %4150 = vmatprep.subr.bf16.mxu0 %v2778
        %4151 = vmatpush1.bf16.msra.mxu0 %v2777
        %4152 = vmatprep.subr.bf16.mxu0 %v2782
        %4153 = vmatpush1.bf16.msra.mxu0 %v2781
        %4154 = vmatprep.subr.bf16.mxu0 %v2786
        %4155 = vmatpush1.bf16.msra.mxu0 %v2785
        %4156 = vmatprep.subr.bf16.mxu0 %v2790
        %4157 = vmatpush1.bf16.msra.mxu0 %v2789
        %4158 = vmatprep.subr.bf16.mxu0 %v2794
        %4159 = vmatpush1.bf16.msra.mxu0 %v2793
        %4160 = vmatprep.subr.bf16.mxu0 %v2798
        %4161 = vmatpush1.bf16.msra.mxu0 %v2797
        %4162 = vmatprep.subr.bf16.mxu0 %v2802
        %4163 = vmatpush1.bf16.msra.mxu0 %v2801
        %4164 = vmatprep.mubr.bf16.mxu0 %v954
        %4165 = vmatmul.mubr.bf16.gmra.mrb[0].mxu0 %v953
        %v4166 = vpop.f32.mrb[0].mxu0
        %v4167 = vadd.f32 %v4116, %v4166
        %v4168 = vpop.f32.mrb[0].mxu0
        %v4169 = vadd.f32 %v4118, %v4168
        %v4170 = vpop.f32.mrb[0].mxu0
        %v4171 = vadd.f32 %v4120, %v4170
        %v4172 = vpop.f32.mrb[0].mxu0
        %v4173 = vadd.f32 %v4122, %v4172
        %4174 = vmatprep.mubr.bf16.mxu0 %v970
        %4175 = vmatmul.mubr.bf16.gmra.mrb[0].mxu0 %v969
        %v4176 = vpop.f32.mrb[0].mxu0
        %v4177 = vadd.f32 %v4126, %v4176
        %v4178 = vpop.f32.mrb[0].mxu0
        %v4179 = vadd.f32 %v4128, %v4178
        %v4180 = vpop.f32.mrb[0].mxu0
        %v4181 = vpop.f32.mrb[0].mxu0
        %4182 = vdwg.mxu0
        %4183 = vmatprep.subr.bf16.mxu0 %v2806
        %4184 = vmatpush1.bf16.msra.mxu0 %v2805
        %4185 = vmatprep.subr.bf16.mxu0 %v2810
        %4186 = vmatpush1.bf16.msra.mxu0 %v2809
        %4187 = vmatprep.subr.bf16.mxu0 %v2814
        %4188 = vmatpush1.bf16.msra.mxu0 %v2813
        %4189 = vmatprep.subr.bf16.mxu0 %v2818
        %4190 = vmatpush1.bf16.msra.mxu0 %v2817
        %4191 = vmatprep.subr.bf16.mxu0 %v2822
        %4192 = vmatpush1.bf16.msra.mxu0 %v2821
        %4193 = vmatprep.subr.bf16.mxu0 %v2826
        %4194 = vmatpush1.bf16.msra.mxu0 %v2825
        %4195 = vmatprep.subr.bf16.mxu0 %v2830
        %4196 = vmatpush1.bf16.msra.mxu0 %v2829
        %4197 = vmatprep.subr.bf16.mxu0 %v2834
        %4198 = vmatpush1.bf16.msra.mxu0 %v2833
        %4199 = vmatprep.subr.bf16.mxu0 %v2838
        %4200 = vmatpush1.bf16.msra.mxu0 %v2837
        %4201 = vmatprep.subr.bf16.mxu0 %v2842
        %4202 = vmatpush1.bf16.msra.mxu0 %v2841
        %4203 = vmatprep.subr.bf16.mxu0 %v2846
        %4204 = vmatpush1.bf16.msra.mxu0 %v2845
        %4205 = vmatprep.subr.bf16.mxu0 %v2850
        %4206 = vmatpush1.bf16.msra.mxu0 %v2849
        %4207 = vmatprep.subr.bf16.mxu0 %v2854
        %4208 = vmatpush1.bf16.msra.mxu0 %v2853
        %4209 = vmatprep.subr.bf16.mxu0 %v2858
        %4210 = vmatpush1.bf16.msra.mxu0 %v2857
        %4211 = vmatprep.subr.bf16.mxu0 %v2862
        %4212 = vmatpush1.bf16.msra.mxu0 %v2861
        %4213 = vmatprep.subr.bf16.mxu0 %v2866
        %4214 = vmatpush1.bf16.msra.mxu0 %v2865
        %4215 = vmatprep.mubr.bf16.mxu0 %v956
        %4216 = vmatmul.mubr.bf16.gmra.mrb[0].mxu0 %v955
        %v4217 = vpop.f32.mrb[0].mxu0
        %v4218 = vadd.f32 %v4167, %v4217
        %v4219 = vpop.f32.mrb[0].mxu0
        %v4220 = vadd.f32 %v4169, %v4219
        %v4221 = vpop.f32.mrb[0].mxu0
        %v4222 = vadd.f32 %v4171, %v4221
        %v4223 = vpop.f32.mrb[0].mxu0
        %v4224 = vadd.f32 %v4173, %v4223
        %4225 = vmatprep.mubr.bf16.mxu0 %v972
        %4226 = vmatmul.mubr.bf16.gmra.mrb[0].mxu0 %v971
        %v4227 = vpop.f32.mrb[0].mxu0
        %v4228 = vadd.f32 %v4177, %v4227
        %v4229 = vpop.f32.mrb[0].mxu0
        %v4230 = vadd.f32 %v4179, %v4229
        %v4231 = vpop.f32.mrb[0].mxu0
        %v4232 = vpop.f32.mrb[0].mxu0
        %4233 = vdwg.mxu0
        %4234 = vmatprep.subr.bf16.mxu0 %v2870
        %4235 = vmatpush1.bf16.msra.mxu0 %v2869
        %4236 = vmatprep.subr.bf16.mxu0 %v2874
        %4237 = vmatpush1.bf16.msra.mxu0 %v2873
        %4238 = vmatprep.subr.bf16.mxu0 %v2878
        %4239 = vmatpush1.bf16.msra.mxu0 %v2877
        %4240 = vmatprep.subr.bf16.mxu0 %v2882
        %4241 = vmatpush1.bf16.msra.mxu0 %v2881
        %4242 = vmatprep.subr.bf16.mxu0 %v2886
        %4243 = vmatpush1.bf16.msra.mxu0 %v2885
        %4244 = vmatprep.subr.bf16.mxu0 %v2890
        %4245 = vmatpush1.bf16.msra.mxu0 %v2889
        %4246 = vmatprep.subr.bf16.mxu0 %v2894
        %4247 = vmatpush1.bf16.msra.mxu0 %v2893
        %4248 = vmatprep.subr.bf16.mxu0 %v2898
        %4249 = vmatpush1.bf16.msra.mxu0 %v2897
        %4250 = vmatprep.subr.bf16.mxu0 %v2902
        %4251 = vmatpush1.bf16.msra.mxu0 %v2901
        %4252 = vmatprep.subr.bf16.mxu0 %v2906
        %4253 = vmatpush1.bf16.msra.mxu0 %v2905
        %4254 = vmatprep.subr.bf16.mxu0 %v2910
        %4255 = vmatpush1.bf16.msra.mxu0 %v2909
        %4256 = vmatprep.subr.bf16.mxu0 %v2914
        %4257 = vmatpush1.bf16.msra.mxu0 %v2913
        %4258 = vmatprep.subr.bf16.mxu0 %v2918
        %4259 = vmatpush1.bf16.msra.mxu0 %v2917
        %4260 = vmatprep.subr.bf16.mxu0 %v2922
        %4261 = vmatpush1.bf16.msra.mxu0 %v2921
        %4262 = vmatprep.subr.bf16.mxu0 %v2926
        %4263 = vmatpush1.bf16.msra.mxu0 %v2925
        %4264 = vmatprep.subr.bf16.mxu0 %v2930
        %4265 = vmatpush1.bf16.msra.mxu0 %v2929
        %4266 = vmatprep.mubr.bf16.mxu0 %v958
        %4267 = vmatmul.mubr.bf16.gmra.mrb[0].mxu0 %v957
        %v4268 = vpop.f32.mrb[0].mxu0
        %v4269 = vadd.f32 %v4218, %v4268
        %v4270 = vpop.f32.mrb[0].mxu0
        %v4271 = vadd.f32 %v4220, %v4270
        %v4272 = vpop.f32.mrb[0].mxu0
        %v4273 = vadd.f32 %v4222, %v4272
        %v4274 = vpop.f32.mrb[0].mxu0
        %v4275 = vadd.f32 %v4224, %v4274
        %4276 = vmatprep.mubr.bf16.mxu0 %v974
        %4277 = vmatmul.mubr.bf16.gmra.mrb[0].mxu0 %v973
        %v4278 = vpop.f32.mrb[0].mxu0
        %v4279 = vadd.f32 %v4228, %v4278
        %v4280 = vpop.f32.mrb[0].mxu0
        %v4281 = vadd.f32 %v4230, %v4280
        %v4282 = vpop.f32.mrb[0].mxu0
        %v4283 = vpop.f32.mrb[0].mxu0
        %4284 = vdwg.mxu0
        %4285 = vmatprep.subr.bf16.mxu0 %v2934
        %4286 = vmatpush1.bf16.msra.mxu0 %v2933
        %4287 = vmatprep.subr.bf16.mxu0 %v2938
        %4288 = vmatpush1.bf16.msra.mxu0 %v2937
        %4289 = vmatprep.subr.bf16.mxu0 %v2942
        %4290 = vmatpush1.bf16.msra.mxu0 %v2941
        %4291 = vmatprep.subr.bf16.mxu0 %v2946
        %4292 = vmatpush1.bf16.msra.mxu0 %v2945
        %4293 = vmatprep.subr.bf16.mxu0 %v2950
        %4294 = vmatpush1.bf16.msra.mxu0 %v2949
        %4295 = vmatprep.subr.bf16.mxu0 %v2954
        %4296 = vmatpush1.bf16.msra.mxu0 %v2953
        %4297 = vmatprep.subr.bf16.mxu0 %v2958
        %4298 = vmatpush1.bf16.msra.mxu0 %v2957
        %4299 = vmatprep.subr.bf16.mxu0 %v2962
        %4300 = vmatpush1.bf16.msra.mxu0 %v2961
        %4301 = vmatprep.subr.bf16.mxu0 %v2966
        %4302 = vmatpush1.bf16.msra.mxu0 %v2965
        %4303 = vmatprep.subr.bf16.mxu0 %v2970
        %4304 = vmatpush1.bf16.msra.mxu0 %v2969
        %4305 = vmatprep.subr.bf16.mxu0 %v2974
        %4306 = vmatpush1.bf16.msra.mxu0 %v2973
        %4307 = vmatprep.subr.bf16.mxu0 %v2978
        %4308 = vmatpush1.bf16.msra.mxu0 %v2977
        %4309 = vmatprep.subr.bf16.mxu0 %v2982
        %4310 = vmatpush1.bf16.msra.mxu0 %v2981
        %4311 = vmatprep.subr.bf16.mxu0 %v2986
        %4312 = vmatpush1.bf16.msra.mxu0 %v2985
        %4313 = vmatprep.subr.bf16.mxu0 %v2990
        %4314 = vmatpush1.bf16.msra.mxu0 %v2989
        %4315 = vmatprep.subr.bf16.mxu0 %v2994
        %4316 = vmatpush1.bf16.msra.mxu0 %v2993
        %4317 = vmatprep.mubr.bf16.mxu0 %v960
        %4318 = vmatmul.mubr.bf16.gmra.mrb[0].mxu0 %v959
        %v4319 = vpop.f32.mrb[0].mxu0
        %v4320 = vadd.f32 %v4269, %v4319
        %v4321 = vpop.f32.mrb[0].mxu0
        %v4322 = vadd.f32 %v4271, %v4321
        %v4323 = vpop.f32.mrb[0].mxu0
        %v4324 = vadd.f32 %v4273, %v4323
        %v4325 = vpop.f32.mrb[0].mxu0
        %v4326 = vadd.f32 %v4275, %v4325
        %4327 = vmatprep.mubr.bf16.mxu0 %v976
        %4328 = vmatmul.mubr.bf16.gmra.mrb[0].mxu0 %v975
        %v4329 = vpop.f32.mrb[0].mxu0
        %v4330 = vadd.f32 %v4279, %v4329
        %v4331 = vpop.f32.mrb[0].mxu0
        %v4332 = vadd.f32 %v4281, %v4331
        %v4333 = vpop.f32.mrb[0].mxu0
        %v4334 = vpop.f32.mrb[0].mxu0
        %4335 = vdwg.mxu0
        %4336 = vmatprep.subr.bf16.mxu0 %v2998
        %4337 = vmatpush1.bf16.msra.mxu0 %v2997
        %4338 = vmatprep.subr.bf16.mxu0 %v3002
        %4339 = vmatpush1.bf16.msra.mxu0 %v3001
        %4340 = vmatprep.subr.bf16.mxu0 %v3006
        %4341 = vmatpush1.bf16.msra.mxu0 %v3005
        %4342 = vmatprep.subr.bf16.mxu0 %v3010
        %4343 = vmatpush1.bf16.msra.mxu0 %v3009
        %4344 = vmatprep.subr.bf16.mxu0 %v3014
        %4345 = vmatpush1.bf16.msra.mxu0 %v3013
        %4346 = vmatprep.subr.bf16.mxu0 %v3018
        %4347 = vmatpush1.bf16.msra.mxu0 %v3017
        %4348 = vmatprep.subr.bf16.mxu0 %v3022
        %4349 = vmatpush1.bf16.msra.mxu0 %v3021
        %4350 = vmatprep.subr.bf16.mxu0 %v3026
        %4351 = vmatpush1.bf16.msra.mxu0 %v3025
        %4352 = vmatprep.subr.bf16.mxu0 %v3030
        %4353 = vmatpush1.bf16.msra.mxu0 %v3029
        %4354 = vmatprep.subr.bf16.mxu0 %v3034
        %4355 = vmatpush1.bf16.msra.mxu0 %v3033
        %4356 = vmatprep.subr.bf16.mxu0 %v3038
        %4357 = vmatpush1.bf16.msra.mxu0 %v3037
        %4358 = vmatprep.subr.bf16.mxu0 %v3042
        %4359 = vmatpush1.bf16.msra.mxu0 %v3041
        %4360 = vmatprep.subr.bf16.mxu0 %v3046
        %4361 = vmatpush1.bf16.msra.mxu0 %v3045
        %4362 = vmatprep.subr.bf16.mxu0 %v3050
        %4363 = vmatpush1.bf16.msra.mxu0 %v3049
        %4364 = vmatprep.subr.bf16.mxu0 %v3054
        %4365 = vmatpush1.bf16.msra.mxu0 %v3053
        %4366 = vmatprep.subr.bf16.mxu0 %v3058
        %4367 = vmatpush1.bf16.msra.mxu0 %v3057
        %4368 = vmatprep.mubr.bf16.mxu0 %v962
        %4369 = vmatmul.mubr.bf16.gmra.mrb[0].mxu0 %v961
        %v4370 = vpop.f32.mrb[0].mxu0
        %v4371 = vadd.f32 %v4320, %v4370
        %v4372 = vpop.f32.mrb[0].mxu0
        %v4373 = vadd.f32 %v4322, %v4372
        %v4374 = vpop.f32.mrb[0].mxu0
        %v4375 = vadd.f32 %v4324, %v4374
        %v4376 = vpop.f32.mrb[0].mxu0
        %v4377 = vadd.f32 %v4326, %v4376
        %4378 = vmatprep.mubr.bf16.mxu0 %v978
        %4379 = vmatmul.mubr.bf16.gmra.mrb[0].mxu0 %v977
        %v4380 = vpop.f32.mrb[0].mxu0
        %v4381 = vadd.f32 %v4330, %v4380
        %v4382 = vpop.f32.mrb[0].mxu0
        %v4383 = vadd.f32 %v4332, %v4382
        %v4384 = vpop.f32.mrb[0].mxu0
        %v4385 = vpop.f32.mrb[0].mxu0
        %4386 = vdwg.mxu0
        %v4387 = vadd.f32 %v327, %v3963
        %v4388 = vadd.f32 %v328, %v3965
        %v4389 = vadd.f32 %v329, %v4371
        %v4390 = vadd.f32 %v330, %v4373
        %v4391 = vadd.f32 %v331, %v3967
        %v4392 = vadd.f32 %v332, %v3969
        %v4393 = vadd.f32 %v333, %v4375
        %v4394 = vadd.f32 %v334, %v4377
        %v4395 = vadd.f32 %v335, %v3973
        %v4396 = vadd.f32 %v336, %v3975
        %v4397 = vadd.f32 %v337, %v4381
        %v4398 = vadd.f32 %v338, %v4383
        %p4399 = scmp.lt.s32.totalorder %s20, 1
        // Predicated region
        $region64: #{discriminator_forward.8} parent=54 // pred_check
          %p4400 = pneg %p4399
        $region65: #{discriminator_forward.8} parent=54 // pred_check_branch
          %4402 = sbr.rel (%p4400) target = $region67
        $region66: #{discriminator_forward.8} parent=54 // pred_region
          %4403 = vst [vmem:[#allocation2] sm:$0xff] %v4387
          %4404 = vst [vmem:[#allocation2 + $0x8] sm:$0xff] %v4388
          %4405 = vst [vmem:[#allocation2 + $0x10] sm:$0xff] %v4389
          %4406 = vst [vmem:[#allocation2 + $0x18] sm:$0xff] %v4390
          %4407 = vst [vmem:[#allocation2 + $0x20] sm:$0xff] %v4391
          %4408 = vst [vmem:[#allocation2 + $0x28] sm:$0xff] %v4392
          %4409 = vst [vmem:[#allocation2 + $0x30] sm:$0xff] %v4393
          %4410 = vst [vmem:[#allocation2 + $0x38] sm:$0xff] %v4394
          %4411 = vst [vmem:[#allocation2 + $0x40] sm:$0x3] %v4395
          %4412 = vst [vmem:[#allocation2 + $0x48] sm:$0x3] %v4396
          %4413 = vst [vmem:[#allocation2 + $0x50] sm:$0x3] %v4397
          %4414 = vst [vmem:[#allocation2 + $0x58] sm:$0x3] %v4398
        $region67: #{discriminator_forward.8} parent=54 // pred_fallthru
          _
        %p4415 = scmp.eq.s32.totalorder %s20, 1
        // Predicated region
        $region68: #{discriminator_forward.8} parent=54 // pred_check
          %p4416 = pneg %p4415
        $region69: #{discriminator_forward.8} parent=54 // pred_check_branch
          %4418 = sbr.rel (%p4416) target = $region71
        $region70: #{discriminator_forward.8} parent=54 // pred_region
          %v4419 = vld [vmem:[%s2] sm:$0xf]
          %v4421 = vlaneseq
          %v4422 = vshrl.u32 %v4421, 7
          %v4423 = vsub.s32 0, %v4422
          %v4424 = vrot.slane %v4419, %v4423
          %v4425 = vlaneseq
          %v4426 = vshrl.u32 %v4425, 7
          %v4427 = vsub.s32 1, %v4426
          %v4428 = vrot.slane %v4419, %v4427
          %v4429 = vlaneseq
          %v4430 = vshrl.u32 %v4429, 7
          %v4431 = vsub.s32 2, %v4430
          %v4432 = vrot.slane %v4419, %v4431
          %v4433 = vlaneseq
          %v4434 = vshrl.u32 %v4433, 7
          %v4435 = vsub.s32 3, %v4434
          %v4436 = vrot.slane %v4419, %v4435
          %v4441 = vmul.f32 %v4387, %v4424
          %v4442 = vmul.f32 %v4388, %v4428
          %v4443 = vmul.f32 %v4389, %v4432
          %v4444 = vmul.f32 %v4390, %v4436
          %v4445 = vmul.f32 %v4391, %v4424
          %v4446 = vmul.f32 %v4392, %v4428
          %v4447 = vmul.f32 %v4393, %v4432
          %v4448 = vmul.f32 %v4394, %v4436
          %v4449 = vmul.f32 %v4395, %v4424
          %v4450 = vmul.f32 %v4396, %v4428
          %v4451 = vmul.f32 %v4397, %v4432
          %v4452 = vmul.f32 %v4398, %v4436
          %v4453 = vld [vmem:[%s3] sm:$0xf]
          %v4455 = vlaneseq
          %v4456 = vshrl.u32 %v4455, 7
          %v4457 = vsub.s32 0, %v4456
          %v4458 = vrot.slane %v4453, %v4457
          %v4459 = vlaneseq
          %v4460 = vshrl.u32 %v4459, 7
          %v4461 = vsub.s32 1, %v4460
          %v4462 = vrot.slane %v4453, %v4461
          %v4463 = vlaneseq
          %v4464 = vshrl.u32 %v4463, 7
          %v4465 = vsub.s32 2, %v4464
          %v4466 = vrot.slane %v4453, %v4465
          %v4467 = vlaneseq
          %v4468 = vshrl.u32 %v4467, 7
          %v4469 = vsub.s32 3, %v4468
          %v4470 = vrot.slane %v4453, %v4469
          %v4475 = vadd.f32 %v4441, %v4458
          %v4476 = vadd.f32 %v4442, %v4462
          %v4477 = vadd.f32 %v4443, %v4466
          %v4478 = vadd.f32 %v4444, %v4470
          %v4479 = vadd.f32 %v4445, %v4458
          %v4480 = vadd.f32 %v4446, %v4462
          %v4481 = vadd.f32 %v4447, %v4466
          %v4482 = vadd.f32 %v4448, %v4470
          %v4483 = vadd.f32 %v4449, %v4458
          %v4484 = vadd.f32 %v4450, %v4462
          %v4485 = vadd.f32 %v4451, %v4466
          %v4486 = vadd.f32 %v4452, %v4470
          %vm4487 = vcmp.ge.f32.partialorder %v4475, 0.0
          %vm4488 = vcmp.ge.f32.partialorder %v4476, 0.0
          %vm4489 = vcmp.ge.f32.partialorder %v4477, 0.0
          %vm4490 = vcmp.ge.f32.partialorder %v4478, 0.0
          %vm4491 = vcmp.ge.f32.partialorder %v4479, 0.0
          %vm4492 = vcmp.ge.f32.partialorder %v4480, 0.0
          %vm4493 = vcmp.ge.f32.partialorder %v4481, 0.0
          %vm4494 = vcmp.ge.f32.partialorder %v4482, 0.0
          %vm4495 = vcmp.ge.f32.partialorder %v4483, 0.0
          %vm4496 = vcmp.ge.f32.partialorder %v4484, 0.0
          %vm4497 = vcmp.ge.f32.partialorder %v4485, 0.0
          %vm4498 = vcmp.ge.f32.partialorder %v4486, 0.0
          %v4499 = vmul.f32 %v4475, 0.2
          %v4500 = vmul.f32 %v4476, 0.2
          %v4501 = vmul.f32 %v4477, 0.2
          %v4502 = vmul.f32 %v4478, 0.2
          %v4503 = vmul.f32 %v4479, 0.2
          %v4504 = vmul.f32 %v4480, 0.2
          %v4505 = vmul.f32 %v4481, 0.2
          %v4506 = vmul.f32 %v4482, 0.2
          %v4507 = vmul.f32 %v4483, 0.2
          %v4508 = vmul.f32 %v4484, 0.2
          %v4509 = vmul.f32 %v4485, 0.2
          %v4510 = vmul.f32 %v4486, 0.2
          %v4511 = vsel %vm4487, %v4475, %v4499
          %v4512 = vsel %vm4488, %v4476, %v4500
          %v4513 = vsel %vm4489, %v4477, %v4501
          %v4514 = vsel %vm4490, %v4478, %v4502
          %v4515 = vsel %vm4491, %v4479, %v4503
          %v4516 = vsel %vm4492, %v4480, %v4504
          %v4517 = vsel %vm4493, %v4481, %v4505
          %v4518 = vsel %vm4494, %v4482, %v4506
          %v4519 = vsel %vm4495, %v4483, %v4507
          %v4520 = vsel %vm4496, %v4484, %v4508
          %v4521 = vsel %vm4497, %v4485, %v4509
          %v4522 = vsel %vm4498, %v4486, %v4510
          %v4523 = vpack.c.bf16 %v4515, %v4511
          %v4524 = vpack.c.bf16 %v4516, %v4512
          %v4525 = vpack.c.bf16 %v4517, %v4513
          %v4526 = vpack.c.bf16 %v4518, %v4514
          %v4527 = vpack.c.bf16 %v4519, %v4519
          %v4528 = vpack.c.bf16 %v4520, %v4520
          %v4529 = vpack.c.bf16 %v4521, %v4521
          %v4530 = vpack.c.bf16 %v4522, %v4522
          %v4539 = vunpack.c.l.b16 %v4523
          %v4540 = vunpack.c.l.b16 %v4524
          %v4541 = vunpack.c.l.b16 %v4525
          %v4542 = vunpack.c.l.b16 %v4526
          %v4543 = vunpack.c.h.b16 %v4523
          %v4544 = vunpack.c.h.b16 %v4524
          %v4545 = vunpack.c.h.b16 %v4525
          %v4546 = vunpack.c.h.b16 %v4526
          %v4547 = vunpack.c.l.b16 %v4527
          %v4548 = vunpack.c.l.b16 %v4528
          %v4549 = vunpack.c.l.b16 %v4529
          %v4550 = vunpack.c.l.b16 %v4530
          %v4551 = vpack.c.b16 %v4540, %v4539
          %v4552 = vpack.c.b16 %v4542, %v4541
          %v4553 = vpack.c.b16 %v4544, %v4543
          %v4554 = vpack.c.b16 %v4546, %v4545
          %v4555 = vpack.c.b16 %v4548, %v4547
          %v4556 = vpack.c.b16 %v4550, %v4549
          %4563 = vst [vmem:[%s309] sm:$0xff] %v4551
          %4564 = vst [vmem:[%s309 + $0x8] sm:$0xff] %v4552
          %4565 = vst [vmem:[%s309 + $0x10] sm:$0xff] %v4553
          %4566 = vst [vmem:[%s309 + $0x18] sm:$0xff] %v4554
          %4567 = vst [vmem:[%s309 + $0x20] sm:$0x11] %v4555
          %4568 = vst [vmem:[%s309 + $0x28] sm:$0x11] %v4556
        $region71: #{discriminator_forward.8} parent=54 // pred_fallthru
          _
        %s4569 = smul.u32 3, %s19
        %p4570 = scmp.lt.s32.totalorder %s4569, 2
        %s4571 = scalar_select %p4570, %s4569, 2
        %s4572 = smul.addr %s4571, 4
        %s4573 = smul.addr %s4572, 4
        %s4574 = scalar_lea.vmem %s4, %s4573
        // Predicated region
        $region72: #{discriminator_forward.8} parent=54 // pred_check
          %p4575 = pneg %p141
        $region73: #{discriminator_forward.8} parent=54 // pred_check_branch
          %4577 = sbr.rel (%p4575) target = $region75
        $region74: #{discriminator_forward.8} parent=54 // pred_region
          %s4578 = smul.u32 3, %s19
        $region75: #{discriminator_forward.8} parent=54 // pred_fallthru
          _
        // Predicated region
        $region76: #{discriminator_forward.8} parent=54 // pred_check
          %p4579 = pneg %p141
        $region77: #{discriminator_forward.8} parent=54 // pred_check_branch
          %4581 = sbr.rel (%p4579) target = $region79
        $region78: #{discriminator_forward.8} parent=54 // pred_region
          %s4582 = smul.u32 3, %s19
          %p4583 = scmp.lt.s32.totalorder %s4582, 2
          %s4584 = scalar_select %p4583, %s4582, 2
          %s4585 = smul.addr %s4584, 4
          %s4586 = smul.addr %s4585, 4
          %s4587 = scalar_lea.vmem %s4, %s4586
        $region79: #{discriminator_forward.8} parent=54 // pred_fallthru
          _
      $region55: #{discriminator_forward.8} parent=5 // pred_fallthru
        _
      %p4588 = scmp.le.s32.totalorder 2, %s10
      // Predicated region
      $region80: #{discriminator_forward.8} parent=5 // pred_check
        %p4589 = pneg %p4588
      $region81: #{discriminator_forward.8} parent=5 // pred_check_branch
        %4591 = sbr.rel (%p4589) target = $region83
      $region82: #{discriminator_forward.8} parent=5 // pred_region
        %s4592 = ssub.s32 %s10, 2
      $region83: #{discriminator_forward.8} parent=5 // pred_fallthru
        _
    $region6: #{discriminator_forward.8} parent=1 // loop_footer
      %s14 = sadd.s32 1, %s10
    $region7: #{discriminator_forward.8} parent=1 // loop_footer_branch
      %9 = sbr.rel target = $region3
    $region8: #{discriminator_forward.8} parent=1 // loop_exit
      _

// kernel: discriminator_forward.9
$region0: #{discriminator_forward.9}
  #allocation0 [shape = 'u32[]', space=smem, size = 0x4, offset = 0x4, fixed_abs, tag = 'smem constant byte address 0x4 - core index']
  #allocation1 [shape = 'u32[144,128]{1,0:T(1,128)}', space=vmem, size = 0x12000, scoped, tag = 'internal scratch']
  #allocation2 [shape = 'f32[8,128]{1,0:T(8,128)}', space=vmem, size = 0x1000, scoped, tag = 'scratch operand']
  %s0 = inlined_call_operand.vmem [shape: bf16[8,8192], index: 0, kind: input, shape index: {}]
  %s1 = inlined_call_operand.vmem [shape: bf16[8192,128], index: 1, kind: input, shape index: {}]
  %s2 = inlined_call_operand.vmem [shape: f32[1,128], index: 2, kind: input, shape index: {}]
  %s3 = inlined_call_operand.vmem [shape: f32[1,128], index: 3, kind: input, shape index: {}]
  %s4 = inlined_call_operand.vmem [shape: f32[8,128], index: 4, kind: output, shape index: {}]
  %s5 = sld [smem:[#allocation0]]
  $region61: #{discriminator_forward.9} parent=0
    _
  %s7 = ssub.s32 1, %s5
  %s8 = scalar_select 0, %s7, %s5
  loop: start=0, step=1, limit=6
  $region2: #{discriminator_forward.9} parent=0 // loop_pre_header
    _
  $region3: #{discriminator_forward.9} parent=0 // loop_header
    %s10 = sphi 0, %s14
    %p11 = scmp.ge.s32.totalorder %s10, 6
    %s17 = sphi 0, %s29
    %s18 = sphi 0, %s25
    %s19 = sphi 0, %s17
    %s20 = sphi 0, %s18
    %s21 = sphi 0, %s19
    %s22 = sphi 0, %s20
    %s34 = sphi 0, %s36
    %s37 = sphi 0, %s34
    %s38 = sphi 0, %s37
    %s54 = sphi 0, %s38
    %s60 = sphi 0, %s62
    %s63 = sphi 0, %s60
    %s64 = sphi 0, %s63
    %s80 = sphi 0, %s64
    %s84 = sphi 0, %s84
    %s86 = sphi 0, %s84
    %s87 = sphi 0, %s86
    %s101 = sphi 0, %s87
    %s105 = sphi 0, %s105
    %s107 = sphi 0, %s105
    %s108 = sphi 0, %s107
    %s122 = sphi 0, %s108
    %s128 = sphi 0, %s130
    %s131 = sphi 0, %s128
    %s132 = sphi 0, %s131
    %s148 = sphi 0, %s132
  $region4: #{discriminator_forward.9} parent=0 // loop_header_branch
    %13 = sbr.rel (%p11) target = $region8
  $region5: #{discriminator_forward.9} parent=0 // loop_body
    %s15 = ssub.s32 %s10, 1
    %s16 = ssub.s32 %s10, 2
    %s23 = sadd.s32 1, %s18
    %p24 = scmp.ge.s32.totalorder %s23, 4
    %s25 = scalar_select %p24, 0, %s23
    %s26 = sadd.s32 1, %s17
    %s27 = scalar_select %p24, %s26, %s17
    %p28 = scmp.ge.s32.totalorder %s27, 1
    %s29 = scalar_select %p28, 0, %s27
    %s30 = ssub.s32 %s17, %s29
    %s31 = ssub.s32 %s18, %s25
    %s32 = sor.u32 %s30, %s31
    %p33 = scmp.eq.s32.totalorder %s32, 0
    %s35 = sadd.s32 %s34, 1
    %s36 = scalar_select %p33, %s34, %s35
    %p39 = pneg %p33
    %p40 = scmp.eq.s32.totalorder %s10, 3
    %p41 = por %p39, %p40
    %p42 = scmp.ne.s32.totalorder %s34, %s37
    %p43 = scmp.eq.s32.totalorder %s10, 0
    %p44 = por %p42, %p43
    %p45 = scmp.ne.s32.totalorder %s34, %s37
    %p46 = scmp.eq.s32.totalorder %s15, 3
    %p47 = por %p45, %p46
    %p48 = scmp.ne.s32.totalorder %s37, %s38
    %p49 = scmp.eq.s32.totalorder %s15, 0
    %p50 = por %p48, %p49
    %p51 = scmp.ne.s32.totalorder %s37, %s38
    %p52 = scmp.eq.s32.totalorder %s16, 3
    %p53 = por %p51, %p52
    %p55 = scmp.ne.s32.totalorder %s38, %s54
    %p56 = scmp.eq.s32.totalorder %s16, 0
    %p57 = por %p55, %p56
    %s58 = ssub.s32 %s18, %s25
    %p59 = scmp.eq.s32.totalorder %s58, 0
    %s61 = sadd.s32 %s60, 1
    %s62 = scalar_select %p59, %s60, %s61
    %p65 = pneg %p59
    %p66 = scmp.eq.s32.totalorder %s10, 3
    %p67 = por %p65, %p66
    %p68 = scmp.ne.s32.totalorder %s60, %s63
    %p69 = scmp.eq.s32.totalorder %s10, 0
    %p70 = por %p68, %p69
    %p71 = scmp.ne.s32.totalorder %s60, %s63
    %p72 = scmp.eq.s32.totalorder %s15, 3
    %p73 = por %p71, %p72
    %p74 = scmp.ne.s32.totalorder %s63, %s64
    %p75 = scmp.eq.s32.totalorder %s15, 0
    %p76 = por %p74, %p75
    %p77 = scmp.ne.s32.totalorder %s63, %s64
    %p78 = scmp.eq.s32.totalorder %s16, 3
    %p79 = por %p77, %p78
    %p81 = scmp.ne.s32.totalorder %s64, %s80
    %p82 = scmp.eq.s32.totalorder %s16, 0
    %p83 = por %p81, %p82
    %s85 = sadd.s32 %s84, 1
    %p88 = scmp.eq.s32.totalorder %s10, 3
    %p89 = scmp.ne.s32.totalorder %s84, %s86
    %p90 = scmp.eq.s32.totalorder %s10, 0
    %p91 = por %p89, %p90
    %p92 = scmp.ne.s32.totalorder %s84, %s86
    %p93 = scmp.eq.s32.totalorder %s15, 3
    %p94 = por %p92, %p93
    %p95 = scmp.ne.s32.totalorder %s86, %s87
    %p96 = scmp.eq.s32.totalorder %s15, 0
    %p97 = por %p95, %p96
    %p98 = scmp.ne.s32.totalorder %s86, %s87
    %p99 = scmp.eq.s32.totalorder %s16, 3
    %p100 = por %p98, %p99
    %p102 = scmp.ne.s32.totalorder %s87, %s101
    %p103 = scmp.eq.s32.totalorder %s16, 0
    %p104 = por %p102, %p103
    %s106 = sadd.s32 %s105, 1
    %p109 = scmp.eq.s32.totalorder %s10, 3
    %p110 = scmp.ne.s32.totalorder %s105, %s107
    %p111 = scmp.eq.s32.totalorder %s10, 0
    %p112 = por %p110, %p111
    %p113 = scmp.ne.s32.totalorder %s105, %s107
    %p114 = scmp.eq.s32.totalorder %s15, 3
    %p115 = por %p113, %p114
    %p116 = scmp.ne.s32.totalorder %s107, %s108
    %p117 = scmp.eq.s32.totalorder %s15, 0
    %p118 = por %p116, %p117
    %p119 = scmp.ne.s32.totalorder %s107, %s108
    %p120 = scmp.eq.s32.totalorder %s16, 3
    %p121 = por %p119, %p120
    %p123 = scmp.ne.s32.totalorder %s108, %s122
    %p124 = scmp.eq.s32.totalorder %s16, 0
    %p125 = por %p123, %p124
    %s126 = ssub.s32 %s17, %s29
    %p127 = scmp.eq.s32.totalorder %s126, 0
    %s129 = sadd.s32 %s128, 1
    %s130 = scalar_select %p127, %s128, %s129
    %p133 = pneg %p127
    %p134 = scmp.eq.s32.totalorder %s10, 3
    %p135 = por %p133, %p134
    %p136 = scmp.ne.s32.totalorder %s128, %s131
    %p137 = scmp.eq.s32.totalorder %s10, 0
    %p138 = por %p136, %p137
    %p139 = scmp.ne.s32.totalorder %s128, %s131
    %p140 = scmp.eq.s32.totalorder %s15, 3
    %p141 = por %p139, %p140
    %p142 = scmp.ne.s32.totalorder %s131, %s132
    %p143 = scmp.eq.s32.totalorder %s15, 0
    %p144 = por %p142, %p143
    %p145 = scmp.ne.s32.totalorder %s131, %s132
    %p146 = scmp.eq.s32.totalorder %s16, 3
    %p147 = por %p145, %p146
    %p149 = scmp.ne.s32.totalorder %s132, %s148
    %p150 = scmp.eq.s32.totalorder %s16, 0
    %p151 = por %p149, %p150
    %p152 = scmp.le.s32.totalorder 1, %s10
    %p153 = scmp.lt.s32.totalorder %s10, 5
    %p154 = pnand %p152, %p153
    %p155 = pneg %p154
    // Predicated region
    $region9: #{discriminator_forward.9} parent=5 // pred_check
      _
    $region10: #{discriminator_forward.9} parent=5 // pred_check_branch
      %157 = sbr.rel (%p154) target = $region12
    $region11: #{discriminator_forward.9} parent=5 // pred_region
      %s158 = ssub.s32 %s10, 1
      // Predicated region
      $region13: #{discriminator_forward.9} parent=11 // pred_check
        %p159 = pneg %p97
      $region14: #{discriminator_forward.9} parent=11 // pred_check_branch
        %161 = sbr.rel (%p159) target = $region16
      $region15: #{discriminator_forward.9} parent=11 // pred_region
        _
      $region16: #{discriminator_forward.9} parent=11 // pred_fallthru
        _
      // Predicated region
      $region17: #{discriminator_forward.9} parent=11 // pred_check
        %p162 = pneg %p118
      $region18: #{discriminator_forward.9} parent=11 // pred_check_branch
        %164 = sbr.rel (%p162) target = $region20
      $region19: #{discriminator_forward.9} parent=11 // pred_region
        _
      $region20: #{discriminator_forward.9} parent=11 // pred_fallthru
        _
    $region12: #{discriminator_forward.9} parent=5 // pred_fallthru
      _
    %p165 = scmp.lt.s32.totalorder %s10, 4
    // Predicated region
    $region21: #{discriminator_forward.9} parent=5 // pred_check
      %p166 = pneg %p165
    $region22: #{discriminator_forward.9} parent=5 // pred_check_branch
      %168 = sbr.rel (%p166) target = $region24
    $region23: #{discriminator_forward.9} parent=5 // pred_region
      // Predicated region
      $region25: #{discriminator_forward.9} parent=23 // pred_check
        %p169 = pneg %p44
      $region26: #{discriminator_forward.9} parent=23 // pred_check_branch
        %171 = sbr.rel (%p169) target = $region28
      $region27: #{discriminator_forward.9} parent=23 // pred_region
        %s172 = smul.u32 16, %s18
        %p173 = scmp.lt.s32.totalorder %s17, 0
        %s174 = scalar_select %p173, %s17, 0
        %p175 = scmp.lt.s32.totalorder %s172, 63
        %s176 = scalar_select %p175, %s172, 63
        %s177 = smul.addr %s174, 64
        %s178 = sadd.s32 %s176, %s177
        %s179 = smul.addr %s178, 4
        %s180 = scalar_lea.vmem %s0, %s179
        %s181 = smul.u32 16, %s18
      $region28: #{discriminator_forward.9} parent=23 // pred_fallthru
        _
      // Predicated region
      $region29: #{discriminator_forward.9} parent=23 // pred_check
        %p182 = pneg %p70
      $region30: #{discriminator_forward.9} parent=23 // pred_check_branch
        %184 = sbr.rel (%p182) target = $region32
      $region31: #{discriminator_forward.9} parent=23 // pred_region
        %s185 = smul.u32 256, %s18
        %p186 = scmp.lt.s32.totalorder %s185, 1023
        %s187 = scalar_select %p186, %s185, 1023
        %s188 = smul.addr %s187, 4
        %s189 = scalar_lea.vmem %s1, %s188
        %s190 = smul.u32 256, %s18
      $region32: #{discriminator_forward.9} parent=23 // pred_fallthru
        _
    $region24: #{discriminator_forward.9} parent=5 // pred_fallthru
      _
    %p191 = scmp.le.s32.totalorder 1, %s10
    %p192 = scmp.lt.s32.totalorder %s10, 5
    %p193 = pnand %p191, %p192
    %p194 = pneg %p193
    // Predicated region
    $region33: #{discriminator_forward.9} parent=5 // pred_check
      _
    $region34: #{discriminator_forward.9} parent=5 // pred_check_branch
      %196 = sbr.rel (%p193) target = $region36
    $region35: #{discriminator_forward.9} parent=5 // pred_region
      %s197 = ssub.s32 %s10, 1
      %s198 = smul.u32 16, %s20
      %p199 = scmp.lt.s32.totalorder %s19, 0
      %s200 = scalar_select %p199, %s19, 0
      %p201 = scmp.lt.s32.totalorder %s198, 63
      %s202 = scalar_select %p201, %s198, 63
      %s203 = smul.addr %s200, 64
      %s204 = sadd.s32 %s202, %s203
      %s205 = smul.addr %s204, 4
      %s206 = scalar_lea.vmem %s0, %s205
      %p207 = pneg %p50
      %p208 = pneg %p47
      %s209 = smul.u32 256, %s20
      %p210 = scmp.lt.s32.totalorder %s209, 1023
      %s211 = scalar_select %p210, %s209, 1023
      %s212 = smul.addr %s211, 4
      %s213 = scalar_lea.vmem %s1, %s212
      %p214 = pneg %p76
      %p215 = pneg %p73
      %p216 = pneg %p97
      %p217 = pneg %p94
      %p218 = pneg %p118
      %p219 = pneg %p115
      %p220 = pneg %p144
      %p221 = pneg %p141
      %p222 = scmp.lt.s32.totalorder %s19, 0
      %s223 = scalar_select %p222, %s19, 0
      %s224 = smul.addr %s223, 8
      %s225 = scalar_lea.vmem %s4, %s224
      %s226 = smul.u32 16, %s20
      %p227 = scmp.lt.s32.totalorder %s19, 0
      %s228 = scalar_select %p227, %s19, 0
      %p229 = scmp.lt.s32.totalorder %s226, 63
      %s230 = scalar_select %p229, %s226, 63
      %s231 = smul.addr %s228, 64
      %s232 = sadd.s32 %s230, %s231
      %s233 = smul.addr %s232, 4
      %s234 = scalar_lea.vmem %s0, %s233
      %s235 = smul.u32 16, %s20
      %s236 = smul.u32 256, %s20
      %p237 = scmp.lt.s32.totalorder %s236, 1023
      %s238 = scalar_select %p237, %s236, 1023
      %s239 = smul.addr %s238, 4
      %s240 = scalar_lea.vmem %s1, %s239
      %s241 = smul.u32 256, %s20
      %p242 = scmp.lt.s32.totalorder %s19, 0
      %s243 = scalar_select %p242, %s19, 0
      %s244 = smul.addr %s243, 8
      %s245 = scalar_lea.vmem %s4, %s244
      %p247 = scmp.eq.s32.totalorder %s20, 0
      // Predicated region
      $region37: #{discriminator_forward.9} parent=35 // pred_check
        %p248 = pneg %p247
      $region38: #{discriminator_forward.9} parent=35 // pred_check_branch
        %250 = sbr.rel (%p248) target = $region40
      $region39: #{discriminator_forward.9} parent=35 // pred_region
        %251 = vst [vmem:[#allocation2] sm:$0xff] 0.0
      $region40: #{discriminator_forward.9} parent=35 // pred_fallthru
        _
      %v252 = vld [vmem:[#allocation2] sm:$0xff]
      %v253 = vld [vmem:[%s234] sm:$0xff]
      %v254 = vld [vmem:[%s234 + $0x8] sm:$0xff]
      %v255 = vld [vmem:[%s234 + $0x10] sm:$0xff]
      %v256 = vld [vmem:[%s234 + $0x18] sm:$0xff]
      %v257 = vld [vmem:[%s234 + $0x20] sm:$0xff]
      %v258 = vld [vmem:[%s234 + $0x28] sm:$0xff]
      %v259 = vld [vmem:[%s234 + $0x30] sm:$0xff]
      %v260 = vld [vmem:[%s234 + $0x38] sm:$0xff]
      %v261 = vld [vmem:[%s240] sm:$0xf]
      %v262 = vld [vmem:[%s240 + $0x4] sm:$0xf]
      %v263 = vld [vmem:[%s240 + $0x8] sm:$0xf]
      %v264 = vld [vmem:[%s240 + $0xc] sm:$0xf]
      %v265 = vld [vmem:[%s240 + $0x10] sm:$0xf]
      %v266 = vld [vmem:[%s240 + $0x14] sm:$0xf]
      %v267 = vld [vmem:[%s240 + $0x18] sm:$0xf]
      %v268 = vld [vmem:[%s240 + $0x1c] sm:$0xf]
      %v269 = vld [vmem:[%s240 + $0x20] sm:$0xf]
      %v270 = vld [vmem:[%s240 + $0x24] sm:$0xf]
      %v271 = vld [vmem:[%s240 + $0x28] sm:$0xf]
      %v272 = vld [vmem:[%s240 + $0x2c] sm:$0xf]
      %v273 = vld [vmem:[%s240 + $0x30] sm:$0xf]
      %v274 = vld [vmem:[%s240 + $0x34] sm:$0xf]
      %v275 = vld [vmem:[%s240 + $0x38] sm:$0xf]
      %v276 = vld [vmem:[%s240 + $0x3c] sm:$0xf]
      %v277 = vld [vmem:[%s240 + $0x40] sm:$0xf]
      %v278 = vld [vmem:[%s240 + $0x44] sm:$0xf]
      %v279 = vld [vmem:[%s240 + $0x48] sm:$0xf]
      %v280 = vld [vmem:[%s240 + $0x4c] sm:$0xf]
      %v281 = vld [vmem:[%s240 + $0x50] sm:$0xf]
      %v282 = vld [vmem:[%s240 + $0x54] sm:$0xf]
      %v283 = vld [vmem:[%s240 + $0x58] sm:$0xf]
      %v284 = vld [vmem:[%s240 + $0x5c] sm:$0xf]
      %v285 = vld [vmem:[%s240 + $0x60] sm:$0xf]
      %v286 = vld [vmem:[%s240 + $0x64] sm:$0xf]
      %v287 = vld [vmem:[%s240 + $0x68] sm:$0xf]
      %v288 = vld [vmem:[%s240 + $0x6c] sm:$0xf]
      %v289 = vld [vmem:[%s240 + $0x70] sm:$0xf]
      %v290 = vld [vmem:[%s240 + $0x74] sm:$0xf]
      %v291 = vld [vmem:[%s240 + $0x78] sm:$0xf]
      %v292 = vld [vmem:[%s240 + $0x7c] sm:$0xf]
      %v293 = vld [vmem:[%s240 + $0x80] sm:$0xf]
      %v294 = vld [vmem:[%s240 + $0x84] sm:$0xf]
      %v295 = vld [vmem:[%s240 + $0x88] sm:$0xf]
      %v296 = vld [vmem:[%s240 + $0x8c] sm:$0xf]
      %v297 = vld [vmem:[%s240 + $0x90] sm:$0xf]
      %v298 = vld [vmem:[%s240 + $0x94] sm:$0xf]
      %v299 = vld [vmem:[%s240 + $0x98] sm:$0xf]
      %v300 = vld [vmem:[%s240 + $0x9c] sm:$0xf]
      %v301 = vld [vmem:[%s240 + $0xa0] sm:$0xf]
      %v302 = vld [vmem:[%s240 + $0xa4] sm:$0xf]
      %v303 = vld [vmem:[%s240 + $0xa8] sm:$0xf]
      %v304 = vld [vmem:[%s240 + $0xac] sm:$0xf]
      %v305 = vld [vmem:[%s240 + $0xb0] sm:$0xf]
      %v306 = vld [vmem:[%s240 + $0xb4] sm:$0xf]
      %v307 = vld [vmem:[%s240 + $0xb8] sm:$0xf]
      %v308 = vld [vmem:[%s240 + $0xbc] sm:$0xf]
      %v309 = vld [vmem:[%s240 + $0xc0] sm:$0xf]
      %v310 = vld [vmem:[%s240 + $0xc4] sm:$0xf]
      %v311 = vld [vmem:[%s240 + $0xc8] sm:$0xf]
      %v312 = vld [vmem:[%s240 + $0xcc] sm:$0xf]
      %v313 = vld [vmem:[%s240 + $0xd0] sm:$0xf]
      %v314 = vld [vmem:[%s240 + $0xd4] sm:$0xf]
      %v315 = vld [vmem:[%s240 + $0xd8] sm:$0xf]
      %v316 = vld [vmem:[%s240 + $0xdc] sm:$0xf]
      %v317 = vld [vmem:[%s240 + $0xe0] sm:$0xf]
      %v318 = vld [vmem:[%s240 + $0xe4] sm:$0xf]
      %v319 = vld [vmem:[%s240 + $0xe8] sm:$0xf]
      %v320 = vld [vmem:[%s240 + $0xec] sm:$0xf]
      %v321 = vld [vmem:[%s240 + $0xf0] sm:$0xf]
      %v322 = vld [vmem:[%s240 + $0xf4] sm:$0xf]
      %v323 = vld [vmem:[%s240 + $0xf8] sm:$0xf]
      %v324 = vld [vmem:[%s240 + $0xfc] sm:$0xf]
      %v325 = vld [vmem:[%s240 + $0x100] sm:$0xf]
      %v326 = vld [vmem:[%s240 + $0x104] sm:$0xf]
      %v327 = vld [vmem:[%s240 + $0x108] sm:$0xf]
      %v328 = vld [vmem:[%s240 + $0x10c] sm:$0xf]
      %v329 = vld [vmem:[%s240 + $0x110] sm:$0xf]
      %v330 = vld [vmem:[%s240 + $0x114] sm:$0xf]
      %v331 = vld [vmem:[%s240 + $0x118] sm:$0xf]
      %v332 = vld [vmem:[%s240 + $0x11c] sm:$0xf]
      %v333 = vld [vmem:[%s240 + $0x120] sm:$0xf]
      %v334 = vld [vmem:[%s240 + $0x124] sm:$0xf]
      %v335 = vld [vmem:[%s240 + $0x128] sm:$0xf]
      %v336 = vld [vmem:[%s240 + $0x12c] sm:$0xf]
      %v337 = vld [vmem:[%s240 + $0x130] sm:$0xf]
      %v338 = vld [vmem:[%s240 + $0x134] sm:$0xf]
      %v339 = vld [vmem:[%s240 + $0x138] sm:$0xf]
      %v340 = vld [vmem:[%s240 + $0x13c] sm:$0xf]
      %v341 = vld [vmem:[%s240 + $0x140] sm:$0xf]
      %v342 = vld [vmem:[%s240 + $0x144] sm:$0xf]
      %v343 = vld [vmem:[%s240 + $0x148] sm:$0xf]
      %v344 = vld [vmem:[%s240 + $0x14c] sm:$0xf]
      %v345 = vld [vmem:[%s240 + $0x150] sm:$0xf]
      %v346 = vld [vmem:[%s240 + $0x154] sm:$0xf]
      %v347 = vld [vmem:[%s240 + $0x158] sm:$0xf]
      %v348 = vld [vmem:[%s240 + $0x15c] sm:$0xf]
      %v349 = vld [vmem:[%s240 + $0x160] sm:$0xf]
      %v350 = vld [vmem:[%s240 + $0x164] sm:$0xf]
      %v351 = vld [vmem:[%s240 + $0x168] sm:$0xf]
      %v352 = vld [vmem:[%s240 + $0x16c] sm:$0xf]
      %v353 = vld [vmem:[%s240 + $0x170] sm:$0xf]
      %v354 = vld [vmem:[%s240 + $0x174] sm:$0xf]
      %v355 = vld [vmem:[%s240 + $0x178] sm:$0xf]
      %v356 = vld [vmem:[%s240 + $0x17c] sm:$0xf]
      %v357 = vld [vmem:[%s240 + $0x180] sm:$0xf]
      %v358 = vld [vmem:[%s240 + $0x184] sm:$0xf]
      %v359 = vld [vmem:[%s240 + $0x188] sm:$0xf]
      %v360 = vld [vmem:[%s240 + $0x18c] sm:$0xf]
      %v361 = vld [vmem:[%s240 + $0x190] sm:$0xf]
      %v362 = vld [vmem:[%s240 + $0x194] sm:$0xf]
      %v363 = vld [vmem:[%s240 + $0x198] sm:$0xf]
      %v364 = vld [vmem:[%s240 + $0x19c] sm:$0xf]
      %v365 = vld [vmem:[%s240 + $0x1a0] sm:$0xf]
      %v366 = vld [vmem:[%s240 + $0x1a4] sm:$0xf]
      %v367 = vld [vmem:[%s240 + $0x1a8] sm:$0xf]
      %v368 = vld [vmem:[%s240 + $0x1ac] sm:$0xf]
      %v369 = vld [vmem:[%s240 + $0x1b0] sm:$0xf]
      %v370 = vld [vmem:[%s240 + $0x1b4] sm:$0xf]
      %v371 = vld [vmem:[%s240 + $0x1b8] sm:$0xf]
      %v372 = vld [vmem:[%s240 + $0x1bc] sm:$0xf]
      %v373 = vld [vmem:[%s240 + $0x1c0] sm:$0xf]
      %v374 = vld [vmem:[%s240 + $0x1c4] sm:$0xf]
      %v375 = vld [vmem:[%s240 + $0x1c8] sm:$0xf]
      %v376 = vld [vmem:[%s240 + $0x1cc] sm:$0xf]
      %v377 = vld [vmem:[%s240 + $0x1d0] sm:$0xf]
      %v378 = vld [vmem:[%s240 + $0x1d4] sm:$0xf]
      %v379 = vld [vmem:[%s240 + $0x1d8] sm:$0xf]
      %v380 = vld [vmem:[%s240 + $0x1dc] sm:$0xf]
      %v381 = vld [vmem:[%s240 + $0x1e0] sm:$0xf]
      %v382 = vld [vmem:[%s240 + $0x1e4] sm:$0xf]
      %v383 = vld [vmem:[%s240 + $0x1e8] sm:$0xf]
      %v384 = vld [vmem:[%s240 + $0x1ec] sm:$0xf]
      %v385 = vld [vmem:[%s240 + $0x1f0] sm:$0xf]
      %v386 = vld [vmem:[%s240 + $0x1f4] sm:$0xf]
      %v387 = vld [vmem:[%s240 + $0x1f8] sm:$0xf]
      %v388 = vld [vmem:[%s240 + $0x1fc] sm:$0xf]
      %v389 = vld [vmem:[%s240 + $0x200] sm:$0xf]
      %v390 = vld [vmem:[%s240 + $0x204] sm:$0xf]
      %v391 = vld [vmem:[%s240 + $0x208] sm:$0xf]
      %v392 = vld [vmem:[%s240 + $0x20c] sm:$0xf]
      %v393 = vld [vmem:[%s240 + $0x210] sm:$0xf]
      %v394 = vld [vmem:[%s240 + $0x214] sm:$0xf]
      %v395 = vld [vmem:[%s240 + $0x218] sm:$0xf]
      %v396 = vld [vmem:[%s240 + $0x21c] sm:$0xf]
      %v397 = vld [vmem:[%s240 + $0x220] sm:$0xf]
      %v398 = vld [vmem:[%s240 + $0x224] sm:$0xf]
      %v399 = vld [vmem:[%s240 + $0x228] sm:$0xf]
      %v400 = vld [vmem:[%s240 + $0x22c] sm:$0xf]
      %v401 = vld [vmem:[%s240 + $0x230] sm:$0xf]
      %v402 = vld [vmem:[%s240 + $0x234] sm:$0xf]
      %v403 = vld [vmem:[%s240 + $0x238] sm:$0xf]
      %v404 = vld [vmem:[%s240 + $0x23c] sm:$0xf]
      %v405 = vld [vmem:[%s240 + $0x240] sm:$0xf]
      %v406 = vld [vmem:[%s240 + $0x244] sm:$0xf]
      %v407 = vld [vmem:[%s240 + $0x248] sm:$0xf]
      %v408 = vld [vmem:[%s240 + $0x24c] sm:$0xf]
      %v409 = vld [vmem:[%s240 + $0x250] sm:$0xf]
      %v410 = vld [vmem:[%s240 + $0x254] sm:$0xf]
      %v411 = vld [vmem:[%s240 + $0x258] sm:$0xf]
      %v412 = vld [vmem:[%s240 + $0x25c] sm:$0xf]
      %v413 = vld [vmem:[%s240 + $0x260] sm:$0xf]
      %v414 = vld [vmem:[%s240 + $0x264] sm:$0xf]
      %v415 = vld [vmem:[%s240 + $0x268] sm:$0xf]
      %v416 = vld [vmem:[%s240 + $0x26c] sm:$0xf]
      %v417 = vld [vmem:[%s240 + $0x270] sm:$0xf]
      %v418 = vld [vmem:[%s240 + $0x274] sm:$0xf]
      %v419 = vld [vmem:[%s240 + $0x278] sm:$0xf]
      %v420 = vld [vmem:[%s240 + $0x27c] sm:$0xf]
      %v421 = vld [vmem:[%s240 + $0x280] sm:$0xf]
      %v422 = vld [vmem:[%s240 + $0x284] sm:$0xf]
      %v423 = vld [vmem:[%s240 + $0x288] sm:$0xf]
      %v424 = vld [vmem:[%s240 + $0x28c] sm:$0xf]
      %v425 = vld [vmem:[%s240 + $0x290] sm:$0xf]
      %v426 = vld [vmem:[%s240 + $0x294] sm:$0xf]
      %v427 = vld [vmem:[%s240 + $0x298] sm:$0xf]
      %v428 = vld [vmem:[%s240 + $0x29c] sm:$0xf]
      %v429 = vld [vmem:[%s240 + $0x2a0] sm:$0xf]
      %v430 = vld [vmem:[%s240 + $0x2a4] sm:$0xf]
      %v431 = vld [vmem:[%s240 + $0x2a8] sm:$0xf]
      %v432 = vld [vmem:[%s240 + $0x2ac] sm:$0xf]
      %v433 = vld [vmem:[%s240 + $0x2b0] sm:$0xf]
      %v434 = vld [vmem:[%s240 + $0x2b4] sm:$0xf]
      %v435 = vld [vmem:[%s240 + $0x2b8] sm:$0xf]
      %v436 = vld [vmem:[%s240 + $0x2bc] sm:$0xf]
      %v437 = vld [vmem:[%s240 + $0x2c0] sm:$0xf]
      %v438 = vld [vmem:[%s240 + $0x2c4] sm:$0xf]
      %v439 = vld [vmem:[%s240 + $0x2c8] sm:$0xf]
      %v440 = vld [vmem:[%s240 + $0x2cc] sm:$0xf]
      %v441 = vld [vmem:[%s240 + $0x2d0] sm:$0xf]
      %v442 = vld [vmem:[%s240 + $0x2d4] sm:$0xf]
      %v443 = vld [vmem:[%s240 + $0x2d8] sm:$0xf]
      %v444 = vld [vmem:[%s240 + $0x2dc] sm:$0xf]
      %v445 = vld [vmem:[%s240 + $0x2e0] sm:$0xf]
      %v446 = vld [vmem:[%s240 + $0x2e4] sm:$0xf]
      %v447 = vld [vmem:[%s240 + $0x2e8] sm:$0xf]
      %v448 = vld [vmem:[%s240 + $0x2ec] sm:$0xf]
      %v449 = vld [vmem:[%s240 + $0x2f0] sm:$0xf]
      %v450 = vld [vmem:[%s240 + $0x2f4] sm:$0xf]
      %v451 = vld [vmem:[%s240 + $0x2f8] sm:$0xf]
      %v452 = vld [vmem:[%s240 + $0x2fc] sm:$0xf]
      %v453 = vld [vmem:[%s240 + $0x300] sm:$0xf]
      %v454 = vld [vmem:[%s240 + $0x304] sm:$0xf]
      %v455 = vld [vmem:[%s240 + $0x308] sm:$0xf]
      %v456 = vld [vmem:[%s240 + $0x30c] sm:$0xf]
      %v457 = vld [vmem:[%s240 + $0x310] sm:$0xf]
      %v458 = vld [vmem:[%s240 + $0x314] sm:$0xf]
      %v459 = vld [vmem:[%s240 + $0x318] sm:$0xf]
      %v460 = vld [vmem:[%s240 + $0x31c] sm:$0xf]
      %v461 = vld [vmem:[%s240 + $0x320] sm:$0xf]
      %v462 = vld [vmem:[%s240 + $0x324] sm:$0xf]
      %v463 = vld [vmem:[%s240 + $0x328] sm:$0xf]
      %v464 = vld [vmem:[%s240 + $0x32c] sm:$0xf]
      %v465 = vld [vmem:[%s240 + $0x330] sm:$0xf]
      %v466 = vld [vmem:[%s240 + $0x334] sm:$0xf]
      %v467 = vld [vmem:[%s240 + $0x338] sm:$0xf]
      %v468 = vld [vmem:[%s240 + $0x33c] sm:$0xf]
      %v469 = vld [vmem:[%s240 + $0x340] sm:$0xf]
      %v470 = vld [vmem:[%s240 + $0x344] sm:$0xf]
      %v471 = vld [vmem:[%s240 + $0x348] sm:$0xf]
      %v472 = vld [vmem:[%s240 + $0x34c] sm:$0xf]
      %v473 = vld [vmem:[%s240 + $0x350] sm:$0xf]
      %v474 = vld [vmem:[%s240 + $0x354] sm:$0xf]
      %v475 = vld [vmem:[%s240 + $0x358] sm:$0xf]
      %v476 = vld [vmem:[%s240 + $0x35c] sm:$0xf]
      %v477 = vld [vmem:[%s240 + $0x360] sm:$0xf]
      %v478 = vld [vmem:[%s240 + $0x364] sm:$0xf]
      %v479 = vld [vmem:[%s240 + $0x368] sm:$0xf]
      %v480 = vld [vmem:[%s240 + $0x36c] sm:$0xf]
      %v481 = vld [vmem:[%s240 + $0x370] sm:$0xf]
      %v482 = vld [vmem:[%s240 + $0x374] sm:$0xf]
      %v483 = vld [vmem:[%s240 + $0x378] sm:$0xf]
      %v484 = vld [vmem:[%s240 + $0x37c] sm:$0xf]
      %v485 = vld [vmem:[%s240 + $0x380] sm:$0xf]
      %v486 = vld [vmem:[%s240 + $0x384] sm:$0xf]
      %v487 = vld [vmem:[%s240 + $0x388] sm:$0xf]
      %v488 = vld [vmem:[%s240 + $0x38c] sm:$0xf]
      %v489 = vld [vmem:[%s240 + $0x390] sm:$0xf]
      %v490 = vld [vmem:[%s240 + $0x394] sm:$0xf]
      %v491 = vld [vmem:[%s240 + $0x398] sm:$0xf]
      %v492 = vld [vmem:[%s240 + $0x39c] sm:$0xf]
      %v493 = vld [vmem:[%s240 + $0x3a0] sm:$0xf]
      %v494 = vld [vmem:[%s240 + $0x3a4] sm:$0xf]
      %v495 = vld [vmem:[%s240 + $0x3a8] sm:$0xf]
      %v496 = vld [vmem:[%s240 + $0x3ac] sm:$0xf]
      %v497 = vld [vmem:[%s240 + $0x3b0] sm:$0xf]
      %v498 = vld [vmem:[%s240 + $0x3b4] sm:$0xf]
      %v499 = vld [vmem:[%s240 + $0x3b8] sm:$0xf]
      %v500 = vld [vmem:[%s240 + $0x3bc] sm:$0xf]
      %v501 = vld [vmem:[%s240 + $0x3c0] sm:$0xf]
      %v502 = vld [vmem:[%s240 + $0x3c4] sm:$0xf]
      %v503 = vld [vmem:[%s240 + $0x3c8] sm:$0xf]
      %v504 = vld [vmem:[%s240 + $0x3cc] sm:$0xf]
      %v505 = vld [vmem:[%s240 + $0x3d0] sm:$0xf]
      %v506 = vld [vmem:[%s240 + $0x3d4] sm:$0xf]
      %v507 = vld [vmem:[%s240 + $0x3d8] sm:$0xf]
      %v508 = vld [vmem:[%s240 + $0x3dc] sm:$0xf]
      %v509 = vld [vmem:[%s240 + $0x3e0] sm:$0xf]
      %v510 = vld [vmem:[%s240 + $0x3e4] sm:$0xf]
      %v511 = vld [vmem:[%s240 + $0x3e8] sm:$0xf]
      %v512 = vld [vmem:[%s240 + $0x3ec] sm:$0xf]
      %v513 = vld [vmem:[%s240 + $0x3f0] sm:$0xf]
      %v514 = vld [vmem:[%s240 + $0x3f4] sm:$0xf]
      %v515 = vld [vmem:[%s240 + $0x3f8] sm:$0xf]
      %v516 = vld [vmem:[%s240 + $0x3fc] sm:$0xf]
      %v525 = vunpack.c.l.b16 %v253
      %v526 = vunpack.c.h.b16 %v253
      %v527 = vunpack.c.l.b16 %v254
      %v528 = vunpack.c.h.b16 %v254
      %v529 = vunpack.c.l.b16 %v255
      %v530 = vunpack.c.h.b16 %v255
      %v531 = vunpack.c.l.b16 %v256
      %v532 = vunpack.c.h.b16 %v256
      %v533 = vunpack.c.l.b16 %v257
      %v534 = vunpack.c.h.b16 %v257
      %v535 = vunpack.c.l.b16 %v258
      %v536 = vunpack.c.h.b16 %v258
      %v537 = vunpack.c.l.b16 %v259
      %v538 = vunpack.c.h.b16 %v259
      %v539 = vunpack.c.l.b16 %v260
      %v540 = vunpack.c.h.b16 %v260
      %v541 = vpack.c.b16 %v525, %v525
      %v542 = vpack.c.b16 %v526, %v526
      %v543 = vpack.c.b16 %v527, %v527
      %v544 = vpack.c.b16 %v528, %v528
      %v545 = vpack.c.b16 %v529, %v529
      %v546 = vpack.c.b16 %v530, %v530
      %v547 = vpack.c.b16 %v531, %v531
      %v548 = vpack.c.b16 %v532, %v532
      %v549 = vpack.c.b16 %v533, %v533
      %v550 = vpack.c.b16 %v534, %v534
      %v551 = vpack.c.b16 %v535, %v535
      %v552 = vpack.c.b16 %v536, %v536
      %v553 = vpack.c.b16 %v537, %v537
      %v554 = vpack.c.b16 %v538, %v538
      %v555 = vpack.c.b16 %v539, %v539
      %v556 = vpack.c.b16 %v540, %v540
      %v829 = vunpack.c.l.b16 %v261
      %v830 = vunpack.c.l.b16 %v262
      %v831 = vunpack.c.l.b16 %v263
      %v832 = vunpack.c.l.b16 %v264
      %v833 = vunpack.c.l.b16 %v265
      %v834 = vunpack.c.l.b16 %v266
      %v835 = vunpack.c.l.b16 %v267
      %v836 = vunpack.c.l.b16 %v268
      %v837 = vunpack.c.l.b16 %v269
      %v838 = vunpack.c.l.b16 %v270
      %v839 = vunpack.c.l.b16 %v271
      %v840 = vunpack.c.l.b16 %v272
      %v841 = vunpack.c.l.b16 %v273
      %v842 = vunpack.c.l.b16 %v274
      %v843 = vunpack.c.l.b16 %v275
      %v844 = vunpack.c.l.b16 %v276
      %v845 = vunpack.c.l.b16 %v277
      %v846 = vunpack.c.l.b16 %v278
      %v847 = vunpack.c.l.b16 %v279
      %v848 = vunpack.c.l.b16 %v280
      %v849 = vunpack.c.l.b16 %v281
      %v850 = vunpack.c.l.b16 %v282
      %v851 = vunpack.c.l.b16 %v283
      %v852 = vunpack.c.l.b16 %v284
      %v853 = vunpack.c.l.b16 %v285
      %v854 = vunpack.c.l.b16 %v286
      %v855 = vunpack.c.l.b16 %v287
      %v856 = vunpack.c.l.b16 %v288
      %v857 = vunpack.c.l.b16 %v289
      %v858 = vunpack.c.l.b16 %v290
      %v859 = vunpack.c.l.b16 %v291
      %v860 = vunpack.c.l.b16 %v292
      %v861 = vunpack.c.l.b16 %v293
      %v862 = vunpack.c.l.b16 %v294
      %v863 = vunpack.c.l.b16 %v295
      %v864 = vunpack.c.l.b16 %v296
      %v865 = vunpack.c.l.b16 %v297
      %v866 = vunpack.c.l.b16 %v298
      %v867 = vunpack.c.l.b16 %v299
      %v868 = vunpack.c.l.b16 %v300
      %v869 = vunpack.c.l.b16 %v301
      %v870 = vunpack.c.l.b16 %v302
      %v871 = vunpack.c.l.b16 %v303
      %v872 = vunpack.c.l.b16 %v304
      %v873 = vunpack.c.l.b16 %v305
      %v874 = vunpack.c.l.b16 %v306
      %v875 = vunpack.c.l.b16 %v307
      %v876 = vunpack.c.l.b16 %v308
      %v877 = vunpack.c.l.b16 %v309
      %v878 = vunpack.c.l.b16 %v310
      %v879 = vunpack.c.l.b16 %v311
      %v880 = vunpack.c.l.b16 %v312
      %v881 = vunpack.c.l.b16 %v313
      %v882 = vunpack.c.l.b16 %v314
      %v883 = vunpack.c.l.b16 %v315
      %v884 = vunpack.c.l.b16 %v316
      %v885 = vunpack.c.l.b16 %v317
      %v886 = vunpack.c.l.b16 %v318
      %v887 = vunpack.c.l.b16 %v319
      %v888 = vunpack.c.l.b16 %v320
      %v889 = vunpack.c.l.b16 %v321
      %v890 = vunpack.c.l.b16 %v322
      %v891 = vunpack.c.l.b16 %v323
      %v892 = vunpack.c.l.b16 %v324
      %v893 = vunpack.c.l.b16 %v325
      %v894 = vunpack.c.l.b16 %v326
      %v895 = vunpack.c.l.b16 %v327
      %v896 = vunpack.c.l.b16 %v328
      %v897 = vunpack.c.l.b16 %v329
      %v898 = vunpack.c.l.b16 %v330
      %v899 = vunpack.c.l.b16 %v331
      %v900 = vunpack.c.l.b16 %v332
      %v901 = vunpack.c.l.b16 %v333
      %v902 = vunpack.c.l.b16 %v334
      %v903 = vunpack.c.l.b16 %v335
      %v904 = vunpack.c.l.b16 %v336
      %v905 = vunpack.c.l.b16 %v337
      %v906 = vunpack.c.l.b16 %v338
      %v907 = vunpack.c.l.b16 %v339
      %v908 = vunpack.c.l.b16 %v340
      %v909 = vunpack.c.l.b16 %v341
      %v910 = vunpack.c.l.b16 %v342
      %v911 = vunpack.c.l.b16 %v343
      %v912 = vunpack.c.l.b16 %v344
      %v913 = vunpack.c.l.b16 %v345
      %v914 = vunpack.c.l.b16 %v346
      %v915 = vunpack.c.l.b16 %v347
      %v916 = vunpack.c.l.b16 %v348
      %v917 = vunpack.c.l.b16 %v349
      %v918 = vunpack.c.l.b16 %v350
      %v919 = vunpack.c.l.b16 %v351
      %v920 = vunpack.c.l.b16 %v352
      %v921 = vunpack.c.l.b16 %v353
      %v922 = vunpack.c.l.b16 %v354
      %v923 = vunpack.c.l.b16 %v355
      %v924 = vunpack.c.l.b16 %v356
      %v925 = vunpack.c.l.b16 %v357
      %v926 = vunpack.c.l.b16 %v358
      %v927 = vunpack.c.l.b16 %v359
      %v928 = vunpack.c.l.b16 %v360
      %v929 = vunpack.c.l.b16 %v361
      %v930 = vunpack.c.l.b16 %v362
      %v931 = vunpack.c.l.b16 %v363
      %v932 = vunpack.c.l.b16 %v364
      %v933 = vunpack.c.l.b16 %v365
      %v934 = vunpack.c.l.b16 %v366
      %v935 = vunpack.c.l.b16 %v367
      %v936 = vunpack.c.l.b16 %v368
      %v937 = vunpack.c.l.b16 %v369
      %v938 = vunpack.c.l.b16 %v370
      %v939 = vunpack.c.l.b16 %v371
      %v940 = vunpack.c.l.b16 %v372
      %v941 = vunpack.c.l.b16 %v373
      %v942 = vunpack.c.l.b16 %v374
      %v943 = vunpack.c.l.b16 %v375
      %v944 = vunpack.c.l.b16 %v376
      %v945 = vunpack.c.l.b16 %v377
      %v946 = vunpack.c.l.b16 %v378
      %v947 = vunpack.c.l.b16 %v379
      %v948 = vunpack.c.l.b16 %v380
      %v949 = vunpack.c.l.b16 %v381
      %v950 = vunpack.c.l.b16 %v382
      %v951 = vunpack.c.l.b16 %v383
      %v952 = vunpack.c.l.b16 %v384
      %v953 = vunpack.c.l.b16 %v385
      %v954 = vunpack.c.l.b16 %v386
      %v955 = vunpack.c.l.b16 %v387
      %v956 = vunpack.c.l.b16 %v388
      %v957 = vunpack.c.l.b16 %v389
      %v958 = vunpack.c.l.b16 %v390
      %v959 = vunpack.c.l.b16 %v391
      %v960 = vunpack.c.l.b16 %v392
      %v961 = vunpack.c.l.b16 %v393
      %v962 = vunpack.c.l.b16 %v394
      %v963 = vunpack.c.l.b16 %v395
      %v964 = vunpack.c.l.b16 %v396
      %v965 = vunpack.c.l.b16 %v397
      %v966 = vunpack.c.l.b16 %v398
      %v967 = vunpack.c.l.b16 %v399
      %v968 = vunpack.c.l.b16 %v400
      %v969 = vunpack.c.l.b16 %v401
      %v970 = vunpack.c.l.b16 %v402
      %v971 = vunpack.c.l.b16 %v403
      %v972 = vunpack.c.l.b16 %v404
      %v973 = vunpack.c.l.b16 %v405
      %v974 = vunpack.c.l.b16 %v406
      %v975 = vunpack.c.l.b16 %v407
      %v976 = vunpack.c.l.b16 %v408
      %v977 = vunpack.c.l.b16 %v409
      %v978 = vunpack.c.l.b16 %v410
      %v979 = vunpack.c.l.b16 %v411
      %v980 = vunpack.c.l.b16 %v412
      %v981 = vunpack.c.l.b16 %v413
      %v982 = vunpack.c.l.b16 %v414
      %v983 = vunpack.c.l.b16 %v415
      %v984 = vunpack.c.l.b16 %v416
      %v985 = vunpack.c.l.b16 %v417
      %v986 = vunpack.c.l.b16 %v418
      %v987 = vunpack.c.l.b16 %v419
      %v988 = vunpack.c.l.b16 %v420
      %v989 = vunpack.c.l.b16 %v421
      %v990 = vunpack.c.l.b16 %v422
      %v991 = vunpack.c.l.b16 %v423
      %v992 = vunpack.c.l.b16 %v424
      %v993 = vunpack.c.l.b16 %v425
      %v994 = vunpack.c.l.b16 %v426
      %v995 = vunpack.c.l.b16 %v427
      %v996 = vunpack.c.l.b16 %v428
      %v997 = vunpack.c.l.b16 %v429
      %v998 = vunpack.c.l.b16 %v430
      %v999 = vunpack.c.l.b16 %v431
      %v1000 = vunpack.c.l.b16 %v432
      %v1001 = vunpack.c.l.b16 %v433
      %v1002 = vunpack.c.l.b16 %v434
      %v1003 = vunpack.c.l.b16 %v435
      %v1004 = vunpack.c.l.b16 %v436
      %v1005 = vunpack.c.l.b16 %v437
      %v1006 = vunpack.c.l.b16 %v438
      %v1007 = vunpack.c.l.b16 %v439
      %v1008 = vunpack.c.l.b16 %v440
      %v1009 = vunpack.c.l.b16 %v441
      %v1010 = vunpack.c.l.b16 %v442
      %v1011 = vunpack.c.l.b16 %v443
      %v1012 = vunpack.c.l.b16 %v444
      %v1013 = vunpack.c.l.b16 %v445
      %v1014 = vunpack.c.l.b16 %v446
      %v1015 = vunpack.c.l.b16 %v447
      %v1016 = vunpack.c.l.b16 %v448
      %v1017 = vunpack.c.l.b16 %v449
      %v1018 = vunpack.c.l.b16 %v450
      %v1019 = vunpack.c.l.b16 %v451
      %v1020 = vunpack.c.l.b16 %v452
      %v1021 = vunpack.c.l.b16 %v453
      %v1022 = vunpack.c.l.b16 %v454
      %v1023 = vunpack.c.l.b16 %v455
      %v1024 = vunpack.c.l.b16 %v456
      %v1025 = vunpack.c.l.b16 %v457
      %v1026 = vunpack.c.l.b16 %v458
      %v1027 = vunpack.c.l.b16 %v459
      %v1028 = vunpack.c.l.b16 %v460
      %v1029 = vunpack.c.l.b16 %v461
      %v1030 = vunpack.c.l.b16 %v462
      %v1031 = vunpack.c.l.b16 %v463
      %v1032 = vunpack.c.l.b16 %v464
      %v1033 = vunpack.c.l.b16 %v465
      %v1034 = vunpack.c.l.b16 %v466
      %v1035 = vunpack.c.l.b16 %v467
      %v1036 = vunpack.c.l.b16 %v468
      %v1037 = vunpack.c.l.b16 %v469
      %v1038 = vunpack.c.l.b16 %v470
      %v1039 = vunpack.c.l.b16 %v471
      %v1040 = vunpack.c.l.b16 %v472
      %v1041 = vunpack.c.l.b16 %v473
      %v1042 = vunpack.c.l.b16 %v474
      %v1043 = vunpack.c.l.b16 %v475
      %v1044 = vunpack.c.l.b16 %v476
      %v1045 = vunpack.c.l.b16 %v477
      %v1046 = vunpack.c.l.b16 %v478
      %v1047 = vunpack.c.l.b16 %v479
      %v1048 = vunpack.c.l.b16 %v480
      %v1049 = vunpack.c.l.b16 %v481
      %v1050 = vunpack.c.l.b16 %v482
      %v1051 = vunpack.c.l.b16 %v483
      %v1052 = vunpack.c.l.b16 %v484
      %v1053 = vunpack.c.l.b16 %v485
      %v1054 = vunpack.c.l.b16 %v486
      %v1055 = vunpack.c.l.b16 %v487
      %v1056 = vunpack.c.l.b16 %v488
      %v1057 = vunpack.c.l.b16 %v489
      %v1058 = vunpack.c.l.b16 %v490
      %v1059 = vunpack.c.l.b16 %v491
      %v1060 = vunpack.c.l.b16 %v492
      %v1061 = vunpack.c.l.b16 %v493
      %v1062 = vunpack.c.l.b16 %v494
      %v1063 = vunpack.c.l.b16 %v495
      %v1064 = vunpack.c.l.b16 %v496
      %v1065 = vunpack.c.l.b16 %v497
      %v1066 = vunpack.c.l.b16 %v498
      %v1067 = vunpack.c.l.b16 %v499
      %v1068 = vunpack.c.l.b16 %v500
      %v1069 = vunpack.c.l.b16 %v501
      %v1070 = vunpack.c.l.b16 %v502
      %v1071 = vunpack.c.l.b16 %v503
      %v1072 = vunpack.c.l.b16 %v504
      %v1073 = vunpack.c.l.b16 %v505
      %v1074 = vunpack.c.l.b16 %v506
      %v1075 = vunpack.c.l.b16 %v507
      %v1076 = vunpack.c.l.b16 %v508
      %v1077 = vunpack.c.l.b16 %v509
      %v1078 = vunpack.c.l.b16 %v510
      %v1079 = vunpack.c.l.b16 %v511
      %v1080 = vunpack.c.l.b16 %v512
      %v1081 = vunpack.c.l.b16 %v513
      %v1082 = vunpack.c.l.b16 %v514
      %v1083 = vunpack.c.l.b16 %v515
      %v1084 = vunpack.c.l.b16 %v516
      %v1085 = vpack.c.b16 %v830, %v829
      %v1086 = vpack.c.b16 %v832, %v831
      %v1087 = vpack.c.b16 %v834, %v833
      %v1088 = vpack.c.b16 %v836, %v835
      %v1089 = vpack.c.b16 %v838, %v837
      %v1090 = vpack.c.b16 %v840, %v839
      %v1091 = vpack.c.b16 %v842, %v841
      %v1092 = vpack.c.b16 %v844, %v843
      %v1093 = vpack.c.b16 %v846, %v845
      %v1094 = vpack.c.b16 %v848, %v847
      %v1095 = vpack.c.b16 %v850, %v849
      %v1096 = vpack.c.b16 %v852, %v851
      %v1097 = vpack.c.b16 %v854, %v853
      %v1098 = vpack.c.b16 %v856, %v855
      %v1099 = vpack.c.b16 %v858, %v857
      %v1100 = vpack.c.b16 %v860, %v859
      %v1101 = vpack.c.b16 %v862, %v861
      %v1102 = vpack.c.b16 %v864, %v863
      %v1103 = vpack.c.b16 %v866, %v865
      %v1104 = vpack.c.b16 %v868, %v867
      %v1105 = vpack.c.b16 %v870, %v869
      %v1106 = vpack.c.b16 %v872, %v871
      %v1107 = vpack.c.b16 %v874, %v873
      %v1108 = vpack.c.b16 %v876, %v875
      %v1109 = vpack.c.b16 %v878, %v877
      %v1110 = vpack.c.b16 %v880, %v879
      %v1111 = vpack.c.b16 %v882, %v881
      %v1112 = vpack.c.b16 %v884, %v883
      %v1113 = vpack.c.b16 %v886, %v885
      %v1114 = vpack.c.b16 %v888, %v887
      %v1115 = vpack.c.b16 %v890, %v889
      %v1116 = vpack.c.b16 %v892, %v891
      %v1117 = vpack.c.b16 %v894, %v893
      %v1118 = vpack.c.b16 %v896, %v895
      %v1119 = vpack.c.b16 %v898, %v897
      %v1120 = vpack.c.b16 %v900, %v899
      %v1121 = vpack.c.b16 %v902, %v901
      %v1122 = vpack.c.b16 %v904, %v903
      %v1123 = vpack.c.b16 %v906, %v905
      %v1124 = vpack.c.b16 %v908, %v907
      %v1125 = vpack.c.b16 %v910, %v909
      %v1126 = vpack.c.b16 %v912, %v911
      %v1127 = vpack.c.b16 %v914, %v913
      %v1128 = vpack.c.b16 %v916, %v915
      %v1129 = vpack.c.b16 %v918, %v917
      %v1130 = vpack.c.b16 %v920, %v919
      %v1131 = vpack.c.b16 %v922, %v921
      %v1132 = vpack.c.b16 %v924, %v923
      %v1133 = vpack.c.b16 %v926, %v925
      %v1134 = vpack.c.b16 %v928, %v927
      %v1135 = vpack.c.b16 %v930, %v929
      %v1136 = vpack.c.b16 %v932, %v931
      %v1137 = vpack.c.b16 %v934, %v933
      %v1138 = vpack.c.b16 %v936, %v935
      %v1139 = vpack.c.b16 %v938, %v937
      %v1140 = vpack.c.b16 %v940, %v939
      %v1141 = vpack.c.b16 %v942, %v941
      %v1142 = vpack.c.b16 %v944, %v943
      %v1143 = vpack.c.b16 %v946, %v945
      %v1144 = vpack.c.b16 %v948, %v947
      %v1145 = vpack.c.b16 %v950, %v949
      %v1146 = vpack.c.b16 %v952, %v951
      %v1147 = vpack.c.b16 %v954, %v953
      %v1148 = vpack.c.b16 %v956, %v955
      %v1149 = vpack.c.b16 %v958, %v957
      %v1150 = vpack.c.b16 %v960, %v959
      %v1151 = vpack.c.b16 %v962, %v961
      %v1152 = vpack.c.b16 %v964, %v963
      %v1153 = vpack.c.b16 %v966, %v965
      %v1154 = vpack.c.b16 %v968, %v967
      %v1155 = vpack.c.b16 %v970, %v969
      %v1156 = vpack.c.b16 %v972, %v971
      %v1157 = vpack.c.b16 %v974, %v973
      %v1158 = vpack.c.b16 %v976, %v975
      %v1159 = vpack.c.b16 %v978, %v977
      %v1160 = vpack.c.b16 %v980, %v979
      %v1161 = vpack.c.b16 %v982, %v981
      %v1162 = vpack.c.b16 %v984, %v983
      %v1163 = vpack.c.b16 %v986, %v985
      %v1164 = vpack.c.b16 %v988, %v987
      %v1165 = vpack.c.b16 %v990, %v989
      %v1166 = vpack.c.b16 %v992, %v991
      %v1167 = vpack.c.b16 %v994, %v993
      %v1168 = vpack.c.b16 %v996, %v995
      %v1169 = vpack.c.b16 %v998, %v997
      %v1170 = vpack.c.b16 %v1000, %v999
      %v1171 = vpack.c.b16 %v1002, %v1001
      %v1172 = vpack.c.b16 %v1004, %v1003
      %v1173 = vpack.c.b16 %v1006, %v1005
      %v1174 = vpack.c.b16 %v1008, %v1007
      %v1175 = vpack.c.b16 %v1010, %v1009
      %v1176 = vpack.c.b16 %v1012, %v1011
      %v1177 = vpack.c.b16 %v1014, %v1013
      %v1178 = vpack.c.b16 %v1016, %v1015
      %v1179 = vpack.c.b16 %v1018, %v1017
      %v1180 = vpack.c.b16 %v1020, %v1019
      %v1181 = vpack.c.b16 %v1022, %v1021
      %v1182 = vpack.c.b16 %v1024, %v1023
      %v1183 = vpack.c.b16 %v1026, %v1025
      %v1184 = vpack.c.b16 %v1028, %v1027
      %v1185 = vpack.c.b16 %v1030, %v1029
      %v1186 = vpack.c.b16 %v1032, %v1031
      %v1187 = vpack.c.b16 %v1034, %v1033
      %v1188 = vpack.c.b16 %v1036, %v1035
      %v1189 = vpack.c.b16 %v1038, %v1037
      %v1190 = vpack.c.b16 %v1040, %v1039
      %v1191 = vpack.c.b16 %v1042, %v1041
      %v1192 = vpack.c.b16 %v1044, %v1043
      %v1193 = vpack.c.b16 %v1046, %v1045
      %v1194 = vpack.c.b16 %v1048, %v1047
      %v1195 = vpack.c.b16 %v1050, %v1049
      %v1196 = vpack.c.b16 %v1052, %v1051
      %v1197 = vpack.c.b16 %v1054, %v1053
      %v1198 = vpack.c.b16 %v1056, %v1055
      %v1199 = vpack.c.b16 %v1058, %v1057
      %v1200 = vpack.c.b16 %v1060, %v1059
      %v1201 = vpack.c.b16 %v1062, %v1061
      %v1202 = vpack.c.b16 %v1064, %v1063
      %v1203 = vpack.c.b16 %v1066, %v1065
      %v1204 = vpack.c.b16 %v1068, %v1067
      %v1205 = vpack.c.b16 %v1070, %v1069
      %v1206 = vpack.c.b16 %v1072, %v1071
      %v1207 = vpack.c.b16 %v1074, %v1073
      %v1208 = vpack.c.b16 %v1076, %v1075
      %v1209 = vpack.c.b16 %v1078, %v1077
      %v1210 = vpack.c.b16 %v1080, %v1079
      %v1211 = vpack.c.b16 %v1082, %v1081
      %v1212 = vpack.c.b16 %v1084, %v1083
      %1341 = vmatprep.subr.bf16.mxu0 0
      %1342 = vmatpush1.bf16.msra.mxu0 %v1085
      %1343 = vmatprep.subr.bf16.mxu0 0
      %1344 = vmatpush1.bf16.msra.mxu0 %v1086
      %1345 = vmatprep.subr.bf16.mxu0 0
      %1346 = vmatpush1.bf16.msra.mxu0 %v1087
      %1347 = vmatprep.subr.bf16.mxu0 0
      %1348 = vmatpush1.bf16.msra.mxu0 %v1088
      %1349 = vmatprep.subr.bf16.mxu0 0
      %1350 = vmatpush1.bf16.msra.mxu0 %v1089
      %1351 = vmatprep.subr.bf16.mxu0 0
      %1352 = vmatpush1.bf16.msra.mxu0 %v1090
      %1353 = vmatprep.subr.bf16.mxu0 0
      %1354 = vmatpush1.bf16.msra.mxu0 %v1091
      %1355 = vmatprep.subr.bf16.mxu0 0
      %1356 = vmatpush1.bf16.msra.mxu0 %v1092
      %1357 = vmatprep.subr.bf16.mxu0 0
      %1358 = vmatpush1.bf16.msra.mxu0 %v1093
      %1359 = vmatprep.subr.bf16.mxu0 0
      %1360 = vmatpush1.bf16.msra.mxu0 %v1094
      %1361 = vmatprep.subr.bf16.mxu0 0
      %1362 = vmatpush1.bf16.msra.mxu0 %v1095
      %1363 = vmatprep.subr.bf16.mxu0 0
      %1364 = vmatpush1.bf16.msra.mxu0 %v1096
      %1365 = vmatprep.subr.bf16.mxu0 0
      %1366 = vmatpush1.bf16.msra.mxu0 %v1097
      %1367 = vmatprep.subr.bf16.mxu0 0
      %1368 = vmatpush1.bf16.msra.mxu0 %v1098
      %1369 = vmatprep.subr.bf16.mxu0 0
      %1370 = vmatpush1.bf16.msra.mxu0 %v1099
      %1371 = vmatprep.subr.bf16.mxu0 0
      %1372 = vmatpush1.bf16.msra.mxu0 %v1100
      %1373 = vmatprep.mubr.bf16.mxu0 %v542
      %1374 = vmatmul.mubr.bf16.gmra.mrb[0].mxu0 %v541
      %v1375 = vpop.f32.mrb[0].mxu0
      %v1376 = vadd.f32 0.0, %v1375
      %v1377 = vpop.f32.mrb[0].mxu0
      %v1378 = vpop.f32.mrb[0].mxu0
      %v1379 = vpop.f32.mrb[0].mxu0
      %1380 = vdwg.mxu0
      %1381 = vmatprep.subr.bf16.mxu0 0
      %1382 = vmatpush1.bf16.msra.mxu0 %v1101
      %1383 = vmatprep.subr.bf16.mxu0 0
      %1384 = vmatpush1.bf16.msra.mxu0 %v1102
      %1385 = vmatprep.subr.bf16.mxu0 0
      %1386 = vmatpush1.bf16.msra.mxu0 %v1103
      %1387 = vmatprep.subr.bf16.mxu0 0
      %1388 = vmatpush1.bf16.msra.mxu0 %v1104
      %1389 = vmatprep.subr.bf16.mxu0 0
      %1390 = vmatpush1.bf16.msra.mxu0 %v1105
      %1391 = vmatprep.subr.bf16.mxu0 0
      %1392 = vmatpush1.bf16.msra.mxu0 %v1106
      %1393 = vmatprep.subr.bf16.mxu0 0
      %1394 = vmatpush1.bf16.msra.mxu0 %v1107
      %1395 = vmatprep.subr.bf16.mxu0 0
      %1396 = vmatpush1.bf16.msra.mxu0 %v1108
      %1397 = vmatprep.subr.bf16.mxu0 0
      %1398 = vmatpush1.bf16.msra.mxu0 %v1109
      %1399 = vmatprep.subr.bf16.mxu0 0
      %1400 = vmatpush1.bf16.msra.mxu0 %v1110
      %1401 = vmatprep.subr.bf16.mxu0 0
      %1402 = vmatpush1.bf16.msra.mxu0 %v1111
      %1403 = vmatprep.subr.bf16.mxu0 0
      %1404 = vmatpush1.bf16.msra.mxu0 %v1112
      %1405 = vmatprep.subr.bf16.mxu0 0
      %1406 = vmatpush1.bf16.msra.mxu0 %v1113
      %1407 = vmatprep.subr.bf16.mxu0 0
      %1408 = vmatpush1.bf16.msra.mxu0 %v1114
      %1409 = vmatprep.subr.bf16.mxu0 0
      %1410 = vmatpush1.bf16.msra.mxu0 %v1115
      %1411 = vmatprep.subr.bf16.mxu0 0
      %1412 = vmatpush1.bf16.msra.mxu0 %v1116
      %1413 = vmatprep.mubr.bf16.mxu0 %v544
      %1414 = vmatmul.mubr.bf16.gmra.mrb[0].mxu0 %v543
      %v1415 = vpop.f32.mrb[0].mxu0
      %v1416 = vadd.f32 %v1376, %v1415
      %v1417 = vpop.f32.mrb[0].mxu0
      %v1418 = vpop.f32.mrb[0].mxu0
      %v1419 = vpop.f32.mrb[0].mxu0
      %1420 = vdwg.mxu0
      %1421 = vmatprep.subr.bf16.mxu0 0
      %1422 = vmatpush1.bf16.msra.mxu0 %v1117
      %1423 = vmatprep.subr.bf16.mxu0 0
      %1424 = vmatpush1.bf16.msra.mxu0 %v1118
      %1425 = vmatprep.subr.bf16.mxu0 0
      %1426 = vmatpush1.bf16.msra.mxu0 %v1119
      %1427 = vmatprep.subr.bf16.mxu0 0
      %1428 = vmatpush1.bf16.msra.mxu0 %v1120
      %1429 = vmatprep.subr.bf16.mxu0 0
      %1430 = vmatpush1.bf16.msra.mxu0 %v1121
      %1431 = vmatprep.subr.bf16.mxu0 0
      %1432 = vmatpush1.bf16.msra.mxu0 %v1122
      %1433 = vmatprep.subr.bf16.mxu0 0
      %1434 = vmatpush1.bf16.msra.mxu0 %v1123
      %1435 = vmatprep.subr.bf16.mxu0 0
      %1436 = vmatpush1.bf16.msra.mxu0 %v1124
      %1437 = vmatprep.subr.bf16.mxu0 0
      %1438 = vmatpush1.bf16.msra.mxu0 %v1125
      %1439 = vmatprep.subr.bf16.mxu0 0
      %1440 = vmatpush1.bf16.msra.mxu0 %v1126
      %1441 = vmatprep.subr.bf16.mxu0 0
      %1442 = vmatpush1.bf16.msra.mxu0 %v1127
      %1443 = vmatprep.subr.bf16.mxu0 0
      %1444 = vmatpush1.bf16.msra.mxu0 %v1128
      %1445 = vmatprep.subr.bf16.mxu0 0
      %1446 = vmatpush1.bf16.msra.mxu0 %v1129
      %1447 = vmatprep.subr.bf16.mxu0 0
      %1448 = vmatpush1.bf16.msra.mxu0 %v1130
      %1449 = vmatprep.subr.bf16.mxu0 0
      %1450 = vmatpush1.bf16.msra.mxu0 %v1131
      %1451 = vmatprep.subr.bf16.mxu0 0
      %1452 = vmatpush1.bf16.msra.mxu0 %v1132
      %1453 = vmatprep.mubr.bf16.mxu0 %v546
      %1454 = vmatmul.mubr.bf16.gmra.mrb[0].mxu0 %v545
      %v1455 = vpop.f32.mrb[0].mxu0
      %v1456 = vadd.f32 %v1416, %v1455
      %v1457 = vpop.f32.mrb[0].mxu0
      %v1458 = vpop.f32.mrb[0].mxu0
      %v1459 = vpop.f32.mrb[0].mxu0
      %1460 = vdwg.mxu0
      %1461 = vmatprep.subr.bf16.mxu0 0
      %1462 = vmatpush1.bf16.msra.mxu0 %v1133
      %1463 = vmatprep.subr.bf16.mxu0 0
      %1464 = vmatpush1.bf16.msra.mxu0 %v1134
      %1465 = vmatprep.subr.bf16.mxu0 0
      %1466 = vmatpush1.bf16.msra.mxu0 %v1135
      %1467 = vmatprep.subr.bf16.mxu0 0
      %1468 = vmatpush1.bf16.msra.mxu0 %v1136
      %1469 = vmatprep.subr.bf16.mxu0 0
      %1470 = vmatpush1.bf16.msra.mxu0 %v1137
      %1471 = vmatprep.subr.bf16.mxu0 0
      %1472 = vmatpush1.bf16.msra.mxu0 %v1138
      %1473 = vmatprep.subr.bf16.mxu0 0
      %1474 = vmatpush1.bf16.msra.mxu0 %v1139
      %1475 = vmatprep.subr.bf16.mxu0 0
      %1476 = vmatpush1.bf16.msra.mxu0 %v1140
      %1477 = vmatprep.subr.bf16.mxu0 0
      %1478 = vmatpush1.bf16.msra.mxu0 %v1141
      %1479 = vmatprep.subr.bf16.mxu0 0
      %1480 = vmatpush1.bf16.msra.mxu0 %v1142
      %1481 = vmatprep.subr.bf16.mxu0 0
      %1482 = vmatpush1.bf16.msra.mxu0 %v1143
      %1483 = vmatprep.subr.bf16.mxu0 0
      %1484 = vmatpush1.bf16.msra.mxu0 %v1144
      %1485 = vmatprep.subr.bf16.mxu0 0
      %1486 = vmatpush1.bf16.msra.mxu0 %v1145
      %1487 = vmatprep.subr.bf16.mxu0 0
      %1488 = vmatpush1.bf16.msra.mxu0 %v1146
      %1489 = vmatprep.subr.bf16.mxu0 0
      %1490 = vmatpush1.bf16.msra.mxu0 %v1147
      %1491 = vmatprep.subr.bf16.mxu0 0
      %1492 = vmatpush1.bf16.msra.mxu0 %v1148
      %1493 = vmatprep.mubr.bf16.mxu0 %v548
      %1494 = vmatmul.mubr.bf16.gmra.mrb[0].mxu0 %v547
      %v1495 = vpop.f32.mrb[0].mxu0
      %v1496 = vadd.f32 %v1456, %v1495
      %v1497 = vpop.f32.mrb[0].mxu0
      %v1498 = vpop.f32.mrb[0].mxu0
      %v1499 = vpop.f32.mrb[0].mxu0
      %1500 = vdwg.mxu0
      %1501 = vmatprep.subr.bf16.mxu0 0
      %1502 = vmatpush1.bf16.msra.mxu0 %v1149
      %1503 = vmatprep.subr.bf16.mxu0 0
      %1504 = vmatpush1.bf16.msra.mxu0 %v1150
      %1505 = vmatprep.subr.bf16.mxu0 0
      %1506 = vmatpush1.bf16.msra.mxu0 %v1151
      %1507 = vmatprep.subr.bf16.mxu0 0
      %1508 = vmatpush1.bf16.msra.mxu0 %v1152
      %1509 = vmatprep.subr.bf16.mxu0 0
      %1510 = vmatpush1.bf16.msra.mxu0 %v1153
      %1511 = vmatprep.subr.bf16.mxu0 0
      %1512 = vmatpush1.bf16.msra.mxu0 %v1154
      %1513 = vmatprep.subr.bf16.mxu0 0
      %1514 = vmatpush1.bf16.msra.mxu0 %v1155
      %1515 = vmatprep.subr.bf16.mxu0 0
      %1516 = vmatpush1.bf16.msra.mxu0 %v1156
      %1517 = vmatprep.subr.bf16.mxu0 0
      %1518 = vmatpush1.bf16.msra.mxu0 %v1157
      %1519 = vmatprep.subr.bf16.mxu0 0
      %1520 = vmatpush1.bf16.msra.mxu0 %v1158
      %1521 = vmatprep.subr.bf16.mxu0 0
      %1522 = vmatpush1.bf16.msra.mxu0 %v1159
      %1523 = vmatprep.subr.bf16.mxu0 0
      %1524 = vmatpush1.bf16.msra.mxu0 %v1160
      %1525 = vmatprep.subr.bf16.mxu0 0
      %1526 = vmatpush1.bf16.msra.mxu0 %v1161
      %1527 = vmatprep.subr.bf16.mxu0 0
      %1528 = vmatpush1.bf16.msra.mxu0 %v1162
      %1529 = vmatprep.subr.bf16.mxu0 0
      %1530 = vmatpush1.bf16.msra.mxu0 %v1163
      %1531 = vmatprep.subr.bf16.mxu0 0
      %1532 = vmatpush1.bf16.msra.mxu0 %v1164
      %1533 = vmatprep.mubr.bf16.mxu0 %v550
      %1534 = vmatmul.mubr.bf16.gmra.mrb[0].mxu0 %v549
      %v1535 = vpop.f32.mrb[0].mxu0
      %v1536 = vadd.f32 %v1496, %v1535
      %v1537 = vpop.f32.mrb[0].mxu0
      %v1538 = vpop.f32.mrb[0].mxu0
      %v1539 = vpop.f32.mrb[0].mxu0
      %1540 = vdwg.mxu0
      %1541 = vmatprep.subr.bf16.mxu0 0
      %1542 = vmatpush1.bf16.msra.mxu0 %v1165
      %1543 = vmatprep.subr.bf16.mxu0 0
      %1544 = vmatpush1.bf16.msra.mxu0 %v1166
      %1545 = vmatprep.subr.bf16.mxu0 0
      %1546 = vmatpush1.bf16.msra.mxu0 %v1167
      %1547 = vmatprep.subr.bf16.mxu0 0
      %1548 = vmatpush1.bf16.msra.mxu0 %v1168
      %1549 = vmatprep.subr.bf16.mxu0 0
      %1550 = vmatpush1.bf16.msra.mxu0 %v1169
      %1551 = vmatprep.subr.bf16.mxu0 0
      %1552 = vmatpush1.bf16.msra.mxu0 %v1170
      %1553 = vmatprep.subr.bf16.mxu0 0
      %1554 = vmatpush1.bf16.msra.mxu0 %v1171
      %1555 = vmatprep.subr.bf16.mxu0 0
      %1556 = vmatpush1.bf16.msra.mxu0 %v1172
      %1557 = vmatprep.subr.bf16.mxu0 0
      %1558 = vmatpush1.bf16.msra.mxu0 %v1173
      %1559 = vmatprep.subr.bf16.mxu0 0
      %1560 = vmatpush1.bf16.msra.mxu0 %v1174
      %1561 = vmatprep.subr.bf16.mxu0 0
      %1562 = vmatpush1.bf16.msra.mxu0 %v1175
      %1563 = vmatprep.subr.bf16.mxu0 0
      %1564 = vmatpush1.bf16.msra.mxu0 %v1176
      %1565 = vmatprep.subr.bf16.mxu0 0
      %1566 = vmatpush1.bf16.msra.mxu0 %v1177
      %1567 = vmatprep.subr.bf16.mxu0 0
      %1568 = vmatpush1.bf16.msra.mxu0 %v1178
      %1569 = vmatprep.subr.bf16.mxu0 0
      %1570 = vmatpush1.bf16.msra.mxu0 %v1179
      %1571 = vmatprep.subr.bf16.mxu0 0
      %1572 = vmatpush1.bf16.msra.mxu0 %v1180
      %1573 = vmatprep.mubr.bf16.mxu0 %v552
      %1574 = vmatmul.mubr.bf16.gmra.mrb[0].mxu0 %v551
      %v1575 = vpop.f32.mrb[0].mxu0
      %v1576 = vadd.f32 %v1536, %v1575
      %v1577 = vpop.f32.mrb[0].mxu0
      %v1578 = vpop.f32.mrb[0].mxu0
      %v1579 = vpop.f32.mrb[0].mxu0
      %1580 = vdwg.mxu0
      %1581 = vmatprep.subr.bf16.mxu0 0
      %1582 = vmatpush1.bf16.msra.mxu0 %v1181
      %1583 = vmatprep.subr.bf16.mxu0 0
      %1584 = vmatpush1.bf16.msra.mxu0 %v1182
      %1585 = vmatprep.subr.bf16.mxu0 0
      %1586 = vmatpush1.bf16.msra.mxu0 %v1183
      %1587 = vmatprep.subr.bf16.mxu0 0
      %1588 = vmatpush1.bf16.msra.mxu0 %v1184
      %1589 = vmatprep.subr.bf16.mxu0 0
      %1590 = vmatpush1.bf16.msra.mxu0 %v1185
      %1591 = vmatprep.subr.bf16.mxu0 0
      %1592 = vmatpush1.bf16.msra.mxu0 %v1186
      %1593 = vmatprep.subr.bf16.mxu0 0
      %1594 = vmatpush1.bf16.msra.mxu0 %v1187
      %1595 = vmatprep.subr.bf16.mxu0 0
      %1596 = vmatpush1.bf16.msra.mxu0 %v1188
      %1597 = vmatprep.subr.bf16.mxu0 0
      %1598 = vmatpush1.bf16.msra.mxu0 %v1189
      %1599 = vmatprep.subr.bf16.mxu0 0
      %1600 = vmatpush1.bf16.msra.mxu0 %v1190
      %1601 = vmatprep.subr.bf16.mxu0 0
      %1602 = vmatpush1.bf16.msra.mxu0 %v1191
      %1603 = vmatprep.subr.bf16.mxu0 0
      %1604 = vmatpush1.bf16.msra.mxu0 %v1192
      %1605 = vmatprep.subr.bf16.mxu0 0
      %1606 = vmatpush1.bf16.msra.mxu0 %v1193
      %1607 = vmatprep.subr.bf16.mxu0 0
      %1608 = vmatpush1.bf16.msra.mxu0 %v1194
      %1609 = vmatprep.subr.bf16.mxu0 0
      %1610 = vmatpush1.bf16.msra.mxu0 %v1195
      %1611 = vmatprep.subr.bf16.mxu0 0
      %1612 = vmatpush1.bf16.msra.mxu0 %v1196
      %1613 = vmatprep.mubr.bf16.mxu0 %v554
      %1614 = vmatmul.mubr.bf16.gmra.mrb[0].mxu0 %v553
      %v1615 = vpop.f32.mrb[0].mxu0
      %v1616 = vadd.f32 %v1576, %v1615
      %v1617 = vpop.f32.mrb[0].mxu0
      %v1618 = vpop.f32.mrb[0].mxu0
      %v1619 = vpop.f32.mrb[0].mxu0
      %1620 = vdwg.mxu0
      %1621 = vmatprep.subr.bf16.mxu0 0
      %1622 = vmatpush1.bf16.msra.mxu0 %v1197
      %1623 = vmatprep.subr.bf16.mxu0 0
      %1624 = vmatpush1.bf16.msra.mxu0 %v1198
      %1625 = vmatprep.subr.bf16.mxu0 0
      %1626 = vmatpush1.bf16.msra.mxu0 %v1199
      %1627 = vmatprep.subr.bf16.mxu0 0
      %1628 = vmatpush1.bf16.msra.mxu0 %v1200
      %1629 = vmatprep.subr.bf16.mxu0 0
      %1630 = vmatpush1.bf16.msra.mxu0 %v1201
      %1631 = vmatprep.subr.bf16.mxu0 0
      %1632 = vmatpush1.bf16.msra.mxu0 %v1202
      %1633 = vmatprep.subr.bf16.mxu0 0
      %1634 = vmatpush1.bf16.msra.mxu0 %v1203
      %1635 = vmatprep.subr.bf16.mxu0 0
      %1636 = vmatpush1.bf16.msra.mxu0 %v1204
      %1637 = vmatprep.subr.bf16.mxu0 0
      %1638 = vmatpush1.bf16.msra.mxu0 %v1205
      %1639 = vmatprep.subr.bf16.mxu0 0
      %1640 = vmatpush1.bf16.msra.mxu0 %v1206
      %1641 = vmatprep.subr.bf16.mxu0 0
      %1642 = vmatpush1.bf16.msra.mxu0 %v1207
      %1643 = vmatprep.subr.bf16.mxu0 0
      %1644 = vmatpush1.bf16.msra.mxu0 %v1208
      %1645 = vmatprep.subr.bf16.mxu0 0
      %1646 = vmatpush1.bf16.msra.mxu0 %v1209
      %1647 = vmatprep.subr.bf16.mxu0 0
      %1648 = vmatpush1.bf16.msra.mxu0 %v1210
      %1649 = vmatprep.subr.bf16.mxu0 0
      %1650 = vmatpush1.bf16.msra.mxu0 %v1211
      %1651 = vmatprep.subr.bf16.mxu0 0
      %1652 = vmatpush1.bf16.msra.mxu0 %v1212
      %1653 = vmatprep.mubr.bf16.mxu0 %v556
      %1654 = vmatmul.mubr.bf16.gmra.mrb[0].mxu0 %v555
      %v1655 = vpop.f32.mrb[0].mxu0
      %v1656 = vadd.f32 %v1616, %v1655
      %v1657 = vpop.f32.mrb[0].mxu0
      %v1658 = vpop.f32.mrb[0].mxu0
      %v1659 = vpop.f32.mrb[0].mxu0
      %1660 = vdwg.mxu0
      %v1661 = vadd.f32 %v252, %v1656
      %p1662 = scmp.lt.s32.totalorder %s20, 3
      // Predicated region
      $region41: #{discriminator_forward.9} parent=35 // pred_check
        %p1663 = pneg %p1662
      $region42: #{discriminator_forward.9} parent=35 // pred_check_branch
        %1665 = sbr.rel (%p1663) target = $region44
      $region43: #{discriminator_forward.9} parent=35 // pred_region
        %1666 = vst [vmem:[#allocation2] sm:$0xff] %v1661
      $region44: #{discriminator_forward.9} parent=35 // pred_fallthru
        _
      %p1667 = scmp.eq.s32.totalorder %s20, 3
      // Predicated region
      $region45: #{discriminator_forward.9} parent=35 // pred_check
        %p1668 = pneg %p1667
      $region46: #{discriminator_forward.9} parent=35 // pred_check_branch
        %1670 = sbr.rel (%p1668) target = $region48
      $region47: #{discriminator_forward.9} parent=35 // pred_region
        %v1671 = vld [vmem:[%s2] sm:$0x1]
        %v1673 = vlaneseq
        %v1674 = vshrl.u32 %v1673, 7
        %v1675 = vsub.s32 0, %v1674
        %v1676 = vrot.slane %v1671, %v1675
        %v1678 = vmul.f32 %v1661, %v1676
        %v1679 = vld [vmem:[%s3] sm:$0x1]
        %v1681 = vlaneseq
        %v1682 = vshrl.u32 %v1681, 7
        %v1683 = vsub.s32 0, %v1682
        %v1684 = vrot.slane %v1679, %v1683
        %v1686 = vadd.f32 %v1678, %v1684
        %1687 = vst [vmem:[%s245] sm:$0xff] %v1686
      $region48: #{discriminator_forward.9} parent=35 // pred_fallthru
        _
      %p1688 = scmp.lt.s32.totalorder %s19, 0
      %s1689 = scalar_select %p1688, %s19, 0
      %s1690 = smul.addr %s1689, 8
      %s1691 = scalar_lea.vmem %s4, %s1690
      // Predicated region
      $region49: #{discriminator_forward.9} parent=35 // pred_check
        %p1692 = pneg %p141
      $region50: #{discriminator_forward.9} parent=35 // pred_check_branch
        %1694 = sbr.rel (%p1692) target = $region52
      $region51: #{discriminator_forward.9} parent=35 // pred_region
        _
      $region52: #{discriminator_forward.9} parent=35 // pred_fallthru
        _
      // Predicated region
      $region53: #{discriminator_forward.9} parent=35 // pred_check
        %p1695 = pneg %p141
      $region54: #{discriminator_forward.9} parent=35 // pred_check_branch
        %1697 = sbr.rel (%p1695) target = $region56
      $region55: #{discriminator_forward.9} parent=35 // pred_region
        %p1698 = scmp.lt.s32.totalorder %s19, 0
        %s1699 = scalar_select %p1698, %s19, 0
        %s1700 = smul.addr %s1699, 8
        %s1701 = scalar_lea.vmem %s4, %s1700
      $region56: #{discriminator_forward.9} parent=35 // pred_fallthru
        _
    $region36: #{discriminator_forward.9} parent=5 // pred_fallthru
      _
    %p1702 = scmp.le.s32.totalorder 2, %s10
    // Predicated region
    $region57: #{discriminator_forward.9} parent=5 // pred_check
      %p1703 = pneg %p1702
    $region58: #{discriminator_forward.9} parent=5 // pred_check_branch
      %1705 = sbr.rel (%p1703) target = $region60
    $region59: #{discriminator_forward.9} parent=5 // pred_region
      %s1706 = ssub.s32 %s10, 2
    $region60: #{discriminator_forward.9} parent=5 // pred_fallthru
      _
  $region6: #{discriminator_forward.9} parent=0 // loop_footer
    %s14 = sadd.s32 1, %s10
  $region7: #{discriminator_forward.9} parent=0 // loop_footer_branch
    %9 = sbr.rel target = $region3
  $region8: #{discriminator_forward.9} parent=0 // loop_exit
    _

</llo_original>
